<compile_context>
chip_gen: v7x
topology: tpu7x:2x2x1
jax: 0.10.0
libtpu: 0.0.40
codegen_flags: <defaults>
</compile_context>

<pallas_src>
import numpy as np

import jax
import jax.numpy as jnp
from jax.experimental import pallas as pl
from jax.experimental.pallas import tpu as pltpu

MAX_LAG = 6                       # largest filter size is 7 -> causal left pad of 6
FILTER_SIZES = tuple(range(2, 8))
N_FILTERS = len(FILTER_SIZES)     # 6
N_LAGS = MAX_LAG + 1              # 7


# ------------------------------ fused kernel --------------------------------
def _summary_net3_kernel(x_ref, wbig_ref, bcat_ref, wdr_ref, bdr_ref,
                         wih_ref, whh_ref, blstm_ref,
                         out_ref, xpad_ref, xim_ref, gx_ref):
    # x_ref    : (T*BP, Cin)               time-major rows (row = t*BP + b), batch padded
    # wbig_ref : (n_layers, 7*C, NHID)     per-layer conv weights, lags stacked along K
    # bcat_ref : (n_layers, NHID)          concatenated conv biases
    # wdr_ref  : (n_layers, NHID, NH)      1x1 dim-reduction weights (block-diag)
    # bdr_ref  : (n_layers, NH)
    # wih_ref  : (NH, 4*GS)                LSTM input weights  (gate stride GS = 128-mult)
    # whh_ref  : (NH, 4*GS)                LSTM hidden weights
    # blstm_ref: (1, 4*GS)                 b_ih + b_hh
    # out_ref  : (BP, NH)                  last hidden state (rows >= B are batch padding)
    # xpad_ref : ((T+MAX_LAG)*BP, C)       VMEM scratch: causally padded activations
    # xim_ref  : (T*BP, 7*C)               VMEM scratch: im2col for the single K=7*C matmul
    # gx_ref   : (T, BP, 4*GS)             VMEM scratch: hoisted, lane-aligned LSTM gates
    BP, NH = out_ref.shape
    M, Cin = x_ref.shape            # M = T*BP
    T = gx_ref.shape[0]
    C = xpad_ref.shape[1]
    GS = whh_ref.shape[1] // 4
    n_layers = bcat_ref.shape[0]
    PADROWS = MAX_LAG * BP

    # ---- causal left pad: zero only rows/lanes that are never overwritten ----
    xpad_ref[0:PADROWS, :] = jnp.zeros((PADROWS, C), jnp.float32)
    if C > Cin:  # unused channel tail of the layer-0 region (read by zero weights)
        xpad_ref[PADROWS:PADROWS + M, Cin:C] = jnp.zeros((M, C - Cin), jnp.float32)
    xpad_ref[PADROWS:PADROWS + M, 0:Cin] = x_ref[...]

    # ---- 3 fused MultiConvLayers (all 3 branches via block-diagonal weights) ----
    outl = None
    for layer in range(n_layers):
        # im2col: 7 statically row-shifted (8-row aligned) copies, then ONE
        # K = 7*C matmul per layer.
        for s in range(N_LAGS):
            start = (MAX_LAG - s) * BP
            xim_ref[:, s * C:(s + 1) * C] = xpad_ref[start:start + M, :]
        hid = jnp.dot(xim_ref[...], wbig_ref[layer],
                      preferred_element_type=jnp.float32)              # (M, NHID)
        hid = jnp.maximum(hid + bcat_ref[layer:layer + 1, :], 0.0)
        outl = jnp.dot(hid, wdr_ref[layer],
                       preferred_element_type=jnp.float32)             # (M, NH)
        outl = jnp.maximum(outl + bdr_ref[layer:layer + 1, :], 0.0)
        # layer output becomes the next layer's (already causally padded) input;
        # write only columns [0:NH] (valid even when C > NH).
        xpad_ref[PADROWS:PADROWS + M, 0:NH] = outl

    # ---- LSTM: x @ W_ih + b hoisted OUT of the serial recurrence ----
    gx_ref[...] = (jnp.dot(outl, wih_ref[...], preferred_element_type=jnp.float32)
                   + blstm_ref[...]).reshape(T, BP, 4 * GS)

    whh = whh_ref[...]                                                 # hoisted load

    def step(t, carry):
        h, c = carry                                                   # (BP, NH) f32
        gates = gx_ref[t] + jnp.dot(h, whh,
                                    preferred_element_type=jnp.float32)  # (BP, 4*GS)
        i = jax.nn.sigmoid(gates[:, 0 * GS:0 * GS + NH])               # lane-aligned slices
        f = jax.nn.sigmoid(gates[:, 1 * GS:1 * GS + NH])
        g = jnp.tanh(gates[:, 2 * GS:2 * GS + NH])
        o = jax.nn.sigmoid(gates[:, 3 * GS:3 * GS + NH])
        c = f * c + i * g
        h = o * jnp.tanh(c)
        return (h, c)

    h0 = jnp.zeros((BP, NH), jnp.float32)
    c0 = jnp.zeros((BP, NH), jnp.float32)
    h_last, _ = jax.lax.fori_loop(0, T, step, (h0, c0), unroll=True)
    out_ref[...] = h_last.astype(out_ref.dtype)   # columns already ordered [I | R | D]


# ------------------------------ forward wrapper ------------------------------
def summary_net3_forward(x, params):
    """x: (B, T, in_channels) -> (B, n_summary). One fused Pallas kernel."""
    wbig, bcat, wdr, bdr, wih, whh, blstm = params
    B, T, Cin = x.shape
    n_layers, KC, NHID = wbig.shape
    C = KC // N_LAGS
    NH = wdr.shape[2]
    GS = wih.shape[1] // 4
    BP = ((B + 7) // 8) * 8                 # sublane-aligned padded batch
    M = T * BP

    # Layout plumbing only: time-major + batch padded to a multiple of 8 so every
    # in-kernel row offset is sublane-aligned. Pad rows are zero and stay batch-local.
    x_tm = jnp.swapaxes(x, 0, 1)                               # (T, B, Cin)
    x_tm = jnp.pad(x_tm, ((0, 0), (0, BP - B), (0, 0)))        # (T, BP, Cin)
    x_tm = x_tm.reshape(M, Cin)

    flops = int(2 * M * n_layers * (KC * NHID + NHID * NH)     # conv + dim-red
                + 2 * M * NH * 4 * GS                          # hoisted x @ W_ih
                + 2 * M * NH * 4 * GS)                         # recurrence h @ W_hh
    transcendentals = int(5 * M * NH)                          # 3 sigmoid + 2 tanh / step
    bytes_accessed = int(4 * (x_tm.size + sum(int(p.size) for p in params) + BP * NH))

    vmem = pl.BlockSpec(memory_space=pltpu.MemorySpace.VMEM)
    out = pl.pallas_call(
        _summary_net3_kernel,
        out_shape=jax.ShapeDtypeStruct((BP, NH), x.dtype),
        in_specs=[vmem] * 8,
        out_specs=vmem,
        scratch_shapes=[
            pltpu.VMEM(((T + MAX_LAG) * BP, C), jnp.float32),  # causally padded activations
            pltpu.VMEM((M, N_LAGS * C), jnp.float32),          # im2col (single K=7*C matmul)
            pltpu.VMEM((T, BP, 4 * GS), jnp.float32),          # hoisted lane-aligned gates
        ],
        cost_estimate=pl.CostEstimate(flops=flops,
                                      transcendentals=transcendentals,
                                      bytes_accessed=bytes_accessed),
        compiler_params=pltpu.CompilerParams(vmem_limit_bytes=32 * 1024 * 1024),
    )(x_tm, wbig, bcat, wdr, bdr, wih, whh, blstm)
    return out[:B]


# ----------------------------- parameter packing -----------------------------
def init_params(key, in_channels, n_summary, n_layers=3):
    """Synthetic per-branch PyTorch-layout params, packed block-diagonally."""
    assert n_summary % 3 == 0 and in_channels % 3 == 0
    C_out = n_summary // 3          # per-branch out channels == LSTM hidden size H
    C_half = C_out // 2
    c_in0 = in_channels // 3        # per-branch input channels
    H = C_out
    NH = 3 * H                      # packed hidden width (= n_summary)
    NHID = 3 * N_FILTERS * C_half   # packed concat-conv width
    C = max(in_channels, NH)        # packed conv-input channel width
    GS = ((NH + 127) // 128) * 128  # 128-lane-aligned LSTM gate stride

    wbig = np.zeros((n_layers, N_LAGS * C, NHID), np.float32)
    bcat = np.zeros((n_layers, NHID), np.float32)
    wdr = np.zeros((n_layers, NHID, NH), np.float32)
    bdr = np.zeros((n_layers, NH), np.float32)
    wih = np.zeros((NH, 4 * GS), np.float32)
    whh = np.zeros((NH, 4 * GS), np.float32)
    blstm = np.zeros((1, 4 * GS), np.float32)

    branch_keys = jax.random.split(key, 3)
    for b, bkey in enumerate(branch_keys):      # branch order I, R, D (torch concat)
        k = bkey
        for layer in range(n_layers):
            cin = c_in0 if layer == 0 else C_out
            row0 = b * cin                      # branch b's input-channel rows
            for j, f in enumerate(FILTER_SIZES):
                k, kw, kb = jax.random.split(k, 3)
                # torch Conv1d(cin, C_half, f): weight (C_half, cin, f), bias (C_half,)
                Wj = np.asarray(0.1 * jax.random.normal(kw, (C_half, cin, f)))
                bj = np.asarray(0.1 * jax.random.normal(kb, (C_half,)))
                col0 = b * N_FILTERS * C_half + j * C_half
                bcat[layer, col0:col0 + C_half] = bj
                for s in range(f):   # lag s uses tap (f-1-s); lags >= f stay zero
                    wbig[layer, s * C + row0:s * C + row0 + cin,
                         col0:col0 + C_half] = Wj[:, :, f - 1 - s].T
            k, kw, kb = jax.random.split(k, 3)
            # dim_red Conv1d(6*C_half, C_out, 1)
            Wdr = np.asarray(0.1 * jax.random.normal(kw, (C_out, N_FILTERS * C_half)))
            Bdr = np.asarray(0.1 * jax.random.normal(kb, (C_out,)))
            r0 = b * N_FILTERS * C_half
            c0 = b * C_out
            wdr[layer, r0:r0 + N_FILTERS * C_half, c0:c0 + C_out] = Wdr.T
            bdr[layer, c0:c0 + C_out] = Bdr
        # LSTM(H, H): torch weight_ih/hh (4H, H), biases (4H,), gate order i,f,g,o
        k, kih, khh, kb1, kb2 = jax.random.split(k, 5)
        Wih = np.asarray(0.1 * jax.random.normal(kih, (4 * H, H)))
        Whh = np.asarray(0.1 * jax.random.normal(khh, (4 * H, H)))
        Bih = np.asarray(0.1 * jax.random.normal(kb1, (4 * H,)))
        Bhh = np.asarray(0.1 * jax.random.normal(kb2, (4 * H,)))
        for gate in range(4):
            rows = slice(b * H, (b + 1) * H)
            cols = slice(gate * GS + b * H, gate * GS + (b + 1) * H)
            wih[rows, cols] = Wih[gate * H:(gate + 1) * H, :].T
            whh[rows, cols] = Whh[gate * H:(gate + 1) * H, :].T
            blstm[0, cols] = (Bih[gate * H:(gate + 1) * H]
                              + Bhh[gate * H:(gate + 1) * H])

    return tuple(jnp.asarray(a) for a in (wbig, bcat, wdr, bdr, wih, whh, blstm))


# ------------------------- pure-JAX reference (check) ------------------------
def _reference_forward(x, params):
    wbig, bcat, wdr, bdr, wih, whh, blstm = params
    B, T, Cin = x.shape
    n_layers, KC, NHID = wbig.shape
    C = KC // N_LAGS
    NH = wdr.shape[2]
    GS = wih.shape[1] // 4
    h = jnp.pad(x, ((0, 0), (0, 0), (0, C - Cin)))
    o = None
    for layer in range(n_layers):
        hp = jnp.pad(h, ((0, 0), (MAX_LAG, 0), (0, 0)))
        acc = jnp.zeros((B, T, NHID), jnp.float32)
        for s in range(N_LAGS):
            acc = acc + jnp.einsum('btc,cn->btn',
                                   hp[:, MAX_LAG - s:MAX_LAG - s + T, :],
                                   wbig[layer, s * C:(s + 1) * C])
        hid = jax.nn.relu(acc + bcat[layer])
        o = jax.nn.relu(jnp.einsum('btn,nm->btm', hid, wdr[layer]) + bdr[layer])
        h = jnp.pad(o, ((0, 0), (0, 0), (0, C - NH)))
    gx = jnp.einsum('btn,ng->btg', o, wih) + blstm[0]

    def step(carry, gxt):
        hh, cc = carry
        gates = gxt + hh @ whh
        i = jax.nn.sigmoid(gates[:, 0 * GS:0 * GS + NH])
        f = jax.nn.sigmoid(gates[:, 1 * GS:1 * GS + NH])
        g = jnp.tanh(gates[:, 2 * GS:2 * GS + NH])
        oo = jax.nn.sigmoid(gates[:, 3 * GS:3 * GS + NH])
        cc = f * cc + i * g
        hh = oo * jnp.tanh(cc)
        return (hh, cc), None

    h0 = jnp.zeros((B, NH), jnp.float32)
    c0 = jnp.zeros((B, NH), jnp.float32)
    (h_last, _), _ = jax.lax.scan(step, (h0, c0), jnp.swapaxes(gx, 0, 1))
    return h_last


# ----------------------------------- main ------------------------------------
if __name__ == "__main__":
    key = jax.random.PRNGKey(0)
    kx, kp = jax.random.split(key)

    B, T = 2, 16
    in_channels, n_summary = 6, 24   # per branch: 2 input channels, 8 summaries
    x = jax.random.normal(kx, (B, T, in_channels), jnp.float32)
    params = init_params(kp, in_channels, n_summary)

    out = jax.jit(summary_net3_forward)(x, params)
    out = jax.block_until_ready(out)
    assert out.shape == (B, n_summary), out.shape
    assert bool(jnp.all(jnp.isfinite(out)))

    ref = _reference_forward(x, params)
    assert jnp.allclose(out, ref, rtol=5e-2, atol=5e-3), (
        "max abs diff vs reference: %e" % float(jnp.max(jnp.abs(out - ref))))

    print("KERNEL_OK")
</pallas_src>

<mosaic_0001>
module attributes {stable_mosaic.version = 11 : i64} {
  func.func @_summary_net3_kernel(%arg0: memref<128x6xf32, #tpu.memory_space<vmem>>, %arg1: memref<3x168x72xf32, #tpu.memory_space<vmem>>, %arg2: memref<3x72xf32, #tpu.memory_space<vmem>>, %arg3: memref<3x72x24xf32, #tpu.memory_space<vmem>>, %arg4: memref<3x24xf32, #tpu.memory_space<vmem>>, %arg5: memref<24x512xf32, #tpu.memory_space<vmem>>, %arg6: memref<24x512xf32, #tpu.memory_space<vmem>>, %arg7: memref<1x512xf32, #tpu.memory_space<vmem>>, %arg8: memref<8x24xf32, #tpu.memory_space<vmem>>, %arg9: memref<176x24xf32, #tpu.memory_space<vmem>>, %arg10: memref<128x168xf32, #tpu.memory_space<vmem>>, %arg11: memref<16x8x512xf32, #tpu.memory_space<vmem>>) attributes {dimension_semantics = [], scalar_prefetch = 0 : i64, scratch_operands = 3 : i64, tpu.core_type = #tpu.core_type<tc>} {
    %cst = arith.constant 0.000000e+00 : f32
    %0 = vector.broadcast %cst : f32 to vector<48x24xf32>
    %c0 = arith.constant 0 : index
    %c0_0 = arith.constant 0 : index
    %1 = vector.load %arg9[%c0, %c0_0] : memref<176x24xf32, #tpu.memory_space<vmem>>, vector<48x24xf32>
    tpu.vector_store %arg9[%c0, %c0_0], %0 {strides = array<i32>} : memref<176x24xf32, #tpu.memory_space<vmem>>, vector<48x24xf32>,
    %cst_1 = arith.constant 0.000000e+00 : f32
    %2 = vector.broadcast %cst_1 : f32 to vector<128x18xf32>
    %c48 = arith.constant 48 : index
    %c6 = arith.constant 6 : index
    %3 = vector.load %arg9[%c48, %c6] : memref<176x24xf32, #tpu.memory_space<vmem>>, vector<128x18xf32>
    tpu.vector_store %arg9[%c48, %c6], %2 {strides = array<i32>} : memref<176x24xf32, #tpu.memory_space<vmem>>, vector<128x18xf32>,
    %c0_2 = arith.constant 0 : index
    %c0_3 = arith.constant 0 : index
    %4 = vector.load %arg0[%c0_2, %c0_3] : memref<128x6xf32, #tpu.memory_space<vmem>>, vector<128x6xf32>
    %c48_4 = arith.constant 48 : index
    %c0_5 = arith.constant 0 : index
    %5 = vector.load %arg9[%c48_4, %c0_5] : memref<176x24xf32, #tpu.memory_space<vmem>>, vector<128x6xf32>
    tpu.vector_store %arg9[%c48_4, %c0_5], %4 {strides = array<i32>} : memref<176x24xf32, #tpu.memory_space<vmem>>, vector<128x6xf32>,
    %c48_6 = arith.constant 48 : index
    %c0_7 = arith.constant 0 : index
    %6 = vector.load %arg9[%c48_6, %c0_7] : memref<176x24xf32, #tpu.memory_space<vmem>>, vector<128x24xf32>
    %c0_8 = arith.constant 0 : index
    %c0_9 = arith.constant 0 : index
    %7 = vector.load %arg10[%c0_8, %c0_9] : memref<128x168xf32, #tpu.memory_space<vmem>>, vector<128x24xf32>
    tpu.vector_store %arg10[%c0_8, %c0_9], %6 {strides = array<i32>} : memref<128x168xf32, #tpu.memory_space<vmem>>, vector<128x24xf32>,
    %c40 = arith.constant 40 : index
    %c0_10 = arith.constant 0 : index
    %8 = vector.load %arg9[%c40, %c0_10] : memref<176x24xf32, #tpu.memory_space<vmem>>, vector<128x24xf32>
    %c0_11 = arith.constant 0 : index
    %c24 = arith.constant 24 : index
    %9 = vector.load %arg10[%c0_11, %c24] : memref<128x168xf32, #tpu.memory_space<vmem>>, vector<128x24xf32>
    tpu.vector_store %arg10[%c0_11, %c24], %8 {strides = array<i32>} : memref<128x168xf32, #tpu.memory_space<vmem>>, vector<128x24xf32>,
    %c32 = arith.constant 32 : index
    %c0_12 = arith.constant 0 : index
    %10 = vector.load %arg9[%c32, %c0_12] : memref<176x24xf32, #tpu.memory_space<vmem>>, vector<128x24xf32>
    %c0_13 = arith.constant 0 : index
    %c48_14 = arith.constant 48 : index
    %11 = vector.load %arg10[%c0_13, %c48_14] : memref<128x168xf32, #tpu.memory_space<vmem>>, vector<128x24xf32>
    tpu.vector_store %arg10[%c0_13, %c48_14], %10 {strides = array<i32>} : memref<128x168xf32, #tpu.memory_space<vmem>>, vector<128x24xf32>,
    %c24_15 = arith.constant 24 : index
    %c0_16 = arith.constant 0 : index
    %12 = vector.load %arg9[%c24_15, %c0_16] : memref<176x24xf32, #tpu.memory_space<vmem>>, vector<128x24xf32>
    %c0_17 = arith.constant 0 : index
    %c72 = arith.constant 72 : index
    %13 = vector.load %arg10[%c0_17, %c72] : memref<128x168xf32, #tpu.memory_space<vmem>>, vector<128x24xf32>
    tpu.vector_store %arg10[%c0_17, %c72], %12 {strides = array<i32>} : memref<128x168xf32, #tpu.memory_space<vmem>>, vector<128x24xf32>,
    %c16 = arith.constant 16 : index
    %c0_18 = arith.constant 0 : index
    %14 = vector.load %arg9[%c16, %c0_18] : memref<176x24xf32, #tpu.memory_space<vmem>>, vector<128x24xf32>
    %c0_19 = arith.constant 0 : index
    %c96 = arith.constant 96 : index
    %15 = vector.load %arg10[%c0_19, %c96] : memref<128x168xf32, #tpu.memory_space<vmem>>, vector<128x24xf32>
    tpu.vector_store %arg10[%c0_19, %c96], %14 {strides = array<i32>} : memref<128x168xf32, #tpu.memory_space<vmem>>, vector<128x24xf32>,
    %c8 = arith.constant 8 : index
    %c0_20 = arith.constant 0 : index
    %16 = vector.load %arg9[%c8, %c0_20] : memref<176x24xf32, #tpu.memory_space<vmem>>, vector<128x24xf32>
    %c0_21 = arith.constant 0 : index
    %c120 = arith.constant 120 : index
    %17 = vector.load %arg10[%c0_21, %c120] : memref<128x168xf32, #tpu.memory_space<vmem>>, vector<128x24xf32>
    tpu.vector_store %arg10[%c0_21, %c120], %16 {strides = array<i32>} : memref<128x168xf32, #tpu.memory_space<vmem>>, vector<128x24xf32>,
    %c0_22 = arith.constant 0 : index
    %c0_23 = arith.constant 0 : index
    %18 = vector.load %arg9[%c0_22, %c0_23] : memref<176x24xf32, #tpu.memory_space<vmem>>, vector<128x24xf32>
    %c0_24 = arith.constant 0 : index
    %c144 = arith.constant 144 : index
    %19 = vector.load %arg10[%c0_24, %c144] : memref<128x168xf32, #tpu.memory_space<vmem>>, vector<128x24xf32>
    tpu.vector_store %arg10[%c0_24, %c144], %18 {strides = array<i32>} : memref<128x168xf32, #tpu.memory_space<vmem>>, vector<128x24xf32>,
    %c0_25 = arith.constant 0 : index
    %c0_26 = arith.constant 0 : index
    %20 = vector.load %arg10[%c0_25, %c0_26] : memref<128x168xf32, #tpu.memory_space<vmem>>, vector<128x168xf32>
    %c0_27 = arith.constant 0 : index
    %c0_28 = arith.constant 0 : index
    %c0_29 = arith.constant 0 : index
    %21 = vector.load %arg1[%c0_27, %c0_28, %c0_29] : memref<3x168x72xf32, #tpu.memory_space<vmem>>, vector<1x168x72xf32>
    %22 = vector.shape_cast %21 : vector<1x168x72xf32> to vector<168x72xf32>
    %cst_30 = arith.constant dense<0.000000e+00> : vector<128x72xf32>
    %23 = tpu.matmul %20, %22, %cst_30 {dimension_numbers = #tpu.dot_dimension_numbers<[1], [0], [0], [1], [0, 0, 1, 1], [], []>} : vector<128x168xf32>, vector<168x72xf32>, vector<128x72xf32> -> vector<128x72xf32>
    %c0_31 = arith.constant 0 : index
    %c0_32 = arith.constant 0 : index
    %24 = vector.load %arg2[%c0_31, %c0_32] : memref<3x72xf32, #tpu.memory_space<vmem>>, vector<1x72xf32>
    %25 = vector.broadcast %24 : vector<1x72xf32> to vector<128x72xf32>
    %26 = arith.addf %23, %25 : vector<128x72xf32>
    %cst_33 = arith.constant 0.000000e+00 : f32
    %27 = vector.broadcast %cst_33 : f32 to vector<128x72xf32>
    %28 = arith.maximumf %26, %27 : vector<128x72xf32>
    %c0_34 = arith.constant 0 : index
    %c0_35 = arith.constant 0 : index
    %c0_36 = arith.constant 0 : index
    %29 = vector.load %arg3[%c0_34, %c0_35, %c0_36] : memref<3x72x24xf32, #tpu.memory_space<vmem>>, vector<1x72x24xf32>
    %30 = vector.shape_cast %29 : vector<1x72x24xf32> to vector<72x24xf32>
    %cst_37 = arith.constant dense<0.000000e+00> : vector<128x24xf32>
    %31 = tpu.matmul %28, %30, %cst_37 {dimension_numbers = #tpu.dot_dimension_numbers<[1], [0], [0], [1], [0, 0, 1, 1], [], []>} : vector<128x72xf32>, vector<72x24xf32>, vector<128x24xf32> -> vector<128x24xf32>
    %c0_38 = arith.constant 0 : index
    %c0_39 = arith.constant 0 : index
    %32 = vector.load %arg4[%c0_38, %c0_39] : memref<3x24xf32, #tpu.memory_space<vmem>>, vector<1x24xf32>
    %33 = vector.broadcast %32 : vector<1x24xf32> to vector<128x24xf32>
    %34 = arith.addf %31, %33 : vector<128x24xf32>
    %cst_40 = arith.constant 0.000000e+00 : f32
    %35 = vector.broadcast %cst_40 : f32 to vector<128x24xf32>
    %36 = arith.maximumf %34, %35 : vector<128x24xf32>
    %c48_41 = arith.constant 48 : index
    %c0_42 = arith.constant 0 : index
    %37 = vector.load %arg9[%c48_41, %c0_42] : memref<176x24xf32, #tpu.memory_space<vmem>>, vector<128x24xf32>
    tpu.vector_store %arg9[%c48_41, %c0_42], %36 {strides = array<i32>} : memref<176x24xf32, #tpu.memory_space<vmem>>, vector<128x24xf32>,
    %c48_43 = arith.constant 48 : index
    %c0_44 = arith.constant 0 : index
    %38 = vector.load %arg9[%c48_43, %c0_44] : memref<176x24xf32, #tpu.memory_space<vmem>>, vector<128x24xf32>
    %c0_45 = arith.constant 0 : index
    %c0_46 = arith.constant 0 : index
    %39 = vector.load %arg10[%c0_45, %c0_46] : memref<128x168xf32, #tpu.memory_space<vmem>>, vector<128x24xf32>
    tpu.vector_store %arg10[%c0_45, %c0_46], %38 {strides = array<i32>} : memref<128x168xf32, #tpu.memory_space<vmem>>, vector<128x24xf32>,
    %c40_47 = arith.constant 40 : index
    %c0_48 = arith.constant 0 : index
    %40 = vector.load %arg9[%c40_47, %c0_48] : memref<176x24xf32, #tpu.memory_space<vmem>>, vector<128x24xf32>
    %c0_49 = arith.constant 0 : index
    %c24_50 = arith.constant 24 : index
    %41 = vector.load %arg10[%c0_49, %c24_50] : memref<128x168xf32, #tpu.memory_space<vmem>>, vector<128x24xf32>
    tpu.vector_store %arg10[%c0_49, %c24_50], %40 {strides = array<i32>} : memref<128x168xf32, #tpu.memory_space<vmem>>, vector<128x24xf32>,
    %c32_51 = arith.constant 32 : index
    %c0_52 = arith.constant 0 : index
    %42 = vector.load %arg9[%c32_51, %c0_52] : memref<176x24xf32, #tpu.memory_space<vmem>>, vector<128x24xf32>
    %c0_53 = arith.constant 0 : index
    %c48_54 = arith.constant 48 : index
    %43 = vector.load %arg10[%c0_53, %c48_54] : memref<128x168xf32, #tpu.memory_space<vmem>>, vector<128x24xf32>
    tpu.vector_store %arg10[%c0_53, %c48_54], %42 {strides = array<i32>} : memref<128x168xf32, #tpu.memory_space<vmem>>, vector<128x24xf32>,
    %c24_55 = arith.constant 24 : index
    %c0_56 = arith.constant 0 : index
    %44 = vector.load %arg9[%c24_55, %c0_56] : memref<176x24xf32, #tpu.memory_space<vmem>>, vector<128x24xf32>
    %c0_57 = arith.constant 0 : index
    %c72_58 = arith.constant 72 : index
    %45 = vector.load %arg10[%c0_57, %c72_58] : memref<128x168xf32, #tpu.memory_space<vmem>>, vector<128x24xf32>
    tpu.vector_store %arg10[%c0_57, %c72_58], %44 {strides = array<i32>} : memref<128x168xf32, #tpu.memory_space<vmem>>, vector<128x24xf32>,
    %c16_59 = arith.constant 16 : index
    %c0_60 = arith.constant 0 : index
    %46 = vector.load %arg9[%c16_59, %c0_60] : memref<176x24xf32, #tpu.memory_space<vmem>>, vector<128x24xf32>
    %c0_61 = arith.constant 0 : index
    %c96_62 = arith.constant 96 : index
    %47 = vector.load %arg10[%c0_61, %c96_62] : memref<128x168xf32, #tpu.memory_space<vmem>>, vector<128x24xf32>
    tpu.vector_store %arg10[%c0_61, %c96_62], %46 {strides = array<i32>} : memref<128x168xf32, #tpu.memory_space<vmem>>, vector<128x24xf32>,
    %c8_63 = arith.constant 8 : index
    %c0_64 = arith.constant 0 : index
    %48 = vector.load %arg9[%c8_63, %c0_64] : memref<176x24xf32, #tpu.memory_space<vmem>>, vector<128x24xf32>
    %c0_65 = arith.constant 0 : index
    %c120_66 = arith.constant 120 : index
    %49 = vector.load %arg10[%c0_65, %c120_66] : memref<128x168xf32, #tpu.memory_space<vmem>>, vector<128x24xf32>
    tpu.vector_store %arg10[%c0_65, %c120_66], %48 {strides = array<i32>} : memref<128x168xf32, #tpu.memory_space<vmem>>, vector<128x24xf32>,
    %c0_67 = arith.constant 0 : index
    %c0_68 = arith.constant 0 : index
    %50 = vector.load %arg9[%c0_67, %c0_68] : memref<176x24xf32, #tpu.memory_space<vmem>>, vector<128x24xf32>
    %c0_69 = arith.constant 0 : index
    %c144_70 = arith.constant 144 : index
    %51 = vector.load %arg10[%c0_69, %c144_70] : memref<128x168xf32, #tpu.memory_space<vmem>>, vector<128x24xf32>
    tpu.vector_store %arg10[%c0_69, %c144_70], %50 {strides = array<i32>} : memref<128x168xf32, #tpu.memory_space<vmem>>, vector<128x24xf32>,
    %c0_71 = arith.constant 0 : index
    %c0_72 = arith.constant 0 : index
    %52 = vector.load %arg10[%c0_71, %c0_72] : memref<128x168xf32, #tpu.memory_space<vmem>>, vector<128x168xf32>
    %c1 = arith.constant 1 : index
    %c0_73 = arith.constant 0 : index
    %c0_74 = arith.constant 0 : index
    %53 = vector.load %arg1[%c1, %c0_73, %c0_74] : memref<3x168x72xf32, #tpu.memory_space<vmem>>, vector<1x168x72xf32>
    %54 = vector.shape_cast %53 : vector<1x168x72xf32> to vector<168x72xf32>
    %cst_75 = arith.constant dense<0.000000e+00> : vector<128x72xf32>
    %55 = tpu.matmul %52, %54, %cst_75 {dimension_numbers = #tpu.dot_dimension_numbers<[1], [0], [0], [1], [0, 0, 1, 1], [], []>} : vector<128x168xf32>, vector<168x72xf32>, vector<128x72xf32> -> vector<128x72xf32>
    %c1_76 = arith.constant 1 : index
    %c0_77 = arith.constant 0 : index
    %56 = vector.load %arg2[%c1_76, %c0_77] : memref<3x72xf32, #tpu.memory_space<vmem>>, vector<1x72xf32>
    %57 = vector.broadcast %56 : vector<1x72xf32> to vector<128x72xf32>
    %58 = arith.addf %55, %57 : vector<128x72xf32>
    %cst_78 = arith.constant 0.000000e+00 : f32
    %59 = vector.broadcast %cst_78 : f32 to vector<128x72xf32>
    %60 = arith.maximumf %58, %59 : vector<128x72xf32>
    %c1_79 = arith.constant 1 : index
    %c0_80 = arith.constant 0 : index
    %c0_81 = arith.constant 0 : index
    %61 = vector.load %arg3[%c1_79, %c0_80, %c0_81] : memref<3x72x24xf32, #tpu.memory_space<vmem>>, vector<1x72x24xf32>
    %62 = vector.shape_cast %61 : vector<1x72x24xf32> to vector<72x24xf32>
    %cst_82 = arith.constant dense<0.000000e+00> : vector<128x24xf32>
    %63 = tpu.matmul %60, %62, %cst_82 {dimension_numbers = #tpu.dot_dimension_numbers<[1], [0], [0], [1], [0, 0, 1, 1], [], []>} : vector<128x72xf32>, vector<72x24xf32>, vector<128x24xf32> -> vector<128x24xf32>
    %c1_83 = arith.constant 1 : index
    %c0_84 = arith.constant 0 : index
    %64 = vector.load %arg4[%c1_83, %c0_84] : memref<3x24xf32, #tpu.memory_space<vmem>>, vector<1x24xf32>
    %65 = vector.broadcast %64 : vector<1x24xf32> to vector<128x24xf32>
    %66 = arith.addf %63, %65 : vector<128x24xf32>
    %cst_85 = arith.constant 0.000000e+00 : f32
    %67 = vector.broadcast %cst_85 : f32 to vector<128x24xf32>
    %68 = arith.maximumf %66, %67 : vector<128x24xf32>
    %c48_86 = arith.constant 48 : index
    %c0_87 = arith.constant 0 : index
    %69 = vector.load %arg9[%c48_86, %c0_87] : memref<176x24xf32, #tpu.memory_space<vmem>>, vector<128x24xf32>
    tpu.vector_store %arg9[%c48_86, %c0_87], %68 {strides = array<i32>} : memref<176x24xf32, #tpu.memory_space<vmem>>, vector<128x24xf32>,
    %c48_88 = arith.constant 48 : index
    %c0_89 = arith.constant 0 : index
    %70 = vector.load %arg9[%c48_88, %c0_89] : memref<176x24xf32, #tpu.memory_space<vmem>>, vector<128x24xf32>
    %c0_90 = arith.constant 0 : index
    %c0_91 = arith.constant 0 : index
    %71 = vector.load %arg10[%c0_90, %c0_91] : memref<128x168xf32, #tpu.memory_space<vmem>>, vector<128x24xf32>
    tpu.vector_store %arg10[%c0_90, %c0_91], %70 {strides = array<i32>} : memref<128x168xf32, #tpu.memory_space<vmem>>, vector<128x24xf32>,
    %c40_92 = arith.constant 40 : index
    %c0_93 = arith.constant 0 : index
    %72 = vector.load %arg9[%c40_92, %c0_93] : memref<176x24xf32, #tpu.memory_space<vmem>>, vector<128x24xf32>
    %c0_94 = arith.constant 0 : index
    %c24_95 = arith.constant 24 : index
    %73 = vector.load %arg10[%c0_94, %c24_95] : memref<128x168xf32, #tpu.memory_space<vmem>>, vector<128x24xf32>
    tpu.vector_store %arg10[%c0_94, %c24_95], %72 {strides = array<i32>} : memref<128x168xf32, #tpu.memory_space<vmem>>, vector<128x24xf32>,
    %c32_96 = arith.constant 32 : index
    %c0_97 = arith.constant 0 : index
    %74 = vector.load %arg9[%c32_96, %c0_97] : memref<176x24xf32, #tpu.memory_space<vmem>>, vector<128x24xf32>
    %c0_98 = arith.constant 0 : index
    %c48_99 = arith.constant 48 : index
    %75 = vector.load %arg10[%c0_98, %c48_99] : memref<128x168xf32, #tpu.memory_space<vmem>>, vector<128x24xf32>
    tpu.vector_store %arg10[%c0_98, %c48_99], %74 {strides = array<i32>} : memref<128x168xf32, #tpu.memory_space<vmem>>, vector<128x24xf32>,
    %c24_100 = arith.constant 24 : index
    %c0_101 = arith.constant 0 : index
    %76 = vector.load %arg9[%c24_100, %c0_101] : memref<176x24xf32, #tpu.memory_space<vmem>>, vector<128x24xf32>
    %c0_102 = arith.constant 0 : index
    %c72_103 = arith.constant 72 : index
    %77 = vector.load %arg10[%c0_102, %c72_103] : memref<128x168xf32, #tpu.memory_space<vmem>>, vector<128x24xf32>
    tpu.vector_store %arg10[%c0_102, %c72_103], %76 {strides = array<i32>} : memref<128x168xf32, #tpu.memory_space<vmem>>, vector<128x24xf32>,
    %c16_104 = arith.constant 16 : index
    %c0_105 = arith.constant 0 : index
    %78 = vector.load %arg9[%c16_104, %c0_105] : memref<176x24xf32, #tpu.memory_space<vmem>>, vector<128x24xf32>
    %c0_106 = arith.constant 0 : index
    %c96_107 = arith.constant 96 : index
    %79 = vector.load %arg10[%c0_106, %c96_107] : memref<128x168xf32, #tpu.memory_space<vmem>>, vector<128x24xf32>
    tpu.vector_store %arg10[%c0_106, %c96_107], %78 {strides = array<i32>} : memref<128x168xf32, #tpu.memory_space<vmem>>, vector<128x24xf32>,
    %c8_108 = arith.constant 8 : index
    %c0_109 = arith.constant 0 : index
    %80 = vector.load %arg9[%c8_108, %c0_109] : memref<176x24xf32, #tpu.memory_space<vmem>>, vector<128x24xf32>
    %c0_110 = arith.constant 0 : index
    %c120_111 = arith.constant 120 : index
    %81 = vector.load %arg10[%c0_110, %c120_111] : memref<128x168xf32, #tpu.memory_space<vmem>>, vector<128x24xf32>
    tpu.vector_store %arg10[%c0_110, %c120_111], %80 {strides = array<i32>} : memref<128x168xf32, #tpu.memory_space<vmem>>, vector<128x24xf32>,
    %c0_112 = arith.constant 0 : index
    %c0_113 = arith.constant 0 : index
    %82 = vector.load %arg9[%c0_112, %c0_113] : memref<176x24xf32, #tpu.memory_space<vmem>>, vector<128x24xf32>
    %c0_114 = arith.constant 0 : index
    %c144_115 = arith.constant 144 : index
    %83 = vector.load %arg10[%c0_114, %c144_115] : memref<128x168xf32, #tpu.memory_space<vmem>>, vector<128x24xf32>
    tpu.vector_store %arg10[%c0_114, %c144_115], %82 {strides = array<i32>} : memref<128x168xf32, #tpu.memory_space<vmem>>, vector<128x24xf32>,
    %c0_116 = arith.constant 0 : index
    %c0_117 = arith.constant 0 : index
    %84 = vector.load %arg10[%c0_116, %c0_117] : memref<128x168xf32, #tpu.memory_space<vmem>>, vector<128x168xf32>
    %c2 = arith.constant 2 : index
    %c0_118 = arith.constant 0 : index
    %c0_119 = arith.constant 0 : index
    %85 = vector.load %arg1[%c2, %c0_118, %c0_119] : memref<3x168x72xf32, #tpu.memory_space<vmem>>, vector<1x168x72xf32>
    %86 = vector.shape_cast %85 : vector<1x168x72xf32> to vector<168x72xf32>
    %cst_120 = arith.constant dense<0.000000e+00> : vector<128x72xf32>
    %87 = tpu.matmul %84, %86, %cst_120 {dimension_numbers = #tpu.dot_dimension_numbers<[1], [0], [0], [1], [0, 0, 1, 1], [], []>} : vector<128x168xf32>, vector<168x72xf32>, vector<128x72xf32> -> vector<128x72xf32>
    %c2_121 = arith.constant 2 : index
    %c0_122 = arith.constant 0 : index
    %88 = vector.load %arg2[%c2_121, %c0_122] : memref<3x72xf32, #tpu.memory_space<vmem>>, vector<1x72xf32>
    %89 = vector.broadcast %88 : vector<1x72xf32> to vector<128x72xf32>
    %90 = arith.addf %87, %89 : vector<128x72xf32>
    %cst_123 = arith.constant 0.000000e+00 : f32
    %91 = vector.broadcast %cst_123 : f32 to vector<128x72xf32>
    %92 = arith.maximumf %90, %91 : vector<128x72xf32>
    %c2_124 = arith.constant 2 : index
    %c0_125 = arith.constant 0 : index
    %c0_126 = arith.constant 0 : index
    %93 = vector.load %arg3[%c2_124, %c0_125, %c0_126] : memref<3x72x24xf32, #tpu.memory_space<vmem>>, vector<1x72x24xf32>
    %94 = vector.shape_cast %93 : vector<1x72x24xf32> to vector<72x24xf32>
    %cst_127 = arith.constant dense<0.000000e+00> : vector<128x24xf32>
    %95 = tpu.matmul %92, %94, %cst_127 {dimension_numbers = #tpu.dot_dimension_numbers<[1], [0], [0], [1], [0, 0, 1, 1], [], []>} : vector<128x72xf32>, vector<72x24xf32>, vector<128x24xf32> -> vector<128x24xf32>
    %c2_128 = arith.constant 2 : index
    %c0_129 = arith.constant 0 : index
    %96 = vector.load %arg4[%c2_128, %c0_129] : memref<3x24xf32, #tpu.memory_space<vmem>>, vector<1x24xf32>
    %97 = vector.broadcast %96 : vector<1x24xf32> to vector<128x24xf32>
    %98 = arith.addf %95, %97 : vector<128x24xf32>
    %cst_130 = arith.constant 0.000000e+00 : f32
    %99 = vector.broadcast %cst_130 : f32 to vector<128x24xf32>
    %100 = arith.maximumf %98, %99 : vector<128x24xf32>
    %c48_131 = arith.constant 48 : index
    %c0_132 = arith.constant 0 : index
    %101 = vector.load %arg9[%c48_131, %c0_132] : memref<176x24xf32, #tpu.memory_space<vmem>>, vector<128x24xf32>
    tpu.vector_store %arg9[%c48_131, %c0_132], %100 {strides = array<i32>} : memref<176x24xf32, #tpu.memory_space<vmem>>, vector<128x24xf32>,
    %c0_133 = arith.constant 0 : index
    %c0_134 = arith.constant 0 : index
    %102 = vector.load %arg5[%c0_133, %c0_134] : memref<24x512xf32, #tpu.memory_space<vmem>>, vector<24x512xf32>
    %cst_135 = arith.constant dense<0.000000e+00> : vector<128x512xf32>
    %103 = tpu.matmul %100, %102, %cst_135 {dimension_numbers = #tpu.dot_dimension_numbers<[1], [0], [0], [1], [0, 0, 1, 1], [], []>} : vector<128x24xf32>, vector<24x512xf32>, vector<128x512xf32> -> vector<128x512xf32>
    %c0_136 = arith.constant 0 : index
    %c0_137 = arith.constant 0 : index
    %104 = vector.load %arg7[%c0_136, %c0_137] : memref<1x512xf32, #tpu.memory_space<vmem>>, vector<1x512xf32>
    %105 = vector.broadcast %104 : vector<1x512xf32> to vector<128x512xf32>
    %106 = arith.addf %103, %105 : vector<128x512xf32>
    %107 = vector.shape_cast %106 : vector<128x512xf32> to vector<16x8x512xf32>
    %c0_138 = arith.constant 0 : index
    %c0_139 = arith.constant 0 : index
    %c0_140 = arith.constant 0 : index
    %108 = vector.load %arg11[%c0_138, %c0_139, %c0_140] : memref<16x8x512xf32, #tpu.memory_space<vmem>>, vector<16x8x512xf32>
    tpu.vector_store %arg11[%c0_138, %c0_139, %c0_140], %107 {strides = array<i32>} : memref<16x8x512xf32, #tpu.memory_space<vmem>>, vector<16x8x512xf32>,
    %c0_141 = arith.constant 0 : index
    %c0_142 = arith.constant 0 : index
    %109 = vector.load %arg6[%c0_141, %c0_142] : memref<24x512xf32, #tpu.memory_space<vmem>>, vector<24x512xf32>
    %cst_143 = arith.constant 0.000000e+00 : f32
    %110 = vector.broadcast %cst_143 : f32 to vector<8x24xf32>
    %cst_144 = arith.constant 0.000000e+00 : f32
    %111 = vector.broadcast %cst_144 : f32 to vector<8x24xf32>
    %c0_i32 = arith.constant 0 : i32
    %112 = arith.index_cast %c0_i32 : i32 to index
    %c0_145 = arith.constant 0 : index
    %c0_146 = arith.constant 0 : index
    %113 = vector.load %arg11[%112, %c0_145, %c0_146] : memref<16x8x512xf32, #tpu.memory_space<vmem>>, vector<1x8x512xf32>
    %114 = vector.shape_cast %113 : vector<1x8x512xf32> to vector<8x512xf32>
    %cst_147 = arith.constant dense<0.000000e+00> : vector<8x512xf32>
    %115 = tpu.matmul %110, %109, %cst_147 {dimension_numbers = #tpu.dot_dimension_numbers<[1], [0], [0], [1], [0, 0, 1, 1], [], []>} : vector<8x24xf32>, vector<24x512xf32>, vector<8x512xf32> -> vector<8x512xf32>
    %116 = arith.addf %114, %115 : vector<8x512xf32>
    %117 = vector.extract_strided_slice %116 {offsets = [0, 0], sizes = [8, 24], strides = [1, 1]} : vector<8x512xf32> to vector<8x24xf32>
    %118 = arith.negf %117 : vector<8x24xf32>
    %119 = math.exp %118 : vector<8x24xf32>
    %cst_148 = arith.constant 1.000000e+00 : f32
    %120 = vector.broadcast %cst_148 : f32 to vector<8x24xf32>
    %121 = arith.addf %120, %119 : vector<8x24xf32>
    %122 = arith.divf %120, %121 : vector<8x24xf32>
    %123 = vector.extract_strided_slice %116 {offsets = [0, 128], sizes = [8, 24], strides = [1, 1]} : vector<8x512xf32> to vector<8x24xf32>
    %124 = arith.negf %123 : vector<8x24xf32>
    %125 = math.exp %124 : vector<8x24xf32>
    %cst_149 = arith.constant 1.000000e+00 : f32
    %126 = vector.broadcast %cst_149 : f32 to vector<8x24xf32>
    %127 = arith.addf %126, %125 : vector<8x24xf32>
    %128 = arith.divf %126, %127 : vector<8x24xf32>
    %129 = vector.extract_strided_slice %116 {offsets = [0, 256], sizes = [8, 24], strides = [1, 1]} : vector<8x512xf32> to vector<8x24xf32>
    %130 = math.tanh %129 : vector<8x24xf32>
    %131 = vector.extract_strided_slice %116 {offsets = [0, 384], sizes = [8, 24], strides = [1, 1]} : vector<8x512xf32> to vector<8x24xf32>
    %132 = arith.negf %131 : vector<8x24xf32>
    %133 = math.exp %132 : vector<8x24xf32>
    %cst_150 = arith.constant 1.000000e+00 : f32
    %134 = vector.broadcast %cst_150 : f32 to vector<8x24xf32>
    %135 = arith.addf %134, %133 : vector<8x24xf32>
    %136 = arith.divf %134, %135 : vector<8x24xf32>
    %137 = arith.mulf %128, %111 : vector<8x24xf32>
    %138 = arith.mulf %122, %130 : vector<8x24xf32>
    %139 = arith.addf %137, %138 : vector<8x24xf32>
    %140 = math.tanh %139 : vector<8x24xf32>
    %141 = arith.mulf %136, %140 : vector<8x24xf32>
    %c1_i32 = arith.constant 1 : i32
    %142 = arith.index_cast %c1_i32 : i32 to index
    %c0_151 = arith.constant 0 : index
    %c0_152 = arith.constant 0 : index
    %143 = vector.load %arg11[%142, %c0_151, %c0_152] : memref<16x8x512xf32, #tpu.memory_space<vmem>>, vector<1x8x512xf32>
    %144 = vector.shape_cast %143 : vector<1x8x512xf32> to vector<8x512xf32>
    %cst_153 = arith.constant dense<0.000000e+00> : vector<8x512xf32>
    %145 = tpu.matmul %141, %109, %cst_153 {dimension_numbers = #tpu.dot_dimension_numbers<[1], [0], [0], [1], [0, 0, 1, 1], [], []>} : vector<8x24xf32>, vector<24x512xf32>, vector<8x512xf32> -> vector<8x512xf32>
    %146 = arith.addf %144, %145 : vector<8x512xf32>
    %147 = vector.extract_strided_slice %146 {offsets = [0, 0], sizes = [8, 24], strides = [1, 1]} : vector<8x512xf32> to vector<8x24xf32>
    %148 = arith.negf %147 : vector<8x24xf32>
    %149 = math.exp %148 : vector<8x24xf32>
    %cst_154 = arith.constant 1.000000e+00 : f32
    %150 = vector.broadcast %cst_154 : f32 to vector<8x24xf32>
    %151 = arith.addf %150, %149 : vector<8x24xf32>
    %152 = arith.divf %150, %151 : vector<8x24xf32>
    %153 = vector.extract_strided_slice %146 {offsets = [0, 128], sizes = [8, 24], strides = [1, 1]} : vector<8x512xf32> to vector<8x24xf32>
    %154 = arith.negf %153 : vector<8x24xf32>
    %155 = math.exp %154 : vector<8x24xf32>
    %cst_155 = arith.constant 1.000000e+00 : f32
    %156 = vector.broadcast %cst_155 : f32 to vector<8x24xf32>
    %157 = arith.addf %156, %155 : vector<8x24xf32>
    %158 = arith.divf %156, %157 : vector<8x24xf32>
    %159 = vector.extract_strided_slice %146 {offsets = [0, 256], sizes = [8, 24], strides = [1, 1]} : vector<8x512xf32> to vector<8x24xf32>
    %160 = math.tanh %159 : vector<8x24xf32>
    %161 = vector.extract_strided_slice %146 {offsets = [0, 384], sizes = [8, 24], strides = [1, 1]} : vector<8x512xf32> to vector<8x24xf32>
    %162 = arith.negf %161 : vector<8x24xf32>
    %163 = math.exp %162 : vector<8x24xf32>
    %cst_156 = arith.constant 1.000000e+00 : f32
    %164 = vector.broadcast %cst_156 : f32 to vector<8x24xf32>
    %165 = arith.addf %164, %163 : vector<8x24xf32>
    %166 = arith.divf %164, %165 : vector<8x24xf32>
    %167 = arith.mulf %158, %139 : vector<8x24xf32>
    %168 = arith.mulf %152, %160 : vector<8x24xf32>
    %169 = arith.addf %167, %168 : vector<8x24xf32>
    %170 = math.tanh %169 : vector<8x24xf32>
    %171 = arith.mulf %166, %170 : vector<8x24xf32>
    %c2_i32 = arith.constant 2 : i32
    %172 = arith.index_cast %c2_i32 : i32 to index
    %c0_157 = arith.constant 0 : index
    %c0_158 = arith.constant 0 : index
    %173 = vector.load %arg11[%172, %c0_157, %c0_158] : memref<16x8x512xf32, #tpu.memory_space<vmem>>, vector<1x8x512xf32>
    %174 = vector.shape_cast %173 : vector<1x8x512xf32> to vector<8x512xf32>
    %cst_159 = arith.constant dense<0.000000e+00> : vector<8x512xf32>
    %175 = tpu.matmul %171, %109, %cst_159 {dimension_numbers = #tpu.dot_dimension_numbers<[1], [0], [0], [1], [0, 0, 1, 1], [], []>} : vector<8x24xf32>, vector<24x512xf32>, vector<8x512xf32> -> vector<8x512xf32>
    %176 = arith.addf %174, %175 : vector<8x512xf32>
    %177 = vector.extract_strided_slice %176 {offsets = [0, 0], sizes = [8, 24], strides = [1, 1]} : vector<8x512xf32> to vector<8x24xf32>
    %178 = arith.negf %177 : vector<8x24xf32>
    %179 = math.exp %178 : vector<8x24xf32>
    %cst_160 = arith.constant 1.000000e+00 : f32
    %180 = vector.broadcast %cst_160 : f32 to vector<8x24xf32>
    %181 = arith.addf %180, %179 : vector<8x24xf32>
    %182 = arith.divf %180, %181 : vector<8x24xf32>
    %183 = vector.extract_strided_slice %176 {offsets = [0, 128], sizes = [8, 24], strides = [1, 1]} : vector<8x512xf32> to vector<8x24xf32>
    %184 = arith.negf %183 : vector<8x24xf32>
    %185 = math.exp %184 : vector<8x24xf32>
    %cst_161 = arith.constant 1.000000e+00 : f32
    %186 = vector.broadcast %cst_161 : f32 to vector<8x24xf32>
    %187 = arith.addf %186, %185 : vector<8x24xf32>
    %188 = arith.divf %186, %187 : vector<8x24xf32>
    %189 = vector.extract_strided_slice %176 {offsets = [0, 256], sizes = [8, 24], strides = [1, 1]} : vector<8x512xf32> to vector<8x24xf32>
    %190 = math.tanh %189 : vector<8x24xf32>
    %191 = vector.extract_strided_slice %176 {offsets = [0, 384], sizes = [8, 24], strides = [1, 1]} : vector<8x512xf32> to vector<8x24xf32>
    %192 = arith.negf %191 : vector<8x24xf32>
    %193 = math.exp %192 : vector<8x24xf32>
    %cst_162 = arith.constant 1.000000e+00 : f32
    %194 = vector.broadcast %cst_162 : f32 to vector<8x24xf32>
    %195 = arith.addf %194, %193 : vector<8x24xf32>
    %196 = arith.divf %194, %195 : vector<8x24xf32>
    %197 = arith.mulf %188, %169 : vector<8x24xf32>
    %198 = arith.mulf %182, %190 : vector<8x24xf32>
    %199 = arith.addf %197, %198 : vector<8x24xf32>
    %200 = math.tanh %199 : vector<8x24xf32>
    %201 = arith.mulf %196, %200 : vector<8x24xf32>
    %c3_i32 = arith.constant 3 : i32
    %202 = arith.index_cast %c3_i32 : i32 to index
    %c0_163 = arith.constant 0 : index
    %c0_164 = arith.constant 0 : index
    %203 = vector.load %arg11[%202, %c0_163, %c0_164] : memref<16x8x512xf32, #tpu.memory_space<vmem>>, vector<1x8x512xf32>
    %204 = vector.shape_cast %203 : vector<1x8x512xf32> to vector<8x512xf32>
    %cst_165 = arith.constant dense<0.000000e+00> : vector<8x512xf32>
    %205 = tpu.matmul %201, %109, %cst_165 {dimension_numbers = #tpu.dot_dimension_numbers<[1], [0], [0], [1], [0, 0, 1, 1], [], []>} : vector<8x24xf32>, vector<24x512xf32>, vector<8x512xf32> -> vector<8x512xf32>
    %206 = arith.addf %204, %205 : vector<8x512xf32>
    %207 = vector.extract_strided_slice %206 {offsets = [0, 0], sizes = [8, 24], strides = [1, 1]} : vector<8x512xf32> to vector<8x24xf32>
    %208 = arith.negf %207 : vector<8x24xf32>
    %209 = math.exp %208 : vector<8x24xf32>
    %cst_166 = arith.constant 1.000000e+00 : f32
    %210 = vector.broadcast %cst_166 : f32 to vector<8x24xf32>
    %211 = arith.addf %210, %209 : vector<8x24xf32>
    %212 = arith.divf %210, %211 : vector<8x24xf32>
    %213 = vector.extract_strided_slice %206 {offsets = [0, 128], sizes = [8, 24], strides = [1, 1]} : vector<8x512xf32> to vector<8x24xf32>
    %214 = arith.negf %213 : vector<8x24xf32>
    %215 = math.exp %214 : vector<8x24xf32>
    %cst_167 = arith.constant 1.000000e+00 : f32
    %216 = vector.broadcast %cst_167 : f32 to vector<8x24xf32>
    %217 = arith.addf %216, %215 : vector<8x24xf32>
    %218 = arith.divf %216, %217 : vector<8x24xf32>
    %219 = vector.extract_strided_slice %206 {offsets = [0, 256], sizes = [8, 24], strides = [1, 1]} : vector<8x512xf32> to vector<8x24xf32>
    %220 = math.tanh %219 : vector<8x24xf32>
    %221 = vector.extract_strided_slice %206 {offsets = [0, 384], sizes = [8, 24], strides = [1, 1]} : vector<8x512xf32> to vector<8x24xf32>
    %222 = arith.negf %221 : vector<8x24xf32>
    %223 = math.exp %222 : vector<8x24xf32>
    %cst_168 = arith.constant 1.000000e+00 : f32
    %224 = vector.broadcast %cst_168 : f32 to vector<8x24xf32>
    %225 = arith.addf %224, %223 : vector<8x24xf32>
    %226 = arith.divf %224, %225 : vector<8x24xf32>
    %227 = arith.mulf %218, %199 : vector<8x24xf32>
    %228 = arith.mulf %212, %220 : vector<8x24xf32>
    %229 = arith.addf %227, %228 : vector<8x24xf32>
    %230 = math.tanh %229 : vector<8x24xf32>
    %231 = arith.mulf %226, %230 : vector<8x24xf32>
    %c4_i32 = arith.constant 4 : i32
    %232 = arith.index_cast %c4_i32 : i32 to index
    %c0_169 = arith.constant 0 : index
    %c0_170 = arith.constant 0 : index
    %233 = vector.load %arg11[%232, %c0_169, %c0_170] : memref<16x8x512xf32, #tpu.memory_space<vmem>>, vector<1x8x512xf32>
    %234 = vector.shape_cast %233 : vector<1x8x512xf32> to vector<8x512xf32>
    %cst_171 = arith.constant dense<0.000000e+00> : vector<8x512xf32>
    %235 = tpu.matmul %231, %109, %cst_171 {dimension_numbers = #tpu.dot_dimension_numbers<[1], [0], [0], [1], [0, 0, 1, 1], [], []>} : vector<8x24xf32>, vector<24x512xf32>, vector<8x512xf32> -> vector<8x512xf32>
    %236 = arith.addf %234, %235 : vector<8x512xf32>
    %237 = vector.extract_strided_slice %236 {offsets = [0, 0], sizes = [8, 24], strides = [1, 1]} : vector<8x512xf32> to vector<8x24xf32>
    %238 = arith.negf %237 : vector<8x24xf32>
    %239 = math.exp %238 : vector<8x24xf32>
    %cst_172 = arith.constant 1.000000e+00 : f32
    %240 = vector.broadcast %cst_172 : f32 to vector<8x24xf32>
    %241 = arith.addf %240, %239 : vector<8x24xf32>
    %242 = arith.divf %240, %241 : vector<8x24xf32>
    %243 = vector.extract_strided_slice %236 {offsets = [0, 128], sizes = [8, 24], strides = [1, 1]} : vector<8x512xf32> to vector<8x24xf32>
    %244 = arith.negf %243 : vector<8x24xf32>
    %245 = math.exp %244 : vector<8x24xf32>
    %cst_173 = arith.constant 1.000000e+00 : f32
    %246 = vector.broadcast %cst_173 : f32 to vector<8x24xf32>
    %247 = arith.addf %246, %245 : vector<8x24xf32>
    %248 = arith.divf %246, %247 : vector<8x24xf32>
    %249 = vector.extract_strided_slice %236 {offsets = [0, 256], sizes = [8, 24], strides = [1, 1]} : vector<8x512xf32> to vector<8x24xf32>
    %250 = math.tanh %249 : vector<8x24xf32>
    %251 = vector.extract_strided_slice %236 {offsets = [0, 384], sizes = [8, 24], strides = [1, 1]} : vector<8x512xf32> to vector<8x24xf32>
    %252 = arith.negf %251 : vector<8x24xf32>
    %253 = math.exp %252 : vector<8x24xf32>
    %cst_174 = arith.constant 1.000000e+00 : f32
    %254 = vector.broadcast %cst_174 : f32 to vector<8x24xf32>
    %255 = arith.addf %254, %253 : vector<8x24xf32>
    %256 = arith.divf %254, %255 : vector<8x24xf32>
    %257 = arith.mulf %248, %229 : vector<8x24xf32>
    %258 = arith.mulf %242, %250 : vector<8x24xf32>
    %259 = arith.addf %257, %258 : vector<8x24xf32>
    %260 = math.tanh %259 : vector<8x24xf32>
    %261 = arith.mulf %256, %260 : vector<8x24xf32>
    %c5_i32 = arith.constant 5 : i32
    %262 = arith.index_cast %c5_i32 : i32 to index
    %c0_175 = arith.constant 0 : index
    %c0_176 = arith.constant 0 : index
    %263 = vector.load %arg11[%262, %c0_175, %c0_176] : memref<16x8x512xf32, #tpu.memory_space<vmem>>, vector<1x8x512xf32>
    %264 = vector.shape_cast %263 : vector<1x8x512xf32> to vector<8x512xf32>
    %cst_177 = arith.constant dense<0.000000e+00> : vector<8x512xf32>
    %265 = tpu.matmul %261, %109, %cst_177 {dimension_numbers = #tpu.dot_dimension_numbers<[1], [0], [0], [1], [0, 0, 1, 1], [], []>} : vector<8x24xf32>, vector<24x512xf32>, vector<8x512xf32> -> vector<8x512xf32>
    %266 = arith.addf %264, %265 : vector<8x512xf32>
    %267 = vector.extract_strided_slice %266 {offsets = [0, 0], sizes = [8, 24], strides = [1, 1]} : vector<8x512xf32> to vector<8x24xf32>
    %268 = arith.negf %267 : vector<8x24xf32>
    %269 = math.exp %268 : vector<8x24xf32>
    %cst_178 = arith.constant 1.000000e+00 : f32
    %270 = vector.broadcast %cst_178 : f32 to vector<8x24xf32>
    %271 = arith.addf %270, %269 : vector<8x24xf32>
    %272 = arith.divf %270, %271 : vector<8x24xf32>
    %273 = vector.extract_strided_slice %266 {offsets = [0, 128], sizes = [8, 24], strides = [1, 1]} : vector<8x512xf32> to vector<8x24xf32>
    %274 = arith.negf %273 : vector<8x24xf32>
    %275 = math.exp %274 : vector<8x24xf32>
    %cst_179 = arith.constant 1.000000e+00 : f32
    %276 = vector.broadcast %cst_179 : f32 to vector<8x24xf32>
    %277 = arith.addf %276, %275 : vector<8x24xf32>
    %278 = arith.divf %276, %277 : vector<8x24xf32>
    %279 = vector.extract_strided_slice %266 {offsets = [0, 256], sizes = [8, 24], strides = [1, 1]} : vector<8x512xf32> to vector<8x24xf32>
    %280 = math.tanh %279 : vector<8x24xf32>
    %281 = vector.extract_strided_slice %266 {offsets = [0, 384], sizes = [8, 24], strides = [1, 1]} : vector<8x512xf32> to vector<8x24xf32>
    %282 = arith.negf %281 : vector<8x24xf32>
    %283 = math.exp %282 : vector<8x24xf32>
    %cst_180 = arith.constant 1.000000e+00 : f32
    %284 = vector.broadcast %cst_180 : f32 to vector<8x24xf32>
    %285 = arith.addf %284, %283 : vector<8x24xf32>
    %286 = arith.divf %284, %285 : vector<8x24xf32>
    %287 = arith.mulf %278, %259 : vector<8x24xf32>
    %288 = arith.mulf %272, %280 : vector<8x24xf32>
    %289 = arith.addf %287, %288 : vector<8x24xf32>
    %290 = math.tanh %289 : vector<8x24xf32>
    %291 = arith.mulf %286, %290 : vector<8x24xf32>
    %c6_i32 = arith.constant 6 : i32
    %292 = arith.index_cast %c6_i32 : i32 to index
    %c0_181 = arith.constant 0 : index
    %c0_182 = arith.constant 0 : index
    %293 = vector.load %arg11[%292, %c0_181, %c0_182] : memref<16x8x512xf32, #tpu.memory_space<vmem>>, vector<1x8x512xf32>
    %294 = vector.shape_cast %293 : vector<1x8x512xf32> to vector<8x512xf32>
    %cst_183 = arith.constant dense<0.000000e+00> : vector<8x512xf32>
    %295 = tpu.matmul %291, %109, %cst_183 {dimension_numbers = #tpu.dot_dimension_numbers<[1], [0], [0], [1], [0, 0, 1, 1], [], []>} : vector<8x24xf32>, vector<24x512xf32>, vector<8x512xf32> -> vector<8x512xf32>
    %296 = arith.addf %294, %295 : vector<8x512xf32>
    %297 = vector.extract_strided_slice %296 {offsets = [0, 0], sizes = [8, 24], strides = [1, 1]} : vector<8x512xf32> to vector<8x24xf32>
    %298 = arith.negf %297 : vector<8x24xf32>
    %299 = math.exp %298 : vector<8x24xf32>
    %cst_184 = arith.constant 1.000000e+00 : f32
    %300 = vector.broadcast %cst_184 : f32 to vector<8x24xf32>
    %301 = arith.addf %300, %299 : vector<8x24xf32>
    %302 = arith.divf %300, %301 : vector<8x24xf32>
    %303 = vector.extract_strided_slice %296 {offsets = [0, 128], sizes = [8, 24], strides = [1, 1]} : vector<8x512xf32> to vector<8x24xf32>
    %304 = arith.negf %303 : vector<8x24xf32>
    %305 = math.exp %304 : vector<8x24xf32>
    %cst_185 = arith.constant 1.000000e+00 : f32
    %306 = vector.broadcast %cst_185 : f32 to vector<8x24xf32>
    %307 = arith.addf %306, %305 : vector<8x24xf32>
    %308 = arith.divf %306, %307 : vector<8x24xf32>
    %309 = vector.extract_strided_slice %296 {offsets = [0, 256], sizes = [8, 24], strides = [1, 1]} : vector<8x512xf32> to vector<8x24xf32>
    %310 = math.tanh %309 : vector<8x24xf32>
    %311 = vector.extract_strided_slice %296 {offsets = [0, 384], sizes = [8, 24], strides = [1, 1]} : vector<8x512xf32> to vector<8x24xf32>
    %312 = arith.negf %311 : vector<8x24xf32>
    %313 = math.exp %312 : vector<8x24xf32>
    %cst_186 = arith.constant 1.000000e+00 : f32
    %314 = vector.broadcast %cst_186 : f32 to vector<8x24xf32>
    %315 = arith.addf %314, %313 : vector<8x24xf32>
    %316 = arith.divf %314, %315 : vector<8x24xf32>
    %317 = arith.mulf %308, %289 : vector<8x24xf32>
    %318 = arith.mulf %302, %310 : vector<8x24xf32>
    %319 = arith.addf %317, %318 : vector<8x24xf32>
    %320 = math.tanh %319 : vector<8x24xf32>
    %321 = arith.mulf %316, %320 : vector<8x24xf32>
    %c7_i32 = arith.constant 7 : i32
    %322 = arith.index_cast %c7_i32 : i32 to index
    %c0_187 = arith.constant 0 : index
    %c0_188 = arith.constant 0 : index
    %323 = vector.load %arg11[%322, %c0_187, %c0_188] : memref<16x8x512xf32, #tpu.memory_space<vmem>>, vector<1x8x512xf32>
    %324 = vector.shape_cast %323 : vector<1x8x512xf32> to vector<8x512xf32>
    %cst_189 = arith.constant dense<0.000000e+00> : vector<8x512xf32>
    %325 = tpu.matmul %321, %109, %cst_189 {dimension_numbers = #tpu.dot_dimension_numbers<[1], [0], [0], [1], [0, 0, 1, 1], [], []>} : vector<8x24xf32>, vector<24x512xf32>, vector<8x512xf32> -> vector<8x512xf32>
    %326 = arith.addf %324, %325 : vector<8x512xf32>
    %327 = vector.extract_strided_slice %326 {offsets = [0, 0], sizes = [8, 24], strides = [1, 1]} : vector<8x512xf32> to vector<8x24xf32>
    %328 = arith.negf %327 : vector<8x24xf32>
    %329 = math.exp %328 : vector<8x24xf32>
    %cst_190 = arith.constant 1.000000e+00 : f32
    %330 = vector.broadcast %cst_190 : f32 to vector<8x24xf32>
    %331 = arith.addf %330, %329 : vector<8x24xf32>
    %332 = arith.divf %330, %331 : vector<8x24xf32>
    %333 = vector.extract_strided_slice %326 {offsets = [0, 128], sizes = [8, 24], strides = [1, 1]} : vector<8x512xf32> to vector<8x24xf32>
    %334 = arith.negf %333 : vector<8x24xf32>
    %335 = math.exp %334 : vector<8x24xf32>
    %cst_191 = arith.constant 1.000000e+00 : f32
    %336 = vector.broadcast %cst_191 : f32 to vector<8x24xf32>
    %337 = arith.addf %336, %335 : vector<8x24xf32>
    %338 = arith.divf %336, %337 : vector<8x24xf32>
    %339 = vector.extract_strided_slice %326 {offsets = [0, 256], sizes = [8, 24], strides = [1, 1]} : vector<8x512xf32> to vector<8x24xf32>
    %340 = math.tanh %339 : vector<8x24xf32>
    %341 = vector.extract_strided_slice %326 {offsets = [0, 384], sizes = [8, 24], strides = [1, 1]} : vector<8x512xf32> to vector<8x24xf32>
    %342 = arith.negf %341 : vector<8x24xf32>
    %343 = math.exp %342 : vector<8x24xf32>
    %cst_192 = arith.constant 1.000000e+00 : f32
    %344 = vector.broadcast %cst_192 : f32 to vector<8x24xf32>
    %345 = arith.addf %344, %343 : vector<8x24xf32>
    %346 = arith.divf %344, %345 : vector<8x24xf32>
    %347 = arith.mulf %338, %319 : vector<8x24xf32>
    %348 = arith.mulf %332, %340 : vector<8x24xf32>
    %349 = arith.addf %347, %348 : vector<8x24xf32>
    %350 = math.tanh %349 : vector<8x24xf32>
    %351 = arith.mulf %346, %350 : vector<8x24xf32>
    %c8_i32 = arith.constant 8 : i32
    %352 = arith.index_cast %c8_i32 : i32 to index
    %c0_193 = arith.constant 0 : index
    %c0_194 = arith.constant 0 : index
    %353 = vector.load %arg11[%352, %c0_193, %c0_194] : memref<16x8x512xf32, #tpu.memory_space<vmem>>, vector<1x8x512xf32>
    %354 = vector.shape_cast %353 : vector<1x8x512xf32> to vector<8x512xf32>
    %cst_195 = arith.constant dense<0.000000e+00> : vector<8x512xf32>
    %355 = tpu.matmul %351, %109, %cst_195 {dimension_numbers = #tpu.dot_dimension_numbers<[1], [0], [0], [1], [0, 0, 1, 1], [], []>} : vector<8x24xf32>, vector<24x512xf32>, vector<8x512xf32> -> vector<8x512xf32>
    %356 = arith.addf %354, %355 : vector<8x512xf32>
    %357 = vector.extract_strided_slice %356 {offsets = [0, 0], sizes = [8, 24], strides = [1, 1]} : vector<8x512xf32> to vector<8x24xf32>
    %358 = arith.negf %357 : vector<8x24xf32>
    %359 = math.exp %358 : vector<8x24xf32>
    %cst_196 = arith.constant 1.000000e+00 : f32
    %360 = vector.broadcast %cst_196 : f32 to vector<8x24xf32>
    %361 = arith.addf %360, %359 : vector<8x24xf32>
    %362 = arith.divf %360, %361 : vector<8x24xf32>
    %363 = vector.extract_strided_slice %356 {offsets = [0, 128], sizes = [8, 24], strides = [1, 1]} : vector<8x512xf32> to vector<8x24xf32>
    %364 = arith.negf %363 : vector<8x24xf32>
    %365 = math.exp %364 : vector<8x24xf32>
    %cst_197 = arith.constant 1.000000e+00 : f32
    %366 = vector.broadcast %cst_197 : f32 to vector<8x24xf32>
    %367 = arith.addf %366, %365 : vector<8x24xf32>
    %368 = arith.divf %366, %367 : vector<8x24xf32>
    %369 = vector.extract_strided_slice %356 {offsets = [0, 256], sizes = [8, 24], strides = [1, 1]} : vector<8x512xf32> to vector<8x24xf32>
    %370 = math.tanh %369 : vector<8x24xf32>
    %371 = vector.extract_strided_slice %356 {offsets = [0, 384], sizes = [8, 24], strides = [1, 1]} : vector<8x512xf32> to vector<8x24xf32>
    %372 = arith.negf %371 : vector<8x24xf32>
    %373 = math.exp %372 : vector<8x24xf32>
    %cst_198 = arith.constant 1.000000e+00 : f32
    %374 = vector.broadcast %cst_198 : f32 to vector<8x24xf32>
    %375 = arith.addf %374, %373 : vector<8x24xf32>
    %376 = arith.divf %374, %375 : vector<8x24xf32>
    %377 = arith.mulf %368, %349 : vector<8x24xf32>
    %378 = arith.mulf %362, %370 : vector<8x24xf32>
    %379 = arith.addf %377, %378 : vector<8x24xf32>
    %380 = math.tanh %379 : vector<8x24xf32>
    %381 = arith.mulf %376, %380 : vector<8x24xf32>
    %c9_i32 = arith.constant 9 : i32
    %382 = arith.index_cast %c9_i32 : i32 to index
    %c0_199 = arith.constant 0 : index
    %c0_200 = arith.constant 0 : index
    %383 = vector.load %arg11[%382, %c0_199, %c0_200] : memref<16x8x512xf32, #tpu.memory_space<vmem>>, vector<1x8x512xf32>
    %384 = vector.shape_cast %383 : vector<1x8x512xf32> to vector<8x512xf32>
    %cst_201 = arith.constant dense<0.000000e+00> : vector<8x512xf32>
    %385 = tpu.matmul %381, %109, %cst_201 {dimension_numbers = #tpu.dot_dimension_numbers<[1], [0], [0], [1], [0, 0, 1, 1], [], []>} : vector<8x24xf32>, vector<24x512xf32>, vector<8x512xf32> -> vector<8x512xf32>
    %386 = arith.addf %384, %385 : vector<8x512xf32>
    %387 = vector.extract_strided_slice %386 {offsets = [0, 0], sizes = [8, 24], strides = [1, 1]} : vector<8x512xf32> to vector<8x24xf32>
    %388 = arith.negf %387 : vector<8x24xf32>
    %389 = math.exp %388 : vector<8x24xf32>
    %cst_202 = arith.constant 1.000000e+00 : f32
    %390 = vector.broadcast %cst_202 : f32 to vector<8x24xf32>
    %391 = arith.addf %390, %389 : vector<8x24xf32>
    %392 = arith.divf %390, %391 : vector<8x24xf32>
    %393 = vector.extract_strided_slice %386 {offsets = [0, 128], sizes = [8, 24], strides = [1, 1]} : vector<8x512xf32> to vector<8x24xf32>
    %394 = arith.negf %393 : vector<8x24xf32>
    %395 = math.exp %394 : vector<8x24xf32>
    %cst_203 = arith.constant 1.000000e+00 : f32
    %396 = vector.broadcast %cst_203 : f32 to vector<8x24xf32>
    %397 = arith.addf %396, %395 : vector<8x24xf32>
    %398 = arith.divf %396, %397 : vector<8x24xf32>
    %399 = vector.extract_strided_slice %386 {offsets = [0, 256], sizes = [8, 24], strides = [1, 1]} : vector<8x512xf32> to vector<8x24xf32>
    %400 = math.tanh %399 : vector<8x24xf32>
    %401 = vector.extract_strided_slice %386 {offsets = [0, 384], sizes = [8, 24], strides = [1, 1]} : vector<8x512xf32> to vector<8x24xf32>
    %402 = arith.negf %401 : vector<8x24xf32>
    %403 = math.exp %402 : vector<8x24xf32>
    %cst_204 = arith.constant 1.000000e+00 : f32
    %404 = vector.broadcast %cst_204 : f32 to vector<8x24xf32>
    %405 = arith.addf %404, %403 : vector<8x24xf32>
    %406 = arith.divf %404, %405 : vector<8x24xf32>
    %407 = arith.mulf %398, %379 : vector<8x24xf32>
    %408 = arith.mulf %392, %400 : vector<8x24xf32>
    %409 = arith.addf %407, %408 : vector<8x24xf32>
    %410 = math.tanh %409 : vector<8x24xf32>
    %411 = arith.mulf %406, %410 : vector<8x24xf32>
    %c10_i32 = arith.constant 10 : i32
    %412 = arith.index_cast %c10_i32 : i32 to index
    %c0_205 = arith.constant 0 : index
    %c0_206 = arith.constant 0 : index
    %413 = vector.load %arg11[%412, %c0_205, %c0_206] : memref<16x8x512xf32, #tpu.memory_space<vmem>>, vector<1x8x512xf32>
    %414 = vector.shape_cast %413 : vector<1x8x512xf32> to vector<8x512xf32>
    %cst_207 = arith.constant dense<0.000000e+00> : vector<8x512xf32>
    %415 = tpu.matmul %411, %109, %cst_207 {dimension_numbers = #tpu.dot_dimension_numbers<[1], [0], [0], [1], [0, 0, 1, 1], [], []>} : vector<8x24xf32>, vector<24x512xf32>, vector<8x512xf32> -> vector<8x512xf32>
    %416 = arith.addf %414, %415 : vector<8x512xf32>
    %417 = vector.extract_strided_slice %416 {offsets = [0, 0], sizes = [8, 24], strides = [1, 1]} : vector<8x512xf32> to vector<8x24xf32>
    %418 = arith.negf %417 : vector<8x24xf32>
    %419 = math.exp %418 : vector<8x24xf32>
    %cst_208 = arith.constant 1.000000e+00 : f32
    %420 = vector.broadcast %cst_208 : f32 to vector<8x24xf32>
    %421 = arith.addf %420, %419 : vector<8x24xf32>
    %422 = arith.divf %420, %421 : vector<8x24xf32>
    %423 = vector.extract_strided_slice %416 {offsets = [0, 128], sizes = [8, 24], strides = [1, 1]} : vector<8x512xf32> to vector<8x24xf32>
    %424 = arith.negf %423 : vector<8x24xf32>
    %425 = math.exp %424 : vector<8x24xf32>
    %cst_209 = arith.constant 1.000000e+00 : f32
    %426 = vector.broadcast %cst_209 : f32 to vector<8x24xf32>
    %427 = arith.addf %426, %425 : vector<8x24xf32>
    %428 = arith.divf %426, %427 : vector<8x24xf32>
    %429 = vector.extract_strided_slice %416 {offsets = [0, 256], sizes = [8, 24], strides = [1, 1]} : vector<8x512xf32> to vector<8x24xf32>
    %430 = math.tanh %429 : vector<8x24xf32>
    %431 = vector.extract_strided_slice %416 {offsets = [0, 384], sizes = [8, 24], strides = [1, 1]} : vector<8x512xf32> to vector<8x24xf32>
    %432 = arith.negf %431 : vector<8x24xf32>
    %433 = math.exp %432 : vector<8x24xf32>
    %cst_210 = arith.constant 1.000000e+00 : f32
    %434 = vector.broadcast %cst_210 : f32 to vector<8x24xf32>
    %435 = arith.addf %434, %433 : vector<8x24xf32>
    %436 = arith.divf %434, %435 : vector<8x24xf32>
    %437 = arith.mulf %428, %409 : vector<8x24xf32>
    %438 = arith.mulf %422, %430 : vector<8x24xf32>
    %439 = arith.addf %437, %438 : vector<8x24xf32>
    %440 = math.tanh %439 : vector<8x24xf32>
    %441 = arith.mulf %436, %440 : vector<8x24xf32>
    %c11_i32 = arith.constant 11 : i32
    %442 = arith.index_cast %c11_i32 : i32 to index
    %c0_211 = arith.constant 0 : index
    %c0_212 = arith.constant 0 : index
    %443 = vector.load %arg11[%442, %c0_211, %c0_212] : memref<16x8x512xf32, #tpu.memory_space<vmem>>, vector<1x8x512xf32>
    %444 = vector.shape_cast %443 : vector<1x8x512xf32> to vector<8x512xf32>
    %cst_213 = arith.constant dense<0.000000e+00> : vector<8x512xf32>
    %445 = tpu.matmul %441, %109, %cst_213 {dimension_numbers = #tpu.dot_dimension_numbers<[1], [0], [0], [1], [0, 0, 1, 1], [], []>} : vector<8x24xf32>, vector<24x512xf32>, vector<8x512xf32> -> vector<8x512xf32>
    %446 = arith.addf %444, %445 : vector<8x512xf32>
    %447 = vector.extract_strided_slice %446 {offsets = [0, 0], sizes = [8, 24], strides = [1, 1]} : vector<8x512xf32> to vector<8x24xf32>
    %448 = arith.negf %447 : vector<8x24xf32>
    %449 = math.exp %448 : vector<8x24xf32>
    %cst_214 = arith.constant 1.000000e+00 : f32
    %450 = vector.broadcast %cst_214 : f32 to vector<8x24xf32>
    %451 = arith.addf %450, %449 : vector<8x24xf32>
    %452 = arith.divf %450, %451 : vector<8x24xf32>
    %453 = vector.extract_strided_slice %446 {offsets = [0, 128], sizes = [8, 24], strides = [1, 1]} : vector<8x512xf32> to vector<8x24xf32>
    %454 = arith.negf %453 : vector<8x24xf32>
    %455 = math.exp %454 : vector<8x24xf32>
    %cst_215 = arith.constant 1.000000e+00 : f32
    %456 = vector.broadcast %cst_215 : f32 to vector<8x24xf32>
    %457 = arith.addf %456, %455 : vector<8x24xf32>
    %458 = arith.divf %456, %457 : vector<8x24xf32>
    %459 = vector.extract_strided_slice %446 {offsets = [0, 256], sizes = [8, 24], strides = [1, 1]} : vector<8x512xf32> to vector<8x24xf32>
    %460 = math.tanh %459 : vector<8x24xf32>
    %461 = vector.extract_strided_slice %446 {offsets = [0, 384], sizes = [8, 24], strides = [1, 1]} : vector<8x512xf32> to vector<8x24xf32>
    %462 = arith.negf %461 : vector<8x24xf32>
    %463 = math.exp %462 : vector<8x24xf32>
    %cst_216 = arith.constant 1.000000e+00 : f32
    %464 = vector.broadcast %cst_216 : f32 to vector<8x24xf32>
    %465 = arith.addf %464, %463 : vector<8x24xf32>
    %466 = arith.divf %464, %465 : vector<8x24xf32>
    %467 = arith.mulf %458, %439 : vector<8x24xf32>
    %468 = arith.mulf %452, %460 : vector<8x24xf32>
    %469 = arith.addf %467, %468 : vector<8x24xf32>
    %470 = math.tanh %469 : vector<8x24xf32>
    %471 = arith.mulf %466, %470 : vector<8x24xf32>
    %c12_i32 = arith.constant 12 : i32
    %472 = arith.index_cast %c12_i32 : i32 to index
    %c0_217 = arith.constant 0 : index
    %c0_218 = arith.constant 0 : index
    %473 = vector.load %arg11[%472, %c0_217, %c0_218] : memref<16x8x512xf32, #tpu.memory_space<vmem>>, vector<1x8x512xf32>
    %474 = vector.shape_cast %473 : vector<1x8x512xf32> to vector<8x512xf32>
    %cst_219 = arith.constant dense<0.000000e+00> : vector<8x512xf32>
    %475 = tpu.matmul %471, %109, %cst_219 {dimension_numbers = #tpu.dot_dimension_numbers<[1], [0], [0], [1], [0, 0, 1, 1], [], []>} : vector<8x24xf32>, vector<24x512xf32>, vector<8x512xf32> -> vector<8x512xf32>
    %476 = arith.addf %474, %475 : vector<8x512xf32>
    %477 = vector.extract_strided_slice %476 {offsets = [0, 0], sizes = [8, 24], strides = [1, 1]} : vector<8x512xf32> to vector<8x24xf32>
    %478 = arith.negf %477 : vector<8x24xf32>
    %479 = math.exp %478 : vector<8x24xf32>
    %cst_220 = arith.constant 1.000000e+00 : f32
    %480 = vector.broadcast %cst_220 : f32 to vector<8x24xf32>
    %481 = arith.addf %480, %479 : vector<8x24xf32>
    %482 = arith.divf %480, %481 : vector<8x24xf32>
    %483 = vector.extract_strided_slice %476 {offsets = [0, 128], sizes = [8, 24], strides = [1, 1]} : vector<8x512xf32> to vector<8x24xf32>
    %484 = arith.negf %483 : vector<8x24xf32>
    %485 = math.exp %484 : vector<8x24xf32>
    %cst_221 = arith.constant 1.000000e+00 : f32
    %486 = vector.broadcast %cst_221 : f32 to vector<8x24xf32>
    %487 = arith.addf %486, %485 : vector<8x24xf32>
    %488 = arith.divf %486, %487 : vector<8x24xf32>
    %489 = vector.extract_strided_slice %476 {offsets = [0, 256], sizes = [8, 24], strides = [1, 1]} : vector<8x512xf32> to vector<8x24xf32>
    %490 = math.tanh %489 : vector<8x24xf32>
    %491 = vector.extract_strided_slice %476 {offsets = [0, 384], sizes = [8, 24], strides = [1, 1]} : vector<8x512xf32> to vector<8x24xf32>
    %492 = arith.negf %491 : vector<8x24xf32>
    %493 = math.exp %492 : vector<8x24xf32>
    %cst_222 = arith.constant 1.000000e+00 : f32
    %494 = vector.broadcast %cst_222 : f32 to vector<8x24xf32>
    %495 = arith.addf %494, %493 : vector<8x24xf32>
    %496 = arith.divf %494, %495 : vector<8x24xf32>
    %497 = arith.mulf %488, %469 : vector<8x24xf32>
    %498 = arith.mulf %482, %490 : vector<8x24xf32>
    %499 = arith.addf %497, %498 : vector<8x24xf32>
    %500 = math.tanh %499 : vector<8x24xf32>
    %501 = arith.mulf %496, %500 : vector<8x24xf32>
    %c13_i32 = arith.constant 13 : i32
    %502 = arith.index_cast %c13_i32 : i32 to index
    %c0_223 = arith.constant 0 : index
    %c0_224 = arith.constant 0 : index
    %503 = vector.load %arg11[%502, %c0_223, %c0_224] : memref<16x8x512xf32, #tpu.memory_space<vmem>>, vector<1x8x512xf32>
    %504 = vector.shape_cast %503 : vector<1x8x512xf32> to vector<8x512xf32>
    %cst_225 = arith.constant dense<0.000000e+00> : vector<8x512xf32>
    %505 = tpu.matmul %501, %109, %cst_225 {dimension_numbers = #tpu.dot_dimension_numbers<[1], [0], [0], [1], [0, 0, 1, 1], [], []>} : vector<8x24xf32>, vector<24x512xf32>, vector<8x512xf32> -> vector<8x512xf32>
    %506 = arith.addf %504, %505 : vector<8x512xf32>
    %507 = vector.extract_strided_slice %506 {offsets = [0, 0], sizes = [8, 24], strides = [1, 1]} : vector<8x512xf32> to vector<8x24xf32>
    %508 = arith.negf %507 : vector<8x24xf32>
    %509 = math.exp %508 : vector<8x24xf32>
    %cst_226 = arith.constant 1.000000e+00 : f32
    %510 = vector.broadcast %cst_226 : f32 to vector<8x24xf32>
    %511 = arith.addf %510, %509 : vector<8x24xf32>
    %512 = arith.divf %510, %511 : vector<8x24xf32>
    %513 = vector.extract_strided_slice %506 {offsets = [0, 128], sizes = [8, 24], strides = [1, 1]} : vector<8x512xf32> to vector<8x24xf32>
    %514 = arith.negf %513 : vector<8x24xf32>
    %515 = math.exp %514 : vector<8x24xf32>
    %cst_227 = arith.constant 1.000000e+00 : f32
    %516 = vector.broadcast %cst_227 : f32 to vector<8x24xf32>
    %517 = arith.addf %516, %515 : vector<8x24xf32>
    %518 = arith.divf %516, %517 : vector<8x24xf32>
    %519 = vector.extract_strided_slice %506 {offsets = [0, 256], sizes = [8, 24], strides = [1, 1]} : vector<8x512xf32> to vector<8x24xf32>
    %520 = math.tanh %519 : vector<8x24xf32>
    %521 = vector.extract_strided_slice %506 {offsets = [0, 384], sizes = [8, 24], strides = [1, 1]} : vector<8x512xf32> to vector<8x24xf32>
    %522 = arith.negf %521 : vector<8x24xf32>
    %523 = math.exp %522 : vector<8x24xf32>
    %cst_228 = arith.constant 1.000000e+00 : f32
    %524 = vector.broadcast %cst_228 : f32 to vector<8x24xf32>
    %525 = arith.addf %524, %523 : vector<8x24xf32>
    %526 = arith.divf %524, %525 : vector<8x24xf32>
    %527 = arith.mulf %518, %499 : vector<8x24xf32>
    %528 = arith.mulf %512, %520 : vector<8x24xf32>
    %529 = arith.addf %527, %528 : vector<8x24xf32>
    %530 = math.tanh %529 : vector<8x24xf32>
    %531 = arith.mulf %526, %530 : vector<8x24xf32>
    %c14_i32 = arith.constant 14 : i32
    %532 = arith.index_cast %c14_i32 : i32 to index
    %c0_229 = arith.constant 0 : index
    %c0_230 = arith.constant 0 : index
    %533 = vector.load %arg11[%532, %c0_229, %c0_230] : memref<16x8x512xf32, #tpu.memory_space<vmem>>, vector<1x8x512xf32>
    %534 = vector.shape_cast %533 : vector<1x8x512xf32> to vector<8x512xf32>
    %cst_231 = arith.constant dense<0.000000e+00> : vector<8x512xf32>
    %535 = tpu.matmul %531, %109, %cst_231 {dimension_numbers = #tpu.dot_dimension_numbers<[1], [0], [0], [1], [0, 0, 1, 1], [], []>} : vector<8x24xf32>, vector<24x512xf32>, vector<8x512xf32> -> vector<8x512xf32>
    %536 = arith.addf %534, %535 : vector<8x512xf32>
    %537 = vector.extract_strided_slice %536 {offsets = [0, 0], sizes = [8, 24], strides = [1, 1]} : vector<8x512xf32> to vector<8x24xf32>
    %538 = arith.negf %537 : vector<8x24xf32>
    %539 = math.exp %538 : vector<8x24xf32>
    %cst_232 = arith.constant 1.000000e+00 : f32
    %540 = vector.broadcast %cst_232 : f32 to vector<8x24xf32>
    %541 = arith.addf %540, %539 : vector<8x24xf32>
    %542 = arith.divf %540, %541 : vector<8x24xf32>
    %543 = vector.extract_strided_slice %536 {offsets = [0, 128], sizes = [8, 24], strides = [1, 1]} : vector<8x512xf32> to vector<8x24xf32>
    %544 = arith.negf %543 : vector<8x24xf32>
    %545 = math.exp %544 : vector<8x24xf32>
    %cst_233 = arith.constant 1.000000e+00 : f32
    %546 = vector.broadcast %cst_233 : f32 to vector<8x24xf32>
    %547 = arith.addf %546, %545 : vector<8x24xf32>
    %548 = arith.divf %546, %547 : vector<8x24xf32>
    %549 = vector.extract_strided_slice %536 {offsets = [0, 256], sizes = [8, 24], strides = [1, 1]} : vector<8x512xf32> to vector<8x24xf32>
    %550 = math.tanh %549 : vector<8x24xf32>
    %551 = vector.extract_strided_slice %536 {offsets = [0, 384], sizes = [8, 24], strides = [1, 1]} : vector<8x512xf32> to vector<8x24xf32>
    %552 = arith.negf %551 : vector<8x24xf32>
    %553 = math.exp %552 : vector<8x24xf32>
    %cst_234 = arith.constant 1.000000e+00 : f32
    %554 = vector.broadcast %cst_234 : f32 to vector<8x24xf32>
    %555 = arith.addf %554, %553 : vector<8x24xf32>
    %556 = arith.divf %554, %555 : vector<8x24xf32>
    %557 = arith.mulf %548, %529 : vector<8x24xf32>
    %558 = arith.mulf %542, %550 : vector<8x24xf32>
    %559 = arith.addf %557, %558 : vector<8x24xf32>
    %560 = math.tanh %559 : vector<8x24xf32>
    %561 = arith.mulf %556, %560 : vector<8x24xf32>
    %c15_i32 = arith.constant 15 : i32
    %562 = arith.index_cast %c15_i32 : i32 to index
    %c0_235 = arith.constant 0 : index
    %c0_236 = arith.constant 0 : index
    %563 = vector.load %arg11[%562, %c0_235, %c0_236] : memref<16x8x512xf32, #tpu.memory_space<vmem>>, vector<1x8x512xf32>
    %564 = vector.shape_cast %563 : vector<1x8x512xf32> to vector<8x512xf32>
    %cst_237 = arith.constant dense<0.000000e+00> : vector<8x512xf32>
    %565 = tpu.matmul %561, %109, %cst_237 {dimension_numbers = #tpu.dot_dimension_numbers<[1], [0], [0], [1], [0, 0, 1, 1], [], []>} : vector<8x24xf32>, vector<24x512xf32>, vector<8x512xf32> -> vector<8x512xf32>
    %566 = arith.addf %564, %565 : vector<8x512xf32>
    %567 = vector.extract_strided_slice %566 {offsets = [0, 0], sizes = [8, 24], strides = [1, 1]} : vector<8x512xf32> to vector<8x24xf32>
    %568 = arith.negf %567 : vector<8x24xf32>
    %569 = math.exp %568 : vector<8x24xf32>
    %cst_238 = arith.constant 1.000000e+00 : f32
    %570 = vector.broadcast %cst_238 : f32 to vector<8x24xf32>
    %571 = arith.addf %570, %569 : vector<8x24xf32>
    %572 = arith.divf %570, %571 : vector<8x24xf32>
    %573 = vector.extract_strided_slice %566 {offsets = [0, 128], sizes = [8, 24], strides = [1, 1]} : vector<8x512xf32> to vector<8x24xf32>
    %574 = arith.negf %573 : vector<8x24xf32>
    %575 = math.exp %574 : vector<8x24xf32>
    %cst_239 = arith.constant 1.000000e+00 : f32
    %576 = vector.broadcast %cst_239 : f32 to vector<8x24xf32>
    %577 = arith.addf %576, %575 : vector<8x24xf32>
    %578 = arith.divf %576, %577 : vector<8x24xf32>
    %579 = vector.extract_strided_slice %566 {offsets = [0, 256], sizes = [8, 24], strides = [1, 1]} : vector<8x512xf32> to vector<8x24xf32>
    %580 = math.tanh %579 : vector<8x24xf32>
    %581 = vector.extract_strided_slice %566 {offsets = [0, 384], sizes = [8, 24], strides = [1, 1]} : vector<8x512xf32> to vector<8x24xf32>
    %582 = arith.negf %581 : vector<8x24xf32>
    %583 = math.exp %582 : vector<8x24xf32>
    %cst_240 = arith.constant 1.000000e+00 : f32
    %584 = vector.broadcast %cst_240 : f32 to vector<8x24xf32>
    %585 = arith.addf %584, %583 : vector<8x24xf32>
    %586 = arith.divf %584, %585 : vector<8x24xf32>
    %587 = arith.mulf %578, %559 : vector<8x24xf32>
    %588 = arith.mulf %572, %580 : vector<8x24xf32>
    %589 = arith.addf %587, %588 : vector<8x24xf32>
    %590 = math.tanh %589 : vector<8x24xf32>
    %591 = arith.mulf %586, %590 : vector<8x24xf32>
    %c16_i32 = arith.constant 16 : i32
    %c0_241 = arith.constant 0 : index
    %c0_242 = arith.constant 0 : index
    %592 = vector.load %arg8[%c0_241, %c0_242] : memref<8x24xf32, #tpu.memory_space<vmem>>, vector<8x24xf32>
    tpu.vector_store %arg8[%c0_241, %c0_242], %591 {strides = array<i32>} : memref<8x24xf32, #tpu.memory_space<vmem>>, vector<8x24xf32>,
    return
  }
}

</mosaic_0001>

<llo_original>
// kernel: summary_net3_forward.1
$region0: #{summary_net3_forward.1}
  #allocation0 [shape = 'u32[]', space=smem, size = 0x4, offset = 0x4, fixed_abs, tag = 'smem constant byte address 0x4 - core index']
  #allocation1 [shape = 'u32[144,128]{1,0:T(1,128)}', space=vmem, size = 0x12000, scoped, tag = 'internal scratch']
  #allocation2 [shape = 'f32[176,24]{1,0:T(8,128)}', space=vmem, size = 0x16000, scoped, tag = 'scratch operand']
  #allocation3 [shape = 'f32[128,168]{1,0:T(8,128)}', space=vmem, size = 0x20000, scoped, tag = 'scratch operand']
  #allocation4 [shape = 'f32[16,8,512]{2,1,0:T(8,128)}', space=vmem, size = 0x40000, scoped, tag = 'scratch operand']
  %s0 = inlined_call_operand.vmem [shape: f32[128,6], index: 0, kind: input, shape index: {}]
  %s1 = inlined_call_operand.vmem [shape: f32[3,168,72], index: 1, kind: input, shape index: {}]
  %s2 = inlined_call_operand.vmem [shape: f32[3,72], index: 2, kind: input, shape index: {}]
  %s3 = inlined_call_operand.vmem [shape: f32[3,72,24], index: 3, kind: input, shape index: {}]
  %s4 = inlined_call_operand.vmem [shape: f32[3,24], index: 4, kind: input, shape index: {}]
  %s5 = inlined_call_operand.vmem [shape: f32[24,512], index: 5, kind: input, shape index: {}]
  %s6 = inlined_call_operand.vmem [shape: f32[24,512], index: 6, kind: input, shape index: {}]
  %s7 = inlined_call_operand.vmem [shape: f32[1,512], index: 7, kind: input, shape index: {}]
  %s8 = inlined_call_operand.vmem [shape: f32[8,24], index: 8, kind: output, shape index: {}]
  %s9 = sld [smem:[#allocation0]]
  $region42: #{summary_net3_forward.1} parent=0
    _
  %s11 = ssub.s32 1, %s9
  %s12 = scalar_select 0, %s11, %s9
  // Predicated region
  $region2: #{summary_net3_forward.1} parent=0 // pred_check
    _
  $region3: #{summary_net3_forward.1} parent=0 // pred_check_branch
    %14 = sbr.rel (0) target = $region5
  $region4: #{summary_net3_forward.1} parent=0 // pred_region
    _
  $region5: #{summary_net3_forward.1} parent=0 // pred_fallthru
    _
  // Predicated region
  $region6: #{summary_net3_forward.1} parent=0 // pred_check
    _
  $region7: #{summary_net3_forward.1} parent=0 // pred_check_branch
    %16 = sbr.rel (0) target = $region9
  $region8: #{summary_net3_forward.1} parent=0 // pred_region
    _
  $region9: #{summary_net3_forward.1} parent=0 // pred_fallthru
    _
  // Predicated region
  $region10: #{summary_net3_forward.1} parent=0 // pred_check
    _
  $region11: #{summary_net3_forward.1} parent=0 // pred_check_branch
    %18 = sbr.rel (0) target = $region13
  $region12: #{summary_net3_forward.1} parent=0 // pred_region
    _
  $region13: #{summary_net3_forward.1} parent=0 // pred_fallthru
    _
  // Predicated region
  $region14: #{summary_net3_forward.1} parent=0 // pred_check
    _
  $region15: #{summary_net3_forward.1} parent=0 // pred_check_branch
    %20 = sbr.rel (0) target = $region17
  $region16: #{summary_net3_forward.1} parent=0 // pred_region
    _
  $region17: #{summary_net3_forward.1} parent=0 // pred_fallthru
    _
  // Predicated region
  $region18: #{summary_net3_forward.1} parent=0 // pred_check
    _
  $region19: #{summary_net3_forward.1} parent=0 // pred_check_branch
    %22 = sbr.rel (0) target = $region21
  $region20: #{summary_net3_forward.1} parent=0 // pred_region
    _
  $region21: #{summary_net3_forward.1} parent=0 // pred_fallthru
    _
  // Predicated region
  $region22: #{summary_net3_forward.1} parent=0 // pred_check
    _
  $region23: #{summary_net3_forward.1} parent=0 // pred_check_branch
    %24 = sbr.rel (0) target = $region25
  $region24: #{summary_net3_forward.1} parent=0 // pred_region
    _
  $region25: #{summary_net3_forward.1} parent=0 // pred_fallthru
    _
  // Predicated region
  $region26: #{summary_net3_forward.1} parent=0 // pred_check
    _
  $region27: #{summary_net3_forward.1} parent=0 // pred_check_branch
    %26 = sbr.rel (0) target = $region29
  $region28: #{summary_net3_forward.1} parent=0 // pred_region
    _
  $region29: #{summary_net3_forward.1} parent=0 // pred_fallthru
    _
  // Predicated region
  $region30: #{summary_net3_forward.1} parent=0 // pred_check
    _
  $region31: #{summary_net3_forward.1} parent=0 // pred_check_branch
    %28 = sbr.rel (0) target = $region33
  $region32: #{summary_net3_forward.1} parent=0 // pred_region
    _
  $region33: #{summary_net3_forward.1} parent=0 // pred_fallthru
    _
  %vm29 = vcmask 195584
  %30 = vst.msk [vmem:[#allocation2] sm:$0xff] %vm29, 0.0
  %31 = vst.msk [vmem:[#allocation2 + $0x8] sm:$0xff] %vm29, 0.0
  %32 = vst.msk [vmem:[#allocation2 + $0x10] sm:$0xff] %vm29, 0.0
  %33 = vst.msk [vmem:[#allocation2 + $0x18] sm:$0xff] %vm29, 0.0
  %34 = vst.msk [vmem:[#allocation2 + $0x20] sm:$0xff] %vm29, 0.0
  %35 = vst.msk [vmem:[#allocation2 + $0x28] sm:$0xff] %vm29, 0.0
  %vm36 = vcmask 195632
  %37 = vst.msk [vmem:[#allocation2 + $0x30] sm:$0xff] %vm36, 0.0
  %38 = vst.msk [vmem:[#allocation2 + $0x38] sm:$0xff] %vm36, 0.0
  %39 = vst.msk [vmem:[#allocation2 + $0x40] sm:$0xff] %vm36, 0.0
  %40 = vst.msk [vmem:[#allocation2 + $0x48] sm:$0xff] %vm36, 0.0
  %41 = vst.msk [vmem:[#allocation2 + $0x50] sm:$0xff] %vm36, 0.0
  %42 = vst.msk [vmem:[#allocation2 + $0x58] sm:$0xff] %vm36, 0.0
  %43 = vst.msk [vmem:[#allocation2 + $0x60] sm:$0xff] %vm36, 0.0
  %44 = vst.msk [vmem:[#allocation2 + $0x68] sm:$0xff] %vm36, 0.0
  %45 = vst.msk [vmem:[#allocation2 + $0x70] sm:$0xff] %vm36, 0.0
  %46 = vst.msk [vmem:[#allocation2 + $0x78] sm:$0xff] %vm36, 0.0
  %47 = vst.msk [vmem:[#allocation2 + $0x80] sm:$0xff] %vm36, 0.0
  %48 = vst.msk [vmem:[#allocation2 + $0x88] sm:$0xff] %vm36, 0.0
  %49 = vst.msk [vmem:[#allocation2 + $0x90] sm:$0xff] %vm36, 0.0
  %50 = vst.msk [vmem:[#allocation2 + $0x98] sm:$0xff] %vm36, 0.0
  %51 = vst.msk [vmem:[#allocation2 + $0xa0] sm:$0xff] %vm36, 0.0
  %52 = vst.msk [vmem:[#allocation2 + $0xa8] sm:$0xff] %vm36, 0.0
  %v53 = vld [vmem:[%s0] sm:$0xff]
  %v54 = vld [vmem:[%s0 + $0x8] sm:$0xff]
  %v55 = vld [vmem:[%s0 + $0x10] sm:$0xff]
  %v56 = vld [vmem:[%s0 + $0x18] sm:$0xff]
  %v57 = vld [vmem:[%s0 + $0x20] sm:$0xff]
  %v58 = vld [vmem:[%s0 + $0x28] sm:$0xff]
  %v59 = vld [vmem:[%s0 + $0x30] sm:$0xff]
  %v60 = vld [vmem:[%s0 + $0x38] sm:$0xff]
  %v61 = vld [vmem:[%s0 + $0x40] sm:$0xff]
  %v62 = vld [vmem:[%s0 + $0x48] sm:$0xff]
  %v63 = vld [vmem:[%s0 + $0x50] sm:$0xff]
  %v64 = vld [vmem:[%s0 + $0x58] sm:$0xff]
  %v65 = vld [vmem:[%s0 + $0x60] sm:$0xff]
  %v66 = vld [vmem:[%s0 + $0x68] sm:$0xff]
  %v67 = vld [vmem:[%s0 + $0x70] sm:$0xff]
  %v68 = vld [vmem:[%s0 + $0x78] sm:$0xff]
  %vm69 = vcmask 48128
  %70 = vst.msk [vmem:[#allocation2 + $0x30] sm:$0xff] %vm69, %v53
  %71 = vst.msk [vmem:[#allocation2 + $0x38] sm:$0xff] %vm69, %v54
  %72 = vst.msk [vmem:[#allocation2 + $0x40] sm:$0xff] %vm69, %v55
  %73 = vst.msk [vmem:[#allocation2 + $0x48] sm:$0xff] %vm69, %v56
  %74 = vst.msk [vmem:[#allocation2 + $0x50] sm:$0xff] %vm69, %v57
  %75 = vst.msk [vmem:[#allocation2 + $0x58] sm:$0xff] %vm69, %v58
  %76 = vst.msk [vmem:[#allocation2 + $0x60] sm:$0xff] %vm69, %v59
  %77 = vst.msk [vmem:[#allocation2 + $0x68] sm:$0xff] %vm69, %v60
  %78 = vst.msk [vmem:[#allocation2 + $0x70] sm:$0xff] %vm69, %v61
  %79 = vst.msk [vmem:[#allocation2 + $0x78] sm:$0xff] %vm69, %v62
  %80 = vst.msk [vmem:[#allocation2 + $0x80] sm:$0xff] %vm69, %v63
  %81 = vst.msk [vmem:[#allocation2 + $0x88] sm:$0xff] %vm69, %v64
  %82 = vst.msk [vmem:[#allocation2 + $0x90] sm:$0xff] %vm69, %v65
  %83 = vst.msk [vmem:[#allocation2 + $0x98] sm:$0xff] %vm69, %v66
  %84 = vst.msk [vmem:[#allocation2 + $0xa0] sm:$0xff] %vm69, %v67
  %85 = vst.msk [vmem:[#allocation2 + $0xa8] sm:$0xff] %vm69, %v68
  %v86 = vld [vmem:[#allocation2 + $0x30] sm:$0xff]
  %v87 = vld [vmem:[#allocation2 + $0x38] sm:$0xff]
  %v88 = vld [vmem:[#allocation2 + $0x40] sm:$0xff]
  %v89 = vld [vmem:[#allocation2 + $0x48] sm:$0xff]
  %v90 = vld [vmem:[#allocation2 + $0x50] sm:$0xff]
  %v91 = vld [vmem:[#allocation2 + $0x58] sm:$0xff]
  %v92 = vld [vmem:[#allocation2 + $0x60] sm:$0xff]
  %v93 = vld [vmem:[#allocation2 + $0x68] sm:$0xff]
  %v94 = vld [vmem:[#allocation2 + $0x70] sm:$0xff]
  %v95 = vld [vmem:[#allocation2 + $0x78] sm:$0xff]
  %v96 = vld [vmem:[#allocation2 + $0x80] sm:$0xff]
  %v97 = vld [vmem:[#allocation2 + $0x88] sm:$0xff]
  %v98 = vld [vmem:[#allocation2 + $0x90] sm:$0xff]
  %v99 = vld [vmem:[#allocation2 + $0x98] sm:$0xff]
  %v100 = vld [vmem:[#allocation2 + $0xa0] sm:$0xff]
  %v101 = vld [vmem:[#allocation2 + $0xa8] sm:$0xff]
  %102 = vst.msk [vmem:[#allocation3] sm:$0xff] %vm29, %v86
  %103 = vst.msk [vmem:[#allocation3 + $0x10] sm:$0xff] %vm29, %v87
  %104 = vst.msk [vmem:[#allocation3 + $0x20] sm:$0xff] %vm29, %v88
  %105 = vst.msk [vmem:[#allocation3 + $0x30] sm:$0xff] %vm29, %v89
  %106 = vst.msk [vmem:[#allocation3 + $0x40] sm:$0xff] %vm29, %v90
  %107 = vst.msk [vmem:[#allocation3 + $0x50] sm:$0xff] %vm29, %v91
  %108 = vst.msk [vmem:[#allocation3 + $0x60] sm:$0xff] %vm29, %v92
  %109 = vst.msk [vmem:[#allocation3 + $0x70] sm:$0xff] %vm29, %v93
  %110 = vst.msk [vmem:[#allocation3 + $0x80] sm:$0xff] %vm29, %v94
  %111 = vst.msk [vmem:[#allocation3 + $0x90] sm:$0xff] %vm29, %v95
  %112 = vst.msk [vmem:[#allocation3 + $0xa0] sm:$0xff] %vm29, %v96
  %113 = vst.msk [vmem:[#allocation3 + $0xb0] sm:$0xff] %vm29, %v97
  %114 = vst.msk [vmem:[#allocation3 + $0xc0] sm:$0xff] %vm29, %v98
  %115 = vst.msk [vmem:[#allocation3 + $0xd0] sm:$0xff] %vm29, %v99
  %116 = vst.msk [vmem:[#allocation3 + $0xe0] sm:$0xff] %vm29, %v100
  %117 = vst.msk [vmem:[#allocation3 + $0xf0] sm:$0xff] %vm29, %v101
  %v118 = vld [vmem:[#allocation2 + $0x28] sm:$0xff]
  %v119 = vld [vmem:[#allocation2 + $0x30] sm:$0xff]
  %v120 = vld [vmem:[#allocation2 + $0x38] sm:$0xff]
  %v121 = vld [vmem:[#allocation2 + $0x40] sm:$0xff]
  %v122 = vld [vmem:[#allocation2 + $0x48] sm:$0xff]
  %v123 = vld [vmem:[#allocation2 + $0x50] sm:$0xff]
  %v124 = vld [vmem:[#allocation2 + $0x58] sm:$0xff]
  %v125 = vld [vmem:[#allocation2 + $0x60] sm:$0xff]
  %v126 = vld [vmem:[#allocation2 + $0x68] sm:$0xff]
  %v127 = vld [vmem:[#allocation2 + $0x70] sm:$0xff]
  %v128 = vld [vmem:[#allocation2 + $0x78] sm:$0xff]
  %v129 = vld [vmem:[#allocation2 + $0x80] sm:$0xff]
  %v130 = vld [vmem:[#allocation2 + $0x88] sm:$0xff]
  %v131 = vld [vmem:[#allocation2 + $0x90] sm:$0xff]
  %v132 = vld [vmem:[#allocation2 + $0x98] sm:$0xff]
  %v133 = vld [vmem:[#allocation2 + $0xa0] sm:$0xff]
  %150 = vrot.lane.b32.xlu0 %v118, 24
  %v151 = vpop.permute.xlu0 %150
  %152 = vrot.lane.b32.xlu0 %v119, 24
  %v153 = vpop.permute.xlu0 %152
  %154 = vrot.lane.b32.xlu0 %v120, 24
  %v155 = vpop.permute.xlu0 %154
  %156 = vrot.lane.b32.xlu0 %v121, 24
  %v157 = vpop.permute.xlu0 %156
  %158 = vrot.lane.b32.xlu0 %v122, 24
  %v159 = vpop.permute.xlu0 %158
  %160 = vrot.lane.b32.xlu0 %v123, 24
  %v161 = vpop.permute.xlu0 %160
  %162 = vrot.lane.b32.xlu0 %v124, 24
  %v163 = vpop.permute.xlu0 %162
  %164 = vrot.lane.b32.xlu0 %v125, 24
  %v165 = vpop.permute.xlu0 %164
  %166 = vrot.lane.b32.xlu0 %v126, 24
  %v167 = vpop.permute.xlu0 %166
  %168 = vrot.lane.b32.xlu0 %v127, 24
  %v169 = vpop.permute.xlu0 %168
  %170 = vrot.lane.b32.xlu0 %v128, 24
  %v171 = vpop.permute.xlu0 %170
  %172 = vrot.lane.b32.xlu0 %v129, 24
  %v173 = vpop.permute.xlu0 %172
  %174 = vrot.lane.b32.xlu0 %v130, 24
  %v175 = vpop.permute.xlu0 %174
  %176 = vrot.lane.b32.xlu0 %v131, 24
  %v177 = vpop.permute.xlu0 %176
  %178 = vrot.lane.b32.xlu0 %v132, 24
  %v179 = vpop.permute.xlu0 %178
  %180 = vrot.lane.b32.xlu0 %v133, 24
  %v181 = vpop.permute.xlu0 %180
  %vm198 = vcmask 392384
  %199 = vst.msk [vmem:[#allocation3] sm:$0xff] %vm198, %v151
  %200 = vst.msk [vmem:[#allocation3 + $0x10] sm:$0xff] %vm198, %v153
  %201 = vst.msk [vmem:[#allocation3 + $0x20] sm:$0xff] %vm198, %v155
  %202 = vst.msk [vmem:[#allocation3 + $0x30] sm:$0xff] %vm198, %v157
  %203 = vst.msk [vmem:[#allocation3 + $0x40] sm:$0xff] %vm198, %v159
  %204 = vst.msk [vmem:[#allocation3 + $0x50] sm:$0xff] %vm198, %v161
  %205 = vst.msk [vmem:[#allocation3 + $0x60] sm:$0xff] %vm198, %v163
  %206 = vst.msk [vmem:[#allocation3 + $0x70] sm:$0xff] %vm198, %v165
  %207 = vst.msk [vmem:[#allocation3 + $0x80] sm:$0xff] %vm198, %v167
  %208 = vst.msk [vmem:[#allocation3 + $0x90] sm:$0xff] %vm198, %v169
  %209 = vst.msk [vmem:[#allocation3 + $0xa0] sm:$0xff] %vm198, %v171
  %210 = vst.msk [vmem:[#allocation3 + $0xb0] sm:$0xff] %vm198, %v173
  %211 = vst.msk [vmem:[#allocation3 + $0xc0] sm:$0xff] %vm198, %v175
  %212 = vst.msk [vmem:[#allocation3 + $0xd0] sm:$0xff] %vm198, %v177
  %213 = vst.msk [vmem:[#allocation3 + $0xe0] sm:$0xff] %vm198, %v179
  %214 = vst.msk [vmem:[#allocation3 + $0xf0] sm:$0xff] %vm198, %v181
  %v215 = vld [vmem:[#allocation2 + $0x20] sm:$0xff]
  %v216 = vld [vmem:[#allocation2 + $0x28] sm:$0xff]
  %v217 = vld [vmem:[#allocation2 + $0x30] sm:$0xff]
  %v218 = vld [vmem:[#allocation2 + $0x38] sm:$0xff]
  %v219 = vld [vmem:[#allocation2 + $0x40] sm:$0xff]
  %v220 = vld [vmem:[#allocation2 + $0x48] sm:$0xff]
  %v221 = vld [vmem:[#allocation2 + $0x50] sm:$0xff]
  %v222 = vld [vmem:[#allocation2 + $0x58] sm:$0xff]
  %v223 = vld [vmem:[#allocation2 + $0x60] sm:$0xff]
  %v224 = vld [vmem:[#allocation2 + $0x68] sm:$0xff]
  %v225 = vld [vmem:[#allocation2 + $0x70] sm:$0xff]
  %v226 = vld [vmem:[#allocation2 + $0x78] sm:$0xff]
  %v227 = vld [vmem:[#allocation2 + $0x80] sm:$0xff]
  %v228 = vld [vmem:[#allocation2 + $0x88] sm:$0xff]
  %v229 = vld [vmem:[#allocation2 + $0x90] sm:$0xff]
  %v230 = vld [vmem:[#allocation2 + $0x98] sm:$0xff]
  %247 = vrot.lane.b32.xlu0 %v215, 48
  %v248 = vpop.permute.xlu0 %247
  %249 = vrot.lane.b32.xlu0 %v216, 48
  %v250 = vpop.permute.xlu0 %249
  %251 = vrot.lane.b32.xlu0 %v217, 48
  %v252 = vpop.permute.xlu0 %251
  %253 = vrot.lane.b32.xlu0 %v218, 48
  %v254 = vpop.permute.xlu0 %253
  %255 = vrot.lane.b32.xlu0 %v219, 48
  %v256 = vpop.permute.xlu0 %255
  %257 = vrot.lane.b32.xlu0 %v220, 48
  %v258 = vpop.permute.xlu0 %257
  %259 = vrot.lane.b32.xlu0 %v221, 48
  %v260 = vpop.permute.xlu0 %259
  %261 = vrot.lane.b32.xlu0 %v222, 48
  %v262 = vpop.permute.xlu0 %261
  %263 = vrot.lane.b32.xlu0 %v223, 48
  %v264 = vpop.permute.xlu0 %263
  %265 = vrot.lane.b32.xlu0 %v224, 48
  %v266 = vpop.permute.xlu0 %265
  %267 = vrot.lane.b32.xlu0 %v225, 48
  %v268 = vpop.permute.xlu0 %267
  %269 = vrot.lane.b32.xlu0 %v226, 48
  %v270 = vpop.permute.xlu0 %269
  %271 = vrot.lane.b32.xlu0 %v227, 48
  %v272 = vpop.permute.xlu0 %271
  %273 = vrot.lane.b32.xlu0 %v228, 48
  %v274 = vpop.permute.xlu0 %273
  %275 = vrot.lane.b32.xlu0 %v229, 48
  %v276 = vpop.permute.xlu0 %275
  %277 = vrot.lane.b32.xlu0 %v230, 48
  %v278 = vpop.permute.xlu0 %277
  %vm295 = vcmask 589184
  %296 = vst.msk [vmem:[#allocation3] sm:$0xff] %vm295, %v248
  %297 = vst.msk [vmem:[#allocation3 + $0x10] sm:$0xff] %vm295, %v250
  %298 = vst.msk [vmem:[#allocation3 + $0x20] sm:$0xff] %vm295, %v252
  %299 = vst.msk [vmem:[#allocation3 + $0x30] sm:$0xff] %vm295, %v254
  %300 = vst.msk [vmem:[#allocation3 + $0x40] sm:$0xff] %vm295, %v256
  %301 = vst.msk [vmem:[#allocation3 + $0x50] sm:$0xff] %vm295, %v258
  %302 = vst.msk [vmem:[#allocation3 + $0x60] sm:$0xff] %vm295, %v260
  %303 = vst.msk [vmem:[#allocation3 + $0x70] sm:$0xff] %vm295, %v262
  %304 = vst.msk [vmem:[#allocation3 + $0x80] sm:$0xff] %vm295, %v264
  %305 = vst.msk [vmem:[#allocation3 + $0x90] sm:$0xff] %vm295, %v266
  %306 = vst.msk [vmem:[#allocation3 + $0xa0] sm:$0xff] %vm295, %v268
  %307 = vst.msk [vmem:[#allocation3 + $0xb0] sm:$0xff] %vm295, %v270
  %308 = vst.msk [vmem:[#allocation3 + $0xc0] sm:$0xff] %vm295, %v272
  %309 = vst.msk [vmem:[#allocation3 + $0xd0] sm:$0xff] %vm295, %v274
  %310 = vst.msk [vmem:[#allocation3 + $0xe0] sm:$0xff] %vm295, %v276
  %311 = vst.msk [vmem:[#allocation3 + $0xf0] sm:$0xff] %vm295, %v278
  %v312 = vld [vmem:[#allocation2 + $0x18] sm:$0xff]
  %v313 = vld [vmem:[#allocation2 + $0x20] sm:$0xff]
  %v314 = vld [vmem:[#allocation2 + $0x28] sm:$0xff]
  %v315 = vld [vmem:[#allocation2 + $0x30] sm:$0xff]
  %v316 = vld [vmem:[#allocation2 + $0x38] sm:$0xff]
  %v317 = vld [vmem:[#allocation2 + $0x40] sm:$0xff]
  %v318 = vld [vmem:[#allocation2 + $0x48] sm:$0xff]
  %v319 = vld [vmem:[#allocation2 + $0x50] sm:$0xff]
  %v320 = vld [vmem:[#allocation2 + $0x58] sm:$0xff]
  %v321 = vld [vmem:[#allocation2 + $0x60] sm:$0xff]
  %v322 = vld [vmem:[#allocation2 + $0x68] sm:$0xff]
  %v323 = vld [vmem:[#allocation2 + $0x70] sm:$0xff]
  %v324 = vld [vmem:[#allocation2 + $0x78] sm:$0xff]
  %v325 = vld [vmem:[#allocation2 + $0x80] sm:$0xff]
  %v326 = vld [vmem:[#allocation2 + $0x88] sm:$0xff]
  %v327 = vld [vmem:[#allocation2 + $0x90] sm:$0xff]
  %344 = vrot.lane.b32.xlu0 %v312, 72
  %v345 = vpop.permute.xlu0 %344
  %346 = vrot.lane.b32.xlu0 %v313, 72
  %v347 = vpop.permute.xlu0 %346
  %348 = vrot.lane.b32.xlu0 %v314, 72
  %v349 = vpop.permute.xlu0 %348
  %350 = vrot.lane.b32.xlu0 %v315, 72
  %v351 = vpop.permute.xlu0 %350
  %352 = vrot.lane.b32.xlu0 %v316, 72
  %v353 = vpop.permute.xlu0 %352
  %354 = vrot.lane.b32.xlu0 %v317, 72
  %v355 = vpop.permute.xlu0 %354
  %356 = vrot.lane.b32.xlu0 %v318, 72
  %v357 = vpop.permute.xlu0 %356
  %358 = vrot.lane.b32.xlu0 %v319, 72
  %v359 = vpop.permute.xlu0 %358
  %360 = vrot.lane.b32.xlu0 %v320, 72
  %v361 = vpop.permute.xlu0 %360
  %362 = vrot.lane.b32.xlu0 %v321, 72
  %v363 = vpop.permute.xlu0 %362
  %364 = vrot.lane.b32.xlu0 %v322, 72
  %v365 = vpop.permute.xlu0 %364
  %366 = vrot.lane.b32.xlu0 %v323, 72
  %v367 = vpop.permute.xlu0 %366
  %368 = vrot.lane.b32.xlu0 %v324, 72
  %v369 = vpop.permute.xlu0 %368
  %370 = vrot.lane.b32.xlu0 %v325, 72
  %v371 = vpop.permute.xlu0 %370
  %372 = vrot.lane.b32.xlu0 %v326, 72
  %v373 = vpop.permute.xlu0 %372
  %374 = vrot.lane.b32.xlu0 %v327, 72
  %v375 = vpop.permute.xlu0 %374
  %vm392 = vcmask 785984
  %393 = vst.msk [vmem:[#allocation3] sm:$0xff] %vm392, %v345
  %394 = vst.msk [vmem:[#allocation3 + $0x10] sm:$0xff] %vm392, %v347
  %395 = vst.msk [vmem:[#allocation3 + $0x20] sm:$0xff] %vm392, %v349
  %396 = vst.msk [vmem:[#allocation3 + $0x30] sm:$0xff] %vm392, %v351
  %397 = vst.msk [vmem:[#allocation3 + $0x40] sm:$0xff] %vm392, %v353
  %398 = vst.msk [vmem:[#allocation3 + $0x50] sm:$0xff] %vm392, %v355
  %399 = vst.msk [vmem:[#allocation3 + $0x60] sm:$0xff] %vm392, %v357
  %400 = vst.msk [vmem:[#allocation3 + $0x70] sm:$0xff] %vm392, %v359
  %401 = vst.msk [vmem:[#allocation3 + $0x80] sm:$0xff] %vm392, %v361
  %402 = vst.msk [vmem:[#allocation3 + $0x90] sm:$0xff] %vm392, %v363
  %403 = vst.msk [vmem:[#allocation3 + $0xa0] sm:$0xff] %vm392, %v365
  %404 = vst.msk [vmem:[#allocation3 + $0xb0] sm:$0xff] %vm392, %v367
  %405 = vst.msk [vmem:[#allocation3 + $0xc0] sm:$0xff] %vm392, %v369
  %406 = vst.msk [vmem:[#allocation3 + $0xd0] sm:$0xff] %vm392, %v371
  %407 = vst.msk [vmem:[#allocation3 + $0xe0] sm:$0xff] %vm392, %v373
  %408 = vst.msk [vmem:[#allocation3 + $0xf0] sm:$0xff] %vm392, %v375
  %v409 = vld [vmem:[#allocation2 + $0x10] sm:$0xff]
  %v410 = vld [vmem:[#allocation2 + $0x18] sm:$0xff]
  %v411 = vld [vmem:[#allocation2 + $0x20] sm:$0xff]
  %v412 = vld [vmem:[#allocation2 + $0x28] sm:$0xff]
  %v413 = vld [vmem:[#allocation2 + $0x30] sm:$0xff]
  %v414 = vld [vmem:[#allocation2 + $0x38] sm:$0xff]
  %v415 = vld [vmem:[#allocation2 + $0x40] sm:$0xff]
  %v416 = vld [vmem:[#allocation2 + $0x48] sm:$0xff]
  %v417 = vld [vmem:[#allocation2 + $0x50] sm:$0xff]
  %v418 = vld [vmem:[#allocation2 + $0x58] sm:$0xff]
  %v419 = vld [vmem:[#allocation2 + $0x60] sm:$0xff]
  %v420 = vld [vmem:[#allocation2 + $0x68] sm:$0xff]
  %v421 = vld [vmem:[#allocation2 + $0x70] sm:$0xff]
  %v422 = vld [vmem:[#allocation2 + $0x78] sm:$0xff]
  %v423 = vld [vmem:[#allocation2 + $0x80] sm:$0xff]
  %v424 = vld [vmem:[#allocation2 + $0x88] sm:$0xff]
  %441 = vrot.lane.b32.xlu0 %v409, 96
  %v442 = vpop.permute.xlu0 %441
  %443 = vrot.lane.b32.xlu0 %v410, 96
  %v444 = vpop.permute.xlu0 %443
  %445 = vrot.lane.b32.xlu0 %v411, 96
  %v446 = vpop.permute.xlu0 %445
  %447 = vrot.lane.b32.xlu0 %v412, 96
  %v448 = vpop.permute.xlu0 %447
  %449 = vrot.lane.b32.xlu0 %v413, 96
  %v450 = vpop.permute.xlu0 %449
  %451 = vrot.lane.b32.xlu0 %v414, 96
  %v452 = vpop.permute.xlu0 %451
  %453 = vrot.lane.b32.xlu0 %v415, 96
  %v454 = vpop.permute.xlu0 %453
  %455 = vrot.lane.b32.xlu0 %v416, 96
  %v456 = vpop.permute.xlu0 %455
  %457 = vrot.lane.b32.xlu0 %v417, 96
  %v458 = vpop.permute.xlu0 %457
  %459 = vrot.lane.b32.xlu0 %v418, 96
  %v460 = vpop.permute.xlu0 %459
  %461 = vrot.lane.b32.xlu0 %v419, 96
  %v462 = vpop.permute.xlu0 %461
  %463 = vrot.lane.b32.xlu0 %v420, 96
  %v464 = vpop.permute.xlu0 %463
  %465 = vrot.lane.b32.xlu0 %v421, 96
  %v466 = vpop.permute.xlu0 %465
  %467 = vrot.lane.b32.xlu0 %v422, 96
  %v468 = vpop.permute.xlu0 %467
  %469 = vrot.lane.b32.xlu0 %v423, 96
  %v470 = vpop.permute.xlu0 %469
  %471 = vrot.lane.b32.xlu0 %v424, 96
  %v472 = vpop.permute.xlu0 %471
  %vm489 = vcmask 982784
  %490 = vst.msk [vmem:[#allocation3] sm:$0xff] %vm489, %v442
  %491 = vst.msk [vmem:[#allocation3 + $0x10] sm:$0xff] %vm489, %v444
  %492 = vst.msk [vmem:[#allocation3 + $0x20] sm:$0xff] %vm489, %v446
  %493 = vst.msk [vmem:[#allocation3 + $0x30] sm:$0xff] %vm489, %v448
  %494 = vst.msk [vmem:[#allocation3 + $0x40] sm:$0xff] %vm489, %v450
  %495 = vst.msk [vmem:[#allocation3 + $0x50] sm:$0xff] %vm489, %v452
  %496 = vst.msk [vmem:[#allocation3 + $0x60] sm:$0xff] %vm489, %v454
  %497 = vst.msk [vmem:[#allocation3 + $0x70] sm:$0xff] %vm489, %v456
  %498 = vst.msk [vmem:[#allocation3 + $0x80] sm:$0xff] %vm489, %v458
  %499 = vst.msk [vmem:[#allocation3 + $0x90] sm:$0xff] %vm489, %v460
  %500 = vst.msk [vmem:[#allocation3 + $0xa0] sm:$0xff] %vm489, %v462
  %501 = vst.msk [vmem:[#allocation3 + $0xb0] sm:$0xff] %vm489, %v464
  %502 = vst.msk [vmem:[#allocation3 + $0xc0] sm:$0xff] %vm489, %v466
  %503 = vst.msk [vmem:[#allocation3 + $0xd0] sm:$0xff] %vm489, %v468
  %504 = vst.msk [vmem:[#allocation3 + $0xe0] sm:$0xff] %vm489, %v470
  %505 = vst.msk [vmem:[#allocation3 + $0xf0] sm:$0xff] %vm489, %v472
  %v506 = vld [vmem:[#allocation2 + $0x8] sm:$0xff]
  %v507 = vld [vmem:[#allocation2 + $0x10] sm:$0xff]
  %v508 = vld [vmem:[#allocation2 + $0x18] sm:$0xff]
  %v509 = vld [vmem:[#allocation2 + $0x20] sm:$0xff]
  %v510 = vld [vmem:[#allocation2 + $0x28] sm:$0xff]
  %v511 = vld [vmem:[#allocation2 + $0x30] sm:$0xff]
  %v512 = vld [vmem:[#allocation2 + $0x38] sm:$0xff]
  %v513 = vld [vmem:[#allocation2 + $0x40] sm:$0xff]
  %v514 = vld [vmem:[#allocation2 + $0x48] sm:$0xff]
  %v515 = vld [vmem:[#allocation2 + $0x50] sm:$0xff]
  %v516 = vld [vmem:[#allocation2 + $0x58] sm:$0xff]
  %v517 = vld [vmem:[#allocation2 + $0x60] sm:$0xff]
  %v518 = vld [vmem:[#allocation2 + $0x68] sm:$0xff]
  %v519 = vld [vmem:[#allocation2 + $0x70] sm:$0xff]
  %v520 = vld [vmem:[#allocation2 + $0x78] sm:$0xff]
  %v521 = vld [vmem:[#allocation2 + $0x80] sm:$0xff]
  %538 = vrot.lane.b32.xlu0 %v506, 120
  %v539 = vpop.permute.xlu0 %538
  %540 = vrot.lane.b32.xlu0 %v507, 120
  %v541 = vpop.permute.xlu0 %540
  %542 = vrot.lane.b32.xlu0 %v508, 120
  %v543 = vpop.permute.xlu0 %542
  %544 = vrot.lane.b32.xlu0 %v509, 120
  %v545 = vpop.permute.xlu0 %544
  %546 = vrot.lane.b32.xlu0 %v510, 120
  %v547 = vpop.permute.xlu0 %546
  %548 = vrot.lane.b32.xlu0 %v511, 120
  %v549 = vpop.permute.xlu0 %548
  %550 = vrot.lane.b32.xlu0 %v512, 120
  %v551 = vpop.permute.xlu0 %550
  %552 = vrot.lane.b32.xlu0 %v513, 120
  %v553 = vpop.permute.xlu0 %552
  %554 = vrot.lane.b32.xlu0 %v514, 120
  %v555 = vpop.permute.xlu0 %554
  %556 = vrot.lane.b32.xlu0 %v515, 120
  %v557 = vpop.permute.xlu0 %556
  %558 = vrot.lane.b32.xlu0 %v516, 120
  %v559 = vpop.permute.xlu0 %558
  %560 = vrot.lane.b32.xlu0 %v517, 120
  %v561 = vpop.permute.xlu0 %560
  %562 = vrot.lane.b32.xlu0 %v518, 120
  %v563 = vpop.permute.xlu0 %562
  %564 = vrot.lane.b32.xlu0 %v519, 120
  %v565 = vpop.permute.xlu0 %564
  %566 = vrot.lane.b32.xlu0 %v520, 120
  %v567 = vpop.permute.xlu0 %566
  %568 = vrot.lane.b32.xlu0 %v521, 120
  %v569 = vpop.permute.xlu0 %568
  %vm586 = vcmask 1048512
  %587 = vst.msk [vmem:[#allocation3] sm:$0xff] %vm586, %v539
  %vm588 = vcmask 130048
  %589 = vst.msk [vmem:[#allocation3 + $0x8] sm:$0xff] %vm588, %v539
  %590 = vst.msk [vmem:[#allocation3 + $0x10] sm:$0xff] %vm586, %v541
  %591 = vst.msk [vmem:[#allocation3 + $0x18] sm:$0xff] %vm588, %v541
  %592 = vst.msk [vmem:[#allocation3 + $0x20] sm:$0xff] %vm586, %v543
  %593 = vst.msk [vmem:[#allocation3 + $0x28] sm:$0xff] %vm588, %v543
  %594 = vst.msk [vmem:[#allocation3 + $0x30] sm:$0xff] %vm586, %v545
  %595 = vst.msk [vmem:[#allocation3 + $0x38] sm:$0xff] %vm588, %v545
  %596 = vst.msk [vmem:[#allocation3 + $0x40] sm:$0xff] %vm586, %v547
  %597 = vst.msk [vmem:[#allocation3 + $0x48] sm:$0xff] %vm588, %v547
  %598 = vst.msk [vmem:[#allocation3 + $0x50] sm:$0xff] %vm586, %v549
  %599 = vst.msk [vmem:[#allocation3 + $0x58] sm:$0xff] %vm588, %v549
  %600 = vst.msk [vmem:[#allocation3 + $0x60] sm:$0xff] %vm586, %v551
  %601 = vst.msk [vmem:[#allocation3 + $0x68] sm:$0xff] %vm588, %v551
  %602 = vst.msk [vmem:[#allocation3 + $0x70] sm:$0xff] %vm586, %v553
  %603 = vst.msk [vmem:[#allocation3 + $0x78] sm:$0xff] %vm588, %v553
  %604 = vst.msk [vmem:[#allocation3 + $0x80] sm:$0xff] %vm586, %v555
  %605 = vst.msk [vmem:[#allocation3 + $0x88] sm:$0xff] %vm588, %v555
  %606 = vst.msk [vmem:[#allocation3 + $0x90] sm:$0xff] %vm586, %v557
  %607 = vst.msk [vmem:[#allocation3 + $0x98] sm:$0xff] %vm588, %v557
  %608 = vst.msk [vmem:[#allocation3 + $0xa0] sm:$0xff] %vm586, %v559
  %609 = vst.msk [vmem:[#allocation3 + $0xa8] sm:$0xff] %vm588, %v559
  %610 = vst.msk [vmem:[#allocation3 + $0xb0] sm:$0xff] %vm586, %v561
  %611 = vst.msk [vmem:[#allocation3 + $0xb8] sm:$0xff] %vm588, %v561
  %612 = vst.msk [vmem:[#allocation3 + $0xc0] sm:$0xff] %vm586, %v563
  %613 = vst.msk [vmem:[#allocation3 + $0xc8] sm:$0xff] %vm588, %v563
  %614 = vst.msk [vmem:[#allocation3 + $0xd0] sm:$0xff] %vm586, %v565
  %615 = vst.msk [vmem:[#allocation3 + $0xd8] sm:$0xff] %vm588, %v565
  %616 = vst.msk [vmem:[#allocation3 + $0xe0] sm:$0xff] %vm586, %v567
  %617 = vst.msk [vmem:[#allocation3 + $0xe8] sm:$0xff] %vm588, %v567
  %618 = vst.msk [vmem:[#allocation3 + $0xf0] sm:$0xff] %vm586, %v569
  %619 = vst.msk [vmem:[#allocation3 + $0xf8] sm:$0xff] %vm588, %v569
  %v620 = vld [vmem:[#allocation2] sm:$0xff]
  %v621 = vld [vmem:[#allocation2 + $0x8] sm:$0xff]
  %v622 = vld [vmem:[#allocation2 + $0x10] sm:$0xff]
  %v623 = vld [vmem:[#allocation2 + $0x18] sm:$0xff]
  %v624 = vld [vmem:[#allocation2 + $0x20] sm:$0xff]
  %v625 = vld [vmem:[#allocation2 + $0x28] sm:$0xff]
  %v626 = vld [vmem:[#allocation2 + $0x30] sm:$0xff]
  %v627 = vld [vmem:[#allocation2 + $0x38] sm:$0xff]
  %v628 = vld [vmem:[#allocation2 + $0x40] sm:$0xff]
  %v629 = vld [vmem:[#allocation2 + $0x48] sm:$0xff]
  %v630 = vld [vmem:[#allocation2 + $0x50] sm:$0xff]
  %v631 = vld [vmem:[#allocation2 + $0x58] sm:$0xff]
  %v632 = vld [vmem:[#allocation2 + $0x60] sm:$0xff]
  %v633 = vld [vmem:[#allocation2 + $0x68] sm:$0xff]
  %v634 = vld [vmem:[#allocation2 + $0x70] sm:$0xff]
  %v635 = vld [vmem:[#allocation2 + $0x78] sm:$0xff]
  %652 = vrot.lane.b32.xlu0 %v620, 16
  %v653 = vpop.permute.xlu0 %652
  %654 = vrot.lane.b32.xlu0 %v621, 16
  %v655 = vpop.permute.xlu0 %654
  %656 = vrot.lane.b32.xlu0 %v622, 16
  %v657 = vpop.permute.xlu0 %656
  %658 = vrot.lane.b32.xlu0 %v623, 16
  %v659 = vpop.permute.xlu0 %658
  %660 = vrot.lane.b32.xlu0 %v624, 16
  %v661 = vpop.permute.xlu0 %660
  %662 = vrot.lane.b32.xlu0 %v625, 16
  %v663 = vpop.permute.xlu0 %662
  %664 = vrot.lane.b32.xlu0 %v626, 16
  %v665 = vpop.permute.xlu0 %664
  %666 = vrot.lane.b32.xlu0 %v627, 16
  %v667 = vpop.permute.xlu0 %666
  %668 = vrot.lane.b32.xlu0 %v628, 16
  %v669 = vpop.permute.xlu0 %668
  %670 = vrot.lane.b32.xlu0 %v629, 16
  %v671 = vpop.permute.xlu0 %670
  %672 = vrot.lane.b32.xlu0 %v630, 16
  %v673 = vpop.permute.xlu0 %672
  %674 = vrot.lane.b32.xlu0 %v631, 16
  %v675 = vpop.permute.xlu0 %674
  %676 = vrot.lane.b32.xlu0 %v632, 16
  %v677 = vpop.permute.xlu0 %676
  %678 = vrot.lane.b32.xlu0 %v633, 16
  %v679 = vpop.permute.xlu0 %678
  %680 = vrot.lane.b32.xlu0 %v634, 16
  %v681 = vpop.permute.xlu0 %680
  %682 = vrot.lane.b32.xlu0 %v635, 16
  %v683 = vpop.permute.xlu0 %682
  %vm700 = vcmask 326784
  %701 = vst.msk [vmem:[#allocation3 + $0x8] sm:$0xff] %vm700, %v653
  %702 = vst.msk [vmem:[#allocation3 + $0x18] sm:$0xff] %vm700, %v655
  %703 = vst.msk [vmem:[#allocation3 + $0x28] sm:$0xff] %vm700, %v657
  %704 = vst.msk [vmem:[#allocation3 + $0x38] sm:$0xff] %vm700, %v659
  %705 = vst.msk [vmem:[#allocation3 + $0x48] sm:$0xff] %vm700, %v661
  %706 = vst.msk [vmem:[#allocation3 + $0x58] sm:$0xff] %vm700, %v663
  %707 = vst.msk [vmem:[#allocation3 + $0x68] sm:$0xff] %vm700, %v665
  %708 = vst.msk [vmem:[#allocation3 + $0x78] sm:$0xff] %vm700, %v667
  %709 = vst.msk [vmem:[#allocation3 + $0x88] sm:$0xff] %vm700, %v669
  %710 = vst.msk [vmem:[#allocation3 + $0x98] sm:$0xff] %vm700, %v671
  %711 = vst.msk [vmem:[#allocation3 + $0xa8] sm:$0xff] %vm700, %v673
  %712 = vst.msk [vmem:[#allocation3 + $0xb8] sm:$0xff] %vm700, %v675
  %713 = vst.msk [vmem:[#allocation3 + $0xc8] sm:$0xff] %vm700, %v677
  %714 = vst.msk [vmem:[#allocation3 + $0xd8] sm:$0xff] %vm700, %v679
  %715 = vst.msk [vmem:[#allocation3 + $0xe8] sm:$0xff] %vm700, %v681
  %716 = vst.msk [vmem:[#allocation3 + $0xf8] sm:$0xff] %vm700, %v683
  %v717 = vld [vmem:[#allocation3] sm:$0xff]
  %v718 = vld [vmem:[#allocation3 + $0x8] sm:$0xff]
  %v719 = vld [vmem:[#allocation3 + $0x10] sm:$0xff]
  %v720 = vld [vmem:[#allocation3 + $0x18] sm:$0xff]
  %v721 = vld [vmem:[#allocation3 + $0x20] sm:$0xff]
  %v722 = vld [vmem:[#allocation3 + $0x28] sm:$0xff]
  %v723 = vld [vmem:[#allocation3 + $0x30] sm:$0xff]
  %v724 = vld [vmem:[#allocation3 + $0x38] sm:$0xff]
  %v725 = vld [vmem:[#allocation3 + $0x40] sm:$0xff]
  %v726 = vld [vmem:[#allocation3 + $0x48] sm:$0xff]
  %v727 = vld [vmem:[#allocation3 + $0x50] sm:$0xff]
  %v728 = vld [vmem:[#allocation3 + $0x58] sm:$0xff]
  %v729 = vld [vmem:[#allocation3 + $0x60] sm:$0xff]
  %v730 = vld [vmem:[#allocation3 + $0x68] sm:$0xff]
  %v731 = vld [vmem:[#allocation3 + $0x70] sm:$0xff]
  %v732 = vld [vmem:[#allocation3 + $0x78] sm:$0xff]
  %v733 = vld [vmem:[#allocation3 + $0x80] sm:$0xff]
  %v734 = vld [vmem:[#allocation3 + $0x88] sm:$0xff]
  %v735 = vld [vmem:[#allocation3 + $0x90] sm:$0xff]
  %v736 = vld [vmem:[#allocation3 + $0x98] sm:$0xff]
  %v737 = vld [vmem:[#allocation3 + $0xa0] sm:$0xff]
  %v738 = vld [vmem:[#allocation3 + $0xa8] sm:$0xff]
  %v739 = vld [vmem:[#allocation3 + $0xb0] sm:$0xff]
  %v740 = vld [vmem:[#allocation3 + $0xb8] sm:$0xff]
  %v741 = vld [vmem:[#allocation3 + $0xc0] sm:$0xff]
  %v742 = vld [vmem:[#allocation3 + $0xc8] sm:$0xff]
  %v743 = vld [vmem:[#allocation3 + $0xd0] sm:$0xff]
  %v744 = vld [vmem:[#allocation3 + $0xd8] sm:$0xff]
  %v745 = vld [vmem:[#allocation3 + $0xe0] sm:$0xff]
  %v746 = vld [vmem:[#allocation3 + $0xe8] sm:$0xff]
  %v747 = vld [vmem:[#allocation3 + $0xf0] sm:$0xff]
  %v748 = vld [vmem:[#allocation3 + $0xf8] sm:$0xff]
  %v749 = vld [vmem:[%s1] sm:$0xff]
  %v750 = vld [vmem:[%s1 + $0x8] sm:$0xff]
  %v751 = vld [vmem:[%s1 + $0x10] sm:$0xff]
  %v752 = vld [vmem:[%s1 + $0x18] sm:$0xff]
  %v753 = vld [vmem:[%s1 + $0x20] sm:$0xff]
  %v754 = vld [vmem:[%s1 + $0x28] sm:$0xff]
  %v755 = vld [vmem:[%s1 + $0x30] sm:$0xff]
  %v756 = vld [vmem:[%s1 + $0x38] sm:$0xff]
  %v757 = vld [vmem:[%s1 + $0x40] sm:$0xff]
  %v758 = vld [vmem:[%s1 + $0x48] sm:$0xff]
  %v759 = vld [vmem:[%s1 + $0x50] sm:$0xff]
  %v760 = vld [vmem:[%s1 + $0x58] sm:$0xff]
  %v761 = vld [vmem:[%s1 + $0x60] sm:$0xff]
  %v762 = vld [vmem:[%s1 + $0x68] sm:$0xff]
  %v763 = vld [vmem:[%s1 + $0x70] sm:$0xff]
  %v764 = vld [vmem:[%s1 + $0x78] sm:$0xff]
  %v765 = vld [vmem:[%s1 + $0x80] sm:$0xff]
  %v766 = vld [vmem:[%s1 + $0x88] sm:$0xff]
  %v767 = vld [vmem:[%s1 + $0x90] sm:$0xff]
  %v768 = vld [vmem:[%s1 + $0x98] sm:$0xff]
  %v769 = vld [vmem:[%s1 + $0xa0] sm:$0xff]
  %v770 = vld [vmem:[%s2] sm:$0x1]
  %v771 = vlaneseq
  %v772 = vshrl.u32 %v771, 7
  %v773 = vsub.s32 0, %v772
  %v774 = vrot.slane %v770, %v773
  %vm775 = vcmask 326656
  %v777 = vsel %vm775, %v718, 0
  %v780 = vsel %vm775, %v720, 0
  %v783 = vsel %vm775, %v722, 0
  %v786 = vsel %vm775, %v724, 0
  %v789 = vsel %vm775, %v726, 0
  %v792 = vsel %vm775, %v728, 0
  %v795 = vsel %vm775, %v730, 0
  %v798 = vsel %vm775, %v732, 0
  %v801 = vsel %vm775, %v734, 0
  %v804 = vsel %vm775, %v736, 0
  %v807 = vsel %vm775, %v738, 0
  %v810 = vsel %vm775, %v740, 0
  %v813 = vsel %vm775, %v742, 0
  %v816 = vsel %vm775, %v744, 0
  %v819 = vsel %vm775, %v746, 0
  %v822 = vsel %vm775, %v748, 0
  %824 = vmatprep.subr.mxu0 0.0
  %825 = vmatpush1.msra.mxu0 %v749
  %826 = vmatprep.subr.mxu0 0.0
  %827 = vmatpush1.msra.mxu0 %v750
  %828 = vmatprep.subr.mxu0 0.0
  %829 = vmatpush1.msra.mxu0 %v751
  %830 = vmatprep.subr.mxu0 0.0
  %831 = vmatpush1.msra.mxu0 %v752
  %832 = vmatprep.subr.mxu0 0.0
  %833 = vmatpush1.msra.mxu0 %v753
  %834 = vmatprep.subr.mxu0 0.0
  %835 = vmatpush1.msra.mxu0 %v754
  %836 = vmatprep.subr.mxu0 0.0
  %837 = vmatpush1.msra.mxu0 %v755
  %838 = vmatprep.subr.mxu0 0.0
  %839 = vmatpush1.msra.mxu0 %v756
  %840 = vmatprep.subr.mxu0 0.0
  %841 = vmatpush1.msra.mxu0 %v757
  %842 = vmatprep.subr.mxu0 0.0
  %843 = vmatpush1.msra.mxu0 %v758
  %844 = vmatprep.subr.mxu0 0.0
  %845 = vmatpush1.msra.mxu0 %v759
  %846 = vmatprep.subr.mxu0 0.0
  %847 = vmatpush1.msra.mxu0 %v760
  %848 = vmatprep.subr.mxu0 0.0
  %849 = vmatpush1.msra.mxu0 %v761
  %850 = vmatprep.subr.mxu0 0.0
  %851 = vmatpush1.msra.mxu0 %v762
  %852 = vmatprep.subr.mxu0 0.0
  %853 = vmatpush1.msra.mxu0 %v763
  %854 = vmatprep.subr.mxu0 0.0
  %855 = vmatpush1.msra.mxu0 %v764
  %856 = vmatprep.subr.mxu0 0.0
  %857 = vmatpush1.msra.mxu0 %v765
  %858 = vmatprep.subr.mxu0 0.0
  %859 = vmatpush1.msra.mxu0 %v766
  %860 = vmatprep.subr.mxu0 0.0
  %861 = vmatpush1.msra.mxu0 %v767
  %862 = vmatprep.subr.mxu0 0.0
  %863 = vmatpush1.msra.mxu0 %v768
  %864 = vmatprep.subr.mxu0 0.0
  %865 = vmatpush1.msra.mxu0 %v769
  %866 = vmatprep.subr.mxu0 0.0
  %867 = vmatpush1.msra.mxu0 0.0
  %868 = vmatprep.subr.mxu0 0.0
  %869 = vmatpush1.msra.mxu0 0.0
  %870 = vmatprep.subr.mxu0 0.0
  %871 = vmatpush1.msra.mxu0 0.0
  %872 = vmatprep.subr.mxu0 0.0
  %873 = vmatpush1.msra.mxu0 0.0
  %874 = vmatprep.subr.mxu0 0.0
  %875 = vmatpush1.msra.mxu0 0.0
  %876 = vmatprep.subr.mxu0 0.0
  %877 = vmatpush1.msra.mxu0 0.0
  %878 = vmatprep.subr.mxu0 0.0
  %879 = vmatpush1.msra.mxu0 0.0
  %880 = vmatprep.subr.mxu0 0.0
  %881 = vmatpush1.msra.mxu0 0.0
  %882 = vmatprep.subr.mxu0 0.0
  %883 = vmatpush1.msra.mxu0 0.0
  %884 = vmatprep.subr.mxu0 0.0
  %885 = vmatpush1.msra.mxu0 0.0
  %886 = vmatprep.subr.mxu0 0.0
  %887 = vmatpush1.msra.mxu0 0.0
  %888 = vmatprep.mubr.f32.mxu0 %v777
  %889 = vmatmul.mubr.f32.gmra.mrb[0].mxu0 %v717
  %v890 = vpop.f32.mrb[0].mxu0
  %v891 = vadd.f32 %v774, %v890
  %v892 = vpop.f32.mrb[0].mxu0
  %893 = vmatprep.mubr.f32.mxu0 %v780
  %894 = vmatmul.mubr.f32.gmra.mrb[0].mxu0 %v719
  %v895 = vpop.f32.mrb[0].mxu0
  %v896 = vadd.f32 %v774, %v895
  %v897 = vpop.f32.mrb[0].mxu0
  %898 = vmatprep.mubr.f32.mxu0 %v783
  %899 = vmatmul.mubr.f32.gmra.mrb[0].mxu0 %v721
  %v900 = vpop.f32.mrb[0].mxu0
  %v901 = vadd.f32 %v774, %v900
  %v902 = vpop.f32.mrb[0].mxu0
  %903 = vmatprep.mubr.f32.mxu0 %v786
  %904 = vmatmul.mubr.f32.gmra.mrb[0].mxu0 %v723
  %v905 = vpop.f32.mrb[0].mxu0
  %v906 = vadd.f32 %v774, %v905
  %v907 = vpop.f32.mrb[0].mxu0
  %908 = vmatprep.mubr.f32.mxu0 %v789
  %909 = vmatmul.mubr.f32.gmra.mrb[0].mxu0 %v725
  %v910 = vpop.f32.mrb[0].mxu0
  %v911 = vadd.f32 %v774, %v910
  %v912 = vpop.f32.mrb[0].mxu0
  %913 = vmatprep.mubr.f32.mxu0 %v792
  %914 = vmatmul.mubr.f32.gmra.mrb[0].mxu0 %v727
  %v915 = vpop.f32.mrb[0].mxu0
  %v916 = vadd.f32 %v774, %v915
  %v917 = vpop.f32.mrb[0].mxu0
  %918 = vmatprep.mubr.f32.mxu0 %v795
  %919 = vmatmul.mubr.f32.gmra.mrb[0].mxu0 %v729
  %v920 = vpop.f32.mrb[0].mxu0
  %v921 = vadd.f32 %v774, %v920
  %v922 = vpop.f32.mrb[0].mxu0
  %923 = vmatprep.mubr.f32.mxu0 %v798
  %924 = vmatmul.mubr.f32.gmra.mrb[0].mxu0 %v731
  %v925 = vpop.f32.mrb[0].mxu0
  %v926 = vadd.f32 %v774, %v925
  %v927 = vpop.f32.mrb[0].mxu0
  %928 = vmatprep.mubr.f32.mxu0 %v801
  %929 = vmatmul.mubr.f32.gmra.mrb[0].mxu0 %v733
  %v930 = vpop.f32.mrb[0].mxu0
  %v931 = vadd.f32 %v774, %v930
  %v932 = vpop.f32.mrb[0].mxu0
  %933 = vmatprep.mubr.f32.mxu0 %v804
  %934 = vmatmul.mubr.f32.gmra.mrb[0].mxu0 %v735
  %v935 = vpop.f32.mrb[0].mxu0
  %v936 = vadd.f32 %v774, %v935
  %v937 = vpop.f32.mrb[0].mxu0
  %938 = vmatprep.mubr.f32.mxu0 %v807
  %939 = vmatmul.mubr.f32.gmra.mrb[0].mxu0 %v737
  %v940 = vpop.f32.mrb[0].mxu0
  %v941 = vadd.f32 %v774, %v940
  %v942 = vpop.f32.mrb[0].mxu0
  %943 = vmatprep.mubr.f32.mxu0 %v810
  %944 = vmatmul.mubr.f32.gmra.mrb[0].mxu0 %v739
  %v945 = vpop.f32.mrb[0].mxu0
  %v946 = vadd.f32 %v774, %v945
  %v947 = vpop.f32.mrb[0].mxu0
  %948 = vmatprep.mubr.f32.mxu0 %v813
  %949 = vmatmul.mubr.f32.gmra.mrb[0].mxu0 %v741
  %v950 = vpop.f32.mrb[0].mxu0
  %v951 = vadd.f32 %v774, %v950
  %v952 = vpop.f32.mrb[0].mxu0
  %953 = vmatprep.mubr.f32.mxu0 %v816
  %954 = vmatmul.mubr.f32.gmra.mrb[0].mxu0 %v743
  %v955 = vpop.f32.mrb[0].mxu0
  %v956 = vadd.f32 %v774, %v955
  %v957 = vpop.f32.mrb[0].mxu0
  %958 = vmatprep.mubr.f32.mxu0 %v819
  %959 = vmatmul.mubr.f32.gmra.mrb[0].mxu0 %v745
  %v960 = vpop.f32.mrb[0].mxu0
  %v961 = vadd.f32 %v774, %v960
  %v962 = vpop.f32.mrb[0].mxu0
  %963 = vmatprep.mubr.f32.mxu0 %v822
  %964 = vmatmul.mubr.f32.gmra.mrb[0].mxu0 %v747
  %v965 = vpop.f32.mrb[0].mxu0
  %v966 = vadd.f32 %v774, %v965
  %v967 = vpop.f32.mrb[0].mxu0
  %968 = vdwg.mxu0
  %v969 = vmax.f32 %v891, 0.0
  %v970 = vmax.f32 %v896, 0.0
  %v971 = vmax.f32 %v901, 0.0
  %v972 = vmax.f32 %v906, 0.0
  %v973 = vmax.f32 %v911, 0.0
  %v974 = vmax.f32 %v916, 0.0
  %v975 = vmax.f32 %v921, 0.0
  %v976 = vmax.f32 %v926, 0.0
  %v977 = vmax.f32 %v931, 0.0
  %v978 = vmax.f32 %v936, 0.0
  %v979 = vmax.f32 %v941, 0.0
  %v980 = vmax.f32 %v946, 0.0
  %v981 = vmax.f32 %v951, 0.0
  %v982 = vmax.f32 %v956, 0.0
  %v983 = vmax.f32 %v961, 0.0
  %v984 = vmax.f32 %v966, 0.0
  %v985 = vld [vmem:[%s3] sm:$0xff]
  %v986 = vld [vmem:[%s3 + $0x8] sm:$0xff]
  %v987 = vld [vmem:[%s3 + $0x10] sm:$0xff]
  %v988 = vld [vmem:[%s3 + $0x18] sm:$0xff]
  %v989 = vld [vmem:[%s3 + $0x20] sm:$0xff]
  %v990 = vld [vmem:[%s3 + $0x28] sm:$0xff]
  %v991 = vld [vmem:[%s3 + $0x30] sm:$0xff]
  %v992 = vld [vmem:[%s3 + $0x38] sm:$0xff]
  %v993 = vld [vmem:[%s3 + $0x40] sm:$0xff]
  %v994 = vld [vmem:[%s4] sm:$0x1]
  %v995 = vlaneseq
  %v996 = vshrl.u32 %v995, 7
  %v997 = vsub.s32 0, %v996
  %v998 = vrot.slane %v994, %v997
  %vm999 = vcmask 588800
  %v1001 = vsel %vm999, %v969, 0
  %v1004 = vsel %vm999, %v970, 0
  %v1007 = vsel %vm999, %v971, 0
  %v1010 = vsel %vm999, %v972, 0
  %v1013 = vsel %vm999, %v973, 0
  %v1016 = vsel %vm999, %v974, 0
  %v1019 = vsel %vm999, %v975, 0
  %v1022 = vsel %vm999, %v976, 0
  %v1025 = vsel %vm999, %v977, 0
  %v1028 = vsel %vm999, %v978, 0
  %v1031 = vsel %vm999, %v979, 0
  %v1034 = vsel %vm999, %v980, 0
  %v1037 = vsel %vm999, %v981, 0
  %v1040 = vsel %vm999, %v982, 0
  %v1043 = vsel %vm999, %v983, 0
  %v1046 = vsel %vm999, %v984, 0
  %1048 = vmatprep.subr.mxu0 0.0
  %1049 = vmatpush1.msra.mxu0 %v985
  %1050 = vmatprep.subr.mxu0 0.0
  %1051 = vmatpush1.msra.mxu0 %v986
  %1052 = vmatprep.subr.mxu0 0.0
  %1053 = vmatpush1.msra.mxu0 %v987
  %1054 = vmatprep.subr.mxu0 0.0
  %1055 = vmatpush1.msra.mxu0 %v988
  %1056 = vmatprep.subr.mxu0 0.0
  %1057 = vmatpush1.msra.mxu0 %v989
  %1058 = vmatprep.subr.mxu0 0.0
  %1059 = vmatpush1.msra.mxu0 %v990
  %1060 = vmatprep.subr.mxu0 0.0
  %1061 = vmatpush1.msra.mxu0 %v991
  %1062 = vmatprep.subr.mxu0 0.0
  %1063 = vmatpush1.msra.mxu0 %v992
  %1064 = vmatprep.subr.mxu0 0.0
  %1065 = vmatpush1.msra.mxu0 %v993
  %1066 = vmatprep.subr.mxu0 0.0
  %1067 = vmatpush1.msra.mxu0 0.0
  %1068 = vmatprep.subr.mxu0 0.0
  %1069 = vmatpush1.msra.mxu0 0.0
  %1070 = vmatprep.subr.mxu0 0.0
  %1071 = vmatpush1.msra.mxu0 0.0
  %1072 = vmatprep.subr.mxu0 0.0
  %1073 = vmatpush1.msra.mxu0 0.0
  %1074 = vmatprep.subr.mxu0 0.0
  %1075 = vmatpush1.msra.mxu0 0.0
  %1076 = vmatprep.subr.mxu0 0.0
  %1077 = vmatpush1.msra.mxu0 0.0
  %1078 = vmatprep.subr.mxu0 0.0
  %1079 = vmatpush1.msra.mxu0 0.0
  %1080 = vmatprep.subr.mxu0 0.0
  %1081 = vmatpush1.msra.mxu0 0.0
  %1082 = vmatprep.subr.mxu0 0.0
  %1083 = vmatpush1.msra.mxu0 0.0
  %1084 = vmatprep.subr.mxu0 0.0
  %1085 = vmatpush1.msra.mxu0 0.0
  %1086 = vmatprep.subr.mxu0 0.0
  %1087 = vmatpush1.msra.mxu0 0.0
  %1088 = vmatprep.subr.mxu0 0.0
  %1089 = vmatpush1.msra.mxu0 0.0
  %1090 = vmatprep.subr.mxu0 0.0
  %1091 = vmatpush1.msra.mxu0 0.0
  %1092 = vmatprep.subr.mxu0 0.0
  %1093 = vmatpush1.msra.mxu0 0.0
  %1094 = vmatprep.subr.mxu0 0.0
  %1095 = vmatpush1.msra.mxu0 0.0
  %1096 = vmatprep.subr.mxu0 0.0
  %1097 = vmatpush1.msra.mxu0 0.0
  %1098 = vmatprep.subr.mxu0 0.0
  %1099 = vmatpush1.msra.mxu0 0.0
  %1100 = vmatprep.subr.mxu0 0.0
  %1101 = vmatpush1.msra.mxu0 0.0
  %1102 = vmatprep.subr.mxu0 0.0
  %1103 = vmatpush1.msra.mxu0 0.0
  %1104 = vmatprep.subr.mxu0 0.0
  %1105 = vmatpush1.msra.mxu0 0.0
  %1106 = vmatprep.subr.mxu0 0.0
  %1107 = vmatpush1.msra.mxu0 0.0
  %1108 = vmatprep.subr.mxu0 0.0
  %1109 = vmatpush1.msra.mxu0 0.0
  %1110 = vmatprep.subr.mxu0 0.0
  %1111 = vmatpush1.msra.mxu0 0.0
  %1112 = vmatprep.mubr.f32.mxu0 0.0
  %1113 = vmatmul.mubr.f32.gmra.mrb[0].mxu0 %v1001
  %v1114 = vpop.f32.mrb[0].mxu0
  %v1115 = vadd.f32 %v998, %v1114
  %v1116 = vpop.f32.mrb[0].mxu0
  %1117 = vmatprep.mubr.f32.mxu0 0.0
  %1118 = vmatmul.mubr.f32.gmra.mrb[0].mxu0 %v1004
  %v1119 = vpop.f32.mrb[0].mxu0
  %v1120 = vadd.f32 %v998, %v1119
  %v1121 = vpop.f32.mrb[0].mxu0
  %1122 = vmatprep.mubr.f32.mxu0 0.0
  %1123 = vmatmul.mubr.f32.gmra.mrb[0].mxu0 %v1007
  %v1124 = vpop.f32.mrb[0].mxu0
  %v1125 = vadd.f32 %v998, %v1124
  %v1126 = vpop.f32.mrb[0].mxu0
  %1127 = vmatprep.mubr.f32.mxu0 0.0
  %1128 = vmatmul.mubr.f32.gmra.mrb[0].mxu0 %v1010
  %v1129 = vpop.f32.mrb[0].mxu0
  %v1130 = vadd.f32 %v998, %v1129
  %v1131 = vpop.f32.mrb[0].mxu0
  %1132 = vmatprep.mubr.f32.mxu0 0.0
  %1133 = vmatmul.mubr.f32.gmra.mrb[0].mxu0 %v1013
  %v1134 = vpop.f32.mrb[0].mxu0
  %v1135 = vadd.f32 %v998, %v1134
  %v1136 = vpop.f32.mrb[0].mxu0
  %1137 = vmatprep.mubr.f32.mxu0 0.0
  %1138 = vmatmul.mubr.f32.gmra.mrb[0].mxu0 %v1016
  %v1139 = vpop.f32.mrb[0].mxu0
  %v1140 = vadd.f32 %v998, %v1139
  %v1141 = vpop.f32.mrb[0].mxu0
  %1142 = vmatprep.mubr.f32.mxu0 0.0
  %1143 = vmatmul.mubr.f32.gmra.mrb[0].mxu0 %v1019
  %v1144 = vpop.f32.mrb[0].mxu0
  %v1145 = vadd.f32 %v998, %v1144
  %v1146 = vpop.f32.mrb[0].mxu0
  %1147 = vmatprep.mubr.f32.mxu0 0.0
  %1148 = vmatmul.mubr.f32.gmra.mrb[0].mxu0 %v1022
  %v1149 = vpop.f32.mrb[0].mxu0
  %v1150 = vadd.f32 %v998, %v1149
  %v1151 = vpop.f32.mrb[0].mxu0
  %1152 = vmatprep.mubr.f32.mxu0 0.0
  %1153 = vmatmul.mubr.f32.gmra.mrb[0].mxu0 %v1025
  %v1154 = vpop.f32.mrb[0].mxu0
  %v1155 = vadd.f32 %v998, %v1154
  %v1156 = vpop.f32.mrb[0].mxu0
  %1157 = vmatprep.mubr.f32.mxu0 0.0
  %1158 = vmatmul.mubr.f32.gmra.mrb[0].mxu0 %v1028
  %v1159 = vpop.f32.mrb[0].mxu0
  %v1160 = vadd.f32 %v998, %v1159
  %v1161 = vpop.f32.mrb[0].mxu0
  %1162 = vmatprep.mubr.f32.mxu0 0.0
  %1163 = vmatmul.mubr.f32.gmra.mrb[0].mxu0 %v1031
  %v1164 = vpop.f32.mrb[0].mxu0
  %v1165 = vadd.f32 %v998, %v1164
  %v1166 = vpop.f32.mrb[0].mxu0
  %1167 = vmatprep.mubr.f32.mxu0 0.0
  %1168 = vmatmul.mubr.f32.gmra.mrb[0].mxu0 %v1034
  %v1169 = vpop.f32.mrb[0].mxu0
  %v1170 = vadd.f32 %v998, %v1169
  %v1171 = vpop.f32.mrb[0].mxu0
  %1172 = vmatprep.mubr.f32.mxu0 0.0
  %1173 = vmatmul.mubr.f32.gmra.mrb[0].mxu0 %v1037
  %v1174 = vpop.f32.mrb[0].mxu0
  %v1175 = vadd.f32 %v998, %v1174
  %v1176 = vpop.f32.mrb[0].mxu0
  %1177 = vmatprep.mubr.f32.mxu0 0.0
  %1178 = vmatmul.mubr.f32.gmra.mrb[0].mxu0 %v1040
  %v1179 = vpop.f32.mrb[0].mxu0
  %v1180 = vadd.f32 %v998, %v1179
  %v1181 = vpop.f32.mrb[0].mxu0
  %1182 = vmatprep.mubr.f32.mxu0 0.0
  %1183 = vmatmul.mubr.f32.gmra.mrb[0].mxu0 %v1043
  %v1184 = vpop.f32.mrb[0].mxu0
  %v1185 = vadd.f32 %v998, %v1184
  %v1186 = vpop.f32.mrb[0].mxu0
  %1187 = vmatprep.mubr.f32.mxu0 0.0
  %1188 = vmatmul.mubr.f32.gmra.mrb[0].mxu0 %v1046
  %v1189 = vpop.f32.mrb[0].mxu0
  %v1190 = vadd.f32 %v998, %v1189
  %v1191 = vpop.f32.mrb[0].mxu0
  %1192 = vdwg.mxu0
  %v1193 = vmax.f32 %v1115, 0.0
  %v1194 = vmax.f32 %v1120, 0.0
  %v1195 = vmax.f32 %v1125, 0.0
  %v1196 = vmax.f32 %v1130, 0.0
  %v1197 = vmax.f32 %v1135, 0.0
  %v1198 = vmax.f32 %v1140, 0.0
  %v1199 = vmax.f32 %v1145, 0.0
  %v1200 = vmax.f32 %v1150, 0.0
  %v1201 = vmax.f32 %v1155, 0.0
  %v1202 = vmax.f32 %v1160, 0.0
  %v1203 = vmax.f32 %v1165, 0.0
  %v1204 = vmax.f32 %v1170, 0.0
  %v1205 = vmax.f32 %v1175, 0.0
  %v1206 = vmax.f32 %v1180, 0.0
  %v1207 = vmax.f32 %v1185, 0.0
  %v1208 = vmax.f32 %v1190, 0.0
  %1209 = vst.msk [vmem:[#allocation2 + $0x30] sm:$0xff] %vm29, %v1193
  %1210 = vst.msk [vmem:[#allocation2 + $0x38] sm:$0xff] %vm29, %v1194
  %1211 = vst.msk [vmem:[#allocation2 + $0x40] sm:$0xff] %vm29, %v1195
  %1212 = vst.msk [vmem:[#allocation2 + $0x48] sm:$0xff] %vm29, %v1196
  %1213 = vst.msk [vmem:[#allocation2 + $0x50] sm:$0xff] %vm29, %v1197
  %1214 = vst.msk [vmem:[#allocation2 + $0x58] sm:$0xff] %vm29, %v1198
  %1215 = vst.msk [vmem:[#allocation2 + $0x60] sm:$0xff] %vm29, %v1199
  %1216 = vst.msk [vmem:[#allocation2 + $0x68] sm:$0xff] %vm29, %v1200
  %1217 = vst.msk [vmem:[#allocation2 + $0x70] sm:$0xff] %vm29, %v1201
  %1218 = vst.msk [vmem:[#allocation2 + $0x78] sm:$0xff] %vm29, %v1202
  %1219 = vst.msk [vmem:[#allocation2 + $0x80] sm:$0xff] %vm29, %v1203
  %1220 = vst.msk [vmem:[#allocation2 + $0x88] sm:$0xff] %vm29, %v1204
  %1221 = vst.msk [vmem:[#allocation2 + $0x90] sm:$0xff] %vm29, %v1205
  %1222 = vst.msk [vmem:[#allocation2 + $0x98] sm:$0xff] %vm29, %v1206
  %1223 = vst.msk [vmem:[#allocation2 + $0xa0] sm:$0xff] %vm29, %v1207
  %1224 = vst.msk [vmem:[#allocation2 + $0xa8] sm:$0xff] %vm29, %v1208
  %v1225 = vld [vmem:[#allocation2 + $0x30] sm:$0xff]
  %v1226 = vld [vmem:[#allocation2 + $0x38] sm:$0xff]
  %v1227 = vld [vmem:[#allocation2 + $0x40] sm:$0xff]
  %v1228 = vld [vmem:[#allocation2 + $0x48] sm:$0xff]
  %v1229 = vld [vmem:[#allocation2 + $0x50] sm:$0xff]
  %v1230 = vld [vmem:[#allocation2 + $0x58] sm:$0xff]
  %v1231 = vld [vmem:[#allocation2 + $0x60] sm:$0xff]
  %v1232 = vld [vmem:[#allocation2 + $0x68] sm:$0xff]
  %v1233 = vld [vmem:[#allocation2 + $0x70] sm:$0xff]
  %v1234 = vld [vmem:[#allocation2 + $0x78] sm:$0xff]
  %v1235 = vld [vmem:[#allocation2 + $0x80] sm:$0xff]
  %v1236 = vld [vmem:[#allocation2 + $0x88] sm:$0xff]
  %v1237 = vld [vmem:[#allocation2 + $0x90] sm:$0xff]
  %v1238 = vld [vmem:[#allocation2 + $0x98] sm:$0xff]
  %v1239 = vld [vmem:[#allocation2 + $0xa0] sm:$0xff]
  %v1240 = vld [vmem:[#allocation2 + $0xa8] sm:$0xff]
  %1241 = vst.msk [vmem:[#allocation3] sm:$0xff] %vm29, %v1225
  %1242 = vst.msk [vmem:[#allocation3 + $0x10] sm:$0xff] %vm29, %v1226
  %1243 = vst.msk [vmem:[#allocation3 + $0x20] sm:$0xff] %vm29, %v1227
  %1244 = vst.msk [vmem:[#allocation3 + $0x30] sm:$0xff] %vm29, %v1228
  %1245 = vst.msk [vmem:[#allocation3 + $0x40] sm:$0xff] %vm29, %v1229
  %1246 = vst.msk [vmem:[#allocation3 + $0x50] sm:$0xff] %vm29, %v1230
  %1247 = vst.msk [vmem:[#allocation3 + $0x60] sm:$0xff] %vm29, %v1231
  %1248 = vst.msk [vmem:[#allocation3 + $0x70] sm:$0xff] %vm29, %v1232
  %1249 = vst.msk [vmem:[#allocation3 + $0x80] sm:$0xff] %vm29, %v1233
  %1250 = vst.msk [vmem:[#allocation3 + $0x90] sm:$0xff] %vm29, %v1234
  %1251 = vst.msk [vmem:[#allocation3 + $0xa0] sm:$0xff] %vm29, %v1235
  %1252 = vst.msk [vmem:[#allocation3 + $0xb0] sm:$0xff] %vm29, %v1236
  %1253 = vst.msk [vmem:[#allocation3 + $0xc0] sm:$0xff] %vm29, %v1237
  %1254 = vst.msk [vmem:[#allocation3 + $0xd0] sm:$0xff] %vm29, %v1238
  %1255 = vst.msk [vmem:[#allocation3 + $0xe0] sm:$0xff] %vm29, %v1239
  %1256 = vst.msk [vmem:[#allocation3 + $0xf0] sm:$0xff] %vm29, %v1240
  %v1257 = vld [vmem:[#allocation2 + $0x28] sm:$0xff]
  %v1258 = vld [vmem:[#allocation2 + $0x30] sm:$0xff]
  %v1259 = vld [vmem:[#allocation2 + $0x38] sm:$0xff]
  %v1260 = vld [vmem:[#allocation2 + $0x40] sm:$0xff]
  %v1261 = vld [vmem:[#allocation2 + $0x48] sm:$0xff]
  %v1262 = vld [vmem:[#allocation2 + $0x50] sm:$0xff]
  %v1263 = vld [vmem:[#allocation2 + $0x58] sm:$0xff]
  %v1264 = vld [vmem:[#allocation2 + $0x60] sm:$0xff]
  %v1265 = vld [vmem:[#allocation2 + $0x68] sm:$0xff]
  %v1266 = vld [vmem:[#allocation2 + $0x70] sm:$0xff]
  %v1267 = vld [vmem:[#allocation2 + $0x78] sm:$0xff]
  %v1268 = vld [vmem:[#allocation2 + $0x80] sm:$0xff]
  %v1269 = vld [vmem:[#allocation2 + $0x88] sm:$0xff]
  %v1270 = vld [vmem:[#allocation2 + $0x90] sm:$0xff]
  %v1271 = vld [vmem:[#allocation2 + $0x98] sm:$0xff]
  %v1272 = vld [vmem:[#allocation2 + $0xa0] sm:$0xff]
  %1289 = vrot.lane.b32.xlu0 %v1257, 24
  %v1290 = vpop.permute.xlu0 %1289
  %1291 = vrot.lane.b32.xlu0 %v1258, 24
  %v1292 = vpop.permute.xlu0 %1291
  %1293 = vrot.lane.b32.xlu0 %v1259, 24
  %v1294 = vpop.permute.xlu0 %1293
  %1295 = vrot.lane.b32.xlu0 %v1260, 24
  %v1296 = vpop.permute.xlu0 %1295
  %1297 = vrot.lane.b32.xlu0 %v1261, 24
  %v1298 = vpop.permute.xlu0 %1297
  %1299 = vrot.lane.b32.xlu0 %v1262, 24
  %v1300 = vpop.permute.xlu0 %1299
  %1301 = vrot.lane.b32.xlu0 %v1263, 24
  %v1302 = vpop.permute.xlu0 %1301
  %1303 = vrot.lane.b32.xlu0 %v1264, 24
  %v1304 = vpop.permute.xlu0 %1303
  %1305 = vrot.lane.b32.xlu0 %v1265, 24
  %v1306 = vpop.permute.xlu0 %1305
  %1307 = vrot.lane.b32.xlu0 %v1266, 24
  %v1308 = vpop.permute.xlu0 %1307
  %1309 = vrot.lane.b32.xlu0 %v1267, 24
  %v1310 = vpop.permute.xlu0 %1309
  %1311 = vrot.lane.b32.xlu0 %v1268, 24
  %v1312 = vpop.permute.xlu0 %1311
  %1313 = vrot.lane.b32.xlu0 %v1269, 24
  %v1314 = vpop.permute.xlu0 %1313
  %1315 = vrot.lane.b32.xlu0 %v1270, 24
  %v1316 = vpop.permute.xlu0 %1315
  %1317 = vrot.lane.b32.xlu0 %v1271, 24
  %v1318 = vpop.permute.xlu0 %1317
  %1319 = vrot.lane.b32.xlu0 %v1272, 24
  %v1320 = vpop.permute.xlu0 %1319
  %1337 = vst.msk [vmem:[#allocation3] sm:$0xff] %vm198, %v1290
  %1338 = vst.msk [vmem:[#allocation3 + $0x10] sm:$0xff] %vm198, %v1292
  %1339 = vst.msk [vmem:[#allocation3 + $0x20] sm:$0xff] %vm198, %v1294
  %1340 = vst.msk [vmem:[#allocation3 + $0x30] sm:$0xff] %vm198, %v1296
  %1341 = vst.msk [vmem:[#allocation3 + $0x40] sm:$0xff] %vm198, %v1298
  %1342 = vst.msk [vmem:[#allocation3 + $0x50] sm:$0xff] %vm198, %v1300
  %1343 = vst.msk [vmem:[#allocation3 + $0x60] sm:$0xff] %vm198, %v1302
  %1344 = vst.msk [vmem:[#allocation3 + $0x70] sm:$0xff] %vm198, %v1304
  %1345 = vst.msk [vmem:[#allocation3 + $0x80] sm:$0xff] %vm198, %v1306
  %1346 = vst.msk [vmem:[#allocation3 + $0x90] sm:$0xff] %vm198, %v1308
  %1347 = vst.msk [vmem:[#allocation3 + $0xa0] sm:$0xff] %vm198, %v1310
  %1348 = vst.msk [vmem:[#allocation3 + $0xb0] sm:$0xff] %vm198, %v1312
  %1349 = vst.msk [vmem:[#allocation3 + $0xc0] sm:$0xff] %vm198, %v1314
  %1350 = vst.msk [vmem:[#allocation3 + $0xd0] sm:$0xff] %vm198, %v1316
  %1351 = vst.msk [vmem:[#allocation3 + $0xe0] sm:$0xff] %vm198, %v1318
  %1352 = vst.msk [vmem:[#allocation3 + $0xf0] sm:$0xff] %vm198, %v1320
  %v1353 = vld [vmem:[#allocation2 + $0x20] sm:$0xff]
  %v1354 = vld [vmem:[#allocation2 + $0x28] sm:$0xff]
  %v1355 = vld [vmem:[#allocation2 + $0x30] sm:$0xff]
  %v1356 = vld [vmem:[#allocation2 + $0x38] sm:$0xff]
  %v1357 = vld [vmem:[#allocation2 + $0x40] sm:$0xff]
  %v1358 = vld [vmem:[#allocation2 + $0x48] sm:$0xff]
  %v1359 = vld [vmem:[#allocation2 + $0x50] sm:$0xff]
  %v1360 = vld [vmem:[#allocation2 + $0x58] sm:$0xff]
  %v1361 = vld [vmem:[#allocation2 + $0x60] sm:$0xff]
  %v1362 = vld [vmem:[#allocation2 + $0x68] sm:$0xff]
  %v1363 = vld [vmem:[#allocation2 + $0x70] sm:$0xff]
  %v1364 = vld [vmem:[#allocation2 + $0x78] sm:$0xff]
  %v1365 = vld [vmem:[#allocation2 + $0x80] sm:$0xff]
  %v1366 = vld [vmem:[#allocation2 + $0x88] sm:$0xff]
  %v1367 = vld [vmem:[#allocation2 + $0x90] sm:$0xff]
  %v1368 = vld [vmem:[#allocation2 + $0x98] sm:$0xff]
  %1385 = vrot.lane.b32.xlu0 %v1353, 48
  %v1386 = vpop.permute.xlu0 %1385
  %1387 = vrot.lane.b32.xlu0 %v1354, 48
  %v1388 = vpop.permute.xlu0 %1387
  %1389 = vrot.lane.b32.xlu0 %v1355, 48
  %v1390 = vpop.permute.xlu0 %1389
  %1391 = vrot.lane.b32.xlu0 %v1356, 48
  %v1392 = vpop.permute.xlu0 %1391
  %1393 = vrot.lane.b32.xlu0 %v1357, 48
  %v1394 = vpop.permute.xlu0 %1393
  %1395 = vrot.lane.b32.xlu0 %v1358, 48
  %v1396 = vpop.permute.xlu0 %1395
  %1397 = vrot.lane.b32.xlu0 %v1359, 48
  %v1398 = vpop.permute.xlu0 %1397
  %1399 = vrot.lane.b32.xlu0 %v1360, 48
  %v1400 = vpop.permute.xlu0 %1399
  %1401 = vrot.lane.b32.xlu0 %v1361, 48
  %v1402 = vpop.permute.xlu0 %1401
  %1403 = vrot.lane.b32.xlu0 %v1362, 48
  %v1404 = vpop.permute.xlu0 %1403
  %1405 = vrot.lane.b32.xlu0 %v1363, 48
  %v1406 = vpop.permute.xlu0 %1405
  %1407 = vrot.lane.b32.xlu0 %v1364, 48
  %v1408 = vpop.permute.xlu0 %1407
  %1409 = vrot.lane.b32.xlu0 %v1365, 48
  %v1410 = vpop.permute.xlu0 %1409
  %1411 = vrot.lane.b32.xlu0 %v1366, 48
  %v1412 = vpop.permute.xlu0 %1411
  %1413 = vrot.lane.b32.xlu0 %v1367, 48
  %v1414 = vpop.permute.xlu0 %1413
  %1415 = vrot.lane.b32.xlu0 %v1368, 48
  %v1416 = vpop.permute.xlu0 %1415
  %1433 = vst.msk [vmem:[#allocation3] sm:$0xff] %vm295, %v1386
  %1434 = vst.msk [vmem:[#allocation3 + $0x10] sm:$0xff] %vm295, %v1388
  %1435 = vst.msk [vmem:[#allocation3 + $0x20] sm:$0xff] %vm295, %v1390
  %1436 = vst.msk [vmem:[#allocation3 + $0x30] sm:$0xff] %vm295, %v1392
  %1437 = vst.msk [vmem:[#allocation3 + $0x40] sm:$0xff] %vm295, %v1394
  %1438 = vst.msk [vmem:[#allocation3 + $0x50] sm:$0xff] %vm295, %v1396
  %1439 = vst.msk [vmem:[#allocation3 + $0x60] sm:$0xff] %vm295, %v1398
  %1440 = vst.msk [vmem:[#allocation3 + $0x70] sm:$0xff] %vm295, %v1400
  %1441 = vst.msk [vmem:[#allocation3 + $0x80] sm:$0xff] %vm295, %v1402
  %1442 = vst.msk [vmem:[#allocation3 + $0x90] sm:$0xff] %vm295, %v1404
  %1443 = vst.msk [vmem:[#allocation3 + $0xa0] sm:$0xff] %vm295, %v1406
  %1444 = vst.msk [vmem:[#allocation3 + $0xb0] sm:$0xff] %vm295, %v1408
  %1445 = vst.msk [vmem:[#allocation3 + $0xc0] sm:$0xff] %vm295, %v1410
  %1446 = vst.msk [vmem:[#allocation3 + $0xd0] sm:$0xff] %vm295, %v1412
  %1447 = vst.msk [vmem:[#allocation3 + $0xe0] sm:$0xff] %vm295, %v1414
  %1448 = vst.msk [vmem:[#allocation3 + $0xf0] sm:$0xff] %vm295, %v1416
  %v1449 = vld [vmem:[#allocation2 + $0x18] sm:$0xff]
  %v1450 = vld [vmem:[#allocation2 + $0x20] sm:$0xff]
  %v1451 = vld [vmem:[#allocation2 + $0x28] sm:$0xff]
  %v1452 = vld [vmem:[#allocation2 + $0x30] sm:$0xff]
  %v1453 = vld [vmem:[#allocation2 + $0x38] sm:$0xff]
  %v1454 = vld [vmem:[#allocation2 + $0x40] sm:$0xff]
  %v1455 = vld [vmem:[#allocation2 + $0x48] sm:$0xff]
  %v1456 = vld [vmem:[#allocation2 + $0x50] sm:$0xff]
  %v1457 = vld [vmem:[#allocation2 + $0x58] sm:$0xff]
  %v1458 = vld [vmem:[#allocation2 + $0x60] sm:$0xff]
  %v1459 = vld [vmem:[#allocation2 + $0x68] sm:$0xff]
  %v1460 = vld [vmem:[#allocation2 + $0x70] sm:$0xff]
  %v1461 = vld [vmem:[#allocation2 + $0x78] sm:$0xff]
  %v1462 = vld [vmem:[#allocation2 + $0x80] sm:$0xff]
  %v1463 = vld [vmem:[#allocation2 + $0x88] sm:$0xff]
  %v1464 = vld [vmem:[#allocation2 + $0x90] sm:$0xff]
  %1481 = vrot.lane.b32.xlu0 %v1449, 72
  %v1482 = vpop.permute.xlu0 %1481
  %1483 = vrot.lane.b32.xlu0 %v1450, 72
  %v1484 = vpop.permute.xlu0 %1483
  %1485 = vrot.lane.b32.xlu0 %v1451, 72
  %v1486 = vpop.permute.xlu0 %1485
  %1487 = vrot.lane.b32.xlu0 %v1452, 72
  %v1488 = vpop.permute.xlu0 %1487
  %1489 = vrot.lane.b32.xlu0 %v1453, 72
  %v1490 = vpop.permute.xlu0 %1489
  %1491 = vrot.lane.b32.xlu0 %v1454, 72
  %v1492 = vpop.permute.xlu0 %1491
  %1493 = vrot.lane.b32.xlu0 %v1455, 72
  %v1494 = vpop.permute.xlu0 %1493
  %1495 = vrot.lane.b32.xlu0 %v1456, 72
  %v1496 = vpop.permute.xlu0 %1495
  %1497 = vrot.lane.b32.xlu0 %v1457, 72
  %v1498 = vpop.permute.xlu0 %1497
  %1499 = vrot.lane.b32.xlu0 %v1458, 72
  %v1500 = vpop.permute.xlu0 %1499
  %1501 = vrot.lane.b32.xlu0 %v1459, 72
  %v1502 = vpop.permute.xlu0 %1501
  %1503 = vrot.lane.b32.xlu0 %v1460, 72
  %v1504 = vpop.permute.xlu0 %1503
  %1505 = vrot.lane.b32.xlu0 %v1461, 72
  %v1506 = vpop.permute.xlu0 %1505
  %1507 = vrot.lane.b32.xlu0 %v1462, 72
  %v1508 = vpop.permute.xlu0 %1507
  %1509 = vrot.lane.b32.xlu0 %v1463, 72
  %v1510 = vpop.permute.xlu0 %1509
  %1511 = vrot.lane.b32.xlu0 %v1464, 72
  %v1512 = vpop.permute.xlu0 %1511
  %1529 = vst.msk [vmem:[#allocation3] sm:$0xff] %vm392, %v1482
  %1530 = vst.msk [vmem:[#allocation3 + $0x10] sm:$0xff] %vm392, %v1484
  %1531 = vst.msk [vmem:[#allocation3 + $0x20] sm:$0xff] %vm392, %v1486
  %1532 = vst.msk [vmem:[#allocation3 + $0x30] sm:$0xff] %vm392, %v1488
  %1533 = vst.msk [vmem:[#allocation3 + $0x40] sm:$0xff] %vm392, %v1490
  %1534 = vst.msk [vmem:[#allocation3 + $0x50] sm:$0xff] %vm392, %v1492
  %1535 = vst.msk [vmem:[#allocation3 + $0x60] sm:$0xff] %vm392, %v1494
  %1536 = vst.msk [vmem:[#allocation3 + $0x70] sm:$0xff] %vm392, %v1496
  %1537 = vst.msk [vmem:[#allocation3 + $0x80] sm:$0xff] %vm392, %v1498
  %1538 = vst.msk [vmem:[#allocation3 + $0x90] sm:$0xff] %vm392, %v1500
  %1539 = vst.msk [vmem:[#allocation3 + $0xa0] sm:$0xff] %vm392, %v1502
  %1540 = vst.msk [vmem:[#allocation3 + $0xb0] sm:$0xff] %vm392, %v1504
  %1541 = vst.msk [vmem:[#allocation3 + $0xc0] sm:$0xff] %vm392, %v1506
  %1542 = vst.msk [vmem:[#allocation3 + $0xd0] sm:$0xff] %vm392, %v1508
  %1543 = vst.msk [vmem:[#allocation3 + $0xe0] sm:$0xff] %vm392, %v1510
  %1544 = vst.msk [vmem:[#allocation3 + $0xf0] sm:$0xff] %vm392, %v1512
  %v1545 = vld [vmem:[#allocation2 + $0x10] sm:$0xff]
  %v1546 = vld [vmem:[#allocation2 + $0x18] sm:$0xff]
  %v1547 = vld [vmem:[#allocation2 + $0x20] sm:$0xff]
  %v1548 = vld [vmem:[#allocation2 + $0x28] sm:$0xff]
  %v1549 = vld [vmem:[#allocation2 + $0x30] sm:$0xff]
  %v1550 = vld [vmem:[#allocation2 + $0x38] sm:$0xff]
  %v1551 = vld [vmem:[#allocation2 + $0x40] sm:$0xff]
  %v1552 = vld [vmem:[#allocation2 + $0x48] sm:$0xff]
  %v1553 = vld [vmem:[#allocation2 + $0x50] sm:$0xff]
  %v1554 = vld [vmem:[#allocation2 + $0x58] sm:$0xff]
  %v1555 = vld [vmem:[#allocation2 + $0x60] sm:$0xff]
  %v1556 = vld [vmem:[#allocation2 + $0x68] sm:$0xff]
  %v1557 = vld [vmem:[#allocation2 + $0x70] sm:$0xff]
  %v1558 = vld [vmem:[#allocation2 + $0x78] sm:$0xff]
  %v1559 = vld [vmem:[#allocation2 + $0x80] sm:$0xff]
  %v1560 = vld [vmem:[#allocation2 + $0x88] sm:$0xff]
  %1577 = vrot.lane.b32.xlu0 %v1545, 96
  %v1578 = vpop.permute.xlu0 %1577
  %1579 = vrot.lane.b32.xlu0 %v1546, 96
  %v1580 = vpop.permute.xlu0 %1579
  %1581 = vrot.lane.b32.xlu0 %v1547, 96
  %v1582 = vpop.permute.xlu0 %1581
  %1583 = vrot.lane.b32.xlu0 %v1548, 96
  %v1584 = vpop.permute.xlu0 %1583
  %1585 = vrot.lane.b32.xlu0 %v1549, 96
  %v1586 = vpop.permute.xlu0 %1585
  %1587 = vrot.lane.b32.xlu0 %v1550, 96
  %v1588 = vpop.permute.xlu0 %1587
  %1589 = vrot.lane.b32.xlu0 %v1551, 96
  %v1590 = vpop.permute.xlu0 %1589
  %1591 = vrot.lane.b32.xlu0 %v1552, 96
  %v1592 = vpop.permute.xlu0 %1591
  %1593 = vrot.lane.b32.xlu0 %v1553, 96
  %v1594 = vpop.permute.xlu0 %1593
  %1595 = vrot.lane.b32.xlu0 %v1554, 96
  %v1596 = vpop.permute.xlu0 %1595
  %1597 = vrot.lane.b32.xlu0 %v1555, 96
  %v1598 = vpop.permute.xlu0 %1597
  %1599 = vrot.lane.b32.xlu0 %v1556, 96
  %v1600 = vpop.permute.xlu0 %1599
  %1601 = vrot.lane.b32.xlu0 %v1557, 96
  %v1602 = vpop.permute.xlu0 %1601
  %1603 = vrot.lane.b32.xlu0 %v1558, 96
  %v1604 = vpop.permute.xlu0 %1603
  %1605 = vrot.lane.b32.xlu0 %v1559, 96
  %v1606 = vpop.permute.xlu0 %1605
  %1607 = vrot.lane.b32.xlu0 %v1560, 96
  %v1608 = vpop.permute.xlu0 %1607
  %1625 = vst.msk [vmem:[#allocation3] sm:$0xff] %vm489, %v1578
  %1626 = vst.msk [vmem:[#allocation3 + $0x10] sm:$0xff] %vm489, %v1580
  %1627 = vst.msk [vmem:[#allocation3 + $0x20] sm:$0xff] %vm489, %v1582
  %1628 = vst.msk [vmem:[#allocation3 + $0x30] sm:$0xff] %vm489, %v1584
  %1629 = vst.msk [vmem:[#allocation3 + $0x40] sm:$0xff] %vm489, %v1586
  %1630 = vst.msk [vmem:[#allocation3 + $0x50] sm:$0xff] %vm489, %v1588
  %1631 = vst.msk [vmem:[#allocation3 + $0x60] sm:$0xff] %vm489, %v1590
  %1632 = vst.msk [vmem:[#allocation3 + $0x70] sm:$0xff] %vm489, %v1592
  %1633 = vst.msk [vmem:[#allocation3 + $0x80] sm:$0xff] %vm489, %v1594
  %1634 = vst.msk [vmem:[#allocation3 + $0x90] sm:$0xff] %vm489, %v1596
  %1635 = vst.msk [vmem:[#allocation3 + $0xa0] sm:$0xff] %vm489, %v1598
  %1636 = vst.msk [vmem:[#allocation3 + $0xb0] sm:$0xff] %vm489, %v1600
  %1637 = vst.msk [vmem:[#allocation3 + $0xc0] sm:$0xff] %vm489, %v1602
  %1638 = vst.msk [vmem:[#allocation3 + $0xd0] sm:$0xff] %vm489, %v1604
  %1639 = vst.msk [vmem:[#allocation3 + $0xe0] sm:$0xff] %vm489, %v1606
  %1640 = vst.msk [vmem:[#allocation3 + $0xf0] sm:$0xff] %vm489, %v1608
  %v1641 = vld [vmem:[#allocation2 + $0x8] sm:$0xff]
  %v1642 = vld [vmem:[#allocation2 + $0x10] sm:$0xff]
  %v1643 = vld [vmem:[#allocation2 + $0x18] sm:$0xff]
  %v1644 = vld [vmem:[#allocation2 + $0x20] sm:$0xff]
  %v1645 = vld [vmem:[#allocation2 + $0x28] sm:$0xff]
  %v1646 = vld [vmem:[#allocation2 + $0x30] sm:$0xff]
  %v1647 = vld [vmem:[#allocation2 + $0x38] sm:$0xff]
  %v1648 = vld [vmem:[#allocation2 + $0x40] sm:$0xff]
  %v1649 = vld [vmem:[#allocation2 + $0x48] sm:$0xff]
  %v1650 = vld [vmem:[#allocation2 + $0x50] sm:$0xff]
  %v1651 = vld [vmem:[#allocation2 + $0x58] sm:$0xff]
  %v1652 = vld [vmem:[#allocation2 + $0x60] sm:$0xff]
  %v1653 = vld [vmem:[#allocation2 + $0x68] sm:$0xff]
  %v1654 = vld [vmem:[#allocation2 + $0x70] sm:$0xff]
  %v1655 = vld [vmem:[#allocation2 + $0x78] sm:$0xff]
  %v1656 = vld [vmem:[#allocation2 + $0x80] sm:$0xff]
  %1673 = vrot.lane.b32.xlu0 %v1641, 120
  %v1674 = vpop.permute.xlu0 %1673
  %1675 = vrot.lane.b32.xlu0 %v1642, 120
  %v1676 = vpop.permute.xlu0 %1675
  %1677 = vrot.lane.b32.xlu0 %v1643, 120
  %v1678 = vpop.permute.xlu0 %1677
  %1679 = vrot.lane.b32.xlu0 %v1644, 120
  %v1680 = vpop.permute.xlu0 %1679
  %1681 = vrot.lane.b32.xlu0 %v1645, 120
  %v1682 = vpop.permute.xlu0 %1681
  %1683 = vrot.lane.b32.xlu0 %v1646, 120
  %v1684 = vpop.permute.xlu0 %1683
  %1685 = vrot.lane.b32.xlu0 %v1647, 120
  %v1686 = vpop.permute.xlu0 %1685
  %1687 = vrot.lane.b32.xlu0 %v1648, 120
  %v1688 = vpop.permute.xlu0 %1687
  %1689 = vrot.lane.b32.xlu0 %v1649, 120
  %v1690 = vpop.permute.xlu0 %1689
  %1691 = vrot.lane.b32.xlu0 %v1650, 120
  %v1692 = vpop.permute.xlu0 %1691
  %1693 = vrot.lane.b32.xlu0 %v1651, 120
  %v1694 = vpop.permute.xlu0 %1693
  %1695 = vrot.lane.b32.xlu0 %v1652, 120
  %v1696 = vpop.permute.xlu0 %1695
  %1697 = vrot.lane.b32.xlu0 %v1653, 120
  %v1698 = vpop.permute.xlu0 %1697
  %1699 = vrot.lane.b32.xlu0 %v1654, 120
  %v1700 = vpop.permute.xlu0 %1699
  %1701 = vrot.lane.b32.xlu0 %v1655, 120
  %v1702 = vpop.permute.xlu0 %1701
  %1703 = vrot.lane.b32.xlu0 %v1656, 120
  %v1704 = vpop.permute.xlu0 %1703
  %1721 = vst.msk [vmem:[#allocation3] sm:$0xff] %vm586, %v1674
  %1722 = vst.msk [vmem:[#allocation3 + $0x8] sm:$0xff] %vm588, %v1674
  %1723 = vst.msk [vmem:[#allocation3 + $0x10] sm:$0xff] %vm586, %v1676
  %1724 = vst.msk [vmem:[#allocation3 + $0x18] sm:$0xff] %vm588, %v1676
  %1725 = vst.msk [vmem:[#allocation3 + $0x20] sm:$0xff] %vm586, %v1678
  %1726 = vst.msk [vmem:[#allocation3 + $0x28] sm:$0xff] %vm588, %v1678
  %1727 = vst.msk [vmem:[#allocation3 + $0x30] sm:$0xff] %vm586, %v1680
  %1728 = vst.msk [vmem:[#allocation3 + $0x38] sm:$0xff] %vm588, %v1680
  %1729 = vst.msk [vmem:[#allocation3 + $0x40] sm:$0xff] %vm586, %v1682
  %1730 = vst.msk [vmem:[#allocation3 + $0x48] sm:$0xff] %vm588, %v1682
  %1731 = vst.msk [vmem:[#allocation3 + $0x50] sm:$0xff] %vm586, %v1684
  %1732 = vst.msk [vmem:[#allocation3 + $0x58] sm:$0xff] %vm588, %v1684
  %1733 = vst.msk [vmem:[#allocation3 + $0x60] sm:$0xff] %vm586, %v1686
  %1734 = vst.msk [vmem:[#allocation3 + $0x68] sm:$0xff] %vm588, %v1686
  %1735 = vst.msk [vmem:[#allocation3 + $0x70] sm:$0xff] %vm586, %v1688
  %1736 = vst.msk [vmem:[#allocation3 + $0x78] sm:$0xff] %vm588, %v1688
  %1737 = vst.msk [vmem:[#allocation3 + $0x80] sm:$0xff] %vm586, %v1690
  %1738 = vst.msk [vmem:[#allocation3 + $0x88] sm:$0xff] %vm588, %v1690
  %1739 = vst.msk [vmem:[#allocation3 + $0x90] sm:$0xff] %vm586, %v1692
  %1740 = vst.msk [vmem:[#allocation3 + $0x98] sm:$0xff] %vm588, %v1692
  %1741 = vst.msk [vmem:[#allocation3 + $0xa0] sm:$0xff] %vm586, %v1694
  %1742 = vst.msk [vmem:[#allocation3 + $0xa8] sm:$0xff] %vm588, %v1694
  %1743 = vst.msk [vmem:[#allocation3 + $0xb0] sm:$0xff] %vm586, %v1696
  %1744 = vst.msk [vmem:[#allocation3 + $0xb8] sm:$0xff] %vm588, %v1696
  %1745 = vst.msk [vmem:[#allocation3 + $0xc0] sm:$0xff] %vm586, %v1698
  %1746 = vst.msk [vmem:[#allocation3 + $0xc8] sm:$0xff] %vm588, %v1698
  %1747 = vst.msk [vmem:[#allocation3 + $0xd0] sm:$0xff] %vm586, %v1700
  %1748 = vst.msk [vmem:[#allocation3 + $0xd8] sm:$0xff] %vm588, %v1700
  %1749 = vst.msk [vmem:[#allocation3 + $0xe0] sm:$0xff] %vm586, %v1702
  %1750 = vst.msk [vmem:[#allocation3 + $0xe8] sm:$0xff] %vm588, %v1702
  %1751 = vst.msk [vmem:[#allocation3 + $0xf0] sm:$0xff] %vm586, %v1704
  %1752 = vst.msk [vmem:[#allocation3 + $0xf8] sm:$0xff] %vm588, %v1704
  %v1753 = vld [vmem:[#allocation2] sm:$0xff]
  %v1754 = vld [vmem:[#allocation2 + $0x8] sm:$0xff]
  %v1755 = vld [vmem:[#allocation2 + $0x10] sm:$0xff]
  %v1756 = vld [vmem:[#allocation2 + $0x18] sm:$0xff]
  %v1757 = vld [vmem:[#allocation2 + $0x20] sm:$0xff]
  %v1758 = vld [vmem:[#allocation2 + $0x28] sm:$0xff]
  %v1759 = vld [vmem:[#allocation2 + $0x30] sm:$0xff]
  %v1760 = vld [vmem:[#allocation2 + $0x38] sm:$0xff]
  %v1761 = vld [vmem:[#allocation2 + $0x40] sm:$0xff]
  %v1762 = vld [vmem:[#allocation2 + $0x48] sm:$0xff]
  %v1763 = vld [vmem:[#allocation2 + $0x50] sm:$0xff]
  %v1764 = vld [vmem:[#allocation2 + $0x58] sm:$0xff]
  %v1765 = vld [vmem:[#allocation2 + $0x60] sm:$0xff]
  %v1766 = vld [vmem:[#allocation2 + $0x68] sm:$0xff]
  %v1767 = vld [vmem:[#allocation2 + $0x70] sm:$0xff]
  %v1768 = vld [vmem:[#allocation2 + $0x78] sm:$0xff]
  %1785 = vrot.lane.b32.xlu0 %v1753, 16
  %v1786 = vpop.permute.xlu0 %1785
  %1787 = vrot.lane.b32.xlu0 %v1754, 16
  %v1788 = vpop.permute.xlu0 %1787
  %1789 = vrot.lane.b32.xlu0 %v1755, 16
  %v1790 = vpop.permute.xlu0 %1789
  %1791 = vrot.lane.b32.xlu0 %v1756, 16
  %v1792 = vpop.permute.xlu0 %1791
  %1793 = vrot.lane.b32.xlu0 %v1757, 16
  %v1794 = vpop.permute.xlu0 %1793
  %1795 = vrot.lane.b32.xlu0 %v1758, 16
  %v1796 = vpop.permute.xlu0 %1795
  %1797 = vrot.lane.b32.xlu0 %v1759, 16
  %v1798 = vpop.permute.xlu0 %1797
  %1799 = vrot.lane.b32.xlu0 %v1760, 16
  %v1800 = vpop.permute.xlu0 %1799
  %1801 = vrot.lane.b32.xlu0 %v1761, 16
  %v1802 = vpop.permute.xlu0 %1801
  %1803 = vrot.lane.b32.xlu0 %v1762, 16
  %v1804 = vpop.permute.xlu0 %1803
  %1805 = vrot.lane.b32.xlu0 %v1763, 16
  %v1806 = vpop.permute.xlu0 %1805
  %1807 = vrot.lane.b32.xlu0 %v1764, 16
  %v1808 = vpop.permute.xlu0 %1807
  %1809 = vrot.lane.b32.xlu0 %v1765, 16
  %v1810 = vpop.permute.xlu0 %1809
  %1811 = vrot.lane.b32.xlu0 %v1766, 16
  %v1812 = vpop.permute.xlu0 %1811
  %1813 = vrot.lane.b32.xlu0 %v1767, 16
  %v1814 = vpop.permute.xlu0 %1813
  %1815 = vrot.lane.b32.xlu0 %v1768, 16
  %v1816 = vpop.permute.xlu0 %1815
  %1833 = vst.msk [vmem:[#allocation3 + $0x8] sm:$0xff] %vm700, %v1786
  %1834 = vst.msk [vmem:[#allocation3 + $0x18] sm:$0xff] %vm700, %v1788
  %1835 = vst.msk [vmem:[#allocation3 + $0x28] sm:$0xff] %vm700, %v1790
  %1836 = vst.msk [vmem:[#allocation3 + $0x38] sm:$0xff] %vm700, %v1792
  %1837 = vst.msk [vmem:[#allocation3 + $0x48] sm:$0xff] %vm700, %v1794
  %1838 = vst.msk [vmem:[#allocation3 + $0x58] sm:$0xff] %vm700, %v1796
  %1839 = vst.msk [vmem:[#allocation3 + $0x68] sm:$0xff] %vm700, %v1798
  %1840 = vst.msk [vmem:[#allocation3 + $0x78] sm:$0xff] %vm700, %v1800
  %1841 = vst.msk [vmem:[#allocation3 + $0x88] sm:$0xff] %vm700, %v1802
  %1842 = vst.msk [vmem:[#allocation3 + $0x98] sm:$0xff] %vm700, %v1804
  %1843 = vst.msk [vmem:[#allocation3 + $0xa8] sm:$0xff] %vm700, %v1806
  %1844 = vst.msk [vmem:[#allocation3 + $0xb8] sm:$0xff] %vm700, %v1808
  %1845 = vst.msk [vmem:[#allocation3 + $0xc8] sm:$0xff] %vm700, %v1810
  %1846 = vst.msk [vmem:[#allocation3 + $0xd8] sm:$0xff] %vm700, %v1812
  %1847 = vst.msk [vmem:[#allocation3 + $0xe8] sm:$0xff] %vm700, %v1814
  %1848 = vst.msk [vmem:[#allocation3 + $0xf8] sm:$0xff] %vm700, %v1816
  %v1849 = vld [vmem:[#allocation3] sm:$0xff]
  %v1850 = vld [vmem:[#allocation3 + $0x8] sm:$0xff]
  %v1851 = vld [vmem:[#allocation3 + $0x10] sm:$0xff]
  %v1852 = vld [vmem:[#allocation3 + $0x18] sm:$0xff]
  %v1853 = vld [vmem:[#allocation3 + $0x20] sm:$0xff]
  %v1854 = vld [vmem:[#allocation3 + $0x28] sm:$0xff]
  %v1855 = vld [vmem:[#allocation3 + $0x30] sm:$0xff]
  %v1856 = vld [vmem:[#allocation3 + $0x38] sm:$0xff]
  %v1857 = vld [vmem:[#allocation3 + $0x40] sm:$0xff]
  %v1858 = vld [vmem:[#allocation3 + $0x48] sm:$0xff]
  %v1859 = vld [vmem:[#allocation3 + $0x50] sm:$0xff]
  %v1860 = vld [vmem:[#allocation3 + $0x58] sm:$0xff]
  %v1861 = vld [vmem:[#allocation3 + $0x60] sm:$0xff]
  %v1862 = vld [vmem:[#allocation3 + $0x68] sm:$0xff]
  %v1863 = vld [vmem:[#allocation3 + $0x70] sm:$0xff]
  %v1864 = vld [vmem:[#allocation3 + $0x78] sm:$0xff]
  %v1865 = vld [vmem:[#allocation3 + $0x80] sm:$0xff]
  %v1866 = vld [vmem:[#allocation3 + $0x88] sm:$0xff]
  %v1867 = vld [vmem:[#allocation3 + $0x90] sm:$0xff]
  %v1868 = vld [vmem:[#allocation3 + $0x98] sm:$0xff]
  %v1869 = vld [vmem:[#allocation3 + $0xa0] sm:$0xff]
  %v1870 = vld [vmem:[#allocation3 + $0xa8] sm:$0xff]
  %v1871 = vld [vmem:[#allocation3 + $0xb0] sm:$0xff]
  %v1872 = vld [vmem:[#allocation3 + $0xb8] sm:$0xff]
  %v1873 = vld [vmem:[#allocation3 + $0xc0] sm:$0xff]
  %v1874 = vld [vmem:[#allocation3 + $0xc8] sm:$0xff]
  %v1875 = vld [vmem:[#allocation3 + $0xd0] sm:$0xff]
  %v1876 = vld [vmem:[#allocation3 + $0xd8] sm:$0xff]
  %v1877 = vld [vmem:[#allocation3 + $0xe0] sm:$0xff]
  %v1878 = vld [vmem:[#allocation3 + $0xe8] sm:$0xff]
  %v1879 = vld [vmem:[#allocation3 + $0xf0] sm:$0xff]
  %v1880 = vld [vmem:[#allocation3 + $0xf8] sm:$0xff]
  %s1881 = scalar_lea.vmem %s1, 168
  %v1882 = vld [vmem:[%s1881] sm:$0xff]
  %v1883 = vld [vmem:[%s1881 + $0x8] sm:$0xff]
  %v1884 = vld [vmem:[%s1881 + $0x10] sm:$0xff]
  %v1885 = vld [vmem:[%s1881 + $0x18] sm:$0xff]
  %v1886 = vld [vmem:[%s1881 + $0x20] sm:$0xff]
  %v1887 = vld [vmem:[%s1881 + $0x28] sm:$0xff]
  %v1888 = vld [vmem:[%s1881 + $0x30] sm:$0xff]
  %v1889 = vld [vmem:[%s1881 + $0x38] sm:$0xff]
  %v1890 = vld [vmem:[%s1881 + $0x40] sm:$0xff]
  %v1891 = vld [vmem:[%s1881 + $0x48] sm:$0xff]
  %v1892 = vld [vmem:[%s1881 + $0x50] sm:$0xff]
  %v1893 = vld [vmem:[%s1881 + $0x58] sm:$0xff]
  %v1894 = vld [vmem:[%s1881 + $0x60] sm:$0xff]
  %v1895 = vld [vmem:[%s1881 + $0x68] sm:$0xff]
  %v1896 = vld [vmem:[%s1881 + $0x70] sm:$0xff]
  %v1897 = vld [vmem:[%s1881 + $0x78] sm:$0xff]
  %v1898 = vld [vmem:[%s1881 + $0x80] sm:$0xff]
  %v1899 = vld [vmem:[%s1881 + $0x88] sm:$0xff]
  %v1900 = vld [vmem:[%s1881 + $0x90] sm:$0xff]
  %v1901 = vld [vmem:[%s1881 + $0x98] sm:$0xff]
  %v1902 = vld [vmem:[%s1881 + $0xa0] sm:$0xff]
  %v1903 = vld [vmem:[%s2 + $0x1] sm:$0x1]
  %v1904 = vlaneseq
  %v1905 = vshrl.u32 %v1904, 7
  %v1906 = vsub.s32 0, %v1905
  %v1907 = vrot.slane %v1903, %v1906
  %v1909 = vsel %vm775, %v1850, 0
  %v1912 = vsel %vm775, %v1852, 0
  %v1915 = vsel %vm775, %v1854, 0
  %v1918 = vsel %vm775, %v1856, 0
  %v1921 = vsel %vm775, %v1858, 0
  %v1924 = vsel %vm775, %v1860, 0
  %v1927 = vsel %vm775, %v1862, 0
  %v1930 = vsel %vm775, %v1864, 0
  %v1933 = vsel %vm775, %v1866, 0
  %v1936 = vsel %vm775, %v1868, 0
  %v1939 = vsel %vm775, %v1870, 0
  %v1942 = vsel %vm775, %v1872, 0
  %v1945 = vsel %vm775, %v1874, 0
  %v1948 = vsel %vm775, %v1876, 0
  %v1951 = vsel %vm775, %v1878, 0
  %v1954 = vsel %vm775, %v1880, 0
  %1956 = vmatprep.subr.mxu0 0.0
  %1957 = vmatpush1.msra.mxu0 %v1882
  %1958 = vmatprep.subr.mxu0 0.0
  %1959 = vmatpush1.msra.mxu0 %v1883
  %1960 = vmatprep.subr.mxu0 0.0
  %1961 = vmatpush1.msra.mxu0 %v1884
  %1962 = vmatprep.subr.mxu0 0.0
  %1963 = vmatpush1.msra.mxu0 %v1885
  %1964 = vmatprep.subr.mxu0 0.0
  %1965 = vmatpush1.msra.mxu0 %v1886
  %1966 = vmatprep.subr.mxu0 0.0
  %1967 = vmatpush1.msra.mxu0 %v1887
  %1968 = vmatprep.subr.mxu0 0.0
  %1969 = vmatpush1.msra.mxu0 %v1888
  %1970 = vmatprep.subr.mxu0 0.0
  %1971 = vmatpush1.msra.mxu0 %v1889
  %1972 = vmatprep.subr.mxu0 0.0
  %1973 = vmatpush1.msra.mxu0 %v1890
  %1974 = vmatprep.subr.mxu0 0.0
  %1975 = vmatpush1.msra.mxu0 %v1891
  %1976 = vmatprep.subr.mxu0 0.0
  %1977 = vmatpush1.msra.mxu0 %v1892
  %1978 = vmatprep.subr.mxu0 0.0
  %1979 = vmatpush1.msra.mxu0 %v1893
  %1980 = vmatprep.subr.mxu0 0.0
  %1981 = vmatpush1.msra.mxu0 %v1894
  %1982 = vmatprep.subr.mxu0 0.0
  %1983 = vmatpush1.msra.mxu0 %v1895
  %1984 = vmatprep.subr.mxu0 0.0
  %1985 = vmatpush1.msra.mxu0 %v1896
  %1986 = vmatprep.subr.mxu0 0.0
  %1987 = vmatpush1.msra.mxu0 %v1897
  %1988 = vmatprep.subr.mxu0 0.0
  %1989 = vmatpush1.msra.mxu0 %v1898
  %1990 = vmatprep.subr.mxu0 0.0
  %1991 = vmatpush1.msra.mxu0 %v1899
  %1992 = vmatprep.subr.mxu0 0.0
  %1993 = vmatpush1.msra.mxu0 %v1900
  %1994 = vmatprep.subr.mxu0 0.0
  %1995 = vmatpush1.msra.mxu0 %v1901
  %1996 = vmatprep.subr.mxu0 0.0
  %1997 = vmatpush1.msra.mxu0 %v1902
  %1998 = vmatprep.subr.mxu0 0.0
  %1999 = vmatpush1.msra.mxu0 0.0
  %2000 = vmatprep.subr.mxu0 0.0
  %2001 = vmatpush1.msra.mxu0 0.0
  %2002 = vmatprep.subr.mxu0 0.0
  %2003 = vmatpush1.msra.mxu0 0.0
  %2004 = vmatprep.subr.mxu0 0.0
  %2005 = vmatpush1.msra.mxu0 0.0
  %2006 = vmatprep.subr.mxu0 0.0
  %2007 = vmatpush1.msra.mxu0 0.0
  %2008 = vmatprep.subr.mxu0 0.0
  %2009 = vmatpush1.msra.mxu0 0.0
  %2010 = vmatprep.subr.mxu0 0.0
  %2011 = vmatpush1.msra.mxu0 0.0
  %2012 = vmatprep.subr.mxu0 0.0
  %2013 = vmatpush1.msra.mxu0 0.0
  %2014 = vmatprep.subr.mxu0 0.0
  %2015 = vmatpush1.msra.mxu0 0.0
  %2016 = vmatprep.subr.mxu0 0.0
  %2017 = vmatpush1.msra.mxu0 0.0
  %2018 = vmatprep.subr.mxu0 0.0
  %2019 = vmatpush1.msra.mxu0 0.0
  %2020 = vmatprep.mubr.f32.mxu0 %v1909
  %2021 = vmatmul.mubr.f32.gmra.mrb[0].mxu0 %v1849
  %v2022 = vpop.f32.mrb[0].mxu0
  %v2023 = vadd.f32 %v1907, %v2022
  %v2024 = vpop.f32.mrb[0].mxu0
  %2025 = vmatprep.mubr.f32.mxu0 %v1912
  %2026 = vmatmul.mubr.f32.gmra.mrb[0].mxu0 %v1851
  %v2027 = vpop.f32.mrb[0].mxu0
  %v2028 = vadd.f32 %v1907, %v2027
  %v2029 = vpop.f32.mrb[0].mxu0
  %2030 = vmatprep.mubr.f32.mxu0 %v1915
  %2031 = vmatmul.mubr.f32.gmra.mrb[0].mxu0 %v1853
  %v2032 = vpop.f32.mrb[0].mxu0
  %v2033 = vadd.f32 %v1907, %v2032
  %v2034 = vpop.f32.mrb[0].mxu0
  %2035 = vmatprep.mubr.f32.mxu0 %v1918
  %2036 = vmatmul.mubr.f32.gmra.mrb[0].mxu0 %v1855
  %v2037 = vpop.f32.mrb[0].mxu0
  %v2038 = vadd.f32 %v1907, %v2037
  %v2039 = vpop.f32.mrb[0].mxu0
  %2040 = vmatprep.mubr.f32.mxu0 %v1921
  %2041 = vmatmul.mubr.f32.gmra.mrb[0].mxu0 %v1857
  %v2042 = vpop.f32.mrb[0].mxu0
  %v2043 = vadd.f32 %v1907, %v2042
  %v2044 = vpop.f32.mrb[0].mxu0
  %2045 = vmatprep.mubr.f32.mxu0 %v1924
  %2046 = vmatmul.mubr.f32.gmra.mrb[0].mxu0 %v1859
  %v2047 = vpop.f32.mrb[0].mxu0
  %v2048 = vadd.f32 %v1907, %v2047
  %v2049 = vpop.f32.mrb[0].mxu0
  %2050 = vmatprep.mubr.f32.mxu0 %v1927
  %2051 = vmatmul.mubr.f32.gmra.mrb[0].mxu0 %v1861
  %v2052 = vpop.f32.mrb[0].mxu0
  %v2053 = vadd.f32 %v1907, %v2052
  %v2054 = vpop.f32.mrb[0].mxu0
  %2055 = vmatprep.mubr.f32.mxu0 %v1930
  %2056 = vmatmul.mubr.f32.gmra.mrb[0].mxu0 %v1863
  %v2057 = vpop.f32.mrb[0].mxu0
  %v2058 = vadd.f32 %v1907, %v2057
  %v2059 = vpop.f32.mrb[0].mxu0
  %2060 = vmatprep.mubr.f32.mxu0 %v1933
  %2061 = vmatmul.mubr.f32.gmra.mrb[0].mxu0 %v1865
  %v2062 = vpop.f32.mrb[0].mxu0
  %v2063 = vadd.f32 %v1907, %v2062
  %v2064 = vpop.f32.mrb[0].mxu0
  %2065 = vmatprep.mubr.f32.mxu0 %v1936
  %2066 = vmatmul.mubr.f32.gmra.mrb[0].mxu0 %v1867
  %v2067 = vpop.f32.mrb[0].mxu0
  %v2068 = vadd.f32 %v1907, %v2067
  %v2069 = vpop.f32.mrb[0].mxu0
  %2070 = vmatprep.mubr.f32.mxu0 %v1939
  %2071 = vmatmul.mubr.f32.gmra.mrb[0].mxu0 %v1869
  %v2072 = vpop.f32.mrb[0].mxu0
  %v2073 = vadd.f32 %v1907, %v2072
  %v2074 = vpop.f32.mrb[0].mxu0
  %2075 = vmatprep.mubr.f32.mxu0 %v1942
  %2076 = vmatmul.mubr.f32.gmra.mrb[0].mxu0 %v1871
  %v2077 = vpop.f32.mrb[0].mxu0
  %v2078 = vadd.f32 %v1907, %v2077
  %v2079 = vpop.f32.mrb[0].mxu0
  %2080 = vmatprep.mubr.f32.mxu0 %v1945
  %2081 = vmatmul.mubr.f32.gmra.mrb[0].mxu0 %v1873
  %v2082 = vpop.f32.mrb[0].mxu0
  %v2083 = vadd.f32 %v1907, %v2082
  %v2084 = vpop.f32.mrb[0].mxu0
  %2085 = vmatprep.mubr.f32.mxu0 %v1948
  %2086 = vmatmul.mubr.f32.gmra.mrb[0].mxu0 %v1875
  %v2087 = vpop.f32.mrb[0].mxu0
  %v2088 = vadd.f32 %v1907, %v2087
  %v2089 = vpop.f32.mrb[0].mxu0
  %2090 = vmatprep.mubr.f32.mxu0 %v1951
  %2091 = vmatmul.mubr.f32.gmra.mrb[0].mxu0 %v1877
  %v2092 = vpop.f32.mrb[0].mxu0
  %v2093 = vadd.f32 %v1907, %v2092
  %v2094 = vpop.f32.mrb[0].mxu0
  %2095 = vmatprep.mubr.f32.mxu0 %v1954
  %2096 = vmatmul.mubr.f32.gmra.mrb[0].mxu0 %v1879
  %v2097 = vpop.f32.mrb[0].mxu0
  %v2098 = vadd.f32 %v1907, %v2097
  %v2099 = vpop.f32.mrb[0].mxu0
  %2100 = vdwg.mxu0
  %v2101 = vmax.f32 %v2023, 0.0
  %v2102 = vmax.f32 %v2028, 0.0
  %v2103 = vmax.f32 %v2033, 0.0
  %v2104 = vmax.f32 %v2038, 0.0
  %v2105 = vmax.f32 %v2043, 0.0
  %v2106 = vmax.f32 %v2048, 0.0
  %v2107 = vmax.f32 %v2053, 0.0
  %v2108 = vmax.f32 %v2058, 0.0
  %v2109 = vmax.f32 %v2063, 0.0
  %v2110 = vmax.f32 %v2068, 0.0
  %v2111 = vmax.f32 %v2073, 0.0
  %v2112 = vmax.f32 %v2078, 0.0
  %v2113 = vmax.f32 %v2083, 0.0
  %v2114 = vmax.f32 %v2088, 0.0
  %v2115 = vmax.f32 %v2093, 0.0
  %v2116 = vmax.f32 %v2098, 0.0
  %s2117 = scalar_lea.vmem %s3, 72
  %v2118 = vld [vmem:[%s2117] sm:$0xff]
  %v2119 = vld [vmem:[%s2117 + $0x8] sm:$0xff]
  %v2120 = vld [vmem:[%s2117 + $0x10] sm:$0xff]
  %v2121 = vld [vmem:[%s2117 + $0x18] sm:$0xff]
  %v2122 = vld [vmem:[%s2117 + $0x20] sm:$0xff]
  %v2123 = vld [vmem:[%s2117 + $0x28] sm:$0xff]
  %v2124 = vld [vmem:[%s2117 + $0x30] sm:$0xff]
  %v2125 = vld [vmem:[%s2117 + $0x38] sm:$0xff]
  %v2126 = vld [vmem:[%s2117 + $0x40] sm:$0xff]
  %v2127 = vld [vmem:[%s4 + $0x1] sm:$0x1]
  %v2128 = vlaneseq
  %v2129 = vshrl.u32 %v2128, 7
  %v2130 = vsub.s32 0, %v2129
  %v2131 = vrot.slane %v2127, %v2130
  %v2133 = vsel %vm999, %v2101, 0
  %v2136 = vsel %vm999, %v2102, 0
  %v2139 = vsel %vm999, %v2103, 0
  %v2142 = vsel %vm999, %v2104, 0
  %v2145 = vsel %vm999, %v2105, 0
  %v2148 = vsel %vm999, %v2106, 0
  %v2151 = vsel %vm999, %v2107, 0
  %v2154 = vsel %vm999, %v2108, 0
  %v2157 = vsel %vm999, %v2109, 0
  %v2160 = vsel %vm999, %v2110, 0
  %v2163 = vsel %vm999, %v2111, 0
  %v2166 = vsel %vm999, %v2112, 0
  %v2169 = vsel %vm999, %v2113, 0
  %v2172 = vsel %vm999, %v2114, 0
  %v2175 = vsel %vm999, %v2115, 0
  %v2178 = vsel %vm999, %v2116, 0
  %2180 = vmatprep.subr.mxu0 0.0
  %2181 = vmatpush1.msra.mxu0 %v2118
  %2182 = vmatprep.subr.mxu0 0.0
  %2183 = vmatpush1.msra.mxu0 %v2119
  %2184 = vmatprep.subr.mxu0 0.0
  %2185 = vmatpush1.msra.mxu0 %v2120
  %2186 = vmatprep.subr.mxu0 0.0
  %2187 = vmatpush1.msra.mxu0 %v2121
  %2188 = vmatprep.subr.mxu0 0.0
  %2189 = vmatpush1.msra.mxu0 %v2122
  %2190 = vmatprep.subr.mxu0 0.0
  %2191 = vmatpush1.msra.mxu0 %v2123
  %2192 = vmatprep.subr.mxu0 0.0
  %2193 = vmatpush1.msra.mxu0 %v2124
  %2194 = vmatprep.subr.mxu0 0.0
  %2195 = vmatpush1.msra.mxu0 %v2125
  %2196 = vmatprep.subr.mxu0 0.0
  %2197 = vmatpush1.msra.mxu0 %v2126
  %2198 = vmatprep.subr.mxu0 0.0
  %2199 = vmatpush1.msra.mxu0 0.0
  %2200 = vmatprep.subr.mxu0 0.0
  %2201 = vmatpush1.msra.mxu0 0.0
  %2202 = vmatprep.subr.mxu0 0.0
  %2203 = vmatpush1.msra.mxu0 0.0
  %2204 = vmatprep.subr.mxu0 0.0
  %2205 = vmatpush1.msra.mxu0 0.0
  %2206 = vmatprep.subr.mxu0 0.0
  %2207 = vmatpush1.msra.mxu0 0.0
  %2208 = vmatprep.subr.mxu0 0.0
  %2209 = vmatpush1.msra.mxu0 0.0
  %2210 = vmatprep.subr.mxu0 0.0
  %2211 = vmatpush1.msra.mxu0 0.0
  %2212 = vmatprep.subr.mxu0 0.0
  %2213 = vmatpush1.msra.mxu0 0.0
  %2214 = vmatprep.subr.mxu0 0.0
  %2215 = vmatpush1.msra.mxu0 0.0
  %2216 = vmatprep.subr.mxu0 0.0
  %2217 = vmatpush1.msra.mxu0 0.0
  %2218 = vmatprep.subr.mxu0 0.0
  %2219 = vmatpush1.msra.mxu0 0.0
  %2220 = vmatprep.subr.mxu0 0.0
  %2221 = vmatpush1.msra.mxu0 0.0
  %2222 = vmatprep.subr.mxu0 0.0
  %2223 = vmatpush1.msra.mxu0 0.0
  %2224 = vmatprep.subr.mxu0 0.0
  %2225 = vmatpush1.msra.mxu0 0.0
  %2226 = vmatprep.subr.mxu0 0.0
  %2227 = vmatpush1.msra.mxu0 0.0
  %2228 = vmatprep.subr.mxu0 0.0
  %2229 = vmatpush1.msra.mxu0 0.0
  %2230 = vmatprep.subr.mxu0 0.0
  %2231 = vmatpush1.msra.mxu0 0.0
  %2232 = vmatprep.subr.mxu0 0.0
  %2233 = vmatpush1.msra.mxu0 0.0
  %2234 = vmatprep.subr.mxu0 0.0
  %2235 = vmatpush1.msra.mxu0 0.0
  %2236 = vmatprep.subr.mxu0 0.0
  %2237 = vmatpush1.msra.mxu0 0.0
  %2238 = vmatprep.subr.mxu0 0.0
  %2239 = vmatpush1.msra.mxu0 0.0
  %2240 = vmatprep.subr.mxu0 0.0
  %2241 = vmatpush1.msra.mxu0 0.0
  %2242 = vmatprep.subr.mxu0 0.0
  %2243 = vmatpush1.msra.mxu0 0.0
  %2244 = vmatprep.mubr.f32.mxu0 0.0
  %2245 = vmatmul.mubr.f32.gmra.mrb[0].mxu0 %v2133
  %v2246 = vpop.f32.mrb[0].mxu0
  %v2247 = vadd.f32 %v2131, %v2246
  %v2248 = vpop.f32.mrb[0].mxu0
  %2249 = vmatprep.mubr.f32.mxu0 0.0
  %2250 = vmatmul.mubr.f32.gmra.mrb[0].mxu0 %v2136
  %v2251 = vpop.f32.mrb[0].mxu0
  %v2252 = vadd.f32 %v2131, %v2251
  %v2253 = vpop.f32.mrb[0].mxu0
  %2254 = vmatprep.mubr.f32.mxu0 0.0
  %2255 = vmatmul.mubr.f32.gmra.mrb[0].mxu0 %v2139
  %v2256 = vpop.f32.mrb[0].mxu0
  %v2257 = vadd.f32 %v2131, %v2256
  %v2258 = vpop.f32.mrb[0].mxu0
  %2259 = vmatprep.mubr.f32.mxu0 0.0
  %2260 = vmatmul.mubr.f32.gmra.mrb[0].mxu0 %v2142
  %v2261 = vpop.f32.mrb[0].mxu0
  %v2262 = vadd.f32 %v2131, %v2261
  %v2263 = vpop.f32.mrb[0].mxu0
  %2264 = vmatprep.mubr.f32.mxu0 0.0
  %2265 = vmatmul.mubr.f32.gmra.mrb[0].mxu0 %v2145
  %v2266 = vpop.f32.mrb[0].mxu0
  %v2267 = vadd.f32 %v2131, %v2266
  %v2268 = vpop.f32.mrb[0].mxu0
  %2269 = vmatprep.mubr.f32.mxu0 0.0
  %2270 = vmatmul.mubr.f32.gmra.mrb[0].mxu0 %v2148
  %v2271 = vpop.f32.mrb[0].mxu0
  %v2272 = vadd.f32 %v2131, %v2271
  %v2273 = vpop.f32.mrb[0].mxu0
  %2274 = vmatprep.mubr.f32.mxu0 0.0
  %2275 = vmatmul.mubr.f32.gmra.mrb[0].mxu0 %v2151
  %v2276 = vpop.f32.mrb[0].mxu0
  %v2277 = vadd.f32 %v2131, %v2276
  %v2278 = vpop.f32.mrb[0].mxu0
  %2279 = vmatprep.mubr.f32.mxu0 0.0
  %2280 = vmatmul.mubr.f32.gmra.mrb[0].mxu0 %v2154
  %v2281 = vpop.f32.mrb[0].mxu0
  %v2282 = vadd.f32 %v2131, %v2281
  %v2283 = vpop.f32.mrb[0].mxu0
  %2284 = vmatprep.mubr.f32.mxu0 0.0
  %2285 = vmatmul.mubr.f32.gmra.mrb[0].mxu0 %v2157
  %v2286 = vpop.f32.mrb[0].mxu0
  %v2287 = vadd.f32 %v2131, %v2286
  %v2288 = vpop.f32.mrb[0].mxu0
  %2289 = vmatprep.mubr.f32.mxu0 0.0
  %2290 = vmatmul.mubr.f32.gmra.mrb[0].mxu0 %v2160
  %v2291 = vpop.f32.mrb[0].mxu0
  %v2292 = vadd.f32 %v2131, %v2291
  %v2293 = vpop.f32.mrb[0].mxu0
  %2294 = vmatprep.mubr.f32.mxu0 0.0
  %2295 = vmatmul.mubr.f32.gmra.mrb[0].mxu0 %v2163
  %v2296 = vpop.f32.mrb[0].mxu0
  %v2297 = vadd.f32 %v2131, %v2296
  %v2298 = vpop.f32.mrb[0].mxu0
  %2299 = vmatprep.mubr.f32.mxu0 0.0
  %2300 = vmatmul.mubr.f32.gmra.mrb[0].mxu0 %v2166
  %v2301 = vpop.f32.mrb[0].mxu0
  %v2302 = vadd.f32 %v2131, %v2301
  %v2303 = vpop.f32.mrb[0].mxu0
  %2304 = vmatprep.mubr.f32.mxu0 0.0
  %2305 = vmatmul.mubr.f32.gmra.mrb[0].mxu0 %v2169
  %v2306 = vpop.f32.mrb[0].mxu0
  %v2307 = vadd.f32 %v2131, %v2306
  %v2308 = vpop.f32.mrb[0].mxu0
  %2309 = vmatprep.mubr.f32.mxu0 0.0
  %2310 = vmatmul.mubr.f32.gmra.mrb[0].mxu0 %v2172
  %v2311 = vpop.f32.mrb[0].mxu0
  %v2312 = vadd.f32 %v2131, %v2311
  %v2313 = vpop.f32.mrb[0].mxu0
  %2314 = vmatprep.mubr.f32.mxu0 0.0
  %2315 = vmatmul.mubr.f32.gmra.mrb[0].mxu0 %v2175
  %v2316 = vpop.f32.mrb[0].mxu0
  %v2317 = vadd.f32 %v2131, %v2316
  %v2318 = vpop.f32.mrb[0].mxu0
  %2319 = vmatprep.mubr.f32.mxu0 0.0
  %2320 = vmatmul.mubr.f32.gmra.mrb[0].mxu0 %v2178
  %v2321 = vpop.f32.mrb[0].mxu0
  %v2322 = vadd.f32 %v2131, %v2321
  %v2323 = vpop.f32.mrb[0].mxu0
  %2324 = vdwg.mxu0
  %v2325 = vmax.f32 %v2247, 0.0
  %v2326 = vmax.f32 %v2252, 0.0
  %v2327 = vmax.f32 %v2257, 0.0
  %v2328 = vmax.f32 %v2262, 0.0
  %v2329 = vmax.f32 %v2267, 0.0
  %v2330 = vmax.f32 %v2272, 0.0
  %v2331 = vmax.f32 %v2277, 0.0
  %v2332 = vmax.f32 %v2282, 0.0
  %v2333 = vmax.f32 %v2287, 0.0
  %v2334 = vmax.f32 %v2292, 0.0
  %v2335 = vmax.f32 %v2297, 0.0
  %v2336 = vmax.f32 %v2302, 0.0
  %v2337 = vmax.f32 %v2307, 0.0
  %v2338 = vmax.f32 %v2312, 0.0
  %v2339 = vmax.f32 %v2317, 0.0
  %v2340 = vmax.f32 %v2322, 0.0
  %2341 = vst.msk [vmem:[#allocation2 + $0x30] sm:$0xff] %vm29, %v2325
  %2342 = vst.msk [vmem:[#allocation2 + $0x38] sm:$0xff] %vm29, %v2326
  %2343 = vst.msk [vmem:[#allocation2 + $0x40] sm:$0xff] %vm29, %v2327
  %2344 = vst.msk [vmem:[#allocation2 + $0x48] sm:$0xff] %vm29, %v2328
  %2345 = vst.msk [vmem:[#allocation2 + $0x50] sm:$0xff] %vm29, %v2329
  %2346 = vst.msk [vmem:[#allocation2 + $0x58] sm:$0xff] %vm29, %v2330
  %2347 = vst.msk [vmem:[#allocation2 + $0x60] sm:$0xff] %vm29, %v2331
  %2348 = vst.msk [vmem:[#allocation2 + $0x68] sm:$0xff] %vm29, %v2332
  %2349 = vst.msk [vmem:[#allocation2 + $0x70] sm:$0xff] %vm29, %v2333
  %2350 = vst.msk [vmem:[#allocation2 + $0x78] sm:$0xff] %vm29, %v2334
  %2351 = vst.msk [vmem:[#allocation2 + $0x80] sm:$0xff] %vm29, %v2335
  %2352 = vst.msk [vmem:[#allocation2 + $0x88] sm:$0xff] %vm29, %v2336
  %2353 = vst.msk [vmem:[#allocation2 + $0x90] sm:$0xff] %vm29, %v2337
  %2354 = vst.msk [vmem:[#allocation2 + $0x98] sm:$0xff] %vm29, %v2338
  %2355 = vst.msk [vmem:[#allocation2 + $0xa0] sm:$0xff] %vm29, %v2339
  %2356 = vst.msk [vmem:[#allocation2 + $0xa8] sm:$0xff] %vm29, %v2340
  %v2357 = vld [vmem:[#allocation2 + $0x30] sm:$0xff]
  %v2358 = vld [vmem:[#allocation2 + $0x38] sm:$0xff]
  %v2359 = vld [vmem:[#allocation2 + $0x40] sm:$0xff]
  %v2360 = vld [vmem:[#allocation2 + $0x48] sm:$0xff]
  %v2361 = vld [vmem:[#allocation2 + $0x50] sm:$0xff]
  %v2362 = vld [vmem:[#allocation2 + $0x58] sm:$0xff]
  %v2363 = vld [vmem:[#allocation2 + $0x60] sm:$0xff]
  %v2364 = vld [vmem:[#allocation2 + $0x68] sm:$0xff]
  %v2365 = vld [vmem:[#allocation2 + $0x70] sm:$0xff]
  %v2366 = vld [vmem:[#allocation2 + $0x78] sm:$0xff]
  %v2367 = vld [vmem:[#allocation2 + $0x80] sm:$0xff]
  %v2368 = vld [vmem:[#allocation2 + $0x88] sm:$0xff]
  %v2369 = vld [vmem:[#allocation2 + $0x90] sm:$0xff]
  %v2370 = vld [vmem:[#allocation2 + $0x98] sm:$0xff]
  %v2371 = vld [vmem:[#allocation2 + $0xa0] sm:$0xff]
  %v2372 = vld [vmem:[#allocation2 + $0xa8] sm:$0xff]
  %2373 = vst.msk [vmem:[#allocation3] sm:$0xff] %vm29, %v2357
  %2374 = vst.msk [vmem:[#allocation3 + $0x10] sm:$0xff] %vm29, %v2358
  %2375 = vst.msk [vmem:[#allocation3 + $0x20] sm:$0xff] %vm29, %v2359
  %2376 = vst.msk [vmem:[#allocation3 + $0x30] sm:$0xff] %vm29, %v2360
  %2377 = vst.msk [vmem:[#allocation3 + $0x40] sm:$0xff] %vm29, %v2361
  %2378 = vst.msk [vmem:[#allocation3 + $0x50] sm:$0xff] %vm29, %v2362
  %2379 = vst.msk [vmem:[#allocation3 + $0x60] sm:$0xff] %vm29, %v2363
  %2380 = vst.msk [vmem:[#allocation3 + $0x70] sm:$0xff] %vm29, %v2364
  %2381 = vst.msk [vmem:[#allocation3 + $0x80] sm:$0xff] %vm29, %v2365
  %2382 = vst.msk [vmem:[#allocation3 + $0x90] sm:$0xff] %vm29, %v2366
  %2383 = vst.msk [vmem:[#allocation3 + $0xa0] sm:$0xff] %vm29, %v2367
  %2384 = vst.msk [vmem:[#allocation3 + $0xb0] sm:$0xff] %vm29, %v2368
  %2385 = vst.msk [vmem:[#allocation3 + $0xc0] sm:$0xff] %vm29, %v2369
  %2386 = vst.msk [vmem:[#allocation3 + $0xd0] sm:$0xff] %vm29, %v2370
  %2387 = vst.msk [vmem:[#allocation3 + $0xe0] sm:$0xff] %vm29, %v2371
  %2388 = vst.msk [vmem:[#allocation3 + $0xf0] sm:$0xff] %vm29, %v2372
  %v2389 = vld [vmem:[#allocation2 + $0x28] sm:$0xff]
  %v2390 = vld [vmem:[#allocation2 + $0x30] sm:$0xff]
  %v2391 = vld [vmem:[#allocation2 + $0x38] sm:$0xff]
  %v2392 = vld [vmem:[#allocation2 + $0x40] sm:$0xff]
  %v2393 = vld [vmem:[#allocation2 + $0x48] sm:$0xff]
  %v2394 = vld [vmem:[#allocation2 + $0x50] sm:$0xff]
  %v2395 = vld [vmem:[#allocation2 + $0x58] sm:$0xff]
  %v2396 = vld [vmem:[#allocation2 + $0x60] sm:$0xff]
  %v2397 = vld [vmem:[#allocation2 + $0x68] sm:$0xff]
  %v2398 = vld [vmem:[#allocation2 + $0x70] sm:$0xff]
  %v2399 = vld [vmem:[#allocation2 + $0x78] sm:$0xff]
  %v2400 = vld [vmem:[#allocation2 + $0x80] sm:$0xff]
  %v2401 = vld [vmem:[#allocation2 + $0x88] sm:$0xff]
  %v2402 = vld [vmem:[#allocation2 + $0x90] sm:$0xff]
  %v2403 = vld [vmem:[#allocation2 + $0x98] sm:$0xff]
  %v2404 = vld [vmem:[#allocation2 + $0xa0] sm:$0xff]
  %2421 = vrot.lane.b32.xlu0 %v2389, 24
  %v2422 = vpop.permute.xlu0 %2421
  %2423 = vrot.lane.b32.xlu0 %v2390, 24
  %v2424 = vpop.permute.xlu0 %2423
  %2425 = vrot.lane.b32.xlu0 %v2391, 24
  %v2426 = vpop.permute.xlu0 %2425
  %2427 = vrot.lane.b32.xlu0 %v2392, 24
  %v2428 = vpop.permute.xlu0 %2427
  %2429 = vrot.lane.b32.xlu0 %v2393, 24
  %v2430 = vpop.permute.xlu0 %2429
  %2431 = vrot.lane.b32.xlu0 %v2394, 24
  %v2432 = vpop.permute.xlu0 %2431
  %2433 = vrot.lane.b32.xlu0 %v2395, 24
  %v2434 = vpop.permute.xlu0 %2433
  %2435 = vrot.lane.b32.xlu0 %v2396, 24
  %v2436 = vpop.permute.xlu0 %2435
  %2437 = vrot.lane.b32.xlu0 %v2397, 24
  %v2438 = vpop.permute.xlu0 %2437
  %2439 = vrot.lane.b32.xlu0 %v2398, 24
  %v2440 = vpop.permute.xlu0 %2439
  %2441 = vrot.lane.b32.xlu0 %v2399, 24
  %v2442 = vpop.permute.xlu0 %2441
  %2443 = vrot.lane.b32.xlu0 %v2400, 24
  %v2444 = vpop.permute.xlu0 %2443
  %2445 = vrot.lane.b32.xlu0 %v2401, 24
  %v2446 = vpop.permute.xlu0 %2445
  %2447 = vrot.lane.b32.xlu0 %v2402, 24
  %v2448 = vpop.permute.xlu0 %2447
  %2449 = vrot.lane.b32.xlu0 %v2403, 24
  %v2450 = vpop.permute.xlu0 %2449
  %2451 = vrot.lane.b32.xlu0 %v2404, 24
  %v2452 = vpop.permute.xlu0 %2451
  %2469 = vst.msk [vmem:[#allocation3] sm:$0xff] %vm198, %v2422
  %2470 = vst.msk [vmem:[#allocation3 + $0x10] sm:$0xff] %vm198, %v2424
  %2471 = vst.msk [vmem:[#allocation3 + $0x20] sm:$0xff] %vm198, %v2426
  %2472 = vst.msk [vmem:[#allocation3 + $0x30] sm:$0xff] %vm198, %v2428
  %2473 = vst.msk [vmem:[#allocation3 + $0x40] sm:$0xff] %vm198, %v2430
  %2474 = vst.msk [vmem:[#allocation3 + $0x50] sm:$0xff] %vm198, %v2432
  %2475 = vst.msk [vmem:[#allocation3 + $0x60] sm:$0xff] %vm198, %v2434
  %2476 = vst.msk [vmem:[#allocation3 + $0x70] sm:$0xff] %vm198, %v2436
  %2477 = vst.msk [vmem:[#allocation3 + $0x80] sm:$0xff] %vm198, %v2438
  %2478 = vst.msk [vmem:[#allocation3 + $0x90] sm:$0xff] %vm198, %v2440
  %2479 = vst.msk [vmem:[#allocation3 + $0xa0] sm:$0xff] %vm198, %v2442
  %2480 = vst.msk [vmem:[#allocation3 + $0xb0] sm:$0xff] %vm198, %v2444
  %2481 = vst.msk [vmem:[#allocation3 + $0xc0] sm:$0xff] %vm198, %v2446
  %2482 = vst.msk [vmem:[#allocation3 + $0xd0] sm:$0xff] %vm198, %v2448
  %2483 = vst.msk [vmem:[#allocation3 + $0xe0] sm:$0xff] %vm198, %v2450
  %2484 = vst.msk [vmem:[#allocation3 + $0xf0] sm:$0xff] %vm198, %v2452
  %v2485 = vld [vmem:[#allocation2 + $0x20] sm:$0xff]
  %v2486 = vld [vmem:[#allocation2 + $0x28] sm:$0xff]
  %v2487 = vld [vmem:[#allocation2 + $0x30] sm:$0xff]
  %v2488 = vld [vmem:[#allocation2 + $0x38] sm:$0xff]
  %v2489 = vld [vmem:[#allocation2 + $0x40] sm:$0xff]
  %v2490 = vld [vmem:[#allocation2 + $0x48] sm:$0xff]
  %v2491 = vld [vmem:[#allocation2 + $0x50] sm:$0xff]
  %v2492 = vld [vmem:[#allocation2 + $0x58] sm:$0xff]
  %v2493 = vld [vmem:[#allocation2 + $0x60] sm:$0xff]
  %v2494 = vld [vmem:[#allocation2 + $0x68] sm:$0xff]
  %v2495 = vld [vmem:[#allocation2 + $0x70] sm:$0xff]
  %v2496 = vld [vmem:[#allocation2 + $0x78] sm:$0xff]
  %v2497 = vld [vmem:[#allocation2 + $0x80] sm:$0xff]
  %v2498 = vld [vmem:[#allocation2 + $0x88] sm:$0xff]
  %v2499 = vld [vmem:[#allocation2 + $0x90] sm:$0xff]
  %v2500 = vld [vmem:[#allocation2 + $0x98] sm:$0xff]
  %2517 = vrot.lane.b32.xlu0 %v2485, 48
  %v2518 = vpop.permute.xlu0 %2517
  %2519 = vrot.lane.b32.xlu0 %v2486, 48
  %v2520 = vpop.permute.xlu0 %2519
  %2521 = vrot.lane.b32.xlu0 %v2487, 48
  %v2522 = vpop.permute.xlu0 %2521
  %2523 = vrot.lane.b32.xlu0 %v2488, 48
  %v2524 = vpop.permute.xlu0 %2523
  %2525 = vrot.lane.b32.xlu0 %v2489, 48
  %v2526 = vpop.permute.xlu0 %2525
  %2527 = vrot.lane.b32.xlu0 %v2490, 48
  %v2528 = vpop.permute.xlu0 %2527
  %2529 = vrot.lane.b32.xlu0 %v2491, 48
  %v2530 = vpop.permute.xlu0 %2529
  %2531 = vrot.lane.b32.xlu0 %v2492, 48
  %v2532 = vpop.permute.xlu0 %2531
  %2533 = vrot.lane.b32.xlu0 %v2493, 48
  %v2534 = vpop.permute.xlu0 %2533
  %2535 = vrot.lane.b32.xlu0 %v2494, 48
  %v2536 = vpop.permute.xlu0 %2535
  %2537 = vrot.lane.b32.xlu0 %v2495, 48
  %v2538 = vpop.permute.xlu0 %2537
  %2539 = vrot.lane.b32.xlu0 %v2496, 48
  %v2540 = vpop.permute.xlu0 %2539
  %2541 = vrot.lane.b32.xlu0 %v2497, 48
  %v2542 = vpop.permute.xlu0 %2541
  %2543 = vrot.lane.b32.xlu0 %v2498, 48
  %v2544 = vpop.permute.xlu0 %2543
  %2545 = vrot.lane.b32.xlu0 %v2499, 48
  %v2546 = vpop.permute.xlu0 %2545
  %2547 = vrot.lane.b32.xlu0 %v2500, 48
  %v2548 = vpop.permute.xlu0 %2547
  %2565 = vst.msk [vmem:[#allocation3] sm:$0xff] %vm295, %v2518
  %2566 = vst.msk [vmem:[#allocation3 + $0x10] sm:$0xff] %vm295, %v2520
  %2567 = vst.msk [vmem:[#allocation3 + $0x20] sm:$0xff] %vm295, %v2522
  %2568 = vst.msk [vmem:[#allocation3 + $0x30] sm:$0xff] %vm295, %v2524
  %2569 = vst.msk [vmem:[#allocation3 + $0x40] sm:$0xff] %vm295, %v2526
  %2570 = vst.msk [vmem:[#allocation3 + $0x50] sm:$0xff] %vm295, %v2528
  %2571 = vst.msk [vmem:[#allocation3 + $0x60] sm:$0xff] %vm295, %v2530
  %2572 = vst.msk [vmem:[#allocation3 + $0x70] sm:$0xff] %vm295, %v2532
  %2573 = vst.msk [vmem:[#allocation3 + $0x80] sm:$0xff] %vm295, %v2534
  %2574 = vst.msk [vmem:[#allocation3 + $0x90] sm:$0xff] %vm295, %v2536
  %2575 = vst.msk [vmem:[#allocation3 + $0xa0] sm:$0xff] %vm295, %v2538
  %2576 = vst.msk [vmem:[#allocation3 + $0xb0] sm:$0xff] %vm295, %v2540
  %2577 = vst.msk [vmem:[#allocation3 + $0xc0] sm:$0xff] %vm295, %v2542
  %2578 = vst.msk [vmem:[#allocation3 + $0xd0] sm:$0xff] %vm295, %v2544
  %2579 = vst.msk [vmem:[#allocation3 + $0xe0] sm:$0xff] %vm295, %v2546
  %2580 = vst.msk [vmem:[#allocation3 + $0xf0] sm:$0xff] %vm295, %v2548
  %v2581 = vld [vmem:[#allocation2 + $0x18] sm:$0xff]
  %v2582 = vld [vmem:[#allocation2 + $0x20] sm:$0xff]
  %v2583 = vld [vmem:[#allocation2 + $0x28] sm:$0xff]
  %v2584 = vld [vmem:[#allocation2 + $0x30] sm:$0xff]
  %v2585 = vld [vmem:[#allocation2 + $0x38] sm:$0xff]
  %v2586 = vld [vmem:[#allocation2 + $0x40] sm:$0xff]
  %v2587 = vld [vmem:[#allocation2 + $0x48] sm:$0xff]
  %v2588 = vld [vmem:[#allocation2 + $0x50] sm:$0xff]
  %v2589 = vld [vmem:[#allocation2 + $0x58] sm:$0xff]
  %v2590 = vld [vmem:[#allocation2 + $0x60] sm:$0xff]
  %v2591 = vld [vmem:[#allocation2 + $0x68] sm:$0xff]
  %v2592 = vld [vmem:[#allocation2 + $0x70] sm:$0xff]
  %v2593 = vld [vmem:[#allocation2 + $0x78] sm:$0xff]
  %v2594 = vld [vmem:[#allocation2 + $0x80] sm:$0xff]
  %v2595 = vld [vmem:[#allocation2 + $0x88] sm:$0xff]
  %v2596 = vld [vmem:[#allocation2 + $0x90] sm:$0xff]
  %2613 = vrot.lane.b32.xlu0 %v2581, 72
  %v2614 = vpop.permute.xlu0 %2613
  %2615 = vrot.lane.b32.xlu0 %v2582, 72
  %v2616 = vpop.permute.xlu0 %2615
  %2617 = vrot.lane.b32.xlu0 %v2583, 72
  %v2618 = vpop.permute.xlu0 %2617
  %2619 = vrot.lane.b32.xlu0 %v2584, 72
  %v2620 = vpop.permute.xlu0 %2619
  %2621 = vrot.lane.b32.xlu0 %v2585, 72
  %v2622 = vpop.permute.xlu0 %2621
  %2623 = vrot.lane.b32.xlu0 %v2586, 72
  %v2624 = vpop.permute.xlu0 %2623
  %2625 = vrot.lane.b32.xlu0 %v2587, 72
  %v2626 = vpop.permute.xlu0 %2625
  %2627 = vrot.lane.b32.xlu0 %v2588, 72
  %v2628 = vpop.permute.xlu0 %2627
  %2629 = vrot.lane.b32.xlu0 %v2589, 72
  %v2630 = vpop.permute.xlu0 %2629
  %2631 = vrot.lane.b32.xlu0 %v2590, 72
  %v2632 = vpop.permute.xlu0 %2631
  %2633 = vrot.lane.b32.xlu0 %v2591, 72
  %v2634 = vpop.permute.xlu0 %2633
  %2635 = vrot.lane.b32.xlu0 %v2592, 72
  %v2636 = vpop.permute.xlu0 %2635
  %2637 = vrot.lane.b32.xlu0 %v2593, 72
  %v2638 = vpop.permute.xlu0 %2637
  %2639 = vrot.lane.b32.xlu0 %v2594, 72
  %v2640 = vpop.permute.xlu0 %2639
  %2641 = vrot.lane.b32.xlu0 %v2595, 72
  %v2642 = vpop.permute.xlu0 %2641
  %2643 = vrot.lane.b32.xlu0 %v2596, 72
  %v2644 = vpop.permute.xlu0 %2643
  %2661 = vst.msk [vmem:[#allocation3] sm:$0xff] %vm392, %v2614
  %2662 = vst.msk [vmem:[#allocation3 + $0x10] sm:$0xff] %vm392, %v2616
  %2663 = vst.msk [vmem:[#allocation3 + $0x20] sm:$0xff] %vm392, %v2618
  %2664 = vst.msk [vmem:[#allocation3 + $0x30] sm:$0xff] %vm392, %v2620
  %2665 = vst.msk [vmem:[#allocation3 + $0x40] sm:$0xff] %vm392, %v2622
  %2666 = vst.msk [vmem:[#allocation3 + $0x50] sm:$0xff] %vm392, %v2624
  %2667 = vst.msk [vmem:[#allocation3 + $0x60] sm:$0xff] %vm392, %v2626
  %2668 = vst.msk [vmem:[#allocation3 + $0x70] sm:$0xff] %vm392, %v2628
  %2669 = vst.msk [vmem:[#allocation3 + $0x80] sm:$0xff] %vm392, %v2630
  %2670 = vst.msk [vmem:[#allocation3 + $0x90] sm:$0xff] %vm392, %v2632
  %2671 = vst.msk [vmem:[#allocation3 + $0xa0] sm:$0xff] %vm392, %v2634
  %2672 = vst.msk [vmem:[#allocation3 + $0xb0] sm:$0xff] %vm392, %v2636
  %2673 = vst.msk [vmem:[#allocation3 + $0xc0] sm:$0xff] %vm392, %v2638
  %2674 = vst.msk [vmem:[#allocation3 + $0xd0] sm:$0xff] %vm392, %v2640
  %2675 = vst.msk [vmem:[#allocation3 + $0xe0] sm:$0xff] %vm392, %v2642
  %2676 = vst.msk [vmem:[#allocation3 + $0xf0] sm:$0xff] %vm392, %v2644
  %v2677 = vld [vmem:[#allocation2 + $0x10] sm:$0xff]
  %v2678 = vld [vmem:[#allocation2 + $0x18] sm:$0xff]
  %v2679 = vld [vmem:[#allocation2 + $0x20] sm:$0xff]
  %v2680 = vld [vmem:[#allocation2 + $0x28] sm:$0xff]
  %v2681 = vld [vmem:[#allocation2 + $0x30] sm:$0xff]
  %v2682 = vld [vmem:[#allocation2 + $0x38] sm:$0xff]
  %v2683 = vld [vmem:[#allocation2 + $0x40] sm:$0xff]
  %v2684 = vld [vmem:[#allocation2 + $0x48] sm:$0xff]
  %v2685 = vld [vmem:[#allocation2 + $0x50] sm:$0xff]
  %v2686 = vld [vmem:[#allocation2 + $0x58] sm:$0xff]
  %v2687 = vld [vmem:[#allocation2 + $0x60] sm:$0xff]
  %v2688 = vld [vmem:[#allocation2 + $0x68] sm:$0xff]
  %v2689 = vld [vmem:[#allocation2 + $0x70] sm:$0xff]
  %v2690 = vld [vmem:[#allocation2 + $0x78] sm:$0xff]
  %v2691 = vld [vmem:[#allocation2 + $0x80] sm:$0xff]
  %v2692 = vld [vmem:[#allocation2 + $0x88] sm:$0xff]
  %2709 = vrot.lane.b32.xlu0 %v2677, 96
  %v2710 = vpop.permute.xlu0 %2709
  %2711 = vrot.lane.b32.xlu0 %v2678, 96
  %v2712 = vpop.permute.xlu0 %2711
  %2713 = vrot.lane.b32.xlu0 %v2679, 96
  %v2714 = vpop.permute.xlu0 %2713
  %2715 = vrot.lane.b32.xlu0 %v2680, 96
  %v2716 = vpop.permute.xlu0 %2715
  %2717 = vrot.lane.b32.xlu0 %v2681, 96
  %v2718 = vpop.permute.xlu0 %2717
  %2719 = vrot.lane.b32.xlu0 %v2682, 96
  %v2720 = vpop.permute.xlu0 %2719
  %2721 = vrot.lane.b32.xlu0 %v2683, 96
  %v2722 = vpop.permute.xlu0 %2721
  %2723 = vrot.lane.b32.xlu0 %v2684, 96
  %v2724 = vpop.permute.xlu0 %2723
  %2725 = vrot.lane.b32.xlu0 %v2685, 96
  %v2726 = vpop.permute.xlu0 %2725
  %2727 = vrot.lane.b32.xlu0 %v2686, 96
  %v2728 = vpop.permute.xlu0 %2727
  %2729 = vrot.lane.b32.xlu0 %v2687, 96
  %v2730 = vpop.permute.xlu0 %2729
  %2731 = vrot.lane.b32.xlu0 %v2688, 96
  %v2732 = vpop.permute.xlu0 %2731
  %2733 = vrot.lane.b32.xlu0 %v2689, 96
  %v2734 = vpop.permute.xlu0 %2733
  %2735 = vrot.lane.b32.xlu0 %v2690, 96
  %v2736 = vpop.permute.xlu0 %2735
  %2737 = vrot.lane.b32.xlu0 %v2691, 96
  %v2738 = vpop.permute.xlu0 %2737
  %2739 = vrot.lane.b32.xlu0 %v2692, 96
  %v2740 = vpop.permute.xlu0 %2739
  %2757 = vst.msk [vmem:[#allocation3] sm:$0xff] %vm489, %v2710
  %2758 = vst.msk [vmem:[#allocation3 + $0x10] sm:$0xff] %vm489, %v2712
  %2759 = vst.msk [vmem:[#allocation3 + $0x20] sm:$0xff] %vm489, %v2714
  %2760 = vst.msk [vmem:[#allocation3 + $0x30] sm:$0xff] %vm489, %v2716
  %2761 = vst.msk [vmem:[#allocation3 + $0x40] sm:$0xff] %vm489, %v2718
  %2762 = vst.msk [vmem:[#allocation3 + $0x50] sm:$0xff] %vm489, %v2720
  %2763 = vst.msk [vmem:[#allocation3 + $0x60] sm:$0xff] %vm489, %v2722
  %2764 = vst.msk [vmem:[#allocation3 + $0x70] sm:$0xff] %vm489, %v2724
  %2765 = vst.msk [vmem:[#allocation3 + $0x80] sm:$0xff] %vm489, %v2726
  %2766 = vst.msk [vmem:[#allocation3 + $0x90] sm:$0xff] %vm489, %v2728
  %2767 = vst.msk [vmem:[#allocation3 + $0xa0] sm:$0xff] %vm489, %v2730
  %2768 = vst.msk [vmem:[#allocation3 + $0xb0] sm:$0xff] %vm489, %v2732
  %2769 = vst.msk [vmem:[#allocation3 + $0xc0] sm:$0xff] %vm489, %v2734
  %2770 = vst.msk [vmem:[#allocation3 + $0xd0] sm:$0xff] %vm489, %v2736
  %2771 = vst.msk [vmem:[#allocation3 + $0xe0] sm:$0xff] %vm489, %v2738
  %2772 = vst.msk [vmem:[#allocation3 + $0xf0] sm:$0xff] %vm489, %v2740
  %v2773 = vld [vmem:[#allocation2 + $0x8] sm:$0xff]
  %v2774 = vld [vmem:[#allocation2 + $0x10] sm:$0xff]
  %v2775 = vld [vmem:[#allocation2 + $0x18] sm:$0xff]
  %v2776 = vld [vmem:[#allocation2 + $0x20] sm:$0xff]
  %v2777 = vld [vmem:[#allocation2 + $0x28] sm:$0xff]
  %v2778 = vld [vmem:[#allocation2 + $0x30] sm:$0xff]
  %v2779 = vld [vmem:[#allocation2 + $0x38] sm:$0xff]
  %v2780 = vld [vmem:[#allocation2 + $0x40] sm:$0xff]
  %v2781 = vld [vmem:[#allocation2 + $0x48] sm:$0xff]
  %v2782 = vld [vmem:[#allocation2 + $0x50] sm:$0xff]
  %v2783 = vld [vmem:[#allocation2 + $0x58] sm:$0xff]
  %v2784 = vld [vmem:[#allocation2 + $0x60] sm:$0xff]
  %v2785 = vld [vmem:[#allocation2 + $0x68] sm:$0xff]
  %v2786 = vld [vmem:[#allocation2 + $0x70] sm:$0xff]
  %v2787 = vld [vmem:[#allocation2 + $0x78] sm:$0xff]
  %v2788 = vld [vmem:[#allocation2 + $0x80] sm:$0xff]
  %2805 = vrot.lane.b32.xlu0 %v2773, 120
  %v2806 = vpop.permute.xlu0 %2805
  %2807 = vrot.lane.b32.xlu0 %v2774, 120
  %v2808 = vpop.permute.xlu0 %2807
  %2809 = vrot.lane.b32.xlu0 %v2775, 120
  %v2810 = vpop.permute.xlu0 %2809
  %2811 = vrot.lane.b32.xlu0 %v2776, 120
  %v2812 = vpop.permute.xlu0 %2811
  %2813 = vrot.lane.b32.xlu0 %v2777, 120
  %v2814 = vpop.permute.xlu0 %2813
  %2815 = vrot.lane.b32.xlu0 %v2778, 120
  %v2816 = vpop.permute.xlu0 %2815
  %2817 = vrot.lane.b32.xlu0 %v2779, 120
  %v2818 = vpop.permute.xlu0 %2817
  %2819 = vrot.lane.b32.xlu0 %v2780, 120
  %v2820 = vpop.permute.xlu0 %2819
  %2821 = vrot.lane.b32.xlu0 %v2781, 120
  %v2822 = vpop.permute.xlu0 %2821
  %2823 = vrot.lane.b32.xlu0 %v2782, 120
  %v2824 = vpop.permute.xlu0 %2823
  %2825 = vrot.lane.b32.xlu0 %v2783, 120
  %v2826 = vpop.permute.xlu0 %2825
  %2827 = vrot.lane.b32.xlu0 %v2784, 120
  %v2828 = vpop.permute.xlu0 %2827
  %2829 = vrot.lane.b32.xlu0 %v2785, 120
  %v2830 = vpop.permute.xlu0 %2829
  %2831 = vrot.lane.b32.xlu0 %v2786, 120
  %v2832 = vpop.permute.xlu0 %2831
  %2833 = vrot.lane.b32.xlu0 %v2787, 120
  %v2834 = vpop.permute.xlu0 %2833
  %2835 = vrot.lane.b32.xlu0 %v2788, 120
  %v2836 = vpop.permute.xlu0 %2835
  %2853 = vst.msk [vmem:[#allocation3] sm:$0xff] %vm586, %v2806
  %2854 = vst.msk [vmem:[#allocation3 + $0x8] sm:$0xff] %vm588, %v2806
  %2855 = vst.msk [vmem:[#allocation3 + $0x10] sm:$0xff] %vm586, %v2808
  %2856 = vst.msk [vmem:[#allocation3 + $0x18] sm:$0xff] %vm588, %v2808
  %2857 = vst.msk [vmem:[#allocation3 + $0x20] sm:$0xff] %vm586, %v2810
  %2858 = vst.msk [vmem:[#allocation3 + $0x28] sm:$0xff] %vm588, %v2810
  %2859 = vst.msk [vmem:[#allocation3 + $0x30] sm:$0xff] %vm586, %v2812
  %2860 = vst.msk [vmem:[#allocation3 + $0x38] sm:$0xff] %vm588, %v2812
  %2861 = vst.msk [vmem:[#allocation3 + $0x40] sm:$0xff] %vm586, %v2814
  %2862 = vst.msk [vmem:[#allocation3 + $0x48] sm:$0xff] %vm588, %v2814
  %2863 = vst.msk [vmem:[#allocation3 + $0x50] sm:$0xff] %vm586, %v2816
  %2864 = vst.msk [vmem:[#allocation3 + $0x58] sm:$0xff] %vm588, %v2816
  %2865 = vst.msk [vmem:[#allocation3 + $0x60] sm:$0xff] %vm586, %v2818
  %2866 = vst.msk [vmem:[#allocation3 + $0x68] sm:$0xff] %vm588, %v2818
  %2867 = vst.msk [vmem:[#allocation3 + $0x70] sm:$0xff] %vm586, %v2820
  %2868 = vst.msk [vmem:[#allocation3 + $0x78] sm:$0xff] %vm588, %v2820
  %2869 = vst.msk [vmem:[#allocation3 + $0x80] sm:$0xff] %vm586, %v2822
  %2870 = vst.msk [vmem:[#allocation3 + $0x88] sm:$0xff] %vm588, %v2822
  %2871 = vst.msk [vmem:[#allocation3 + $0x90] sm:$0xff] %vm586, %v2824
  %2872 = vst.msk [vmem:[#allocation3 + $0x98] sm:$0xff] %vm588, %v2824
  %2873 = vst.msk [vmem:[#allocation3 + $0xa0] sm:$0xff] %vm586, %v2826
  %2874 = vst.msk [vmem:[#allocation3 + $0xa8] sm:$0xff] %vm588, %v2826
  %2875 = vst.msk [vmem:[#allocation3 + $0xb0] sm:$0xff] %vm586, %v2828
  %2876 = vst.msk [vmem:[#allocation3 + $0xb8] sm:$0xff] %vm588, %v2828
  %2877 = vst.msk [vmem:[#allocation3 + $0xc0] sm:$0xff] %vm586, %v2830
  %2878 = vst.msk [vmem:[#allocation3 + $0xc8] sm:$0xff] %vm588, %v2830
  %2879 = vst.msk [vmem:[#allocation3 + $0xd0] sm:$0xff] %vm586, %v2832
  %2880 = vst.msk [vmem:[#allocation3 + $0xd8] sm:$0xff] %vm588, %v2832
  %2881 = vst.msk [vmem:[#allocation3 + $0xe0] sm:$0xff] %vm586, %v2834
  %2882 = vst.msk [vmem:[#allocation3 + $0xe8] sm:$0xff] %vm588, %v2834
  %2883 = vst.msk [vmem:[#allocation3 + $0xf0] sm:$0xff] %vm586, %v2836
  %2884 = vst.msk [vmem:[#allocation3 + $0xf8] sm:$0xff] %vm588, %v2836
  %v2885 = vld [vmem:[#allocation2] sm:$0xff]
  %v2886 = vld [vmem:[#allocation2 + $0x8] sm:$0xff]
  %v2887 = vld [vmem:[#allocation2 + $0x10] sm:$0xff]
  %v2888 = vld [vmem:[#allocation2 + $0x18] sm:$0xff]
  %v2889 = vld [vmem:[#allocation2 + $0x20] sm:$0xff]
  %v2890 = vld [vmem:[#allocation2 + $0x28] sm:$0xff]
  %v2891 = vld [vmem:[#allocation2 + $0x30] sm:$0xff]
  %v2892 = vld [vmem:[#allocation2 + $0x38] sm:$0xff]
  %v2893 = vld [vmem:[#allocation2 + $0x40] sm:$0xff]
  %v2894 = vld [vmem:[#allocation2 + $0x48] sm:$0xff]
  %v2895 = vld [vmem:[#allocation2 + $0x50] sm:$0xff]
  %v2896 = vld [vmem:[#allocation2 + $0x58] sm:$0xff]
  %v2897 = vld [vmem:[#allocation2 + $0x60] sm:$0xff]
  %v2898 = vld [vmem:[#allocation2 + $0x68] sm:$0xff]
  %v2899 = vld [vmem:[#allocation2 + $0x70] sm:$0xff]
  %v2900 = vld [vmem:[#allocation2 + $0x78] sm:$0xff]
  %2917 = vrot.lane.b32.xlu0 %v2885, 16
  %v2918 = vpop.permute.xlu0 %2917
  %2919 = vrot.lane.b32.xlu0 %v2886, 16
  %v2920 = vpop.permute.xlu0 %2919
  %2921 = vrot.lane.b32.xlu0 %v2887, 16
  %v2922 = vpop.permute.xlu0 %2921
  %2923 = vrot.lane.b32.xlu0 %v2888, 16
  %v2924 = vpop.permute.xlu0 %2923
  %2925 = vrot.lane.b32.xlu0 %v2889, 16
  %v2926 = vpop.permute.xlu0 %2925
  %2927 = vrot.lane.b32.xlu0 %v2890, 16
  %v2928 = vpop.permute.xlu0 %2927
  %2929 = vrot.lane.b32.xlu0 %v2891, 16
  %v2930 = vpop.permute.xlu0 %2929
  %2931 = vrot.lane.b32.xlu0 %v2892, 16
  %v2932 = vpop.permute.xlu0 %2931
  %2933 = vrot.lane.b32.xlu0 %v2893, 16
  %v2934 = vpop.permute.xlu0 %2933
  %2935 = vrot.lane.b32.xlu0 %v2894, 16
  %v2936 = vpop.permute.xlu0 %2935
  %2937 = vrot.lane.b32.xlu0 %v2895, 16
  %v2938 = vpop.permute.xlu0 %2937
  %2939 = vrot.lane.b32.xlu0 %v2896, 16
  %v2940 = vpop.permute.xlu0 %2939
  %2941 = vrot.lane.b32.xlu0 %v2897, 16
  %v2942 = vpop.permute.xlu0 %2941
  %2943 = vrot.lane.b32.xlu0 %v2898, 16
  %v2944 = vpop.permute.xlu0 %2943
  %2945 = vrot.lane.b32.xlu0 %v2899, 16
  %v2946 = vpop.permute.xlu0 %2945
  %2947 = vrot.lane.b32.xlu0 %v2900, 16
  %v2948 = vpop.permute.xlu0 %2947
  %2965 = vst.msk [vmem:[#allocation3 + $0x8] sm:$0xff] %vm700, %v2918
  %2966 = vst.msk [vmem:[#allocation3 + $0x18] sm:$0xff] %vm700, %v2920
  %2967 = vst.msk [vmem:[#allocation3 + $0x28] sm:$0xff] %vm700, %v2922
  %2968 = vst.msk [vmem:[#allocation3 + $0x38] sm:$0xff] %vm700, %v2924
  %2969 = vst.msk [vmem:[#allocation3 + $0x48] sm:$0xff] %vm700, %v2926
  %2970 = vst.msk [vmem:[#allocation3 + $0x58] sm:$0xff] %vm700, %v2928
  %2971 = vst.msk [vmem:[#allocation3 + $0x68] sm:$0xff] %vm700, %v2930
  %2972 = vst.msk [vmem:[#allocation3 + $0x78] sm:$0xff] %vm700, %v2932
  %2973 = vst.msk [vmem:[#allocation3 + $0x88] sm:$0xff] %vm700, %v2934
  %2974 = vst.msk [vmem:[#allocation3 + $0x98] sm:$0xff] %vm700, %v2936
  %2975 = vst.msk [vmem:[#allocation3 + $0xa8] sm:$0xff] %vm700, %v2938
  %2976 = vst.msk [vmem:[#allocation3 + $0xb8] sm:$0xff] %vm700, %v2940
  %2977 = vst.msk [vmem:[#allocation3 + $0xc8] sm:$0xff] %vm700, %v2942
  %2978 = vst.msk [vmem:[#allocation3 + $0xd8] sm:$0xff] %vm700, %v2944
  %2979 = vst.msk [vmem:[#allocation3 + $0xe8] sm:$0xff] %vm700, %v2946
  %2980 = vst.msk [vmem:[#allocation3 + $0xf8] sm:$0xff] %vm700, %v2948
  %v2981 = vld [vmem:[#allocation3] sm:$0xff]
  %v2982 = vld [vmem:[#allocation3 + $0x8] sm:$0xff]
  %v2983 = vld [vmem:[#allocation3 + $0x10] sm:$0xff]
  %v2984 = vld [vmem:[#allocation3 + $0x18] sm:$0xff]
  %v2985 = vld [vmem:[#allocation3 + $0x20] sm:$0xff]
  %v2986 = vld [vmem:[#allocation3 + $0x28] sm:$0xff]
  %v2987 = vld [vmem:[#allocation3 + $0x30] sm:$0xff]
  %v2988 = vld [vmem:[#allocation3 + $0x38] sm:$0xff]
  %v2989 = vld [vmem:[#allocation3 + $0x40] sm:$0xff]
  %v2990 = vld [vmem:[#allocation3 + $0x48] sm:$0xff]
  %v2991 = vld [vmem:[#allocation3 + $0x50] sm:$0xff]
  %v2992 = vld [vmem:[#allocation3 + $0x58] sm:$0xff]
  %v2993 = vld [vmem:[#allocation3 + $0x60] sm:$0xff]
  %v2994 = vld [vmem:[#allocation3 + $0x68] sm:$0xff]
  %v2995 = vld [vmem:[#allocation3 + $0x70] sm:$0xff]
  %v2996 = vld [vmem:[#allocation3 + $0x78] sm:$0xff]
  %v2997 = vld [vmem:[#allocation3 + $0x80] sm:$0xff]
  %v2998 = vld [vmem:[#allocation3 + $0x88] sm:$0xff]
  %v2999 = vld [vmem:[#allocation3 + $0x90] sm:$0xff]
  %v3000 = vld [vmem:[#allocation3 + $0x98] sm:$0xff]
  %v3001 = vld [vmem:[#allocation3 + $0xa0] sm:$0xff]
  %v3002 = vld [vmem:[#allocation3 + $0xa8] sm:$0xff]
  %v3003 = vld [vmem:[#allocation3 + $0xb0] sm:$0xff]
  %v3004 = vld [vmem:[#allocation3 + $0xb8] sm:$0xff]
  %v3005 = vld [vmem:[#allocation3 + $0xc0] sm:$0xff]
  %v3006 = vld [vmem:[#allocation3 + $0xc8] sm:$0xff]
  %v3007 = vld [vmem:[#allocation3 + $0xd0] sm:$0xff]
  %v3008 = vld [vmem:[#allocation3 + $0xd8] sm:$0xff]
  %v3009 = vld [vmem:[#allocation3 + $0xe0] sm:$0xff]
  %v3010 = vld [vmem:[#allocation3 + $0xe8] sm:$0xff]
  %v3011 = vld [vmem:[#allocation3 + $0xf0] sm:$0xff]
  %v3012 = vld [vmem:[#allocation3 + $0xf8] sm:$0xff]
  %s3013 = scalar_lea.vmem %s1, 336
  %v3014 = vld [vmem:[%s3013] sm:$0xff]
  %v3015 = vld [vmem:[%s3013 + $0x8] sm:$0xff]
  %v3016 = vld [vmem:[%s3013 + $0x10] sm:$0xff]
  %v3017 = vld [vmem:[%s3013 + $0x18] sm:$0xff]
  %v3018 = vld [vmem:[%s3013 + $0x20] sm:$0xff]
  %v3019 = vld [vmem:[%s3013 + $0x28] sm:$0xff]
  %v3020 = vld [vmem:[%s3013 + $0x30] sm:$0xff]
  %v3021 = vld [vmem:[%s3013 + $0x38] sm:$0xff]
  %v3022 = vld [vmem:[%s3013 + $0x40] sm:$0xff]
  %v3023 = vld [vmem:[%s3013 + $0x48] sm:$0xff]
  %v3024 = vld [vmem:[%s3013 + $0x50] sm:$0xff]
  %v3025 = vld [vmem:[%s3013 + $0x58] sm:$0xff]
  %v3026 = vld [vmem:[%s3013 + $0x60] sm:$0xff]
  %v3027 = vld [vmem:[%s3013 + $0x68] sm:$0xff]
  %v3028 = vld [vmem:[%s3013 + $0x70] sm:$0xff]
  %v3029 = vld [vmem:[%s3013 + $0x78] sm:$0xff]
  %v3030 = vld [vmem:[%s3013 + $0x80] sm:$0xff]
  %v3031 = vld [vmem:[%s3013 + $0x88] sm:$0xff]
  %v3032 = vld [vmem:[%s3013 + $0x90] sm:$0xff]
  %v3033 = vld [vmem:[%s3013 + $0x98] sm:$0xff]
  %v3034 = vld [vmem:[%s3013 + $0xa0] sm:$0xff]
  %v3035 = vld [vmem:[%s2 + $0x2] sm:$0x1]
  %v3036 = vlaneseq
  %v3037 = vshrl.u32 %v3036, 7
  %v3038 = vsub.s32 0, %v3037
  %v3039 = vrot.slane %v3035, %v3038
  %v3041 = vsel %vm775, %v2982, 0
  %v3044 = vsel %vm775, %v2984, 0
  %v3047 = vsel %vm775, %v2986, 0
  %v3050 = vsel %vm775, %v2988, 0
  %v3053 = vsel %vm775, %v2990, 0
  %v3056 = vsel %vm775, %v2992, 0
  %v3059 = vsel %vm775, %v2994, 0
  %v3062 = vsel %vm775, %v2996, 0
  %v3065 = vsel %vm775, %v2998, 0
  %v3068 = vsel %vm775, %v3000, 0
  %v3071 = vsel %vm775, %v3002, 0
  %v3074 = vsel %vm775, %v3004, 0
  %v3077 = vsel %vm775, %v3006, 0
  %v3080 = vsel %vm775, %v3008, 0
  %v3083 = vsel %vm775, %v3010, 0
  %v3086 = vsel %vm775, %v3012, 0
  %3088 = vmatprep.subr.mxu0 0.0
  %3089 = vmatpush1.msra.mxu0 %v3014
  %3090 = vmatprep.subr.mxu0 0.0
  %3091 = vmatpush1.msra.mxu0 %v3015
  %3092 = vmatprep.subr.mxu0 0.0
  %3093 = vmatpush1.msra.mxu0 %v3016
  %3094 = vmatprep.subr.mxu0 0.0
  %3095 = vmatpush1.msra.mxu0 %v3017
  %3096 = vmatprep.subr.mxu0 0.0
  %3097 = vmatpush1.msra.mxu0 %v3018
  %3098 = vmatprep.subr.mxu0 0.0
  %3099 = vmatpush1.msra.mxu0 %v3019
  %3100 = vmatprep.subr.mxu0 0.0
  %3101 = vmatpush1.msra.mxu0 %v3020
  %3102 = vmatprep.subr.mxu0 0.0
  %3103 = vmatpush1.msra.mxu0 %v3021
  %3104 = vmatprep.subr.mxu0 0.0
  %3105 = vmatpush1.msra.mxu0 %v3022
  %3106 = vmatprep.subr.mxu0 0.0
  %3107 = vmatpush1.msra.mxu0 %v3023
  %3108 = vmatprep.subr.mxu0 0.0
  %3109 = vmatpush1.msra.mxu0 %v3024
  %3110 = vmatprep.subr.mxu0 0.0
  %3111 = vmatpush1.msra.mxu0 %v3025
  %3112 = vmatprep.subr.mxu0 0.0
  %3113 = vmatpush1.msra.mxu0 %v3026
  %3114 = vmatprep.subr.mxu0 0.0
  %3115 = vmatpush1.msra.mxu0 %v3027
  %3116 = vmatprep.subr.mxu0 0.0
  %3117 = vmatpush1.msra.mxu0 %v3028
  %3118 = vmatprep.subr.mxu0 0.0
  %3119 = vmatpush1.msra.mxu0 %v3029
  %3120 = vmatprep.subr.mxu0 0.0
  %3121 = vmatpush1.msra.mxu0 %v3030
  %3122 = vmatprep.subr.mxu0 0.0
  %3123 = vmatpush1.msra.mxu0 %v3031
  %3124 = vmatprep.subr.mxu0 0.0
  %3125 = vmatpush1.msra.mxu0 %v3032
  %3126 = vmatprep.subr.mxu0 0.0
  %3127 = vmatpush1.msra.mxu0 %v3033
  %3128 = vmatprep.subr.mxu0 0.0
  %3129 = vmatpush1.msra.mxu0 %v3034
  %3130 = vmatprep.subr.mxu0 0.0
  %3131 = vmatpush1.msra.mxu0 0.0
  %3132 = vmatprep.subr.mxu0 0.0
  %3133 = vmatpush1.msra.mxu0 0.0
  %3134 = vmatprep.subr.mxu0 0.0
  %3135 = vmatpush1.msra.mxu0 0.0
  %3136 = vmatprep.subr.mxu0 0.0
  %3137 = vmatpush1.msra.mxu0 0.0
  %3138 = vmatprep.subr.mxu0 0.0
  %3139 = vmatpush1.msra.mxu0 0.0
  %3140 = vmatprep.subr.mxu0 0.0
  %3141 = vmatpush1.msra.mxu0 0.0
  %3142 = vmatprep.subr.mxu0 0.0
  %3143 = vmatpush1.msra.mxu0 0.0
  %3144 = vmatprep.subr.mxu0 0.0
  %3145 = vmatpush1.msra.mxu0 0.0
  %3146 = vmatprep.subr.mxu0 0.0
  %3147 = vmatpush1.msra.mxu0 0.0
  %3148 = vmatprep.subr.mxu0 0.0
  %3149 = vmatpush1.msra.mxu0 0.0
  %3150 = vmatprep.subr.mxu0 0.0
  %3151 = vmatpush1.msra.mxu0 0.0
  %3152 = vmatprep.mubr.f32.mxu0 %v3041
  %3153 = vmatmul.mubr.f32.gmra.mrb[0].mxu0 %v2981
  %v3154 = vpop.f32.mrb[0].mxu0
  %v3155 = vadd.f32 %v3039, %v3154
  %v3156 = vpop.f32.mrb[0].mxu0
  %3157 = vmatprep.mubr.f32.mxu0 %v3044
  %3158 = vmatmul.mubr.f32.gmra.mrb[0].mxu0 %v2983
  %v3159 = vpop.f32.mrb[0].mxu0
  %v3160 = vadd.f32 %v3039, %v3159
  %v3161 = vpop.f32.mrb[0].mxu0
  %3162 = vmatprep.mubr.f32.mxu0 %v3047
  %3163 = vmatmul.mubr.f32.gmra.mrb[0].mxu0 %v2985
  %v3164 = vpop.f32.mrb[0].mxu0
  %v3165 = vadd.f32 %v3039, %v3164
  %v3166 = vpop.f32.mrb[0].mxu0
  %3167 = vmatprep.mubr.f32.mxu0 %v3050
  %3168 = vmatmul.mubr.f32.gmra.mrb[0].mxu0 %v2987
  %v3169 = vpop.f32.mrb[0].mxu0
  %v3170 = vadd.f32 %v3039, %v3169
  %v3171 = vpop.f32.mrb[0].mxu0
  %3172 = vmatprep.mubr.f32.mxu0 %v3053
  %3173 = vmatmul.mubr.f32.gmra.mrb[0].mxu0 %v2989
  %v3174 = vpop.f32.mrb[0].mxu0
  %v3175 = vadd.f32 %v3039, %v3174
  %v3176 = vpop.f32.mrb[0].mxu0
  %3177 = vmatprep.mubr.f32.mxu0 %v3056
  %3178 = vmatmul.mubr.f32.gmra.mrb[0].mxu0 %v2991
  %v3179 = vpop.f32.mrb[0].mxu0
  %v3180 = vadd.f32 %v3039, %v3179
  %v3181 = vpop.f32.mrb[0].mxu0
  %3182 = vmatprep.mubr.f32.mxu0 %v3059
  %3183 = vmatmul.mubr.f32.gmra.mrb[0].mxu0 %v2993
  %v3184 = vpop.f32.mrb[0].mxu0
  %v3185 = vadd.f32 %v3039, %v3184
  %v3186 = vpop.f32.mrb[0].mxu0
  %3187 = vmatprep.mubr.f32.mxu0 %v3062
  %3188 = vmatmul.mubr.f32.gmra.mrb[0].mxu0 %v2995
  %v3189 = vpop.f32.mrb[0].mxu0
  %v3190 = vadd.f32 %v3039, %v3189
  %v3191 = vpop.f32.mrb[0].mxu0
  %3192 = vmatprep.mubr.f32.mxu0 %v3065
  %3193 = vmatmul.mubr.f32.gmra.mrb[0].mxu0 %v2997
  %v3194 = vpop.f32.mrb[0].mxu0
  %v3195 = vadd.f32 %v3039, %v3194
  %v3196 = vpop.f32.mrb[0].mxu0
  %3197 = vmatprep.mubr.f32.mxu0 %v3068
  %3198 = vmatmul.mubr.f32.gmra.mrb[0].mxu0 %v2999
  %v3199 = vpop.f32.mrb[0].mxu0
  %v3200 = vadd.f32 %v3039, %v3199
  %v3201 = vpop.f32.mrb[0].mxu0
  %3202 = vmatprep.mubr.f32.mxu0 %v3071
  %3203 = vmatmul.mubr.f32.gmra.mrb[0].mxu0 %v3001
  %v3204 = vpop.f32.mrb[0].mxu0
  %v3205 = vadd.f32 %v3039, %v3204
  %v3206 = vpop.f32.mrb[0].mxu0
  %3207 = vmatprep.mubr.f32.mxu0 %v3074
  %3208 = vmatmul.mubr.f32.gmra.mrb[0].mxu0 %v3003
  %v3209 = vpop.f32.mrb[0].mxu0
  %v3210 = vadd.f32 %v3039, %v3209
  %v3211 = vpop.f32.mrb[0].mxu0
  %3212 = vmatprep.mubr.f32.mxu0 %v3077
  %3213 = vmatmul.mubr.f32.gmra.mrb[0].mxu0 %v3005
  %v3214 = vpop.f32.mrb[0].mxu0
  %v3215 = vadd.f32 %v3039, %v3214
  %v3216 = vpop.f32.mrb[0].mxu0
  %3217 = vmatprep.mubr.f32.mxu0 %v3080
  %3218 = vmatmul.mubr.f32.gmra.mrb[0].mxu0 %v3007
  %v3219 = vpop.f32.mrb[0].mxu0
  %v3220 = vadd.f32 %v3039, %v3219
  %v3221 = vpop.f32.mrb[0].mxu0
  %3222 = vmatprep.mubr.f32.mxu0 %v3083
  %3223 = vmatmul.mubr.f32.gmra.mrb[0].mxu0 %v3009
  %v3224 = vpop.f32.mrb[0].mxu0
  %v3225 = vadd.f32 %v3039, %v3224
  %v3226 = vpop.f32.mrb[0].mxu0
  %3227 = vmatprep.mubr.f32.mxu0 %v3086
  %3228 = vmatmul.mubr.f32.gmra.mrb[0].mxu0 %v3011
  %v3229 = vpop.f32.mrb[0].mxu0
  %v3230 = vadd.f32 %v3039, %v3229
  %v3231 = vpop.f32.mrb[0].mxu0
  %3232 = vdwg.mxu0
  %v3233 = vmax.f32 %v3155, 0.0
  %v3234 = vmax.f32 %v3160, 0.0
  %v3235 = vmax.f32 %v3165, 0.0
  %v3236 = vmax.f32 %v3170, 0.0
  %v3237 = vmax.f32 %v3175, 0.0
  %v3238 = vmax.f32 %v3180, 0.0
  %v3239 = vmax.f32 %v3185, 0.0
  %v3240 = vmax.f32 %v3190, 0.0
  %v3241 = vmax.f32 %v3195, 0.0
  %v3242 = vmax.f32 %v3200, 0.0
  %v3243 = vmax.f32 %v3205, 0.0
  %v3244 = vmax.f32 %v3210, 0.0
  %v3245 = vmax.f32 %v3215, 0.0
  %v3246 = vmax.f32 %v3220, 0.0
  %v3247 = vmax.f32 %v3225, 0.0
  %v3248 = vmax.f32 %v3230, 0.0
  %s3249 = scalar_lea.vmem %s3, 144
  %v3250 = vld [vmem:[%s3249] sm:$0xff]
  %v3251 = vld [vmem:[%s3249 + $0x8] sm:$0xff]
  %v3252 = vld [vmem:[%s3249 + $0x10] sm:$0xff]
  %v3253 = vld [vmem:[%s3249 + $0x18] sm:$0xff]
  %v3254 = vld [vmem:[%s3249 + $0x20] sm:$0xff]
  %v3255 = vld [vmem:[%s3249 + $0x28] sm:$0xff]
  %v3256 = vld [vmem:[%s3249 + $0x30] sm:$0xff]
  %v3257 = vld [vmem:[%s3249 + $0x38] sm:$0xff]
  %v3258 = vld [vmem:[%s3249 + $0x40] sm:$0xff]
  %v3259 = vld [vmem:[%s4 + $0x2] sm:$0x1]
  %v3260 = vlaneseq
  %v3261 = vshrl.u32 %v3260, 7
  %v3262 = vsub.s32 0, %v3261
  %v3263 = vrot.slane %v3259, %v3262
  %v3265 = vsel %vm999, %v3233, 0
  %v3268 = vsel %vm999, %v3234, 0
  %v3271 = vsel %vm999, %v3235, 0
  %v3274 = vsel %vm999, %v3236, 0
  %v3277 = vsel %vm999, %v3237, 0
  %v3280 = vsel %vm999, %v3238, 0
  %v3283 = vsel %vm999, %v3239, 0
  %v3286 = vsel %vm999, %v3240, 0
  %v3289 = vsel %vm999, %v3241, 0
  %v3292 = vsel %vm999, %v3242, 0
  %v3295 = vsel %vm999, %v3243, 0
  %v3298 = vsel %vm999, %v3244, 0
  %v3301 = vsel %vm999, %v3245, 0
  %v3304 = vsel %vm999, %v3246, 0
  %v3307 = vsel %vm999, %v3247, 0
  %v3310 = vsel %vm999, %v3248, 0
  %3312 = vmatprep.subr.mxu0 0.0
  %3313 = vmatpush1.msra.mxu0 %v3250
  %3314 = vmatprep.subr.mxu0 0.0
  %3315 = vmatpush1.msra.mxu0 %v3251
  %3316 = vmatprep.subr.mxu0 0.0
  %3317 = vmatpush1.msra.mxu0 %v3252
  %3318 = vmatprep.subr.mxu0 0.0
  %3319 = vmatpush1.msra.mxu0 %v3253
  %3320 = vmatprep.subr.mxu0 0.0
  %3321 = vmatpush1.msra.mxu0 %v3254
  %3322 = vmatprep.subr.mxu0 0.0
  %3323 = vmatpush1.msra.mxu0 %v3255
  %3324 = vmatprep.subr.mxu0 0.0
  %3325 = vmatpush1.msra.mxu0 %v3256
  %3326 = vmatprep.subr.mxu0 0.0
  %3327 = vmatpush1.msra.mxu0 %v3257
  %3328 = vmatprep.subr.mxu0 0.0
  %3329 = vmatpush1.msra.mxu0 %v3258
  %3330 = vmatprep.subr.mxu0 0.0
  %3331 = vmatpush1.msra.mxu0 0.0
  %3332 = vmatprep.subr.mxu0 0.0
  %3333 = vmatpush1.msra.mxu0 0.0
  %3334 = vmatprep.subr.mxu0 0.0
  %3335 = vmatpush1.msra.mxu0 0.0
  %3336 = vmatprep.subr.mxu0 0.0
  %3337 = vmatpush1.msra.mxu0 0.0
  %3338 = vmatprep.subr.mxu0 0.0
  %3339 = vmatpush1.msra.mxu0 0.0
  %3340 = vmatprep.subr.mxu0 0.0
  %3341 = vmatpush1.msra.mxu0 0.0
  %3342 = vmatprep.subr.mxu0 0.0
  %3343 = vmatpush1.msra.mxu0 0.0
  %3344 = vmatprep.subr.mxu0 0.0
  %3345 = vmatpush1.msra.mxu0 0.0
  %3346 = vmatprep.subr.mxu0 0.0
  %3347 = vmatpush1.msra.mxu0 0.0
  %3348 = vmatprep.subr.mxu0 0.0
  %3349 = vmatpush1.msra.mxu0 0.0
  %3350 = vmatprep.subr.mxu0 0.0
  %3351 = vmatpush1.msra.mxu0 0.0
  %3352 = vmatprep.subr.mxu0 0.0
  %3353 = vmatpush1.msra.mxu0 0.0
  %3354 = vmatprep.subr.mxu0 0.0
  %3355 = vmatpush1.msra.mxu0 0.0
  %3356 = vmatprep.subr.mxu0 0.0
  %3357 = vmatpush1.msra.mxu0 0.0
  %3358 = vmatprep.subr.mxu0 0.0
  %3359 = vmatpush1.msra.mxu0 0.0
  %3360 = vmatprep.subr.mxu0 0.0
  %3361 = vmatpush1.msra.mxu0 0.0
  %3362 = vmatprep.subr.mxu0 0.0
  %3363 = vmatpush1.msra.mxu0 0.0
  %3364 = vmatprep.subr.mxu0 0.0
  %3365 = vmatpush1.msra.mxu0 0.0
  %3366 = vmatprep.subr.mxu0 0.0
  %3367 = vmatpush1.msra.mxu0 0.0
  %3368 = vmatprep.subr.mxu0 0.0
  %3369 = vmatpush1.msra.mxu0 0.0
  %3370 = vmatprep.subr.mxu0 0.0
  %3371 = vmatpush1.msra.mxu0 0.0
  %3372 = vmatprep.subr.mxu0 0.0
  %3373 = vmatpush1.msra.mxu0 0.0
  %3374 = vmatprep.subr.mxu0 0.0
  %3375 = vmatpush1.msra.mxu0 0.0
  %3376 = vmatprep.mubr.f32.mxu0 0.0
  %3377 = vmatmul.mubr.f32.gmra.mrb[0].mxu0 %v3265
  %v3378 = vpop.f32.mrb[0].mxu0
  %v3379 = vadd.f32 %v3263, %v3378
  %v3380 = vpop.f32.mrb[0].mxu0
  %3381 = vmatprep.mubr.f32.mxu0 0.0
  %3382 = vmatmul.mubr.f32.gmra.mrb[0].mxu0 %v3268
  %v3383 = vpop.f32.mrb[0].mxu0
  %v3384 = vadd.f32 %v3263, %v3383
  %v3385 = vpop.f32.mrb[0].mxu0
  %3386 = vmatprep.mubr.f32.mxu0 0.0
  %3387 = vmatmul.mubr.f32.gmra.mrb[0].mxu0 %v3271
  %v3388 = vpop.f32.mrb[0].mxu0
  %v3389 = vadd.f32 %v3263, %v3388
  %v3390 = vpop.f32.mrb[0].mxu0
  %3391 = vmatprep.mubr.f32.mxu0 0.0
  %3392 = vmatmul.mubr.f32.gmra.mrb[0].mxu0 %v3274
  %v3393 = vpop.f32.mrb[0].mxu0
  %v3394 = vadd.f32 %v3263, %v3393
  %v3395 = vpop.f32.mrb[0].mxu0
  %3396 = vmatprep.mubr.f32.mxu0 0.0
  %3397 = vmatmul.mubr.f32.gmra.mrb[0].mxu0 %v3277
  %v3398 = vpop.f32.mrb[0].mxu0
  %v3399 = vadd.f32 %v3263, %v3398
  %v3400 = vpop.f32.mrb[0].mxu0
  %3401 = vmatprep.mubr.f32.mxu0 0.0
  %3402 = vmatmul.mubr.f32.gmra.mrb[0].mxu0 %v3280
  %v3403 = vpop.f32.mrb[0].mxu0
  %v3404 = vadd.f32 %v3263, %v3403
  %v3405 = vpop.f32.mrb[0].mxu0
  %3406 = vmatprep.mubr.f32.mxu0 0.0
  %3407 = vmatmul.mubr.f32.gmra.mrb[0].mxu0 %v3283
  %v3408 = vpop.f32.mrb[0].mxu0
  %v3409 = vadd.f32 %v3263, %v3408
  %v3410 = vpop.f32.mrb[0].mxu0
  %3411 = vmatprep.mubr.f32.mxu0 0.0
  %3412 = vmatmul.mubr.f32.gmra.mrb[0].mxu0 %v3286
  %v3413 = vpop.f32.mrb[0].mxu0
  %v3414 = vadd.f32 %v3263, %v3413
  %v3415 = vpop.f32.mrb[0].mxu0
  %3416 = vmatprep.mubr.f32.mxu0 0.0
  %3417 = vmatmul.mubr.f32.gmra.mrb[0].mxu0 %v3289
  %v3418 = vpop.f32.mrb[0].mxu0
  %v3419 = vadd.f32 %v3263, %v3418
  %v3420 = vpop.f32.mrb[0].mxu0
  %3421 = vmatprep.mubr.f32.mxu0 0.0
  %3422 = vmatmul.mubr.f32.gmra.mrb[0].mxu0 %v3292
  %v3423 = vpop.f32.mrb[0].mxu0
  %v3424 = vadd.f32 %v3263, %v3423
  %v3425 = vpop.f32.mrb[0].mxu0
  %3426 = vmatprep.mubr.f32.mxu0 0.0
  %3427 = vmatmul.mubr.f32.gmra.mrb[0].mxu0 %v3295
  %v3428 = vpop.f32.mrb[0].mxu0
  %v3429 = vadd.f32 %v3263, %v3428
  %v3430 = vpop.f32.mrb[0].mxu0
  %3431 = vmatprep.mubr.f32.mxu0 0.0
  %3432 = vmatmul.mubr.f32.gmra.mrb[0].mxu0 %v3298
  %v3433 = vpop.f32.mrb[0].mxu0
  %v3434 = vadd.f32 %v3263, %v3433
  %v3435 = vpop.f32.mrb[0].mxu0
  %3436 = vmatprep.mubr.f32.mxu0 0.0
  %3437 = vmatmul.mubr.f32.gmra.mrb[0].mxu0 %v3301
  %v3438 = vpop.f32.mrb[0].mxu0
  %v3439 = vadd.f32 %v3263, %v3438
  %v3440 = vpop.f32.mrb[0].mxu0
  %3441 = vmatprep.mubr.f32.mxu0 0.0
  %3442 = vmatmul.mubr.f32.gmra.mrb[0].mxu0 %v3304
  %v3443 = vpop.f32.mrb[0].mxu0
  %v3444 = vadd.f32 %v3263, %v3443
  %v3445 = vpop.f32.mrb[0].mxu0
  %3446 = vmatprep.mubr.f32.mxu0 0.0
  %3447 = vmatmul.mubr.f32.gmra.mrb[0].mxu0 %v3307
  %v3448 = vpop.f32.mrb[0].mxu0
  %v3449 = vadd.f32 %v3263, %v3448
  %v3450 = vpop.f32.mrb[0].mxu0
  %3451 = vmatprep.mubr.f32.mxu0 0.0
  %3452 = vmatmul.mubr.f32.gmra.mrb[0].mxu0 %v3310
  %v3453 = vpop.f32.mrb[0].mxu0
  %v3454 = vadd.f32 %v3263, %v3453
  %v3455 = vpop.f32.mrb[0].mxu0
  %3456 = vdwg.mxu0
  %v3457 = vmax.f32 %v3379, 0.0
  %v3458 = vmax.f32 %v3384, 0.0
  %v3459 = vmax.f32 %v3389, 0.0
  %v3460 = vmax.f32 %v3394, 0.0
  %v3461 = vmax.f32 %v3399, 0.0
  %v3462 = vmax.f32 %v3404, 0.0
  %v3463 = vmax.f32 %v3409, 0.0
  %v3464 = vmax.f32 %v3414, 0.0
  %v3465 = vmax.f32 %v3419, 0.0
  %v3466 = vmax.f32 %v3424, 0.0
  %v3467 = vmax.f32 %v3429, 0.0
  %v3468 = vmax.f32 %v3434, 0.0
  %v3469 = vmax.f32 %v3439, 0.0
  %v3470 = vmax.f32 %v3444, 0.0
  %v3471 = vmax.f32 %v3449, 0.0
  %v3472 = vmax.f32 %v3454, 0.0
  %3473 = vst.msk [vmem:[#allocation2 + $0x30] sm:$0xff] %vm29, %v3457
  %3474 = vst.msk [vmem:[#allocation2 + $0x38] sm:$0xff] %vm29, %v3458
  %3475 = vst.msk [vmem:[#allocation2 + $0x40] sm:$0xff] %vm29, %v3459
  %3476 = vst.msk [vmem:[#allocation2 + $0x48] sm:$0xff] %vm29, %v3460
  %3477 = vst.msk [vmem:[#allocation2 + $0x50] sm:$0xff] %vm29, %v3461
  %3478 = vst.msk [vmem:[#allocation2 + $0x58] sm:$0xff] %vm29, %v3462
  %3479 = vst.msk [vmem:[#allocation2 + $0x60] sm:$0xff] %vm29, %v3463
  %3480 = vst.msk [vmem:[#allocation2 + $0x68] sm:$0xff] %vm29, %v3464
  %3481 = vst.msk [vmem:[#allocation2 + $0x70] sm:$0xff] %vm29, %v3465
  %3482 = vst.msk [vmem:[#allocation2 + $0x78] sm:$0xff] %vm29, %v3466
  %3483 = vst.msk [vmem:[#allocation2 + $0x80] sm:$0xff] %vm29, %v3467
  %3484 = vst.msk [vmem:[#allocation2 + $0x88] sm:$0xff] %vm29, %v3468
  %3485 = vst.msk [vmem:[#allocation2 + $0x90] sm:$0xff] %vm29, %v3469
  %3486 = vst.msk [vmem:[#allocation2 + $0x98] sm:$0xff] %vm29, %v3470
  %3487 = vst.msk [vmem:[#allocation2 + $0xa0] sm:$0xff] %vm29, %v3471
  %3488 = vst.msk [vmem:[#allocation2 + $0xa8] sm:$0xff] %vm29, %v3472
  %v3489 = vld [vmem:[%s5] sm:$0xff]
  %v3490 = vld [vmem:[%s5 + $0x8] sm:$0xff]
  %v3491 = vld [vmem:[%s5 + $0x10] sm:$0xff]
  %v3492 = vld [vmem:[%s5 + $0x18] sm:$0xff]
  %v3493 = vld [vmem:[%s5 + $0x20] sm:$0xff]
  %v3494 = vld [vmem:[%s5 + $0x28] sm:$0xff]
  %v3495 = vld [vmem:[%s5 + $0x30] sm:$0xff]
  %v3496 = vld [vmem:[%s5 + $0x38] sm:$0xff]
  %v3497 = vld [vmem:[%s5 + $0x40] sm:$0xff]
  %v3498 = vld [vmem:[%s5 + $0x48] sm:$0xff]
  %v3499 = vld [vmem:[%s5 + $0x50] sm:$0xff]
  %v3500 = vld [vmem:[%s5 + $0x58] sm:$0xff]
  %v3501 = vld [vmem:[%s7] sm:$0xf]
  %v3503 = vlaneseq
  %v3504 = vshrl.u32 %v3503, 7
  %v3505 = vsub.s32 0, %v3504
  %v3506 = vrot.slane %v3501, %v3505
  %v3507 = vlaneseq
  %v3508 = vshrl.u32 %v3507, 7
  %v3509 = vsub.s32 1, %v3508
  %v3510 = vrot.slane %v3501, %v3509
  %v3511 = vlaneseq
  %v3512 = vshrl.u32 %v3511, 7
  %v3513 = vsub.s32 2, %v3512
  %v3514 = vrot.slane %v3501, %v3513
  %v3515 = vlaneseq
  %v3516 = vshrl.u32 %v3515, 7
  %v3517 = vsub.s32 3, %v3516
  %v3518 = vrot.slane %v3501, %v3517
  %v3524 = vsel %vm29, %v3457, 0
  %v3527 = vsel %vm29, %v3458, 0
  %v3530 = vsel %vm29, %v3459, 0
  %v3533 = vsel %vm29, %v3460, 0
  %v3536 = vsel %vm29, %v3461, 0
  %v3539 = vsel %vm29, %v3462, 0
  %v3542 = vsel %vm29, %v3463, 0
  %v3545 = vsel %vm29, %v3464, 0
  %v3548 = vsel %vm29, %v3465, 0
  %v3551 = vsel %vm29, %v3466, 0
  %v3554 = vsel %vm29, %v3467, 0
  %v3557 = vsel %vm29, %v3468, 0
  %v3560 = vsel %vm29, %v3469, 0
  %v3563 = vsel %vm29, %v3470, 0
  %v3566 = vsel %vm29, %v3471, 0
  %v3569 = vsel %vm29, %v3472, 0
  %3571 = vmatprep.subr.mxu0 %v3490
  %3572 = vmatpush1.msra.mxu0 %v3489
  %3573 = vmatprep.subr.mxu0 %v3494
  %3574 = vmatpush1.msra.mxu0 %v3493
  %3575 = vmatprep.subr.mxu0 %v3498
  %3576 = vmatpush1.msra.mxu0 %v3497
  %3577 = vmatprep.subr.mxu0 0.0
  %3578 = vmatpush1.msra.mxu0 0.0
  %3579 = vmatprep.subr.mxu0 0.0
  %3580 = vmatpush1.msra.mxu0 0.0
  %3581 = vmatprep.subr.mxu0 0.0
  %3582 = vmatpush1.msra.mxu0 0.0
  %3583 = vmatprep.subr.mxu0 0.0
  %3584 = vmatpush1.msra.mxu0 0.0
  %3585 = vmatprep.subr.mxu0 0.0
  %3586 = vmatpush1.msra.mxu0 0.0
  %3587 = vmatprep.subr.mxu0 0.0
  %3588 = vmatpush1.msra.mxu0 0.0
  %3589 = vmatprep.subr.mxu0 0.0
  %3590 = vmatpush1.msra.mxu0 0.0
  %3591 = vmatprep.subr.mxu0 0.0
  %3592 = vmatpush1.msra.mxu0 0.0
  %3593 = vmatprep.subr.mxu0 0.0
  %3594 = vmatpush1.msra.mxu0 0.0
  %3595 = vmatprep.subr.mxu0 0.0
  %3596 = vmatpush1.msra.mxu0 0.0
  %3597 = vmatprep.subr.mxu0 0.0
  %3598 = vmatpush1.msra.mxu0 0.0
  %3599 = vmatprep.subr.mxu0 0.0
  %3600 = vmatpush1.msra.mxu0 0.0
  %3601 = vmatprep.subr.mxu0 0.0
  %3602 = vmatpush1.msra.mxu0 0.0
  %3603 = vmatprep.subr.mxu0 0.0
  %3604 = vmatpush1.msra.mxu0 0.0
  %3605 = vmatprep.subr.mxu0 0.0
  %3606 = vmatpush1.msra.mxu0 0.0
  %3607 = vmatprep.subr.mxu0 0.0
  %3608 = vmatpush1.msra.mxu0 0.0
  %3609 = vmatprep.subr.mxu0 0.0
  %3610 = vmatpush1.msra.mxu0 0.0
  %3611 = vmatprep.subr.mxu0 0.0
  %3612 = vmatpush1.msra.mxu0 0.0
  %3613 = vmatprep.subr.mxu0 0.0
  %3614 = vmatpush1.msra.mxu0 0.0
  %3615 = vmatprep.subr.mxu0 0.0
  %3616 = vmatpush1.msra.mxu0 0.0
  %3617 = vmatprep.subr.mxu0 0.0
  %3618 = vmatpush1.msra.mxu0 0.0
  %3619 = vmatprep.subr.mxu0 0.0
  %3620 = vmatpush1.msra.mxu0 0.0
  %3621 = vmatprep.subr.mxu0 0.0
  %3622 = vmatpush1.msra.mxu0 0.0
  %3623 = vmatprep.subr.mxu0 0.0
  %3624 = vmatpush1.msra.mxu0 0.0
  %3625 = vmatprep.subr.mxu0 0.0
  %3626 = vmatpush1.msra.mxu0 0.0
  %3627 = vmatprep.subr.mxu0 0.0
  %3628 = vmatpush1.msra.mxu0 0.0
  %3629 = vmatprep.subr.mxu0 0.0
  %3630 = vmatpush1.msra.mxu0 0.0
  %3631 = vmatprep.subr.mxu0 0.0
  %3632 = vmatpush1.msra.mxu0 0.0
  %3633 = vmatprep.subr.mxu0 0.0
  %3634 = vmatpush1.msra.mxu0 0.0
  %3635 = vmatprep.mubr.f32.mxu0 0.0
  %3636 = vmatmul.mubr.f32.gmra.mrb[0].mxu0 %v3524
  %v3637 = vpop.f32.mrb[0].mxu0
  %v3638 = vadd.f32 %v3506, %v3637
  %v3639 = vpop.f32.mrb[0].mxu0
  %v3640 = vadd.f32 %v3510, %v3639
  %3641 = vmatprep.mubr.f32.mxu0 0.0
  %3642 = vmatmul.mubr.f32.gmra.mrb[0].mxu0 %v3527
  %v3643 = vpop.f32.mrb[0].mxu0
  %v3644 = vadd.f32 %v3506, %v3643
  %v3645 = vpop.f32.mrb[0].mxu0
  %v3646 = vadd.f32 %v3510, %v3645
  %3647 = vmatprep.mubr.f32.mxu0 0.0
  %3648 = vmatmul.mubr.f32.gmra.mrb[0].mxu0 %v3530
  %v3649 = vpop.f32.mrb[0].mxu0
  %v3650 = vadd.f32 %v3506, %v3649
  %v3651 = vpop.f32.mrb[0].mxu0
  %v3652 = vadd.f32 %v3510, %v3651
  %3653 = vmatprep.mubr.f32.mxu0 0.0
  %3654 = vmatmul.mubr.f32.gmra.mrb[0].mxu0 %v3533
  %v3655 = vpop.f32.mrb[0].mxu0
  %v3656 = vadd.f32 %v3506, %v3655
  %v3657 = vpop.f32.mrb[0].mxu0
  %v3658 = vadd.f32 %v3510, %v3657
  %3659 = vmatprep.mubr.f32.mxu0 0.0
  %3660 = vmatmul.mubr.f32.gmra.mrb[0].mxu0 %v3536
  %v3661 = vpop.f32.mrb[0].mxu0
  %v3662 = vadd.f32 %v3506, %v3661
  %v3663 = vpop.f32.mrb[0].mxu0
  %v3664 = vadd.f32 %v3510, %v3663
  %3665 = vmatprep.mubr.f32.mxu0 0.0
  %3666 = vmatmul.mubr.f32.gmra.mrb[0].mxu0 %v3539
  %v3667 = vpop.f32.mrb[0].mxu0
  %v3668 = vadd.f32 %v3506, %v3667
  %v3669 = vpop.f32.mrb[0].mxu0
  %v3670 = vadd.f32 %v3510, %v3669
  %3671 = vmatprep.mubr.f32.mxu0 0.0
  %3672 = vmatmul.mubr.f32.gmra.mrb[0].mxu0 %v3542
  %v3673 = vpop.f32.mrb[0].mxu0
  %v3674 = vadd.f32 %v3506, %v3673
  %v3675 = vpop.f32.mrb[0].mxu0
  %v3676 = vadd.f32 %v3510, %v3675
  %3677 = vmatprep.mubr.f32.mxu0 0.0
  %3678 = vmatmul.mubr.f32.gmra.mrb[0].mxu0 %v3545
  %v3679 = vpop.f32.mrb[0].mxu0
  %v3680 = vadd.f32 %v3506, %v3679
  %v3681 = vpop.f32.mrb[0].mxu0
  %v3682 = vadd.f32 %v3510, %v3681
  %3683 = vmatprep.mubr.f32.mxu0 0.0
  %3684 = vmatmul.mubr.f32.gmra.mrb[0].mxu0 %v3548
  %v3685 = vpop.f32.mrb[0].mxu0
  %v3686 = vadd.f32 %v3506, %v3685
  %v3687 = vpop.f32.mrb[0].mxu0
  %v3688 = vadd.f32 %v3510, %v3687
  %3689 = vmatprep.mubr.f32.mxu0 0.0
  %3690 = vmatmul.mubr.f32.gmra.mrb[0].mxu0 %v3551
  %v3691 = vpop.f32.mrb[0].mxu0
  %v3692 = vadd.f32 %v3506, %v3691
  %v3693 = vpop.f32.mrb[0].mxu0
  %v3694 = vadd.f32 %v3510, %v3693
  %3695 = vmatprep.mubr.f32.mxu0 0.0
  %3696 = vmatmul.mubr.f32.gmra.mrb[0].mxu0 %v3554
  %v3697 = vpop.f32.mrb[0].mxu0
  %v3698 = vadd.f32 %v3506, %v3697
  %v3699 = vpop.f32.mrb[0].mxu0
  %v3700 = vadd.f32 %v3510, %v3699
  %3701 = vmatprep.mubr.f32.mxu0 0.0
  %3702 = vmatmul.mubr.f32.gmra.mrb[0].mxu0 %v3557
  %v3703 = vpop.f32.mrb[0].mxu0
  %v3704 = vadd.f32 %v3506, %v3703
  %v3705 = vpop.f32.mrb[0].mxu0
  %v3706 = vadd.f32 %v3510, %v3705
  %3707 = vmatprep.mubr.f32.mxu0 0.0
  %3708 = vmatmul.mubr.f32.gmra.mrb[0].mxu0 %v3560
  %v3709 = vpop.f32.mrb[0].mxu0
  %v3710 = vadd.f32 %v3506, %v3709
  %v3711 = vpop.f32.mrb[0].mxu0
  %v3712 = vadd.f32 %v3510, %v3711
  %3713 = vmatprep.mubr.f32.mxu0 0.0
  %3714 = vmatmul.mubr.f32.gmra.mrb[0].mxu0 %v3563
  %v3715 = vpop.f32.mrb[0].mxu0
  %v3716 = vadd.f32 %v3506, %v3715
  %v3717 = vpop.f32.mrb[0].mxu0
  %v3718 = vadd.f32 %v3510, %v3717
  %3719 = vmatprep.mubr.f32.mxu0 0.0
  %3720 = vmatmul.mubr.f32.gmra.mrb[0].mxu0 %v3566
  %v3721 = vpop.f32.mrb[0].mxu0
  %v3722 = vadd.f32 %v3506, %v3721
  %v3723 = vpop.f32.mrb[0].mxu0
  %v3724 = vadd.f32 %v3510, %v3723
  %3725 = vmatprep.mubr.f32.mxu0 0.0
  %3726 = vmatmul.mubr.f32.gmra.mrb[0].mxu0 %v3569
  %v3727 = vpop.f32.mrb[0].mxu0
  %v3728 = vadd.f32 %v3506, %v3727
  %v3729 = vpop.f32.mrb[0].mxu0
  %v3730 = vadd.f32 %v3510, %v3729
  %3731 = vdwg.mxu0
  %3732 = vmatprep.subr.mxu0 %v3492
  %3733 = vmatpush1.msra.mxu0 %v3491
  %3734 = vmatprep.subr.mxu0 %v3496
  %3735 = vmatpush1.msra.mxu0 %v3495
  %3736 = vmatprep.subr.mxu0 %v3500
  %3737 = vmatpush1.msra.mxu0 %v3499
  %3738 = vmatprep.subr.mxu0 0.0
  %3739 = vmatpush1.msra.mxu0 0.0
  %3740 = vmatprep.subr.mxu0 0.0
  %3741 = vmatpush1.msra.mxu0 0.0
  %3742 = vmatprep.subr.mxu0 0.0
  %3743 = vmatpush1.msra.mxu0 0.0
  %3744 = vmatprep.subr.mxu0 0.0
  %3745 = vmatpush1.msra.mxu0 0.0
  %3746 = vmatprep.subr.mxu0 0.0
  %3747 = vmatpush1.msra.mxu0 0.0
  %3748 = vmatprep.subr.mxu0 0.0
  %3749 = vmatpush1.msra.mxu0 0.0
  %3750 = vmatprep.subr.mxu0 0.0
  %3751 = vmatpush1.msra.mxu0 0.0
  %3752 = vmatprep.subr.mxu0 0.0
  %3753 = vmatpush1.msra.mxu0 0.0
  %3754 = vmatprep.subr.mxu0 0.0
  %3755 = vmatpush1.msra.mxu0 0.0
  %3756 = vmatprep.subr.mxu0 0.0
  %3757 = vmatpush1.msra.mxu0 0.0
  %3758 = vmatprep.subr.mxu0 0.0
  %3759 = vmatpush1.msra.mxu0 0.0
  %3760 = vmatprep.subr.mxu0 0.0
  %3761 = vmatpush1.msra.mxu0 0.0
  %3762 = vmatprep.subr.mxu0 0.0
  %3763 = vmatpush1.msra.mxu0 0.0
  %3764 = vmatprep.subr.mxu0 0.0
  %3765 = vmatpush1.msra.mxu0 0.0
  %3766 = vmatprep.subr.mxu0 0.0
  %3767 = vmatpush1.msra.mxu0 0.0
  %3768 = vmatprep.subr.mxu0 0.0
  %3769 = vmatpush1.msra.mxu0 0.0
  %3770 = vmatprep.subr.mxu0 0.0
  %3771 = vmatpush1.msra.mxu0 0.0
  %3772 = vmatprep.subr.mxu0 0.0
  %3773 = vmatpush1.msra.mxu0 0.0
  %3774 = vmatprep.subr.mxu0 0.0
  %3775 = vmatpush1.msra.mxu0 0.0
  %3776 = vmatprep.subr.mxu0 0.0
  %3777 = vmatpush1.msra.mxu0 0.0
  %3778 = vmatprep.subr.mxu0 0.0
  %3779 = vmatpush1.msra.mxu0 0.0
  %3780 = vmatprep.subr.mxu0 0.0
  %3781 = vmatpush1.msra.mxu0 0.0
  %3782 = vmatprep.subr.mxu0 0.0
  %3783 = vmatpush1.msra.mxu0 0.0
  %3784 = vmatprep.subr.mxu0 0.0
  %3785 = vmatpush1.msra.mxu0 0.0
  %3786 = vmatprep.subr.mxu0 0.0
  %3787 = vmatpush1.msra.mxu0 0.0
  %3788 = vmatprep.subr.mxu0 0.0
  %3789 = vmatpush1.msra.mxu0 0.0
  %3790 = vmatprep.subr.mxu0 0.0
  %3791 = vmatpush1.msra.mxu0 0.0
  %3792 = vmatprep.subr.mxu0 0.0
  %3793 = vmatpush1.msra.mxu0 0.0
  %3794 = vmatprep.subr.mxu0 0.0
  %3795 = vmatpush1.msra.mxu0 0.0
  %3796 = vmatprep.mubr.f32.mxu0 0.0
  %3797 = vmatmul.mubr.f32.gmra.mrb[0].mxu0 %v3524
  %v3798 = vpop.f32.mrb[0].mxu0
  %v3799 = vadd.f32 %v3514, %v3798
  %v3800 = vpop.f32.mrb[0].mxu0
  %v3801 = vadd.f32 %v3518, %v3800
  %3802 = vmatprep.mubr.f32.mxu0 0.0
  %3803 = vmatmul.mubr.f32.gmra.mrb[0].mxu0 %v3527
  %v3804 = vpop.f32.mrb[0].mxu0
  %v3805 = vadd.f32 %v3514, %v3804
  %v3806 = vpop.f32.mrb[0].mxu0
  %v3807 = vadd.f32 %v3518, %v3806
  %3808 = vmatprep.mubr.f32.mxu0 0.0
  %3809 = vmatmul.mubr.f32.gmra.mrb[0].mxu0 %v3530
  %v3810 = vpop.f32.mrb[0].mxu0
  %v3811 = vadd.f32 %v3514, %v3810
  %v3812 = vpop.f32.mrb[0].mxu0
  %v3813 = vadd.f32 %v3518, %v3812
  %3814 = vmatprep.mubr.f32.mxu0 0.0
  %3815 = vmatmul.mubr.f32.gmra.mrb[0].mxu0 %v3533
  %v3816 = vpop.f32.mrb[0].mxu0
  %v3817 = vadd.f32 %v3514, %v3816
  %v3818 = vpop.f32.mrb[0].mxu0
  %v3819 = vadd.f32 %v3518, %v3818
  %3820 = vmatprep.mubr.f32.mxu0 0.0
  %3821 = vmatmul.mubr.f32.gmra.mrb[0].mxu0 %v3536
  %v3822 = vpop.f32.mrb[0].mxu0
  %v3823 = vadd.f32 %v3514, %v3822
  %v3824 = vpop.f32.mrb[0].mxu0
  %v3825 = vadd.f32 %v3518, %v3824
  %3826 = vmatprep.mubr.f32.mxu0 0.0
  %3827 = vmatmul.mubr.f32.gmra.mrb[0].mxu0 %v3539
  %v3828 = vpop.f32.mrb[0].mxu0
  %v3829 = vadd.f32 %v3514, %v3828
  %v3830 = vpop.f32.mrb[0].mxu0
  %v3831 = vadd.f32 %v3518, %v3830
  %3832 = vmatprep.mubr.f32.mxu0 0.0
  %3833 = vmatmul.mubr.f32.gmra.mrb[0].mxu0 %v3542
  %v3834 = vpop.f32.mrb[0].mxu0
  %v3835 = vadd.f32 %v3514, %v3834
  %v3836 = vpop.f32.mrb[0].mxu0
  %v3837 = vadd.f32 %v3518, %v3836
  %3838 = vmatprep.mubr.f32.mxu0 0.0
  %3839 = vmatmul.mubr.f32.gmra.mrb[0].mxu0 %v3545
  %v3840 = vpop.f32.mrb[0].mxu0
  %v3841 = vadd.f32 %v3514, %v3840
  %v3842 = vpop.f32.mrb[0].mxu0
  %v3843 = vadd.f32 %v3518, %v3842
  %3844 = vmatprep.mubr.f32.mxu0 0.0
  %3845 = vmatmul.mubr.f32.gmra.mrb[0].mxu0 %v3548
  %v3846 = vpop.f32.mrb[0].mxu0
  %v3847 = vadd.f32 %v3514, %v3846
  %v3848 = vpop.f32.mrb[0].mxu0
  %v3849 = vadd.f32 %v3518, %v3848
  %3850 = vmatprep.mubr.f32.mxu0 0.0
  %3851 = vmatmul.mubr.f32.gmra.mrb[0].mxu0 %v3551
  %v3852 = vpop.f32.mrb[0].mxu0
  %v3853 = vadd.f32 %v3514, %v3852
  %v3854 = vpop.f32.mrb[0].mxu0
  %v3855 = vadd.f32 %v3518, %v3854
  %3856 = vmatprep.mubr.f32.mxu0 0.0
  %3857 = vmatmul.mubr.f32.gmra.mrb[0].mxu0 %v3554
  %v3858 = vpop.f32.mrb[0].mxu0
  %v3859 = vadd.f32 %v3514, %v3858
  %v3860 = vpop.f32.mrb[0].mxu0
  %v3861 = vadd.f32 %v3518, %v3860
  %3862 = vmatprep.mubr.f32.mxu0 0.0
  %3863 = vmatmul.mubr.f32.gmra.mrb[0].mxu0 %v3557
  %v3864 = vpop.f32.mrb[0].mxu0
  %v3865 = vadd.f32 %v3514, %v3864
  %v3866 = vpop.f32.mrb[0].mxu0
  %v3867 = vadd.f32 %v3518, %v3866
  %3868 = vmatprep.mubr.f32.mxu0 0.0
  %3869 = vmatmul.mubr.f32.gmra.mrb[0].mxu0 %v3560
  %v3870 = vpop.f32.mrb[0].mxu0
  %v3871 = vadd.f32 %v3514, %v3870
  %v3872 = vpop.f32.mrb[0].mxu0
  %v3873 = vadd.f32 %v3518, %v3872
  %3874 = vmatprep.mubr.f32.mxu0 0.0
  %3875 = vmatmul.mubr.f32.gmra.mrb[0].mxu0 %v3563
  %v3876 = vpop.f32.mrb[0].mxu0
  %v3877 = vadd.f32 %v3514, %v3876
  %v3878 = vpop.f32.mrb[0].mxu0
  %v3879 = vadd.f32 %v3518, %v3878
  %3880 = vmatprep.mubr.f32.mxu0 0.0
  %3881 = vmatmul.mubr.f32.gmra.mrb[0].mxu0 %v3566
  %v3882 = vpop.f32.mrb[0].mxu0
  %v3883 = vadd.f32 %v3514, %v3882
  %v3884 = vpop.f32.mrb[0].mxu0
  %v3885 = vadd.f32 %v3518, %v3884
  %3886 = vmatprep.mubr.f32.mxu0 0.0
  %3887 = vmatmul.mubr.f32.gmra.mrb[0].mxu0 %v3569
  %v3888 = vpop.f32.mrb[0].mxu0
  %v3889 = vadd.f32 %v3514, %v3888
  %v3890 = vpop.f32.mrb[0].mxu0
  %v3891 = vadd.f32 %v3518, %v3890
  %3892 = vdwg.mxu0
  %3893 = vst [vmem:[#allocation4] sm:$0xff] %v3638
  %3894 = vst [vmem:[#allocation4 + $0x8] sm:$0xff] %v3640
  %3895 = vst [vmem:[#allocation4 + $0x10] sm:$0xff] %v3799
  %3896 = vst [vmem:[#allocation4 + $0x18] sm:$0xff] %v3801
  %3897 = vst [vmem:[#allocation4 + $0x20] sm:$0xff] %v3644
  %3898 = vst [vmem:[#allocation4 + $0x28] sm:$0xff] %v3646
  %3899 = vst [vmem:[#allocation4 + $0x30] sm:$0xff] %v3805
  %3900 = vst [vmem:[#allocation4 + $0x38] sm:$0xff] %v3807
  %3901 = vst [vmem:[#allocation4 + $0x40] sm:$0xff] %v3650
  %3902 = vst [vmem:[#allocation4 + $0x48] sm:$0xff] %v3652
  %3903 = vst [vmem:[#allocation4 + $0x50] sm:$0xff] %v3811
  %3904 = vst [vmem:[#allocation4 + $0x58] sm:$0xff] %v3813
  %3905 = vst [vmem:[#allocation4 + $0x60] sm:$0xff] %v3656
  %3906 = vst [vmem:[#allocation4 + $0x68] sm:$0xff] %v3658
  %3907 = vst [vmem:[#allocation4 + $0x70] sm:$0xff] %v3817
  %3908 = vst [vmem:[#allocation4 + $0x78] sm:$0xff] %v3819
  %3909 = vst [vmem:[#allocation4 + $0x80] sm:$0xff] %v3662
  %3910 = vst [vmem:[#allocation4 + $0x88] sm:$0xff] %v3664
  %3911 = vst [vmem:[#allocation4 + $0x90] sm:$0xff] %v3823
  %3912 = vst [vmem:[#allocation4 + $0x98] sm:$0xff] %v3825
  %3913 = vst [vmem:[#allocation4 + $0xa0] sm:$0xff] %v3668
  %3914 = vst [vmem:[#allocation4 + $0xa8] sm:$0xff] %v3670
  %3915 = vst [vmem:[#allocation4 + $0xb0] sm:$0xff] %v3829
  %3916 = vst [vmem:[#allocation4 + $0xb8] sm:$0xff] %v3831
  %3917 = vst [vmem:[#allocation4 + $0xc0] sm:$0xff] %v3674
  %3918 = vst [vmem:[#allocation4 + $0xc8] sm:$0xff] %v3676
  %3919 = vst [vmem:[#allocation4 + $0xd0] sm:$0xff] %v3835
  %3920 = vst [vmem:[#allocation4 + $0xd8] sm:$0xff] %v3837
  %3921 = vst [vmem:[#allocation4 + $0xe0] sm:$0xff] %v3680
  %3922 = vst [vmem:[#allocation4 + $0xe8] sm:$0xff] %v3682
  %3923 = vst [vmem:[#allocation4 + $0xf0] sm:$0xff] %v3841
  %3924 = vst [vmem:[#allocation4 + $0xf8] sm:$0xff] %v3843
  %3925 = vst [vmem:[#allocation4 + $0x100] sm:$0xff] %v3686
  %3926 = vst [vmem:[#allocation4 + $0x108] sm:$0xff] %v3688
  %3927 = vst [vmem:[#allocation4 + $0x110] sm:$0xff] %v3847
  %3928 = vst [vmem:[#allocation4 + $0x118] sm:$0xff] %v3849
  %3929 = vst [vmem:[#allocation4 + $0x120] sm:$0xff] %v3692
  %3930 = vst [vmem:[#allocation4 + $0x128] sm:$0xff] %v3694
  %3931 = vst [vmem:[#allocation4 + $0x130] sm:$0xff] %v3853
  %3932 = vst [vmem:[#allocation4 + $0x138] sm:$0xff] %v3855
  %3933 = vst [vmem:[#allocation4 + $0x140] sm:$0xff] %v3698
  %3934 = vst [vmem:[#allocation4 + $0x148] sm:$0xff] %v3700
  %3935 = vst [vmem:[#allocation4 + $0x150] sm:$0xff] %v3859
  %3936 = vst [vmem:[#allocation4 + $0x158] sm:$0xff] %v3861
  %3937 = vst [vmem:[#allocation4 + $0x160] sm:$0xff] %v3704
  %3938 = vst [vmem:[#allocation4 + $0x168] sm:$0xff] %v3706
  %3939 = vst [vmem:[#allocation4 + $0x170] sm:$0xff] %v3865
  %3940 = vst [vmem:[#allocation4 + $0x178] sm:$0xff] %v3867
  %3941 = vst [vmem:[#allocation4 + $0x180] sm:$0xff] %v3710
  %3942 = vst [vmem:[#allocation4 + $0x188] sm:$0xff] %v3712
  %3943 = vst [vmem:[#allocation4 + $0x190] sm:$0xff] %v3871
  %3944 = vst [vmem:[#allocation4 + $0x198] sm:$0xff] %v3873
  %3945 = vst [vmem:[#allocation4 + $0x1a0] sm:$0xff] %v3716
  %3946 = vst [vmem:[#allocation4 + $0x1a8] sm:$0xff] %v3718
  %3947 = vst [vmem:[#allocation4 + $0x1b0] sm:$0xff] %v3877
  %3948 = vst [vmem:[#allocation4 + $0x1b8] sm:$0xff] %v3879
  %3949 = vst [vmem:[#allocation4 + $0x1c0] sm:$0xff] %v3722
  %3950 = vst [vmem:[#allocation4 + $0x1c8] sm:$0xff] %v3724
  %3951 = vst [vmem:[#allocation4 + $0x1d0] sm:$0xff] %v3883
  %3952 = vst [vmem:[#allocation4 + $0x1d8] sm:$0xff] %v3885
  %3953 = vst [vmem:[#allocation4 + $0x1e0] sm:$0xff] %v3728
  %3954 = vst [vmem:[#allocation4 + $0x1e8] sm:$0xff] %v3730
  %3955 = vst [vmem:[#allocation4 + $0x1f0] sm:$0xff] %v3889
  %3956 = vst [vmem:[#allocation4 + $0x1f8] sm:$0xff] %v3891
  %v3957 = vld [vmem:[%s6] sm:$0xff]
  %v3958 = vld [vmem:[%s6 + $0x8] sm:$0xff]
  %v3959 = vld [vmem:[%s6 + $0x10] sm:$0xff]
  %v3960 = vld [vmem:[%s6 + $0x18] sm:$0xff]
  %v3961 = vld [vmem:[%s6 + $0x20] sm:$0xff]
  %v3962 = vld [vmem:[%s6 + $0x28] sm:$0xff]
  %v3963 = vld [vmem:[%s6 + $0x30] sm:$0xff]
  %v3964 = vld [vmem:[%s6 + $0x38] sm:$0xff]
  %v3965 = vld [vmem:[%s6 + $0x40] sm:$0xff]
  %v3966 = vld [vmem:[%s6 + $0x48] sm:$0xff]
  %v3967 = vld [vmem:[%s6 + $0x50] sm:$0xff]
  %v3968 = vld [vmem:[%s6 + $0x58] sm:$0xff]
  %v3969 = vld [vmem:[#allocation4] sm:$0xff]
  %v3970 = vld [vmem:[#allocation4 + $0x8] sm:$0xff]
  %v3971 = vld [vmem:[#allocation4 + $0x10] sm:$0xff]
  %v3972 = vld [vmem:[#allocation4 + $0x18] sm:$0xff]
  %v3974 = vsel %vm29, 0.0, 0
  %3976 = vmatprep.subr.mxu0 %v3958
  %3977 = vmatpush1.msra.mxu0 %v3957
  %3978 = vmatprep.subr.mxu0 %v3962
  %3979 = vmatpush1.msra.mxu0 %v3961
  %3980 = vmatprep.subr.mxu0 %v3966
  %3981 = vmatpush1.msra.mxu0 %v3965
  %3982 = vmatprep.subr.mxu0 0.0
  %3983 = vmatpush1.msra.mxu0 0.0
  %3984 = vmatprep.subr.mxu0 0.0
  %3985 = vmatpush1.msra.mxu0 0.0
  %3986 = vmatprep.subr.mxu0 0.0
  %3987 = vmatpush1.msra.mxu0 0.0
  %3988 = vmatprep.subr.mxu0 0.0
  %3989 = vmatpush1.msra.mxu0 0.0
  %3990 = vmatprep.subr.mxu0 0.0
  %3991 = vmatpush1.msra.mxu0 0.0
  %3992 = vmatprep.subr.mxu0 0.0
  %3993 = vmatpush1.msra.mxu0 0.0
  %3994 = vmatprep.subr.mxu0 0.0
  %3995 = vmatpush1.msra.mxu0 0.0
  %3996 = vmatprep.subr.mxu0 0.0
  %3997 = vmatpush1.msra.mxu0 0.0
  %3998 = vmatprep.subr.mxu0 0.0
  %3999 = vmatpush1.msra.mxu0 0.0
  %4000 = vmatprep.subr.mxu0 0.0
  %4001 = vmatpush1.msra.mxu0 0.0
  %4002 = vmatprep.subr.mxu0 0.0
  %4003 = vmatpush1.msra.mxu0 0.0
  %4004 = vmatprep.subr.mxu0 0.0
  %4005 = vmatpush1.msra.mxu0 0.0
  %4006 = vmatprep.subr.mxu0 0.0
  %4007 = vmatpush1.msra.mxu0 0.0
  %4008 = vmatprep.subr.mxu0 0.0
  %4009 = vmatpush1.msra.mxu0 0.0
  %4010 = vmatprep.subr.mxu0 0.0
  %4011 = vmatpush1.msra.mxu0 0.0
  %4012 = vmatprep.subr.mxu0 0.0
  %4013 = vmatpush1.msra.mxu0 0.0
  %4014 = vmatprep.subr.mxu0 0.0
  %4015 = vmatpush1.msra.mxu0 0.0
  %4016 = vmatprep.subr.mxu0 0.0
  %4017 = vmatpush1.msra.mxu0 0.0
  %4018 = vmatprep.subr.mxu0 0.0
  %4019 = vmatpush1.msra.mxu0 0.0
  %4020 = vmatprep.subr.mxu0 0.0
  %4021 = vmatpush1.msra.mxu0 0.0
  %4022 = vmatprep.subr.mxu0 0.0
  %4023 = vmatpush1.msra.mxu0 0.0
  %4024 = vmatprep.subr.mxu0 0.0
  %4025 = vmatpush1.msra.mxu0 0.0
  %4026 = vmatprep.subr.mxu0 0.0
  %4027 = vmatpush1.msra.mxu0 0.0
  %4028 = vmatprep.subr.mxu0 0.0
  %4029 = vmatpush1.msra.mxu0 0.0
  %4030 = vmatprep.subr.mxu0 0.0
  %4031 = vmatpush1.msra.mxu0 0.0
  %4032 = vmatprep.subr.mxu0 0.0
  %4033 = vmatpush1.msra.mxu0 0.0
  %4034 = vmatprep.subr.mxu0 0.0
  %4035 = vmatpush1.msra.mxu0 0.0
  %4036 = vmatprep.subr.mxu0 0.0
  %4037 = vmatpush1.msra.mxu0 0.0
  %4038 = vmatprep.subr.mxu0 0.0
  %4039 = vmatpush1.msra.mxu0 0.0
  %4040 = vmatprep.mubr.f32.mxu0 0.0
  %4041 = vmatmul.mubr.f32.gmra.mrb[0].mxu0 %v3974
  %v4042 = vpop.f32.mrb[0].mxu0
  %v4043 = vadd.f32 0.0, %v4042
  %v4044 = vpop.f32.mrb[0].mxu0
  %v4045 = vadd.f32 0.0, %v4044
  %4046 = vdwg.mxu0
  %4047 = vmatprep.subr.mxu0 %v3960
  %4048 = vmatpush1.msra.mxu0 %v3959
  %4049 = vmatprep.subr.mxu0 %v3964
  %4050 = vmatpush1.msra.mxu0 %v3963
  %4051 = vmatprep.subr.mxu0 %v3968
  %4052 = vmatpush1.msra.mxu0 %v3967
  %4053 = vmatprep.subr.mxu0 0.0
  %4054 = vmatpush1.msra.mxu0 0.0
  %4055 = vmatprep.subr.mxu0 0.0
  %4056 = vmatpush1.msra.mxu0 0.0
  %4057 = vmatprep.subr.mxu0 0.0
  %4058 = vmatpush1.msra.mxu0 0.0
  %4059 = vmatprep.subr.mxu0 0.0
  %4060 = vmatpush1.msra.mxu0 0.0
  %4061 = vmatprep.subr.mxu0 0.0
  %4062 = vmatpush1.msra.mxu0 0.0
  %4063 = vmatprep.subr.mxu0 0.0
  %4064 = vmatpush1.msra.mxu0 0.0
  %4065 = vmatprep.subr.mxu0 0.0
  %4066 = vmatpush1.msra.mxu0 0.0
  %4067 = vmatprep.subr.mxu0 0.0
  %4068 = vmatpush1.msra.mxu0 0.0
  %4069 = vmatprep.subr.mxu0 0.0
  %4070 = vmatpush1.msra.mxu0 0.0
  %4071 = vmatprep.subr.mxu0 0.0
  %4072 = vmatpush1.msra.mxu0 0.0
  %4073 = vmatprep.subr.mxu0 0.0
  %4074 = vmatpush1.msra.mxu0 0.0
  %4075 = vmatprep.subr.mxu0 0.0
  %4076 = vmatpush1.msra.mxu0 0.0
  %4077 = vmatprep.subr.mxu0 0.0
  %4078 = vmatpush1.msra.mxu0 0.0
  %4079 = vmatprep.subr.mxu0 0.0
  %4080 = vmatpush1.msra.mxu0 0.0
  %4081 = vmatprep.subr.mxu0 0.0
  %4082 = vmatpush1.msra.mxu0 0.0
  %4083 = vmatprep.subr.mxu0 0.0
  %4084 = vmatpush1.msra.mxu0 0.0
  %4085 = vmatprep.subr.mxu0 0.0
  %4086 = vmatpush1.msra.mxu0 0.0
  %4087 = vmatprep.subr.mxu0 0.0
  %4088 = vmatpush1.msra.mxu0 0.0
  %4089 = vmatprep.subr.mxu0 0.0
  %4090 = vmatpush1.msra.mxu0 0.0
  %4091 = vmatprep.subr.mxu0 0.0
  %4092 = vmatpush1.msra.mxu0 0.0
  %4093 = vmatprep.subr.mxu0 0.0
  %4094 = vmatpush1.msra.mxu0 0.0
  %4095 = vmatprep.subr.mxu0 0.0
  %4096 = vmatpush1.msra.mxu0 0.0
  %4097 = vmatprep.subr.mxu0 0.0
  %4098 = vmatpush1.msra.mxu0 0.0
  %4099 = vmatprep.subr.mxu0 0.0
  %4100 = vmatpush1.msra.mxu0 0.0
  %4101 = vmatprep.subr.mxu0 0.0
  %4102 = vmatpush1.msra.mxu0 0.0
  %4103 = vmatprep.subr.mxu0 0.0
  %4104 = vmatpush1.msra.mxu0 0.0
  %4105 = vmatprep.subr.mxu0 0.0
  %4106 = vmatpush1.msra.mxu0 0.0
  %4107 = vmatprep.subr.mxu0 0.0
  %4108 = vmatpush1.msra.mxu0 0.0
  %4109 = vmatprep.subr.mxu0 0.0
  %4110 = vmatpush1.msra.mxu0 0.0
  %4111 = vmatprep.mubr.f32.mxu0 0.0
  %4112 = vmatmul.mubr.f32.gmra.mrb[0].mxu0 %v3974
  %v4113 = vpop.f32.mrb[0].mxu0
  %v4114 = vadd.f32 0.0, %v4113
  %v4115 = vpop.f32.mrb[0].mxu0
  %v4116 = vadd.f32 0.0, %v4115
  %4117 = vdwg.mxu0
  %v4118 = vadd.f32 %v3969, %v4043
  %v4119 = vadd.f32 %v3970, %v4045
  %v4120 = vadd.f32 %v3971, %v4114
  %v4121 = vadd.f32 %v3972, %v4116
  %v4122 = vxor.u32 %v4118, 2147483648
  %v4123 = vmul.f32 %v4122, 1.442695
  %v4124 = vpow.pop %v4123
  %v4125 = vadd.f32 %v4124, 1.0
  %v4126 = vrcp.pop %v4125
  %v4127 = vmul.f32 1.0, %v4126
  %v4128 = vxor.u32 %v4119, 2147483648
  %v4129 = vmul.f32 %v4128, 1.442695
  %v4130 = vpow.pop %v4129
  %v4131 = vadd.f32 %v4130, 1.0
  %v4132 = vrcp.pop %v4131
  %v4133 = vmul.f32 1.0, %v4132
  %v4134 = vtanh.pop %v4120
  %v4135 = vxor.u32 %v4121, 2147483648
  %v4136 = vmul.f32 %v4135, 1.442695
  %v4137 = vpow.pop %v4136
  %v4138 = vadd.f32 %v4137, 1.0
  %v4139 = vrcp.pop %v4138
  %v4140 = vmul.f32 1.0, %v4139
  %v4141 = vmul.f32 %v4133, 0.0
  %v4142 = vmul.f32 %v4127, %v4134
  %v4143 = vadd.f32 %v4141, %v4142
  %v4144 = vtanh.pop %v4143
  %v4145 = vmul.f32 %v4140, %v4144
  %s4146 = scalar_lea.vmem [#allocation4], 32
  %v4147 = vld [vmem:[%s4146] sm:$0xff]
  %v4148 = vld [vmem:[%s4146 + $0x8] sm:$0xff]
  %v4149 = vld [vmem:[%s4146 + $0x10] sm:$0xff]
  %v4150 = vld [vmem:[%s4146 + $0x18] sm:$0xff]
  %v4152 = vsel %vm29, %v4145, 0
  %4154 = vmatprep.subr.mxu0 %v3958
  %4155 = vmatpush1.msra.mxu0 %v3957
  %4156 = vmatprep.subr.mxu0 %v3962
  %4157 = vmatpush1.msra.mxu0 %v3961
  %4158 = vmatprep.subr.mxu0 %v3966
  %4159 = vmatpush1.msra.mxu0 %v3965
  %4160 = vmatprep.subr.mxu0 0.0
  %4161 = vmatpush1.msra.mxu0 0.0
  %4162 = vmatprep.subr.mxu0 0.0
  %4163 = vmatpush1.msra.mxu0 0.0
  %4164 = vmatprep.subr.mxu0 0.0
  %4165 = vmatpush1.msra.mxu0 0.0
  %4166 = vmatprep.subr.mxu0 0.0
  %4167 = vmatpush1.msra.mxu0 0.0
  %4168 = vmatprep.subr.mxu0 0.0
  %4169 = vmatpush1.msra.mxu0 0.0
  %4170 = vmatprep.subr.mxu0 0.0
  %4171 = vmatpush1.msra.mxu0 0.0
  %4172 = vmatprep.subr.mxu0 0.0
  %4173 = vmatpush1.msra.mxu0 0.0
  %4174 = vmatprep.subr.mxu0 0.0
  %4175 = vmatpush1.msra.mxu0 0.0
  %4176 = vmatprep.subr.mxu0 0.0
  %4177 = vmatpush1.msra.mxu0 0.0
  %4178 = vmatprep.subr.mxu0 0.0
  %4179 = vmatpush1.msra.mxu0 0.0
  %4180 = vmatprep.subr.mxu0 0.0
  %4181 = vmatpush1.msra.mxu0 0.0
  %4182 = vmatprep.subr.mxu0 0.0
  %4183 = vmatpush1.msra.mxu0 0.0
  %4184 = vmatprep.subr.mxu0 0.0
  %4185 = vmatpush1.msra.mxu0 0.0
  %4186 = vmatprep.subr.mxu0 0.0
  %4187 = vmatpush1.msra.mxu0 0.0
  %4188 = vmatprep.subr.mxu0 0.0
  %4189 = vmatpush1.msra.mxu0 0.0
  %4190 = vmatprep.subr.mxu0 0.0
  %4191 = vmatpush1.msra.mxu0 0.0
  %4192 = vmatprep.subr.mxu0 0.0
  %4193 = vmatpush1.msra.mxu0 0.0
  %4194 = vmatprep.subr.mxu0 0.0
  %4195 = vmatpush1.msra.mxu0 0.0
  %4196 = vmatprep.subr.mxu0 0.0
  %4197 = vmatpush1.msra.mxu0 0.0
  %4198 = vmatprep.subr.mxu0 0.0
  %4199 = vmatpush1.msra.mxu0 0.0
  %4200 = vmatprep.subr.mxu0 0.0
  %4201 = vmatpush1.msra.mxu0 0.0
  %4202 = vmatprep.subr.mxu0 0.0
  %4203 = vmatpush1.msra.mxu0 0.0
  %4204 = vmatprep.subr.mxu0 0.0
  %4205 = vmatpush1.msra.mxu0 0.0
  %4206 = vmatprep.subr.mxu0 0.0
  %4207 = vmatpush1.msra.mxu0 0.0
  %4208 = vmatprep.subr.mxu0 0.0
  %4209 = vmatpush1.msra.mxu0 0.0
  %4210 = vmatprep.subr.mxu0 0.0
  %4211 = vmatpush1.msra.mxu0 0.0
  %4212 = vmatprep.subr.mxu0 0.0
  %4213 = vmatpush1.msra.mxu0 0.0
  %4214 = vmatprep.subr.mxu0 0.0
  %4215 = vmatpush1.msra.mxu0 0.0
  %4216 = vmatprep.subr.mxu0 0.0
  %4217 = vmatpush1.msra.mxu0 0.0
  %4218 = vmatprep.mubr.f32.mxu0 0.0
  %4219 = vmatmul.mubr.f32.gmra.mrb[0].mxu0 %v4152
  %v4220 = vpop.f32.mrb[0].mxu0
  %v4221 = vadd.f32 0.0, %v4220
  %v4222 = vpop.f32.mrb[0].mxu0
  %v4223 = vadd.f32 0.0, %v4222
  %4224 = vdwg.mxu0
  %4225 = vmatprep.subr.mxu0 %v3960
  %4226 = vmatpush1.msra.mxu0 %v3959
  %4227 = vmatprep.subr.mxu0 %v3964
  %4228 = vmatpush1.msra.mxu0 %v3963
  %4229 = vmatprep.subr.mxu0 %v3968
  %4230 = vmatpush1.msra.mxu0 %v3967
  %4231 = vmatprep.subr.mxu0 0.0
  %4232 = vmatpush1.msra.mxu0 0.0
  %4233 = vmatprep.subr.mxu0 0.0
  %4234 = vmatpush1.msra.mxu0 0.0
  %4235 = vmatprep.subr.mxu0 0.0
  %4236 = vmatpush1.msra.mxu0 0.0
  %4237 = vmatprep.subr.mxu0 0.0
  %4238 = vmatpush1.msra.mxu0 0.0
  %4239 = vmatprep.subr.mxu0 0.0
  %4240 = vmatpush1.msra.mxu0 0.0
  %4241 = vmatprep.subr.mxu0 0.0
  %4242 = vmatpush1.msra.mxu0 0.0
  %4243 = vmatprep.subr.mxu0 0.0
  %4244 = vmatpush1.msra.mxu0 0.0
  %4245 = vmatprep.subr.mxu0 0.0
  %4246 = vmatpush1.msra.mxu0 0.0
  %4247 = vmatprep.subr.mxu0 0.0
  %4248 = vmatpush1.msra.mxu0 0.0
  %4249 = vmatprep.subr.mxu0 0.0
  %4250 = vmatpush1.msra.mxu0 0.0
  %4251 = vmatprep.subr.mxu0 0.0
  %4252 = vmatpush1.msra.mxu0 0.0
  %4253 = vmatprep.subr.mxu0 0.0
  %4254 = vmatpush1.msra.mxu0 0.0
  %4255 = vmatprep.subr.mxu0 0.0
  %4256 = vmatpush1.msra.mxu0 0.0
  %4257 = vmatprep.subr.mxu0 0.0
  %4258 = vmatpush1.msra.mxu0 0.0
  %4259 = vmatprep.subr.mxu0 0.0
  %4260 = vmatpush1.msra.mxu0 0.0
  %4261 = vmatprep.subr.mxu0 0.0
  %4262 = vmatpush1.msra.mxu0 0.0
  %4263 = vmatprep.subr.mxu0 0.0
  %4264 = vmatpush1.msra.mxu0 0.0
  %4265 = vmatprep.subr.mxu0 0.0
  %4266 = vmatpush1.msra.mxu0 0.0
  %4267 = vmatprep.subr.mxu0 0.0
  %4268 = vmatpush1.msra.mxu0 0.0
  %4269 = vmatprep.subr.mxu0 0.0
  %4270 = vmatpush1.msra.mxu0 0.0
  %4271 = vmatprep.subr.mxu0 0.0
  %4272 = vmatpush1.msra.mxu0 0.0
  %4273 = vmatprep.subr.mxu0 0.0
  %4274 = vmatpush1.msra.mxu0 0.0
  %4275 = vmatprep.subr.mxu0 0.0
  %4276 = vmatpush1.msra.mxu0 0.0
  %4277 = vmatprep.subr.mxu0 0.0
  %4278 = vmatpush1.msra.mxu0 0.0
  %4279 = vmatprep.subr.mxu0 0.0
  %4280 = vmatpush1.msra.mxu0 0.0
  %4281 = vmatprep.subr.mxu0 0.0
  %4282 = vmatpush1.msra.mxu0 0.0
  %4283 = vmatprep.subr.mxu0 0.0
  %4284 = vmatpush1.msra.mxu0 0.0
  %4285 = vmatprep.subr.mxu0 0.0
  %4286 = vmatpush1.msra.mxu0 0.0
  %4287 = vmatprep.subr.mxu0 0.0
  %4288 = vmatpush1.msra.mxu0 0.0
  %4289 = vmatprep.mubr.f32.mxu0 0.0
  %4290 = vmatmul.mubr.f32.gmra.mrb[0].mxu0 %v4152
  %v4291 = vpop.f32.mrb[0].mxu0
  %v4292 = vadd.f32 0.0, %v4291
  %v4293 = vpop.f32.mrb[0].mxu0
  %v4294 = vadd.f32 0.0, %v4293
  %4295 = vdwg.mxu0
  %v4296 = vadd.f32 %v4147, %v4221
  %v4297 = vadd.f32 %v4148, %v4223
  %v4298 = vadd.f32 %v4149, %v4292
  %v4299 = vadd.f32 %v4150, %v4294
  %v4300 = vxor.u32 %v4296, 2147483648
  %v4301 = vmul.f32 %v4300, 1.442695
  %v4302 = vpow.pop %v4301
  %v4303 = vadd.f32 %v4302, 1.0
  %v4304 = vrcp.pop %v4303
  %v4305 = vmul.f32 1.0, %v4304
  %v4306 = vxor.u32 %v4297, 2147483648
  %v4307 = vmul.f32 %v4306, 1.442695
  %v4308 = vpow.pop %v4307
  %v4309 = vadd.f32 %v4308, 1.0
  %v4310 = vrcp.pop %v4309
  %v4311 = vmul.f32 1.0, %v4310
  %v4312 = vtanh.pop %v4298
  %v4313 = vxor.u32 %v4299, 2147483648
  %v4314 = vmul.f32 %v4313, 1.442695
  %v4315 = vpow.pop %v4314
  %v4316 = vadd.f32 %v4315, 1.0
  %v4317 = vrcp.pop %v4316
  %v4318 = vmul.f32 1.0, %v4317
  %v4319 = vmul.f32 %v4311, %v4143
  %v4320 = vmul.f32 %v4305, %v4312
  %v4321 = vadd.f32 %v4319, %v4320
  %v4322 = vtanh.pop %v4321
  %v4323 = vmul.f32 %v4318, %v4322
  %s4324 = scalar_lea.vmem [#allocation4], 64
  %v4325 = vld [vmem:[%s4324] sm:$0xff]
  %v4326 = vld [vmem:[%s4324 + $0x8] sm:$0xff]
  %v4327 = vld [vmem:[%s4324 + $0x10] sm:$0xff]
  %v4328 = vld [vmem:[%s4324 + $0x18] sm:$0xff]
  %v4330 = vsel %vm29, %v4323, 0
  %4332 = vmatprep.subr.mxu0 %v3958
  %4333 = vmatpush1.msra.mxu0 %v3957
  %4334 = vmatprep.subr.mxu0 %v3962
  %4335 = vmatpush1.msra.mxu0 %v3961
  %4336 = vmatprep.subr.mxu0 %v3966
  %4337 = vmatpush1.msra.mxu0 %v3965
  %4338 = vmatprep.subr.mxu0 0.0
  %4339 = vmatpush1.msra.mxu0 0.0
  %4340 = vmatprep.subr.mxu0 0.0
  %4341 = vmatpush1.msra.mxu0 0.0
  %4342 = vmatprep.subr.mxu0 0.0
  %4343 = vmatpush1.msra.mxu0 0.0
  %4344 = vmatprep.subr.mxu0 0.0
  %4345 = vmatpush1.msra.mxu0 0.0
  %4346 = vmatprep.subr.mxu0 0.0
  %4347 = vmatpush1.msra.mxu0 0.0
  %4348 = vmatprep.subr.mxu0 0.0
  %4349 = vmatpush1.msra.mxu0 0.0
  %4350 = vmatprep.subr.mxu0 0.0
  %4351 = vmatpush1.msra.mxu0 0.0
  %4352 = vmatprep.subr.mxu0 0.0
  %4353 = vmatpush1.msra.mxu0 0.0
  %4354 = vmatprep.subr.mxu0 0.0
  %4355 = vmatpush1.msra.mxu0 0.0
  %4356 = vmatprep.subr.mxu0 0.0
  %4357 = vmatpush1.msra.mxu0 0.0
  %4358 = vmatprep.subr.mxu0 0.0
  %4359 = vmatpush1.msra.mxu0 0.0
  %4360 = vmatprep.subr.mxu0 0.0
  %4361 = vmatpush1.msra.mxu0 0.0
  %4362 = vmatprep.subr.mxu0 0.0
  %4363 = vmatpush1.msra.mxu0 0.0
  %4364 = vmatprep.subr.mxu0 0.0
  %4365 = vmatpush1.msra.mxu0 0.0
  %4366 = vmatprep.subr.mxu0 0.0
  %4367 = vmatpush1.msra.mxu0 0.0
  %4368 = vmatprep.subr.mxu0 0.0
  %4369 = vmatpush1.msra.mxu0 0.0
  %4370 = vmatprep.subr.mxu0 0.0
  %4371 = vmatpush1.msra.mxu0 0.0
  %4372 = vmatprep.subr.mxu0 0.0
  %4373 = vmatpush1.msra.mxu0 0.0
  %4374 = vmatprep.subr.mxu0 0.0
  %4375 = vmatpush1.msra.mxu0 0.0
  %4376 = vmatprep.subr.mxu0 0.0
  %4377 = vmatpush1.msra.mxu0 0.0
  %4378 = vmatprep.subr.mxu0 0.0
  %4379 = vmatpush1.msra.mxu0 0.0
  %4380 = vmatprep.subr.mxu0 0.0
  %4381 = vmatpush1.msra.mxu0 0.0
  %4382 = vmatprep.subr.mxu0 0.0
  %4383 = vmatpush1.msra.mxu0 0.0
  %4384 = vmatprep.subr.mxu0 0.0
  %4385 = vmatpush1.msra.mxu0 0.0
  %4386 = vmatprep.subr.mxu0 0.0
  %4387 = vmatpush1.msra.mxu0 0.0
  %4388 = vmatprep.subr.mxu0 0.0
  %4389 = vmatpush1.msra.mxu0 0.0
  %4390 = vmatprep.subr.mxu0 0.0
  %4391 = vmatpush1.msra.mxu0 0.0
  %4392 = vmatprep.subr.mxu0 0.0
  %4393 = vmatpush1.msra.mxu0 0.0
  %4394 = vmatprep.subr.mxu0 0.0
  %4395 = vmatpush1.msra.mxu0 0.0
  %4396 = vmatprep.mubr.f32.mxu0 0.0
  %4397 = vmatmul.mubr.f32.gmra.mrb[0].mxu0 %v4330
  %v4398 = vpop.f32.mrb[0].mxu0
  %v4399 = vadd.f32 0.0, %v4398
  %v4400 = vpop.f32.mrb[0].mxu0
  %v4401 = vadd.f32 0.0, %v4400
  %4402 = vdwg.mxu0
  %4403 = vmatprep.subr.mxu0 %v3960
  %4404 = vmatpush1.msra.mxu0 %v3959
  %4405 = vmatprep.subr.mxu0 %v3964
  %4406 = vmatpush1.msra.mxu0 %v3963
  %4407 = vmatprep.subr.mxu0 %v3968
  %4408 = vmatpush1.msra.mxu0 %v3967
  %4409 = vmatprep.subr.mxu0 0.0
  %4410 = vmatpush1.msra.mxu0 0.0
  %4411 = vmatprep.subr.mxu0 0.0
  %4412 = vmatpush1.msra.mxu0 0.0
  %4413 = vmatprep.subr.mxu0 0.0
  %4414 = vmatpush1.msra.mxu0 0.0
  %4415 = vmatprep.subr.mxu0 0.0
  %4416 = vmatpush1.msra.mxu0 0.0
  %4417 = vmatprep.subr.mxu0 0.0
  %4418 = vmatpush1.msra.mxu0 0.0
  %4419 = vmatprep.subr.mxu0 0.0
  %4420 = vmatpush1.msra.mxu0 0.0
  %4421 = vmatprep.subr.mxu0 0.0
  %4422 = vmatpush1.msra.mxu0 0.0
  %4423 = vmatprep.subr.mxu0 0.0
  %4424 = vmatpush1.msra.mxu0 0.0
  %4425 = vmatprep.subr.mxu0 0.0
  %4426 = vmatpush1.msra.mxu0 0.0
  %4427 = vmatprep.subr.mxu0 0.0
  %4428 = vmatpush1.msra.mxu0 0.0
  %4429 = vmatprep.subr.mxu0 0.0
  %4430 = vmatpush1.msra.mxu0 0.0
  %4431 = vmatprep.subr.mxu0 0.0
  %4432 = vmatpush1.msra.mxu0 0.0
  %4433 = vmatprep.subr.mxu0 0.0
  %4434 = vmatpush1.msra.mxu0 0.0
  %4435 = vmatprep.subr.mxu0 0.0
  %4436 = vmatpush1.msra.mxu0 0.0
  %4437 = vmatprep.subr.mxu0 0.0
  %4438 = vmatpush1.msra.mxu0 0.0
  %4439 = vmatprep.subr.mxu0 0.0
  %4440 = vmatpush1.msra.mxu0 0.0
  %4441 = vmatprep.subr.mxu0 0.0
  %4442 = vmatpush1.msra.mxu0 0.0
  %4443 = vmatprep.subr.mxu0 0.0
  %4444 = vmatpush1.msra.mxu0 0.0
  %4445 = vmatprep.subr.mxu0 0.0
  %4446 = vmatpush1.msra.mxu0 0.0
  %4447 = vmatprep.subr.mxu0 0.0
  %4448 = vmatpush1.msra.mxu0 0.0
  %4449 = vmatprep.subr.mxu0 0.0
  %4450 = vmatpush1.msra.mxu0 0.0
  %4451 = vmatprep.subr.mxu0 0.0
  %4452 = vmatpush1.msra.mxu0 0.0
  %4453 = vmatprep.subr.mxu0 0.0
  %4454 = vmatpush1.msra.mxu0 0.0
  %4455 = vmatprep.subr.mxu0 0.0
  %4456 = vmatpush1.msra.mxu0 0.0
  %4457 = vmatprep.subr.mxu0 0.0
  %4458 = vmatpush1.msra.mxu0 0.0
  %4459 = vmatprep.subr.mxu0 0.0
  %4460 = vmatpush1.msra.mxu0 0.0
  %4461 = vmatprep.subr.mxu0 0.0
  %4462 = vmatpush1.msra.mxu0 0.0
  %4463 = vmatprep.subr.mxu0 0.0
  %4464 = vmatpush1.msra.mxu0 0.0
  %4465 = vmatprep.subr.mxu0 0.0
  %4466 = vmatpush1.msra.mxu0 0.0
  %4467 = vmatprep.mubr.f32.mxu0 0.0
  %4468 = vmatmul.mubr.f32.gmra.mrb[0].mxu0 %v4330
  %v4469 = vpop.f32.mrb[0].mxu0
  %v4470 = vadd.f32 0.0, %v4469
  %v4471 = vpop.f32.mrb[0].mxu0
  %v4472 = vadd.f32 0.0, %v4471
  %4473 = vdwg.mxu0
  %v4474 = vadd.f32 %v4325, %v4399
  %v4475 = vadd.f32 %v4326, %v4401
  %v4476 = vadd.f32 %v4327, %v4470
  %v4477 = vadd.f32 %v4328, %v4472
  %v4478 = vxor.u32 %v4474, 2147483648
  %v4479 = vmul.f32 %v4478, 1.442695
  %v4480 = vpow.pop %v4479
  %v4481 = vadd.f32 %v4480, 1.0
  %v4482 = vrcp.pop %v4481
  %v4483 = vmul.f32 1.0, %v4482
  %v4484 = vxor.u32 %v4475, 2147483648
  %v4485 = vmul.f32 %v4484, 1.442695
  %v4486 = vpow.pop %v4485
  %v4487 = vadd.f32 %v4486, 1.0
  %v4488 = vrcp.pop %v4487
  %v4489 = vmul.f32 1.0, %v4488
  %v4490 = vtanh.pop %v4476
  %v4491 = vxor.u32 %v4477, 2147483648
  %v4492 = vmul.f32 %v4491, 1.442695
  %v4493 = vpow.pop %v4492
  %v4494 = vadd.f32 %v4493, 1.0
  %v4495 = vrcp.pop %v4494
  %v4496 = vmul.f32 1.0, %v4495
  %v4497 = vmul.f32 %v4489, %v4321
  %v4498 = vmul.f32 %v4483, %v4490
  %v4499 = vadd.f32 %v4497, %v4498
  %v4500 = vtanh.pop %v4499
  %v4501 = vmul.f32 %v4496, %v4500
  %s4502 = scalar_lea.vmem [#allocation4], 96
  %v4503 = vld [vmem:[%s4502] sm:$0xff]
  %v4504 = vld [vmem:[%s4502 + $0x8] sm:$0xff]
  %v4505 = vld [vmem:[%s4502 + $0x10] sm:$0xff]
  %v4506 = vld [vmem:[%s4502 + $0x18] sm:$0xff]
  %v4508 = vsel %vm29, %v4501, 0
  %4510 = vmatprep.subr.mxu0 %v3958
  %4511 = vmatpush1.msra.mxu0 %v3957
  %4512 = vmatprep.subr.mxu0 %v3962
  %4513 = vmatpush1.msra.mxu0 %v3961
  %4514 = vmatprep.subr.mxu0 %v3966
  %4515 = vmatpush1.msra.mxu0 %v3965
  %4516 = vmatprep.subr.mxu0 0.0
  %4517 = vmatpush1.msra.mxu0 0.0
  %4518 = vmatprep.subr.mxu0 0.0
  %4519 = vmatpush1.msra.mxu0 0.0
  %4520 = vmatprep.subr.mxu0 0.0
  %4521 = vmatpush1.msra.mxu0 0.0
  %4522 = vmatprep.subr.mxu0 0.0
  %4523 = vmatpush1.msra.mxu0 0.0
  %4524 = vmatprep.subr.mxu0 0.0
  %4525 = vmatpush1.msra.mxu0 0.0
  %4526 = vmatprep.subr.mxu0 0.0
  %4527 = vmatpush1.msra.mxu0 0.0
  %4528 = vmatprep.subr.mxu0 0.0
  %4529 = vmatpush1.msra.mxu0 0.0
  %4530 = vmatprep.subr.mxu0 0.0
  %4531 = vmatpush1.msra.mxu0 0.0
  %4532 = vmatprep.subr.mxu0 0.0
  %4533 = vmatpush1.msra.mxu0 0.0
  %4534 = vmatprep.subr.mxu0 0.0
  %4535 = vmatpush1.msra.mxu0 0.0
  %4536 = vmatprep.subr.mxu0 0.0
  %4537 = vmatpush1.msra.mxu0 0.0
  %4538 = vmatprep.subr.mxu0 0.0
  %4539 = vmatpush1.msra.mxu0 0.0
  %4540 = vmatprep.subr.mxu0 0.0
  %4541 = vmatpush1.msra.mxu0 0.0
  %4542 = vmatprep.subr.mxu0 0.0
  %4543 = vmatpush1.msra.mxu0 0.0
  %4544 = vmatprep.subr.mxu0 0.0
  %4545 = vmatpush1.msra.mxu0 0.0
  %4546 = vmatprep.subr.mxu0 0.0
  %4547 = vmatpush1.msra.mxu0 0.0
  %4548 = vmatprep.subr.mxu0 0.0
  %4549 = vmatpush1.msra.mxu0 0.0
  %4550 = vmatprep.subr.mxu0 0.0
  %4551 = vmatpush1.msra.mxu0 0.0
  %4552 = vmatprep.subr.mxu0 0.0
  %4553 = vmatpush1.msra.mxu0 0.0
  %4554 = vmatprep.subr.mxu0 0.0
  %4555 = vmatpush1.msra.mxu0 0.0
  %4556 = vmatprep.subr.mxu0 0.0
  %4557 = vmatpush1.msra.mxu0 0.0
  %4558 = vmatprep.subr.mxu0 0.0
  %4559 = vmatpush1.msra.mxu0 0.0
  %4560 = vmatprep.subr.mxu0 0.0
  %4561 = vmatpush1.msra.mxu0 0.0
  %4562 = vmatprep.subr.mxu0 0.0
  %4563 = vmatpush1.msra.mxu0 0.0
  %4564 = vmatprep.subr.mxu0 0.0
  %4565 = vmatpush1.msra.mxu0 0.0
  %4566 = vmatprep.subr.mxu0 0.0
  %4567 = vmatpush1.msra.mxu0 0.0
  %4568 = vmatprep.subr.mxu0 0.0
  %4569 = vmatpush1.msra.mxu0 0.0
  %4570 = vmatprep.subr.mxu0 0.0
  %4571 = vmatpush1.msra.mxu0 0.0
  %4572 = vmatprep.subr.mxu0 0.0
  %4573 = vmatpush1.msra.mxu0 0.0
  %4574 = vmatprep.mubr.f32.mxu0 0.0
  %4575 = vmatmul.mubr.f32.gmra.mrb[0].mxu0 %v4508
  %v4576 = vpop.f32.mrb[0].mxu0
  %v4577 = vadd.f32 0.0, %v4576
  %v4578 = vpop.f32.mrb[0].mxu0
  %v4579 = vadd.f32 0.0, %v4578
  %4580 = vdwg.mxu0
  %4581 = vmatprep.subr.mxu0 %v3960
  %4582 = vmatpush1.msra.mxu0 %v3959
  %4583 = vmatprep.subr.mxu0 %v3964
  %4584 = vmatpush1.msra.mxu0 %v3963
  %4585 = vmatprep.subr.mxu0 %v3968
  %4586 = vmatpush1.msra.mxu0 %v3967
  %4587 = vmatprep.subr.mxu0 0.0
  %4588 = vmatpush1.msra.mxu0 0.0
  %4589 = vmatprep.subr.mxu0 0.0
  %4590 = vmatpush1.msra.mxu0 0.0
  %4591 = vmatprep.subr.mxu0 0.0
  %4592 = vmatpush1.msra.mxu0 0.0
  %4593 = vmatprep.subr.mxu0 0.0
  %4594 = vmatpush1.msra.mxu0 0.0
  %4595 = vmatprep.subr.mxu0 0.0
  %4596 = vmatpush1.msra.mxu0 0.0
  %4597 = vmatprep.subr.mxu0 0.0
  %4598 = vmatpush1.msra.mxu0 0.0
  %4599 = vmatprep.subr.mxu0 0.0
  %4600 = vmatpush1.msra.mxu0 0.0
  %4601 = vmatprep.subr.mxu0 0.0
  %4602 = vmatpush1.msra.mxu0 0.0
  %4603 = vmatprep.subr.mxu0 0.0
  %4604 = vmatpush1.msra.mxu0 0.0
  %4605 = vmatprep.subr.mxu0 0.0
  %4606 = vmatpush1.msra.mxu0 0.0
  %4607 = vmatprep.subr.mxu0 0.0
  %4608 = vmatpush1.msra.mxu0 0.0
  %4609 = vmatprep.subr.mxu0 0.0
  %4610 = vmatpush1.msra.mxu0 0.0
  %4611 = vmatprep.subr.mxu0 0.0
  %4612 = vmatpush1.msra.mxu0 0.0
  %4613 = vmatprep.subr.mxu0 0.0
  %4614 = vmatpush1.msra.mxu0 0.0
  %4615 = vmatprep.subr.mxu0 0.0
  %4616 = vmatpush1.msra.mxu0 0.0
  %4617 = vmatprep.subr.mxu0 0.0
  %4618 = vmatpush1.msra.mxu0 0.0
  %4619 = vmatprep.subr.mxu0 0.0
  %4620 = vmatpush1.msra.mxu0 0.0
  %4621 = vmatprep.subr.mxu0 0.0
  %4622 = vmatpush1.msra.mxu0 0.0
  %4623 = vmatprep.subr.mxu0 0.0
  %4624 = vmatpush1.msra.mxu0 0.0
  %4625 = vmatprep.subr.mxu0 0.0
  %4626 = vmatpush1.msra.mxu0 0.0
  %4627 = vmatprep.subr.mxu0 0.0
  %4628 = vmatpush1.msra.mxu0 0.0
  %4629 = vmatprep.subr.mxu0 0.0
  %4630 = vmatpush1.msra.mxu0 0.0
  %4631 = vmatprep.subr.mxu0 0.0
  %4632 = vmatpush1.msra.mxu0 0.0
  %4633 = vmatprep.subr.mxu0 0.0
  %4634 = vmatpush1.msra.mxu0 0.0
  %4635 = vmatprep.subr.mxu0 0.0
  %4636 = vmatpush1.msra.mxu0 0.0
  %4637 = vmatprep.subr.mxu0 0.0
  %4638 = vmatpush1.msra.mxu0 0.0
  %4639 = vmatprep.subr.mxu0 0.0
  %4640 = vmatpush1.msra.mxu0 0.0
  %4641 = vmatprep.subr.mxu0 0.0
  %4642 = vmatpush1.msra.mxu0 0.0
  %4643 = vmatprep.subr.mxu0 0.0
  %4644 = vmatpush1.msra.mxu0 0.0
  %4645 = vmatprep.mubr.f32.mxu0 0.0
  %4646 = vmatmul.mubr.f32.gmra.mrb[0].mxu0 %v4508
  %v4647 = vpop.f32.mrb[0].mxu0
  %v4648 = vadd.f32 0.0, %v4647
  %v4649 = vpop.f32.mrb[0].mxu0
  %v4650 = vadd.f32 0.0, %v4649
  %4651 = vdwg.mxu0
  %v4652 = vadd.f32 %v4503, %v4577
  %v4653 = vadd.f32 %v4504, %v4579
  %v4654 = vadd.f32 %v4505, %v4648
  %v4655 = vadd.f32 %v4506, %v4650
  %v4656 = vxor.u32 %v4652, 2147483648
  %v4657 = vmul.f32 %v4656, 1.442695
  %v4658 = vpow.pop %v4657
  %v4659 = vadd.f32 %v4658, 1.0
  %v4660 = vrcp.pop %v4659
  %v4661 = vmul.f32 1.0, %v4660
  %v4662 = vxor.u32 %v4653, 2147483648
  %v4663 = vmul.f32 %v4662, 1.442695
  %v4664 = vpow.pop %v4663
  %v4665 = vadd.f32 %v4664, 1.0
  %v4666 = vrcp.pop %v4665
  %v4667 = vmul.f32 1.0, %v4666
  %v4668 = vtanh.pop %v4654
  %v4669 = vxor.u32 %v4655, 2147483648
  %v4670 = vmul.f32 %v4669, 1.442695
  %v4671 = vpow.pop %v4670
  %v4672 = vadd.f32 %v4671, 1.0
  %v4673 = vrcp.pop %v4672
  %v4674 = vmul.f32 1.0, %v4673
  %v4675 = vmul.f32 %v4667, %v4499
  %v4676 = vmul.f32 %v4661, %v4668
  %v4677 = vadd.f32 %v4675, %v4676
  %v4678 = vtanh.pop %v4677
  %v4679 = vmul.f32 %v4674, %v4678
  %s4680 = scalar_lea.vmem [#allocation4], 128
  %v4681 = vld [vmem:[%s4680] sm:$0xff]
  %v4682 = vld [vmem:[%s4680 + $0x8] sm:$0xff]
  %v4683 = vld [vmem:[%s4680 + $0x10] sm:$0xff]
  %v4684 = vld [vmem:[%s4680 + $0x18] sm:$0xff]
  %v4686 = vsel %vm29, %v4679, 0
  %4688 = vmatprep.subr.mxu0 %v3958
  %4689 = vmatpush1.msra.mxu0 %v3957
  %4690 = vmatprep.subr.mxu0 %v3962
  %4691 = vmatpush1.msra.mxu0 %v3961
  %4692 = vmatprep.subr.mxu0 %v3966
  %4693 = vmatpush1.msra.mxu0 %v3965
  %4694 = vmatprep.subr.mxu0 0.0
  %4695 = vmatpush1.msra.mxu0 0.0
  %4696 = vmatprep.subr.mxu0 0.0
  %4697 = vmatpush1.msra.mxu0 0.0
  %4698 = vmatprep.subr.mxu0 0.0
  %4699 = vmatpush1.msra.mxu0 0.0
  %4700 = vmatprep.subr.mxu0 0.0
  %4701 = vmatpush1.msra.mxu0 0.0
  %4702 = vmatprep.subr.mxu0 0.0
  %4703 = vmatpush1.msra.mxu0 0.0
  %4704 = vmatprep.subr.mxu0 0.0
  %4705 = vmatpush1.msra.mxu0 0.0
  %4706 = vmatprep.subr.mxu0 0.0
  %4707 = vmatpush1.msra.mxu0 0.0
  %4708 = vmatprep.subr.mxu0 0.0
  %4709 = vmatpush1.msra.mxu0 0.0
  %4710 = vmatprep.subr.mxu0 0.0
  %4711 = vmatpush1.msra.mxu0 0.0
  %4712 = vmatprep.subr.mxu0 0.0
  %4713 = vmatpush1.msra.mxu0 0.0
  %4714 = vmatprep.subr.mxu0 0.0
  %4715 = vmatpush1.msra.mxu0 0.0
  %4716 = vmatprep.subr.mxu0 0.0
  %4717 = vmatpush1.msra.mxu0 0.0
  %4718 = vmatprep.subr.mxu0 0.0
  %4719 = vmatpush1.msra.mxu0 0.0
  %4720 = vmatprep.subr.mxu0 0.0
  %4721 = vmatpush1.msra.mxu0 0.0
  %4722 = vmatprep.subr.mxu0 0.0
  %4723 = vmatpush1.msra.mxu0 0.0
  %4724 = vmatprep.subr.mxu0 0.0
  %4725 = vmatpush1.msra.mxu0 0.0
  %4726 = vmatprep.subr.mxu0 0.0
  %4727 = vmatpush1.msra.mxu0 0.0
  %4728 = vmatprep.subr.mxu0 0.0
  %4729 = vmatpush1.msra.mxu0 0.0
  %4730 = vmatprep.subr.mxu0 0.0
  %4731 = vmatpush1.msra.mxu0 0.0
  %4732 = vmatprep.subr.mxu0 0.0
  %4733 = vmatpush1.msra.mxu0 0.0
  %4734 = vmatprep.subr.mxu0 0.0
  %4735 = vmatpush1.msra.mxu0 0.0
  %4736 = vmatprep.subr.mxu0 0.0
  %4737 = vmatpush1.msra.mxu0 0.0
  %4738 = vmatprep.subr.mxu0 0.0
  %4739 = vmatpush1.msra.mxu0 0.0
  %4740 = vmatprep.subr.mxu0 0.0
  %4741 = vmatpush1.msra.mxu0 0.0
  %4742 = vmatprep.subr.mxu0 0.0
  %4743 = vmatpush1.msra.mxu0 0.0
  %4744 = vmatprep.subr.mxu0 0.0
  %4745 = vmatpush1.msra.mxu0 0.0
  %4746 = vmatprep.subr.mxu0 0.0
  %4747 = vmatpush1.msra.mxu0 0.0
  %4748 = vmatprep.subr.mxu0 0.0
  %4749 = vmatpush1.msra.mxu0 0.0
  %4750 = vmatprep.subr.mxu0 0.0
  %4751 = vmatpush1.msra.mxu0 0.0
  %4752 = vmatprep.mubr.f32.mxu0 0.0
  %4753 = vmatmul.mubr.f32.gmra.mrb[0].mxu0 %v4686
  %v4754 = vpop.f32.mrb[0].mxu0
  %v4755 = vadd.f32 0.0, %v4754
  %v4756 = vpop.f32.mrb[0].mxu0
  %v4757 = vadd.f32 0.0, %v4756
  %4758 = vdwg.mxu0
  %4759 = vmatprep.subr.mxu0 %v3960
  %4760 = vmatpush1.msra.mxu0 %v3959
  %4761 = vmatprep.subr.mxu0 %v3964
  %4762 = vmatpush1.msra.mxu0 %v3963
  %4763 = vmatprep.subr.mxu0 %v3968
  %4764 = vmatpush1.msra.mxu0 %v3967
  %4765 = vmatprep.subr.mxu0 0.0
  %4766 = vmatpush1.msra.mxu0 0.0
  %4767 = vmatprep.subr.mxu0 0.0
  %4768 = vmatpush1.msra.mxu0 0.0
  %4769 = vmatprep.subr.mxu0 0.0
  %4770 = vmatpush1.msra.mxu0 0.0
  %4771 = vmatprep.subr.mxu0 0.0
  %4772 = vmatpush1.msra.mxu0 0.0
  %4773 = vmatprep.subr.mxu0 0.0
  %4774 = vmatpush1.msra.mxu0 0.0
  %4775 = vmatprep.subr.mxu0 0.0
  %4776 = vmatpush1.msra.mxu0 0.0
  %4777 = vmatprep.subr.mxu0 0.0
  %4778 = vmatpush1.msra.mxu0 0.0
  %4779 = vmatprep.subr.mxu0 0.0
  %4780 = vmatpush1.msra.mxu0 0.0
  %4781 = vmatprep.subr.mxu0 0.0
  %4782 = vmatpush1.msra.mxu0 0.0
  %4783 = vmatprep.subr.mxu0 0.0
  %4784 = vmatpush1.msra.mxu0 0.0
  %4785 = vmatprep.subr.mxu0 0.0
  %4786 = vmatpush1.msra.mxu0 0.0
  %4787 = vmatprep.subr.mxu0 0.0
  %4788 = vmatpush1.msra.mxu0 0.0
  %4789 = vmatprep.subr.mxu0 0.0
  %4790 = vmatpush1.msra.mxu0 0.0
  %4791 = vmatprep.subr.mxu0 0.0
  %4792 = vmatpush1.msra.mxu0 0.0
  %4793 = vmatprep.subr.mxu0 0.0
  %4794 = vmatpush1.msra.mxu0 0.0
  %4795 = vmatprep.subr.mxu0 0.0
  %4796 = vmatpush1.msra.mxu0 0.0
  %4797 = vmatprep.subr.mxu0 0.0
  %4798 = vmatpush1.msra.mxu0 0.0
  %4799 = vmatprep.subr.mxu0 0.0
  %4800 = vmatpush1.msra.mxu0 0.0
  %4801 = vmatprep.subr.mxu0 0.0
  %4802 = vmatpush1.msra.mxu0 0.0
  %4803 = vmatprep.subr.mxu0 0.0
  %4804 = vmatpush1.msra.mxu0 0.0
  %4805 = vmatprep.subr.mxu0 0.0
  %4806 = vmatpush1.msra.mxu0 0.0
  %4807 = vmatprep.subr.mxu0 0.0
  %4808 = vmatpush1.msra.mxu0 0.0
  %4809 = vmatprep.subr.mxu0 0.0
  %4810 = vmatpush1.msra.mxu0 0.0
  %4811 = vmatprep.subr.mxu0 0.0
  %4812 = vmatpush1.msra.mxu0 0.0
  %4813 = vmatprep.subr.mxu0 0.0
  %4814 = vmatpush1.msra.mxu0 0.0
  %4815 = vmatprep.subr.mxu0 0.0
  %4816 = vmatpush1.msra.mxu0 0.0
  %4817 = vmatprep.subr.mxu0 0.0
  %4818 = vmatpush1.msra.mxu0 0.0
  %4819 = vmatprep.subr.mxu0 0.0
  %4820 = vmatpush1.msra.mxu0 0.0
  %4821 = vmatprep.subr.mxu0 0.0
  %4822 = vmatpush1.msra.mxu0 0.0
  %4823 = vmatprep.mubr.f32.mxu0 0.0
  %4824 = vmatmul.mubr.f32.gmra.mrb[0].mxu0 %v4686
  %v4825 = vpop.f32.mrb[0].mxu0
  %v4826 = vadd.f32 0.0, %v4825
  %v4827 = vpop.f32.mrb[0].mxu0
  %v4828 = vadd.f32 0.0, %v4827
  %4829 = vdwg.mxu0
  %v4830 = vadd.f32 %v4681, %v4755
  %v4831 = vadd.f32 %v4682, %v4757
  %v4832 = vadd.f32 %v4683, %v4826
  %v4833 = vadd.f32 %v4684, %v4828
  %v4834 = vxor.u32 %v4830, 2147483648
  %v4835 = vmul.f32 %v4834, 1.442695
  %v4836 = vpow.pop %v4835
  %v4837 = vadd.f32 %v4836, 1.0
  %v4838 = vrcp.pop %v4837
  %v4839 = vmul.f32 1.0, %v4838
  %v4840 = vxor.u32 %v4831, 2147483648
  %v4841 = vmul.f32 %v4840, 1.442695
  %v4842 = vpow.pop %v4841
  %v4843 = vadd.f32 %v4842, 1.0
  %v4844 = vrcp.pop %v4843
  %v4845 = vmul.f32 1.0, %v4844
  %v4846 = vtanh.pop %v4832
  %v4847 = vxor.u32 %v4833, 2147483648
  %v4848 = vmul.f32 %v4847, 1.442695
  %v4849 = vpow.pop %v4848
  %v4850 = vadd.f32 %v4849, 1.0
  %v4851 = vrcp.pop %v4850
  %v4852 = vmul.f32 1.0, %v4851
  %v4853 = vmul.f32 %v4845, %v4677
  %v4854 = vmul.f32 %v4839, %v4846
  %v4855 = vadd.f32 %v4853, %v4854
  %v4856 = vtanh.pop %v4855
  %v4857 = vmul.f32 %v4852, %v4856
  %s4858 = scalar_lea.vmem [#allocation4], 160
  %v4859 = vld [vmem:[%s4858] sm:$0xff]
  %v4860 = vld [vmem:[%s4858 + $0x8] sm:$0xff]
  %v4861 = vld [vmem:[%s4858 + $0x10] sm:$0xff]
  %v4862 = vld [vmem:[%s4858 + $0x18] sm:$0xff]
  %v4864 = vsel %vm29, %v4857, 0
  %4866 = vmatprep.subr.mxu0 %v3958
  %4867 = vmatpush1.msra.mxu0 %v3957
  %4868 = vmatprep.subr.mxu0 %v3962
  %4869 = vmatpush1.msra.mxu0 %v3961
  %4870 = vmatprep.subr.mxu0 %v3966
  %4871 = vmatpush1.msra.mxu0 %v3965
  %4872 = vmatprep.subr.mxu0 0.0
  %4873 = vmatpush1.msra.mxu0 0.0
  %4874 = vmatprep.subr.mxu0 0.0
  %4875 = vmatpush1.msra.mxu0 0.0
  %4876 = vmatprep.subr.mxu0 0.0
  %4877 = vmatpush1.msra.mxu0 0.0
  %4878 = vmatprep.subr.mxu0 0.0
  %4879 = vmatpush1.msra.mxu0 0.0
  %4880 = vmatprep.subr.mxu0 0.0
  %4881 = vmatpush1.msra.mxu0 0.0
  %4882 = vmatprep.subr.mxu0 0.0
  %4883 = vmatpush1.msra.mxu0 0.0
  %4884 = vmatprep.subr.mxu0 0.0
  %4885 = vmatpush1.msra.mxu0 0.0
  %4886 = vmatprep.subr.mxu0 0.0
  %4887 = vmatpush1.msra.mxu0 0.0
  %4888 = vmatprep.subr.mxu0 0.0
  %4889 = vmatpush1.msra.mxu0 0.0
  %4890 = vmatprep.subr.mxu0 0.0
  %4891 = vmatpush1.msra.mxu0 0.0
  %4892 = vmatprep.subr.mxu0 0.0
  %4893 = vmatpush1.msra.mxu0 0.0
  %4894 = vmatprep.subr.mxu0 0.0
  %4895 = vmatpush1.msra.mxu0 0.0
  %4896 = vmatprep.subr.mxu0 0.0
  %4897 = vmatpush1.msra.mxu0 0.0
  %4898 = vmatprep.subr.mxu0 0.0
  %4899 = vmatpush1.msra.mxu0 0.0
  %4900 = vmatprep.subr.mxu0 0.0
  %4901 = vmatpush1.msra.mxu0 0.0
  %4902 = vmatprep.subr.mxu0 0.0
  %4903 = vmatpush1.msra.mxu0 0.0
  %4904 = vmatprep.subr.mxu0 0.0
  %4905 = vmatpush1.msra.mxu0 0.0
  %4906 = vmatprep.subr.mxu0 0.0
  %4907 = vmatpush1.msra.mxu0 0.0
  %4908 = vmatprep.subr.mxu0 0.0
  %4909 = vmatpush1.msra.mxu0 0.0
  %4910 = vmatprep.subr.mxu0 0.0
  %4911 = vmatpush1.msra.mxu0 0.0
  %4912 = vmatprep.subr.mxu0 0.0
  %4913 = vmatpush1.msra.mxu0 0.0
  %4914 = vmatprep.subr.mxu0 0.0
  %4915 = vmatpush1.msra.mxu0 0.0
  %4916 = vmatprep.subr.mxu0 0.0
  %4917 = vmatpush1.msra.mxu0 0.0
  %4918 = vmatprep.subr.mxu0 0.0
  %4919 = vmatpush1.msra.mxu0 0.0
  %4920 = vmatprep.subr.mxu0 0.0
  %4921 = vmatpush1.msra.mxu0 0.0
  %4922 = vmatprep.subr.mxu0 0.0
  %4923 = vmatpush1.msra.mxu0 0.0
  %4924 = vmatprep.subr.mxu0 0.0
  %4925 = vmatpush1.msra.mxu0 0.0
  %4926 = vmatprep.subr.mxu0 0.0
  %4927 = vmatpush1.msra.mxu0 0.0
  %4928 = vmatprep.subr.mxu0 0.0
  %4929 = vmatpush1.msra.mxu0 0.0
  %4930 = vmatprep.mubr.f32.mxu0 0.0
  %4931 = vmatmul.mubr.f32.gmra.mrb[0].mxu0 %v4864
  %v4932 = vpop.f32.mrb[0].mxu0
  %v4933 = vadd.f32 0.0, %v4932
  %v4934 = vpop.f32.mrb[0].mxu0
  %v4935 = vadd.f32 0.0, %v4934
  %4936 = vdwg.mxu0
  %4937 = vmatprep.subr.mxu0 %v3960
  %4938 = vmatpush1.msra.mxu0 %v3959
  %4939 = vmatprep.subr.mxu0 %v3964
  %4940 = vmatpush1.msra.mxu0 %v3963
  %4941 = vmatprep.subr.mxu0 %v3968
  %4942 = vmatpush1.msra.mxu0 %v3967
  %4943 = vmatprep.subr.mxu0 0.0
  %4944 = vmatpush1.msra.mxu0 0.0
  %4945 = vmatprep.subr.mxu0 0.0
  %4946 = vmatpush1.msra.mxu0 0.0
  %4947 = vmatprep.subr.mxu0 0.0
  %4948 = vmatpush1.msra.mxu0 0.0
  %4949 = vmatprep.subr.mxu0 0.0
  %4950 = vmatpush1.msra.mxu0 0.0
  %4951 = vmatprep.subr.mxu0 0.0
  %4952 = vmatpush1.msra.mxu0 0.0
  %4953 = vmatprep.subr.mxu0 0.0
  %4954 = vmatpush1.msra.mxu0 0.0
  %4955 = vmatprep.subr.mxu0 0.0
  %4956 = vmatpush1.msra.mxu0 0.0
  %4957 = vmatprep.subr.mxu0 0.0
  %4958 = vmatpush1.msra.mxu0 0.0
  %4959 = vmatprep.subr.mxu0 0.0
  %4960 = vmatpush1.msra.mxu0 0.0
  %4961 = vmatprep.subr.mxu0 0.0
  %4962 = vmatpush1.msra.mxu0 0.0
  %4963 = vmatprep.subr.mxu0 0.0
  %4964 = vmatpush1.msra.mxu0 0.0
  %4965 = vmatprep.subr.mxu0 0.0
  %4966 = vmatpush1.msra.mxu0 0.0
  %4967 = vmatprep.subr.mxu0 0.0
  %4968 = vmatpush1.msra.mxu0 0.0
  %4969 = vmatprep.subr.mxu0 0.0
  %4970 = vmatpush1.msra.mxu0 0.0
  %4971 = vmatprep.subr.mxu0 0.0
  %4972 = vmatpush1.msra.mxu0 0.0
  %4973 = vmatprep.subr.mxu0 0.0
  %4974 = vmatpush1.msra.mxu0 0.0
  %4975 = vmatprep.subr.mxu0 0.0
  %4976 = vmatpush1.msra.mxu0 0.0
  %4977 = vmatprep.subr.mxu0 0.0
  %4978 = vmatpush1.msra.mxu0 0.0
  %4979 = vmatprep.subr.mxu0 0.0
  %4980 = vmatpush1.msra.mxu0 0.0
  %4981 = vmatprep.subr.mxu0 0.0
  %4982 = vmatpush1.msra.mxu0 0.0
  %4983 = vmatprep.subr.mxu0 0.0
  %4984 = vmatpush1.msra.mxu0 0.0
  %4985 = vmatprep.subr.mxu0 0.0
  %4986 = vmatpush1.msra.mxu0 0.0
  %4987 = vmatprep.subr.mxu0 0.0
  %4988 = vmatpush1.msra.mxu0 0.0
  %4989 = vmatprep.subr.mxu0 0.0
  %4990 = vmatpush1.msra.mxu0 0.0
  %4991 = vmatprep.subr.mxu0 0.0
  %4992 = vmatpush1.msra.mxu0 0.0
  %4993 = vmatprep.subr.mxu0 0.0
  %4994 = vmatpush1.msra.mxu0 0.0
  %4995 = vmatprep.subr.mxu0 0.0
  %4996 = vmatpush1.msra.mxu0 0.0
  %4997 = vmatprep.subr.mxu0 0.0
  %4998 = vmatpush1.msra.mxu0 0.0
  %4999 = vmatprep.subr.mxu0 0.0
  %5000 = vmatpush1.msra.mxu0 0.0
  %5001 = vmatprep.mubr.f32.mxu0 0.0
  %5002 = vmatmul.mubr.f32.gmra.mrb[0].mxu0 %v4864
  %v5003 = vpop.f32.mrb[0].mxu0
  %v5004 = vadd.f32 0.0, %v5003
  %v5005 = vpop.f32.mrb[0].mxu0
  %v5006 = vadd.f32 0.0, %v5005
  %5007 = vdwg.mxu0
  %v5008 = vadd.f32 %v4859, %v4933
  %v5009 = vadd.f32 %v4860, %v4935
  %v5010 = vadd.f32 %v4861, %v5004
  %v5011 = vadd.f32 %v4862, %v5006
  %v5012 = vxor.u32 %v5008, 2147483648
  %v5013 = vmul.f32 %v5012, 1.442695
  %v5014 = vpow.pop %v5013
  %v5015 = vadd.f32 %v5014, 1.0
  %v5016 = vrcp.pop %v5015
  %v5017 = vmul.f32 1.0, %v5016
  %v5018 = vxor.u32 %v5009, 2147483648
  %v5019 = vmul.f32 %v5018, 1.442695
  %v5020 = vpow.pop %v5019
  %v5021 = vadd.f32 %v5020, 1.0
  %v5022 = vrcp.pop %v5021
  %v5023 = vmul.f32 1.0, %v5022
  %v5024 = vtanh.pop %v5010
  %v5025 = vxor.u32 %v5011, 2147483648
  %v5026 = vmul.f32 %v5025, 1.442695
  %v5027 = vpow.pop %v5026
  %v5028 = vadd.f32 %v5027, 1.0
  %v5029 = vrcp.pop %v5028
  %v5030 = vmul.f32 1.0, %v5029
  %v5031 = vmul.f32 %v5023, %v4855
  %v5032 = vmul.f32 %v5017, %v5024
  %v5033 = vadd.f32 %v5031, %v5032
  %v5034 = vtanh.pop %v5033
  %v5035 = vmul.f32 %v5030, %v5034
  %s5036 = scalar_lea.vmem [#allocation4], 192
  %v5037 = vld [vmem:[%s5036] sm:$0xff]
  %v5038 = vld [vmem:[%s5036 + $0x8] sm:$0xff]
  %v5039 = vld [vmem:[%s5036 + $0x10] sm:$0xff]
  %v5040 = vld [vmem:[%s5036 + $0x18] sm:$0xff]
  %v5042 = vsel %vm29, %v5035, 0
  %5044 = vmatprep.subr.mxu0 %v3958
  %5045 = vmatpush1.msra.mxu0 %v3957
  %5046 = vmatprep.subr.mxu0 %v3962
  %5047 = vmatpush1.msra.mxu0 %v3961
  %5048 = vmatprep.subr.mxu0 %v3966
  %5049 = vmatpush1.msra.mxu0 %v3965
  %5050 = vmatprep.subr.mxu0 0.0
  %5051 = vmatpush1.msra.mxu0 0.0
  %5052 = vmatprep.subr.mxu0 0.0
  %5053 = vmatpush1.msra.mxu0 0.0
  %5054 = vmatprep.subr.mxu0 0.0
  %5055 = vmatpush1.msra.mxu0 0.0
  %5056 = vmatprep.subr.mxu0 0.0
  %5057 = vmatpush1.msra.mxu0 0.0
  %5058 = vmatprep.subr.mxu0 0.0
  %5059 = vmatpush1.msra.mxu0 0.0
  %5060 = vmatprep.subr.mxu0 0.0
  %5061 = vmatpush1.msra.mxu0 0.0
  %5062 = vmatprep.subr.mxu0 0.0
  %5063 = vmatpush1.msra.mxu0 0.0
  %5064 = vmatprep.subr.mxu0 0.0
  %5065 = vmatpush1.msra.mxu0 0.0
  %5066 = vmatprep.subr.mxu0 0.0
  %5067 = vmatpush1.msra.mxu0 0.0
  %5068 = vmatprep.subr.mxu0 0.0
  %5069 = vmatpush1.msra.mxu0 0.0
  %5070 = vmatprep.subr.mxu0 0.0
  %5071 = vmatpush1.msra.mxu0 0.0
  %5072 = vmatprep.subr.mxu0 0.0
  %5073 = vmatpush1.msra.mxu0 0.0
  %5074 = vmatprep.subr.mxu0 0.0
  %5075 = vmatpush1.msra.mxu0 0.0
  %5076 = vmatprep.subr.mxu0 0.0
  %5077 = vmatpush1.msra.mxu0 0.0
  %5078 = vmatprep.subr.mxu0 0.0
  %5079 = vmatpush1.msra.mxu0 0.0
  %5080 = vmatprep.subr.mxu0 0.0
  %5081 = vmatpush1.msra.mxu0 0.0
  %5082 = vmatprep.subr.mxu0 0.0
  %5083 = vmatpush1.msra.mxu0 0.0
  %5084 = vmatprep.subr.mxu0 0.0
  %5085 = vmatpush1.msra.mxu0 0.0
  %5086 = vmatprep.subr.mxu0 0.0
  %5087 = vmatpush1.msra.mxu0 0.0
  %5088 = vmatprep.subr.mxu0 0.0
  %5089 = vmatpush1.msra.mxu0 0.0
  %5090 = vmatprep.subr.mxu0 0.0
  %5091 = vmatpush1.msra.mxu0 0.0
  %5092 = vmatprep.subr.mxu0 0.0
  %5093 = vmatpush1.msra.mxu0 0.0
  %5094 = vmatprep.subr.mxu0 0.0
  %5095 = vmatpush1.msra.mxu0 0.0
  %5096 = vmatprep.subr.mxu0 0.0
  %5097 = vmatpush1.msra.mxu0 0.0
  %5098 = vmatprep.subr.mxu0 0.0
  %5099 = vmatpush1.msra.mxu0 0.0
  %5100 = vmatprep.subr.mxu0 0.0
  %5101 = vmatpush1.msra.mxu0 0.0
  %5102 = vmatprep.subr.mxu0 0.0
  %5103 = vmatpush1.msra.mxu0 0.0
  %5104 = vmatprep.subr.mxu0 0.0
  %5105 = vmatpush1.msra.mxu0 0.0
  %5106 = vmatprep.subr.mxu0 0.0
  %5107 = vmatpush1.msra.mxu0 0.0
  %5108 = vmatprep.mubr.f32.mxu0 0.0
  %5109 = vmatmul.mubr.f32.gmra.mrb[0].mxu0 %v5042
  %v5110 = vpop.f32.mrb[0].mxu0
  %v5111 = vadd.f32 0.0, %v5110
  %v5112 = vpop.f32.mrb[0].mxu0
  %v5113 = vadd.f32 0.0, %v5112
  %5114 = vdwg.mxu0
  %5115 = vmatprep.subr.mxu0 %v3960
  %5116 = vmatpush1.msra.mxu0 %v3959
  %5117 = vmatprep.subr.mxu0 %v3964
  %5118 = vmatpush1.msra.mxu0 %v3963
  %5119 = vmatprep.subr.mxu0 %v3968
  %5120 = vmatpush1.msra.mxu0 %v3967
  %5121 = vmatprep.subr.mxu0 0.0
  %5122 = vmatpush1.msra.mxu0 0.0
  %5123 = vmatprep.subr.mxu0 0.0
  %5124 = vmatpush1.msra.mxu0 0.0
  %5125 = vmatprep.subr.mxu0 0.0
  %5126 = vmatpush1.msra.mxu0 0.0
  %5127 = vmatprep.subr.mxu0 0.0
  %5128 = vmatpush1.msra.mxu0 0.0
  %5129 = vmatprep.subr.mxu0 0.0
  %5130 = vmatpush1.msra.mxu0 0.0
  %5131 = vmatprep.subr.mxu0 0.0
  %5132 = vmatpush1.msra.mxu0 0.0
  %5133 = vmatprep.subr.mxu0 0.0
  %5134 = vmatpush1.msra.mxu0 0.0
  %5135 = vmatprep.subr.mxu0 0.0
  %5136 = vmatpush1.msra.mxu0 0.0
  %5137 = vmatprep.subr.mxu0 0.0
  %5138 = vmatpush1.msra.mxu0 0.0
  %5139 = vmatprep.subr.mxu0 0.0
  %5140 = vmatpush1.msra.mxu0 0.0
  %5141 = vmatprep.subr.mxu0 0.0
  %5142 = vmatpush1.msra.mxu0 0.0
  %5143 = vmatprep.subr.mxu0 0.0
  %5144 = vmatpush1.msra.mxu0 0.0
  %5145 = vmatprep.subr.mxu0 0.0
  %5146 = vmatpush1.msra.mxu0 0.0
  %5147 = vmatprep.subr.mxu0 0.0
  %5148 = vmatpush1.msra.mxu0 0.0
  %5149 = vmatprep.subr.mxu0 0.0
  %5150 = vmatpush1.msra.mxu0 0.0
  %5151 = vmatprep.subr.mxu0 0.0
  %5152 = vmatpush1.msra.mxu0 0.0
  %5153 = vmatprep.subr.mxu0 0.0
  %5154 = vmatpush1.msra.mxu0 0.0
  %5155 = vmatprep.subr.mxu0 0.0
  %5156 = vmatpush1.msra.mxu0 0.0
  %5157 = vmatprep.subr.mxu0 0.0
  %5158 = vmatpush1.msra.mxu0 0.0
  %5159 = vmatprep.subr.mxu0 0.0
  %5160 = vmatpush1.msra.mxu0 0.0
  %5161 = vmatprep.subr.mxu0 0.0
  %5162 = vmatpush1.msra.mxu0 0.0
  %5163 = vmatprep.subr.mxu0 0.0
  %5164 = vmatpush1.msra.mxu0 0.0
  %5165 = vmatprep.subr.mxu0 0.0
  %5166 = vmatpush1.msra.mxu0 0.0
  %5167 = vmatprep.subr.mxu0 0.0
  %5168 = vmatpush1.msra.mxu0 0.0
  %5169 = vmatprep.subr.mxu0 0.0
  %5170 = vmatpush1.msra.mxu0 0.0
  %5171 = vmatprep.subr.mxu0 0.0
  %5172 = vmatpush1.msra.mxu0 0.0
  %5173 = vmatprep.subr.mxu0 0.0
  %5174 = vmatpush1.msra.mxu0 0.0
  %5175 = vmatprep.subr.mxu0 0.0
  %5176 = vmatpush1.msra.mxu0 0.0
  %5177 = vmatprep.subr.mxu0 0.0
  %5178 = vmatpush1.msra.mxu0 0.0
  %5179 = vmatprep.mubr.f32.mxu0 0.0
  %5180 = vmatmul.mubr.f32.gmra.mrb[0].mxu0 %v5042
  %v5181 = vpop.f32.mrb[0].mxu0
  %v5182 = vadd.f32 0.0, %v5181
  %v5183 = vpop.f32.mrb[0].mxu0
  %v5184 = vadd.f32 0.0, %v5183
  %5185 = vdwg.mxu0
  %v5186 = vadd.f32 %v5037, %v5111
  %v5187 = vadd.f32 %v5038, %v5113
  %v5188 = vadd.f32 %v5039, %v5182
  %v5189 = vadd.f32 %v5040, %v5184
  %v5190 = vxor.u32 %v5186, 2147483648
  %v5191 = vmul.f32 %v5190, 1.442695
  %v5192 = vpow.pop %v5191
  %v5193 = vadd.f32 %v5192, 1.0
  %v5194 = vrcp.pop %v5193
  %v5195 = vmul.f32 1.0, %v5194
  %v5196 = vxor.u32 %v5187, 2147483648
  %v5197 = vmul.f32 %v5196, 1.442695
  %v5198 = vpow.pop %v5197
  %v5199 = vadd.f32 %v5198, 1.0
  %v5200 = vrcp.pop %v5199
  %v5201 = vmul.f32 1.0, %v5200
  %v5202 = vtanh.pop %v5188
  %v5203 = vxor.u32 %v5189, 2147483648
  %v5204 = vmul.f32 %v5203, 1.442695
  %v5205 = vpow.pop %v5204
  %v5206 = vadd.f32 %v5205, 1.0
  %v5207 = vrcp.pop %v5206
  %v5208 = vmul.f32 1.0, %v5207
  %v5209 = vmul.f32 %v5201, %v5033
  %v5210 = vmul.f32 %v5195, %v5202
  %v5211 = vadd.f32 %v5209, %v5210
  %v5212 = vtanh.pop %v5211
  %v5213 = vmul.f32 %v5208, %v5212
  %s5214 = scalar_lea.vmem [#allocation4], 224
  %v5215 = vld [vmem:[%s5214] sm:$0xff]
  %v5216 = vld [vmem:[%s5214 + $0x8] sm:$0xff]
  %v5217 = vld [vmem:[%s5214 + $0x10] sm:$0xff]
  %v5218 = vld [vmem:[%s5214 + $0x18] sm:$0xff]
  %v5220 = vsel %vm29, %v5213, 0
  %5222 = vmatprep.subr.mxu0 %v3958
  %5223 = vmatpush1.msra.mxu0 %v3957
  %5224 = vmatprep.subr.mxu0 %v3962
  %5225 = vmatpush1.msra.mxu0 %v3961
  %5226 = vmatprep.subr.mxu0 %v3966
  %5227 = vmatpush1.msra.mxu0 %v3965
  %5228 = vmatprep.subr.mxu0 0.0
  %5229 = vmatpush1.msra.mxu0 0.0
  %5230 = vmatprep.subr.mxu0 0.0
  %5231 = vmatpush1.msra.mxu0 0.0
  %5232 = vmatprep.subr.mxu0 0.0
  %5233 = vmatpush1.msra.mxu0 0.0
  %5234 = vmatprep.subr.mxu0 0.0
  %5235 = vmatpush1.msra.mxu0 0.0
  %5236 = vmatprep.subr.mxu0 0.0
  %5237 = vmatpush1.msra.mxu0 0.0
  %5238 = vmatprep.subr.mxu0 0.0
  %5239 = vmatpush1.msra.mxu0 0.0
  %5240 = vmatprep.subr.mxu0 0.0
  %5241 = vmatpush1.msra.mxu0 0.0
  %5242 = vmatprep.subr.mxu0 0.0
  %5243 = vmatpush1.msra.mxu0 0.0
  %5244 = vmatprep.subr.mxu0 0.0
  %5245 = vmatpush1.msra.mxu0 0.0
  %5246 = vmatprep.subr.mxu0 0.0
  %5247 = vmatpush1.msra.mxu0 0.0
  %5248 = vmatprep.subr.mxu0 0.0
  %5249 = vmatpush1.msra.mxu0 0.0
  %5250 = vmatprep.subr.mxu0 0.0
  %5251 = vmatpush1.msra.mxu0 0.0
  %5252 = vmatprep.subr.mxu0 0.0
  %5253 = vmatpush1.msra.mxu0 0.0
  %5254 = vmatprep.subr.mxu0 0.0
  %5255 = vmatpush1.msra.mxu0 0.0
  %5256 = vmatprep.subr.mxu0 0.0
  %5257 = vmatpush1.msra.mxu0 0.0
  %5258 = vmatprep.subr.mxu0 0.0
  %5259 = vmatpush1.msra.mxu0 0.0
  %5260 = vmatprep.subr.mxu0 0.0
  %5261 = vmatpush1.msra.mxu0 0.0
  %5262 = vmatprep.subr.mxu0 0.0
  %5263 = vmatpush1.msra.mxu0 0.0
  %5264 = vmatprep.subr.mxu0 0.0
  %5265 = vmatpush1.msra.mxu0 0.0
  %5266 = vmatprep.subr.mxu0 0.0
  %5267 = vmatpush1.msra.mxu0 0.0
  %5268 = vmatprep.subr.mxu0 0.0
  %5269 = vmatpush1.msra.mxu0 0.0
  %5270 = vmatprep.subr.mxu0 0.0
  %5271 = vmatpush1.msra.mxu0 0.0
  %5272 = vmatprep.subr.mxu0 0.0
  %5273 = vmatpush1.msra.mxu0 0.0
  %5274 = vmatprep.subr.mxu0 0.0
  %5275 = vmatpush1.msra.mxu0 0.0
  %5276 = vmatprep.subr.mxu0 0.0
  %5277 = vmatpush1.msra.mxu0 0.0
  %5278 = vmatprep.subr.mxu0 0.0
  %5279 = vmatpush1.msra.mxu0 0.0
  %5280 = vmatprep.subr.mxu0 0.0
  %5281 = vmatpush1.msra.mxu0 0.0
  %5282 = vmatprep.subr.mxu0 0.0
  %5283 = vmatpush1.msra.mxu0 0.0
  %5284 = vmatprep.subr.mxu0 0.0
  %5285 = vmatpush1.msra.mxu0 0.0
  %5286 = vmatprep.mubr.f32.mxu0 0.0
  %5287 = vmatmul.mubr.f32.gmra.mrb[0].mxu0 %v5220
  %v5288 = vpop.f32.mrb[0].mxu0
  %v5289 = vadd.f32 0.0, %v5288
  %v5290 = vpop.f32.mrb[0].mxu0
  %v5291 = vadd.f32 0.0, %v5290
  %5292 = vdwg.mxu0
  %5293 = vmatprep.subr.mxu0 %v3960
  %5294 = vmatpush1.msra.mxu0 %v3959
  %5295 = vmatprep.subr.mxu0 %v3964
  %5296 = vmatpush1.msra.mxu0 %v3963
  %5297 = vmatprep.subr.mxu0 %v3968
  %5298 = vmatpush1.msra.mxu0 %v3967
  %5299 = vmatprep.subr.mxu0 0.0
  %5300 = vmatpush1.msra.mxu0 0.0
  %5301 = vmatprep.subr.mxu0 0.0
  %5302 = vmatpush1.msra.mxu0 0.0
  %5303 = vmatprep.subr.mxu0 0.0
  %5304 = vmatpush1.msra.mxu0 0.0
  %5305 = vmatprep.subr.mxu0 0.0
  %5306 = vmatpush1.msra.mxu0 0.0
  %5307 = vmatprep.subr.mxu0 0.0
  %5308 = vmatpush1.msra.mxu0 0.0
  %5309 = vmatprep.subr.mxu0 0.0
  %5310 = vmatpush1.msra.mxu0 0.0
  %5311 = vmatprep.subr.mxu0 0.0
  %5312 = vmatpush1.msra.mxu0 0.0
  %5313 = vmatprep.subr.mxu0 0.0
  %5314 = vmatpush1.msra.mxu0 0.0
  %5315 = vmatprep.subr.mxu0 0.0
  %5316 = vmatpush1.msra.mxu0 0.0
  %5317 = vmatprep.subr.mxu0 0.0
  %5318 = vmatpush1.msra.mxu0 0.0
  %5319 = vmatprep.subr.mxu0 0.0
  %5320 = vmatpush1.msra.mxu0 0.0
  %5321 = vmatprep.subr.mxu0 0.0
  %5322 = vmatpush1.msra.mxu0 0.0
  %5323 = vmatprep.subr.mxu0 0.0
  %5324 = vmatpush1.msra.mxu0 0.0
  %5325 = vmatprep.subr.mxu0 0.0
  %5326 = vmatpush1.msra.mxu0 0.0
  %5327 = vmatprep.subr.mxu0 0.0
  %5328 = vmatpush1.msra.mxu0 0.0
  %5329 = vmatprep.subr.mxu0 0.0
  %5330 = vmatpush1.msra.mxu0 0.0
  %5331 = vmatprep.subr.mxu0 0.0
  %5332 = vmatpush1.msra.mxu0 0.0
  %5333 = vmatprep.subr.mxu0 0.0
  %5334 = vmatpush1.msra.mxu0 0.0
  %5335 = vmatprep.subr.mxu0 0.0
  %5336 = vmatpush1.msra.mxu0 0.0
  %5337 = vmatprep.subr.mxu0 0.0
  %5338 = vmatpush1.msra.mxu0 0.0
  %5339 = vmatprep.subr.mxu0 0.0
  %5340 = vmatpush1.msra.mxu0 0.0
  %5341 = vmatprep.subr.mxu0 0.0
  %5342 = vmatpush1.msra.mxu0 0.0
  %5343 = vmatprep.subr.mxu0 0.0
  %5344 = vmatpush1.msra.mxu0 0.0
  %5345 = vmatprep.subr.mxu0 0.0
  %5346 = vmatpush1.msra.mxu0 0.0
  %5347 = vmatprep.subr.mxu0 0.0
  %5348 = vmatpush1.msra.mxu0 0.0
  %5349 = vmatprep.subr.mxu0 0.0
  %5350 = vmatpush1.msra.mxu0 0.0
  %5351 = vmatprep.subr.mxu0 0.0
  %5352 = vmatpush1.msra.mxu0 0.0
  %5353 = vmatprep.subr.mxu0 0.0
  %5354 = vmatpush1.msra.mxu0 0.0
  %5355 = vmatprep.subr.mxu0 0.0
  %5356 = vmatpush1.msra.mxu0 0.0
  %5357 = vmatprep.mubr.f32.mxu0 0.0
  %5358 = vmatmul.mubr.f32.gmra.mrb[0].mxu0 %v5220
  %v5359 = vpop.f32.mrb[0].mxu0
  %v5360 = vadd.f32 0.0, %v5359
  %v5361 = vpop.f32.mrb[0].mxu0
  %v5362 = vadd.f32 0.0, %v5361
  %5363 = vdwg.mxu0
  %v5364 = vadd.f32 %v5215, %v5289
  %v5365 = vadd.f32 %v5216, %v5291
  %v5366 = vadd.f32 %v5217, %v5360
  %v5367 = vadd.f32 %v5218, %v5362
  %v5368 = vxor.u32 %v5364, 2147483648
  %v5369 = vmul.f32 %v5368, 1.442695
  %v5370 = vpow.pop %v5369
  %v5371 = vadd.f32 %v5370, 1.0
  %v5372 = vrcp.pop %v5371
  %v5373 = vmul.f32 1.0, %v5372
  %v5374 = vxor.u32 %v5365, 2147483648
  %v5375 = vmul.f32 %v5374, 1.442695
  %v5376 = vpow.pop %v5375
  %v5377 = vadd.f32 %v5376, 1.0
  %v5378 = vrcp.pop %v5377
  %v5379 = vmul.f32 1.0, %v5378
  %v5380 = vtanh.pop %v5366
  %v5381 = vxor.u32 %v5367, 2147483648
  %v5382 = vmul.f32 %v5381, 1.442695
  %v5383 = vpow.pop %v5382
  %v5384 = vadd.f32 %v5383, 1.0
  %v5385 = vrcp.pop %v5384
  %v5386 = vmul.f32 1.0, %v5385
  %v5387 = vmul.f32 %v5379, %v5211
  %v5388 = vmul.f32 %v5373, %v5380
  %v5389 = vadd.f32 %v5387, %v5388
  %v5390 = vtanh.pop %v5389
  %v5391 = vmul.f32 %v5386, %v5390
  %s5392 = scalar_lea.vmem [#allocation4], 256
  %v5393 = vld [vmem:[%s5392] sm:$0xff]
  %v5394 = vld [vmem:[%s5392 + $0x8] sm:$0xff]
  %v5395 = vld [vmem:[%s5392 + $0x10] sm:$0xff]
  %v5396 = vld [vmem:[%s5392 + $0x18] sm:$0xff]
  %v5398 = vsel %vm29, %v5391, 0
  %5400 = vmatprep.subr.mxu0 %v3958
  %5401 = vmatpush1.msra.mxu0 %v3957
  %5402 = vmatprep.subr.mxu0 %v3962
  %5403 = vmatpush1.msra.mxu0 %v3961
  %5404 = vmatprep.subr.mxu0 %v3966
  %5405 = vmatpush1.msra.mxu0 %v3965
  %5406 = vmatprep.subr.mxu0 0.0
  %5407 = vmatpush1.msra.mxu0 0.0
  %5408 = vmatprep.subr.mxu0 0.0
  %5409 = vmatpush1.msra.mxu0 0.0
  %5410 = vmatprep.subr.mxu0 0.0
  %5411 = vmatpush1.msra.mxu0 0.0
  %5412 = vmatprep.subr.mxu0 0.0
  %5413 = vmatpush1.msra.mxu0 0.0
  %5414 = vmatprep.subr.mxu0 0.0
  %5415 = vmatpush1.msra.mxu0 0.0
  %5416 = vmatprep.subr.mxu0 0.0
  %5417 = vmatpush1.msra.mxu0 0.0
  %5418 = vmatprep.subr.mxu0 0.0
  %5419 = vmatpush1.msra.mxu0 0.0
  %5420 = vmatprep.subr.mxu0 0.0
  %5421 = vmatpush1.msra.mxu0 0.0
  %5422 = vmatprep.subr.mxu0 0.0
  %5423 = vmatpush1.msra.mxu0 0.0
  %5424 = vmatprep.subr.mxu0 0.0
  %5425 = vmatpush1.msra.mxu0 0.0
  %5426 = vmatprep.subr.mxu0 0.0
  %5427 = vmatpush1.msra.mxu0 0.0
  %5428 = vmatprep.subr.mxu0 0.0
  %5429 = vmatpush1.msra.mxu0 0.0
  %5430 = vmatprep.subr.mxu0 0.0
  %5431 = vmatpush1.msra.mxu0 0.0
  %5432 = vmatprep.subr.mxu0 0.0
  %5433 = vmatpush1.msra.mxu0 0.0
  %5434 = vmatprep.subr.mxu0 0.0
  %5435 = vmatpush1.msra.mxu0 0.0
  %5436 = vmatprep.subr.mxu0 0.0
  %5437 = vmatpush1.msra.mxu0 0.0
  %5438 = vmatprep.subr.mxu0 0.0
  %5439 = vmatpush1.msra.mxu0 0.0
  %5440 = vmatprep.subr.mxu0 0.0
  %5441 = vmatpush1.msra.mxu0 0.0
  %5442 = vmatprep.subr.mxu0 0.0
  %5443 = vmatpush1.msra.mxu0 0.0
  %5444 = vmatprep.subr.mxu0 0.0
  %5445 = vmatpush1.msra.mxu0 0.0
  %5446 = vmatprep.subr.mxu0 0.0
  %5447 = vmatpush1.msra.mxu0 0.0
  %5448 = vmatprep.subr.mxu0 0.0
  %5449 = vmatpush1.msra.mxu0 0.0
  %5450 = vmatprep.subr.mxu0 0.0
  %5451 = vmatpush1.msra.mxu0 0.0
  %5452 = vmatprep.subr.mxu0 0.0
  %5453 = vmatpush1.msra.mxu0 0.0
  %5454 = vmatprep.subr.mxu0 0.0
  %5455 = vmatpush1.msra.mxu0 0.0
  %5456 = vmatprep.subr.mxu0 0.0
  %5457 = vmatpush1.msra.mxu0 0.0
  %5458 = vmatprep.subr.mxu0 0.0
  %5459 = vmatpush1.msra.mxu0 0.0
  %5460 = vmatprep.subr.mxu0 0.0
  %5461 = vmatpush1.msra.mxu0 0.0
  %5462 = vmatprep.subr.mxu0 0.0
  %5463 = vmatpush1.msra.mxu0 0.0
  %5464 = vmatprep.mubr.f32.mxu0 0.0
  %5465 = vmatmul.mubr.f32.gmra.mrb[0].mxu0 %v5398
  %v5466 = vpop.f32.mrb[0].mxu0
  %v5467 = vadd.f32 0.0, %v5466
  %v5468 = vpop.f32.mrb[0].mxu0
  %v5469 = vadd.f32 0.0, %v5468
  %5470 = vdwg.mxu0
  %5471 = vmatprep.subr.mxu0 %v3960
  %5472 = vmatpush1.msra.mxu0 %v3959
  %5473 = vmatprep.subr.mxu0 %v3964
  %5474 = vmatpush1.msra.mxu0 %v3963
  %5475 = vmatprep.subr.mxu0 %v3968
  %5476 = vmatpush1.msra.mxu0 %v3967
  %5477 = vmatprep.subr.mxu0 0.0
  %5478 = vmatpush1.msra.mxu0 0.0
  %5479 = vmatprep.subr.mxu0 0.0
  %5480 = vmatpush1.msra.mxu0 0.0
  %5481 = vmatprep.subr.mxu0 0.0
  %5482 = vmatpush1.msra.mxu0 0.0
  %5483 = vmatprep.subr.mxu0 0.0
  %5484 = vmatpush1.msra.mxu0 0.0
  %5485 = vmatprep.subr.mxu0 0.0
  %5486 = vmatpush1.msra.mxu0 0.0
  %5487 = vmatprep.subr.mxu0 0.0
  %5488 = vmatpush1.msra.mxu0 0.0
  %5489 = vmatprep.subr.mxu0 0.0
  %5490 = vmatpush1.msra.mxu0 0.0
  %5491 = vmatprep.subr.mxu0 0.0
  %5492 = vmatpush1.msra.mxu0 0.0
  %5493 = vmatprep.subr.mxu0 0.0
  %5494 = vmatpush1.msra.mxu0 0.0
  %5495 = vmatprep.subr.mxu0 0.0
  %5496 = vmatpush1.msra.mxu0 0.0
  %5497 = vmatprep.subr.mxu0 0.0
  %5498 = vmatpush1.msra.mxu0 0.0
  %5499 = vmatprep.subr.mxu0 0.0
  %5500 = vmatpush1.msra.mxu0 0.0
  %5501 = vmatprep.subr.mxu0 0.0
  %5502 = vmatpush1.msra.mxu0 0.0
  %5503 = vmatprep.subr.mxu0 0.0
  %5504 = vmatpush1.msra.mxu0 0.0
  %5505 = vmatprep.subr.mxu0 0.0
  %5506 = vmatpush1.msra.mxu0 0.0
  %5507 = vmatprep.subr.mxu0 0.0
  %5508 = vmatpush1.msra.mxu0 0.0
  %5509 = vmatprep.subr.mxu0 0.0
  %5510 = vmatpush1.msra.mxu0 0.0
  %5511 = vmatprep.subr.mxu0 0.0
  %5512 = vmatpush1.msra.mxu0 0.0
  %5513 = vmatprep.subr.mxu0 0.0
  %5514 = vmatpush1.msra.mxu0 0.0
  %5515 = vmatprep.subr.mxu0 0.0
  %5516 = vmatpush1.msra.mxu0 0.0
  %5517 = vmatprep.subr.mxu0 0.0
  %5518 = vmatpush1.msra.mxu0 0.0
  %5519 = vmatprep.subr.mxu0 0.0
  %5520 = vmatpush1.msra.mxu0 0.0
  %5521 = vmatprep.subr.mxu0 0.0
  %5522 = vmatpush1.msra.mxu0 0.0
  %5523 = vmatprep.subr.mxu0 0.0
  %5524 = vmatpush1.msra.mxu0 0.0
  %5525 = vmatprep.subr.mxu0 0.0
  %5526 = vmatpush1.msra.mxu0 0.0
  %5527 = vmatprep.subr.mxu0 0.0
  %5528 = vmatpush1.msra.mxu0 0.0
  %5529 = vmatprep.subr.mxu0 0.0
  %5530 = vmatpush1.msra.mxu0 0.0
  %5531 = vmatprep.subr.mxu0 0.0
  %5532 = vmatpush1.msra.mxu0 0.0
  %5533 = vmatprep.subr.mxu0 0.0
  %5534 = vmatpush1.msra.mxu0 0.0
  %5535 = vmatprep.mubr.f32.mxu0 0.0
  %5536 = vmatmul.mubr.f32.gmra.mrb[0].mxu0 %v5398
  %v5537 = vpop.f32.mrb[0].mxu0
  %v5538 = vadd.f32 0.0, %v5537
  %v5539 = vpop.f32.mrb[0].mxu0
  %v5540 = vadd.f32 0.0, %v5539
  %5541 = vdwg.mxu0
  %v5542 = vadd.f32 %v5393, %v5467
  %v5543 = vadd.f32 %v5394, %v5469
  %v5544 = vadd.f32 %v5395, %v5538
  %v5545 = vadd.f32 %v5396, %v5540
  %v5546 = vxor.u32 %v5542, 2147483648
  %v5547 = vmul.f32 %v5546, 1.442695
  %v5548 = vpow.pop %v5547
  %v5549 = vadd.f32 %v5548, 1.0
  %v5550 = vrcp.pop %v5549
  %v5551 = vmul.f32 1.0, %v5550
  %v5552 = vxor.u32 %v5543, 2147483648
  %v5553 = vmul.f32 %v5552, 1.442695
  %v5554 = vpow.pop %v5553
  %v5555 = vadd.f32 %v5554, 1.0
  %v5556 = vrcp.pop %v5555
  %v5557 = vmul.f32 1.0, %v5556
  %v5558 = vtanh.pop %v5544
  %v5559 = vxor.u32 %v5545, 2147483648
  %v5560 = vmul.f32 %v5559, 1.442695
  %v5561 = vpow.pop %v5560
  %v5562 = vadd.f32 %v5561, 1.0
  %v5563 = vrcp.pop %v5562
  %v5564 = vmul.f32 1.0, %v5563
  %v5565 = vmul.f32 %v5557, %v5389
  %v5566 = vmul.f32 %v5551, %v5558
  %v5567 = vadd.f32 %v5565, %v5566
  %v5568 = vtanh.pop %v5567
  %v5569 = vmul.f32 %v5564, %v5568
  %s5570 = scalar_lea.vmem [#allocation4], 288
  %v5571 = vld [vmem:[%s5570] sm:$0xff]
  %v5572 = vld [vmem:[%s5570 + $0x8] sm:$0xff]
  %v5573 = vld [vmem:[%s5570 + $0x10] sm:$0xff]
  %v5574 = vld [vmem:[%s5570 + $0x18] sm:$0xff]
  %v5576 = vsel %vm29, %v5569, 0
  %5578 = vmatprep.subr.mxu0 %v3958
  %5579 = vmatpush1.msra.mxu0 %v3957
  %5580 = vmatprep.subr.mxu0 %v3962
  %5581 = vmatpush1.msra.mxu0 %v3961
  %5582 = vmatprep.subr.mxu0 %v3966
  %5583 = vmatpush1.msra.mxu0 %v3965
  %5584 = vmatprep.subr.mxu0 0.0
  %5585 = vmatpush1.msra.mxu0 0.0
  %5586 = vmatprep.subr.mxu0 0.0
  %5587 = vmatpush1.msra.mxu0 0.0
  %5588 = vmatprep.subr.mxu0 0.0
  %5589 = vmatpush1.msra.mxu0 0.0
  %5590 = vmatprep.subr.mxu0 0.0
  %5591 = vmatpush1.msra.mxu0 0.0
  %5592 = vmatprep.subr.mxu0 0.0
  %5593 = vmatpush1.msra.mxu0 0.0
  %5594 = vmatprep.subr.mxu0 0.0
  %5595 = vmatpush1.msra.mxu0 0.0
  %5596 = vmatprep.subr.mxu0 0.0
  %5597 = vmatpush1.msra.mxu0 0.0
  %5598 = vmatprep.subr.mxu0 0.0
  %5599 = vmatpush1.msra.mxu0 0.0
  %5600 = vmatprep.subr.mxu0 0.0
  %5601 = vmatpush1.msra.mxu0 0.0
  %5602 = vmatprep.subr.mxu0 0.0
  %5603 = vmatpush1.msra.mxu0 0.0
  %5604 = vmatprep.subr.mxu0 0.0
  %5605 = vmatpush1.msra.mxu0 0.0
  %5606 = vmatprep.subr.mxu0 0.0
  %5607 = vmatpush1.msra.mxu0 0.0
  %5608 = vmatprep.subr.mxu0 0.0
  %5609 = vmatpush1.msra.mxu0 0.0
  %5610 = vmatprep.subr.mxu0 0.0
  %5611 = vmatpush1.msra.mxu0 0.0
  %5612 = vmatprep.subr.mxu0 0.0
  %5613 = vmatpush1.msra.mxu0 0.0
  %5614 = vmatprep.subr.mxu0 0.0
  %5615 = vmatpush1.msra.mxu0 0.0
  %5616 = vmatprep.subr.mxu0 0.0
  %5617 = vmatpush1.msra.mxu0 0.0
  %5618 = vmatprep.subr.mxu0 0.0
  %5619 = vmatpush1.msra.mxu0 0.0
  %5620 = vmatprep.subr.mxu0 0.0
  %5621 = vmatpush1.msra.mxu0 0.0
  %5622 = vmatprep.subr.mxu0 0.0
  %5623 = vmatpush1.msra.mxu0 0.0
  %5624 = vmatprep.subr.mxu0 0.0
  %5625 = vmatpush1.msra.mxu0 0.0
  %5626 = vmatprep.subr.mxu0 0.0
  %5627 = vmatpush1.msra.mxu0 0.0
  %5628 = vmatprep.subr.mxu0 0.0
  %5629 = vmatpush1.msra.mxu0 0.0
  %5630 = vmatprep.subr.mxu0 0.0
  %5631 = vmatpush1.msra.mxu0 0.0
  %5632 = vmatprep.subr.mxu0 0.0
  %5633 = vmatpush1.msra.mxu0 0.0
  %5634 = vmatprep.subr.mxu0 0.0
  %5635 = vmatpush1.msra.mxu0 0.0
  %5636 = vmatprep.subr.mxu0 0.0
  %5637 = vmatpush1.msra.mxu0 0.0
  %5638 = vmatprep.subr.mxu0 0.0
  %5639 = vmatpush1.msra.mxu0 0.0
  %5640 = vmatprep.subr.mxu0 0.0
  %5641 = vmatpush1.msra.mxu0 0.0
  %5642 = vmatprep.mubr.f32.mxu0 0.0
  %5643 = vmatmul.mubr.f32.gmra.mrb[0].mxu0 %v5576
  %v5644 = vpop.f32.mrb[0].mxu0
  %v5645 = vadd.f32 0.0, %v5644
  %v5646 = vpop.f32.mrb[0].mxu0
  %v5647 = vadd.f32 0.0, %v5646
  %5648 = vdwg.mxu0
  %5649 = vmatprep.subr.mxu0 %v3960
  %5650 = vmatpush1.msra.mxu0 %v3959
  %5651 = vmatprep.subr.mxu0 %v3964
  %5652 = vmatpush1.msra.mxu0 %v3963
  %5653 = vmatprep.subr.mxu0 %v3968
  %5654 = vmatpush1.msra.mxu0 %v3967
  %5655 = vmatprep.subr.mxu0 0.0
  %5656 = vmatpush1.msra.mxu0 0.0
  %5657 = vmatprep.subr.mxu0 0.0
  %5658 = vmatpush1.msra.mxu0 0.0
  %5659 = vmatprep.subr.mxu0 0.0
  %5660 = vmatpush1.msra.mxu0 0.0
  %5661 = vmatprep.subr.mxu0 0.0
  %5662 = vmatpush1.msra.mxu0 0.0
  %5663 = vmatprep.subr.mxu0 0.0
  %5664 = vmatpush1.msra.mxu0 0.0
  %5665 = vmatprep.subr.mxu0 0.0
  %5666 = vmatpush1.msra.mxu0 0.0
  %5667 = vmatprep.subr.mxu0 0.0
  %5668 = vmatpush1.msra.mxu0 0.0
  %5669 = vmatprep.subr.mxu0 0.0
  %5670 = vmatpush1.msra.mxu0 0.0
  %5671 = vmatprep.subr.mxu0 0.0
  %5672 = vmatpush1.msra.mxu0 0.0
  %5673 = vmatprep.subr.mxu0 0.0
  %5674 = vmatpush1.msra.mxu0 0.0
  %5675 = vmatprep.subr.mxu0 0.0
  %5676 = vmatpush1.msra.mxu0 0.0
  %5677 = vmatprep.subr.mxu0 0.0
  %5678 = vmatpush1.msra.mxu0 0.0
  %5679 = vmatprep.subr.mxu0 0.0
  %5680 = vmatpush1.msra.mxu0 0.0
  %5681 = vmatprep.subr.mxu0 0.0
  %5682 = vmatpush1.msra.mxu0 0.0
  %5683 = vmatprep.subr.mxu0 0.0
  %5684 = vmatpush1.msra.mxu0 0.0
  %5685 = vmatprep.subr.mxu0 0.0
  %5686 = vmatpush1.msra.mxu0 0.0
  %5687 = vmatprep.subr.mxu0 0.0
  %5688 = vmatpush1.msra.mxu0 0.0
  %5689 = vmatprep.subr.mxu0 0.0
  %5690 = vmatpush1.msra.mxu0 0.0
  %5691 = vmatprep.subr.mxu0 0.0
  %5692 = vmatpush1.msra.mxu0 0.0
  %5693 = vmatprep.subr.mxu0 0.0
  %5694 = vmatpush1.msra.mxu0 0.0
  %5695 = vmatprep.subr.mxu0 0.0
  %5696 = vmatpush1.msra.mxu0 0.0
  %5697 = vmatprep.subr.mxu0 0.0
  %5698 = vmatpush1.msra.mxu0 0.0
  %5699 = vmatprep.subr.mxu0 0.0
  %5700 = vmatpush1.msra.mxu0 0.0
  %5701 = vmatprep.subr.mxu0 0.0
  %5702 = vmatpush1.msra.mxu0 0.0
  %5703 = vmatprep.subr.mxu0 0.0
  %5704 = vmatpush1.msra.mxu0 0.0
  %5705 = vmatprep.subr.mxu0 0.0
  %5706 = vmatpush1.msra.mxu0 0.0
  %5707 = vmatprep.subr.mxu0 0.0
  %5708 = vmatpush1.msra.mxu0 0.0
  %5709 = vmatprep.subr.mxu0 0.0
  %5710 = vmatpush1.msra.mxu0 0.0
  %5711 = vmatprep.subr.mxu0 0.0
  %5712 = vmatpush1.msra.mxu0 0.0
  %5713 = vmatprep.mubr.f32.mxu0 0.0
  %5714 = vmatmul.mubr.f32.gmra.mrb[0].mxu0 %v5576
  %v5715 = vpop.f32.mrb[0].mxu0
  %v5716 = vadd.f32 0.0, %v5715
  %v5717 = vpop.f32.mrb[0].mxu0
  %v5718 = vadd.f32 0.0, %v5717
  %5719 = vdwg.mxu0
  %v5720 = vadd.f32 %v5571, %v5645
  %v5721 = vadd.f32 %v5572, %v5647
  %v5722 = vadd.f32 %v5573, %v5716
  %v5723 = vadd.f32 %v5574, %v5718
  %v5724 = vxor.u32 %v5720, 2147483648
  %v5725 = vmul.f32 %v5724, 1.442695
  %v5726 = vpow.pop %v5725
  %v5727 = vadd.f32 %v5726, 1.0
  %v5728 = vrcp.pop %v5727
  %v5729 = vmul.f32 1.0, %v5728
  %v5730 = vxor.u32 %v5721, 2147483648
  %v5731 = vmul.f32 %v5730, 1.442695
  %v5732 = vpow.pop %v5731
  %v5733 = vadd.f32 %v5732, 1.0
  %v5734 = vrcp.pop %v5733
  %v5735 = vmul.f32 1.0, %v5734
  %v5736 = vtanh.pop %v5722
  %v5737 = vxor.u32 %v5723, 2147483648
  %v5738 = vmul.f32 %v5737, 1.442695
  %v5739 = vpow.pop %v5738
  %v5740 = vadd.f32 %v5739, 1.0
  %v5741 = vrcp.pop %v5740
  %v5742 = vmul.f32 1.0, %v5741
  %v5743 = vmul.f32 %v5735, %v5567
  %v5744 = vmul.f32 %v5729, %v5736
  %v5745 = vadd.f32 %v5743, %v5744
  %v5746 = vtanh.pop %v5745
  %v5747 = vmul.f32 %v5742, %v5746
  %s5748 = scalar_lea.vmem [#allocation4], 320
  %v5749 = vld [vmem:[%s5748] sm:$0xff]
  %v5750 = vld [vmem:[%s5748 + $0x8] sm:$0xff]
  %v5751 = vld [vmem:[%s5748 + $0x10] sm:$0xff]
  %v5752 = vld [vmem:[%s5748 + $0x18] sm:$0xff]
  %v5754 = vsel %vm29, %v5747, 0
  %5756 = vmatprep.subr.mxu0 %v3958
  %5757 = vmatpush1.msra.mxu0 %v3957
  %5758 = vmatprep.subr.mxu0 %v3962
  %5759 = vmatpush1.msra.mxu0 %v3961
  %5760 = vmatprep.subr.mxu0 %v3966
  %5761 = vmatpush1.msra.mxu0 %v3965
  %5762 = vmatprep.subr.mxu0 0.0
  %5763 = vmatpush1.msra.mxu0 0.0
  %5764 = vmatprep.subr.mxu0 0.0
  %5765 = vmatpush1.msra.mxu0 0.0
  %5766 = vmatprep.subr.mxu0 0.0
  %5767 = vmatpush1.msra.mxu0 0.0
  %5768 = vmatprep.subr.mxu0 0.0
  %5769 = vmatpush1.msra.mxu0 0.0
  %5770 = vmatprep.subr.mxu0 0.0
  %5771 = vmatpush1.msra.mxu0 0.0
  %5772 = vmatprep.subr.mxu0 0.0
  %5773 = vmatpush1.msra.mxu0 0.0
  %5774 = vmatprep.subr.mxu0 0.0
  %5775 = vmatpush1.msra.mxu0 0.0
  %5776 = vmatprep.subr.mxu0 0.0
  %5777 = vmatpush1.msra.mxu0 0.0
  %5778 = vmatprep.subr.mxu0 0.0
  %5779 = vmatpush1.msra.mxu0 0.0
  %5780 = vmatprep.subr.mxu0 0.0
  %5781 = vmatpush1.msra.mxu0 0.0
  %5782 = vmatprep.subr.mxu0 0.0
  %5783 = vmatpush1.msra.mxu0 0.0
  %5784 = vmatprep.subr.mxu0 0.0
  %5785 = vmatpush1.msra.mxu0 0.0
  %5786 = vmatprep.subr.mxu0 0.0
  %5787 = vmatpush1.msra.mxu0 0.0
  %5788 = vmatprep.subr.mxu0 0.0
  %5789 = vmatpush1.msra.mxu0 0.0
  %5790 = vmatprep.subr.mxu0 0.0
  %5791 = vmatpush1.msra.mxu0 0.0
  %5792 = vmatprep.subr.mxu0 0.0
  %5793 = vmatpush1.msra.mxu0 0.0
  %5794 = vmatprep.subr.mxu0 0.0
  %5795 = vmatpush1.msra.mxu0 0.0
  %5796 = vmatprep.subr.mxu0 0.0
  %5797 = vmatpush1.msra.mxu0 0.0
  %5798 = vmatprep.subr.mxu0 0.0
  %5799 = vmatpush1.msra.mxu0 0.0
  %5800 = vmatprep.subr.mxu0 0.0
  %5801 = vmatpush1.msra.mxu0 0.0
  %5802 = vmatprep.subr.mxu0 0.0
  %5803 = vmatpush1.msra.mxu0 0.0
  %5804 = vmatprep.subr.mxu0 0.0
  %5805 = vmatpush1.msra.mxu0 0.0
  %5806 = vmatprep.subr.mxu0 0.0
  %5807 = vmatpush1.msra.mxu0 0.0
  %5808 = vmatprep.subr.mxu0 0.0
  %5809 = vmatpush1.msra.mxu0 0.0
  %5810 = vmatprep.subr.mxu0 0.0
  %5811 = vmatpush1.msra.mxu0 0.0
  %5812 = vmatprep.subr.mxu0 0.0
  %5813 = vmatpush1.msra.mxu0 0.0
  %5814 = vmatprep.subr.mxu0 0.0
  %5815 = vmatpush1.msra.mxu0 0.0
  %5816 = vmatprep.subr.mxu0 0.0
  %5817 = vmatpush1.msra.mxu0 0.0
  %5818 = vmatprep.subr.mxu0 0.0
  %5819 = vmatpush1.msra.mxu0 0.0
  %5820 = vmatprep.mubr.f32.mxu0 0.0
  %5821 = vmatmul.mubr.f32.gmra.mrb[0].mxu0 %v5754
  %v5822 = vpop.f32.mrb[0].mxu0
  %v5823 = vadd.f32 0.0, %v5822
  %v5824 = vpop.f32.mrb[0].mxu0
  %v5825 = vadd.f32 0.0, %v5824
  %5826 = vdwg.mxu0
  %5827 = vmatprep.subr.mxu0 %v3960
  %5828 = vmatpush1.msra.mxu0 %v3959
  %5829 = vmatprep.subr.mxu0 %v3964
  %5830 = vmatpush1.msra.mxu0 %v3963
  %5831 = vmatprep.subr.mxu0 %v3968
  %5832 = vmatpush1.msra.mxu0 %v3967
  %5833 = vmatprep.subr.mxu0 0.0
  %5834 = vmatpush1.msra.mxu0 0.0
  %5835 = vmatprep.subr.mxu0 0.0
  %5836 = vmatpush1.msra.mxu0 0.0
  %5837 = vmatprep.subr.mxu0 0.0
  %5838 = vmatpush1.msra.mxu0 0.0
  %5839 = vmatprep.subr.mxu0 0.0
  %5840 = vmatpush1.msra.mxu0 0.0
  %5841 = vmatprep.subr.mxu0 0.0
  %5842 = vmatpush1.msra.mxu0 0.0
  %5843 = vmatprep.subr.mxu0 0.0
  %5844 = vmatpush1.msra.mxu0 0.0
  %5845 = vmatprep.subr.mxu0 0.0
  %5846 = vmatpush1.msra.mxu0 0.0
  %5847 = vmatprep.subr.mxu0 0.0
  %5848 = vmatpush1.msra.mxu0 0.0
  %5849 = vmatprep.subr.mxu0 0.0
  %5850 = vmatpush1.msra.mxu0 0.0
  %5851 = vmatprep.subr.mxu0 0.0
  %5852 = vmatpush1.msra.mxu0 0.0
  %5853 = vmatprep.subr.mxu0 0.0
  %5854 = vmatpush1.msra.mxu0 0.0
  %5855 = vmatprep.subr.mxu0 0.0
  %5856 = vmatpush1.msra.mxu0 0.0
  %5857 = vmatprep.subr.mxu0 0.0
  %5858 = vmatpush1.msra.mxu0 0.0
  %5859 = vmatprep.subr.mxu0 0.0
  %5860 = vmatpush1.msra.mxu0 0.0
  %5861 = vmatprep.subr.mxu0 0.0
  %5862 = vmatpush1.msra.mxu0 0.0
  %5863 = vmatprep.subr.mxu0 0.0
  %5864 = vmatpush1.msra.mxu0 0.0
  %5865 = vmatprep.subr.mxu0 0.0
  %5866 = vmatpush1.msra.mxu0 0.0
  %5867 = vmatprep.subr.mxu0 0.0
  %5868 = vmatpush1.msra.mxu0 0.0
  %5869 = vmatprep.subr.mxu0 0.0
  %5870 = vmatpush1.msra.mxu0 0.0
  %5871 = vmatprep.subr.mxu0 0.0
  %5872 = vmatpush1.msra.mxu0 0.0
  %5873 = vmatprep.subr.mxu0 0.0
  %5874 = vmatpush1.msra.mxu0 0.0
  %5875 = vmatprep.subr.mxu0 0.0
  %5876 = vmatpush1.msra.mxu0 0.0
  %5877 = vmatprep.subr.mxu0 0.0
  %5878 = vmatpush1.msra.mxu0 0.0
  %5879 = vmatprep.subr.mxu0 0.0
  %5880 = vmatpush1.msra.mxu0 0.0
  %5881 = vmatprep.subr.mxu0 0.0
  %5882 = vmatpush1.msra.mxu0 0.0
  %5883 = vmatprep.subr.mxu0 0.0
  %5884 = vmatpush1.msra.mxu0 0.0
  %5885 = vmatprep.subr.mxu0 0.0
  %5886 = vmatpush1.msra.mxu0 0.0
  %5887 = vmatprep.subr.mxu0 0.0
  %5888 = vmatpush1.msra.mxu0 0.0
  %5889 = vmatprep.subr.mxu0 0.0
  %5890 = vmatpush1.msra.mxu0 0.0
  %5891 = vmatprep.mubr.f32.mxu0 0.0
  %5892 = vmatmul.mubr.f32.gmra.mrb[0].mxu0 %v5754
  %v5893 = vpop.f32.mrb[0].mxu0
  %v5894 = vadd.f32 0.0, %v5893
  %v5895 = vpop.f32.mrb[0].mxu0
  %v5896 = vadd.f32 0.0, %v5895
  %5897 = vdwg.mxu0
  %v5898 = vadd.f32 %v5749, %v5823
  %v5899 = vadd.f32 %v5750, %v5825
  %v5900 = vadd.f32 %v5751, %v5894
  %v5901 = vadd.f32 %v5752, %v5896
  %v5902 = vxor.u32 %v5898, 2147483648
  %v5903 = vmul.f32 %v5902, 1.442695
  %v5904 = vpow.pop %v5903
  %v5905 = vadd.f32 %v5904, 1.0
  %v5906 = vrcp.pop %v5905
  %v5907 = vmul.f32 1.0, %v5906
  %v5908 = vxor.u32 %v5899, 2147483648
  %v5909 = vmul.f32 %v5908, 1.442695
  %v5910 = vpow.pop %v5909
  %v5911 = vadd.f32 %v5910, 1.0
  %v5912 = vrcp.pop %v5911
  %v5913 = vmul.f32 1.0, %v5912
  %v5914 = vtanh.pop %v5900
  %v5915 = vxor.u32 %v5901, 2147483648
  %v5916 = vmul.f32 %v5915, 1.442695
  %v5917 = vpow.pop %v5916
  %v5918 = vadd.f32 %v5917, 1.0
  %v5919 = vrcp.pop %v5918
  %v5920 = vmul.f32 1.0, %v5919
  %v5921 = vmul.f32 %v5913, %v5745
  %v5922 = vmul.f32 %v5907, %v5914
  %v5923 = vadd.f32 %v5921, %v5922
  %v5924 = vtanh.pop %v5923
  %v5925 = vmul.f32 %v5920, %v5924
  %s5926 = scalar_lea.vmem [#allocation4], 352
  %v5927 = vld [vmem:[%s5926] sm:$0xff]
  %v5928 = vld [vmem:[%s5926 + $0x8] sm:$0xff]
  %v5929 = vld [vmem:[%s5926 + $0x10] sm:$0xff]
  %v5930 = vld [vmem:[%s5926 + $0x18] sm:$0xff]
  %v5932 = vsel %vm29, %v5925, 0
  %5934 = vmatprep.subr.mxu0 %v3958
  %5935 = vmatpush1.msra.mxu0 %v3957
  %5936 = vmatprep.subr.mxu0 %v3962
  %5937 = vmatpush1.msra.mxu0 %v3961
  %5938 = vmatprep.subr.mxu0 %v3966
  %5939 = vmatpush1.msra.mxu0 %v3965
  %5940 = vmatprep.subr.mxu0 0.0
  %5941 = vmatpush1.msra.mxu0 0.0
  %5942 = vmatprep.subr.mxu0 0.0
  %5943 = vmatpush1.msra.mxu0 0.0
  %5944 = vmatprep.subr.mxu0 0.0
  %5945 = vmatpush1.msra.mxu0 0.0
  %5946 = vmatprep.subr.mxu0 0.0
  %5947 = vmatpush1.msra.mxu0 0.0
  %5948 = vmatprep.subr.mxu0 0.0
  %5949 = vmatpush1.msra.mxu0 0.0
  %5950 = vmatprep.subr.mxu0 0.0
  %5951 = vmatpush1.msra.mxu0 0.0
  %5952 = vmatprep.subr.mxu0 0.0
  %5953 = vmatpush1.msra.mxu0 0.0
  %5954 = vmatprep.subr.mxu0 0.0
  %5955 = vmatpush1.msra.mxu0 0.0
  %5956 = vmatprep.subr.mxu0 0.0
  %5957 = vmatpush1.msra.mxu0 0.0
  %5958 = vmatprep.subr.mxu0 0.0
  %5959 = vmatpush1.msra.mxu0 0.0
  %5960 = vmatprep.subr.mxu0 0.0
  %5961 = vmatpush1.msra.mxu0 0.0
  %5962 = vmatprep.subr.mxu0 0.0
  %5963 = vmatpush1.msra.mxu0 0.0
  %5964 = vmatprep.subr.mxu0 0.0
  %5965 = vmatpush1.msra.mxu0 0.0
  %5966 = vmatprep.subr.mxu0 0.0
  %5967 = vmatpush1.msra.mxu0 0.0
  %5968 = vmatprep.subr.mxu0 0.0
  %5969 = vmatpush1.msra.mxu0 0.0
  %5970 = vmatprep.subr.mxu0 0.0
  %5971 = vmatpush1.msra.mxu0 0.0
  %5972 = vmatprep.subr.mxu0 0.0
  %5973 = vmatpush1.msra.mxu0 0.0
  %5974 = vmatprep.subr.mxu0 0.0
  %5975 = vmatpush1.msra.mxu0 0.0
  %5976 = vmatprep.subr.mxu0 0.0
  %5977 = vmatpush1.msra.mxu0 0.0
  %5978 = vmatprep.subr.mxu0 0.0
  %5979 = vmatpush1.msra.mxu0 0.0
  %5980 = vmatprep.subr.mxu0 0.0
  %5981 = vmatpush1.msra.mxu0 0.0
  %5982 = vmatprep.subr.mxu0 0.0
  %5983 = vmatpush1.msra.mxu0 0.0
  %5984 = vmatprep.subr.mxu0 0.0
  %5985 = vmatpush1.msra.mxu0 0.0
  %5986 = vmatprep.subr.mxu0 0.0
  %5987 = vmatpush1.msra.mxu0 0.0
  %5988 = vmatprep.subr.mxu0 0.0
  %5989 = vmatpush1.msra.mxu0 0.0
  %5990 = vmatprep.subr.mxu0 0.0
  %5991 = vmatpush1.msra.mxu0 0.0
  %5992 = vmatprep.subr.mxu0 0.0
  %5993 = vmatpush1.msra.mxu0 0.0
  %5994 = vmatprep.subr.mxu0 0.0
  %5995 = vmatpush1.msra.mxu0 0.0
  %5996 = vmatprep.subr.mxu0 0.0
  %5997 = vmatpush1.msra.mxu0 0.0
  %5998 = vmatprep.mubr.f32.mxu0 0.0
  %5999 = vmatmul.mubr.f32.gmra.mrb[0].mxu0 %v5932
  %v6000 = vpop.f32.mrb[0].mxu0
  %v6001 = vadd.f32 0.0, %v6000
  %v6002 = vpop.f32.mrb[0].mxu0
  %v6003 = vadd.f32 0.0, %v6002
  %6004 = vdwg.mxu0
  %6005 = vmatprep.subr.mxu0 %v3960
  %6006 = vmatpush1.msra.mxu0 %v3959
  %6007 = vmatprep.subr.mxu0 %v3964
  %6008 = vmatpush1.msra.mxu0 %v3963
  %6009 = vmatprep.subr.mxu0 %v3968
  %6010 = vmatpush1.msra.mxu0 %v3967
  %6011 = vmatprep.subr.mxu0 0.0
  %6012 = vmatpush1.msra.mxu0 0.0
  %6013 = vmatprep.subr.mxu0 0.0
  %6014 = vmatpush1.msra.mxu0 0.0
  %6015 = vmatprep.subr.mxu0 0.0
  %6016 = vmatpush1.msra.mxu0 0.0
  %6017 = vmatprep.subr.mxu0 0.0
  %6018 = vmatpush1.msra.mxu0 0.0
  %6019 = vmatprep.subr.mxu0 0.0
  %6020 = vmatpush1.msra.mxu0 0.0
  %6021 = vmatprep.subr.mxu0 0.0
  %6022 = vmatpush1.msra.mxu0 0.0
  %6023 = vmatprep.subr.mxu0 0.0
  %6024 = vmatpush1.msra.mxu0 0.0
  %6025 = vmatprep.subr.mxu0 0.0
  %6026 = vmatpush1.msra.mxu0 0.0
  %6027 = vmatprep.subr.mxu0 0.0
  %6028 = vmatpush1.msra.mxu0 0.0
  %6029 = vmatprep.subr.mxu0 0.0
  %6030 = vmatpush1.msra.mxu0 0.0
  %6031 = vmatprep.subr.mxu0 0.0
  %6032 = vmatpush1.msra.mxu0 0.0
  %6033 = vmatprep.subr.mxu0 0.0
  %6034 = vmatpush1.msra.mxu0 0.0
  %6035 = vmatprep.subr.mxu0 0.0
  %6036 = vmatpush1.msra.mxu0 0.0
  %6037 = vmatprep.subr.mxu0 0.0
  %6038 = vmatpush1.msra.mxu0 0.0
  %6039 = vmatprep.subr.mxu0 0.0
  %6040 = vmatpush1.msra.mxu0 0.0
  %6041 = vmatprep.subr.mxu0 0.0
  %6042 = vmatpush1.msra.mxu0 0.0
  %6043 = vmatprep.subr.mxu0 0.0
  %6044 = vmatpush1.msra.mxu0 0.0
  %6045 = vmatprep.subr.mxu0 0.0
  %6046 = vmatpush1.msra.mxu0 0.0
  %6047 = vmatprep.subr.mxu0 0.0
  %6048 = vmatpush1.msra.mxu0 0.0
  %6049 = vmatprep.subr.mxu0 0.0
  %6050 = vmatpush1.msra.mxu0 0.0
  %6051 = vmatprep.subr.mxu0 0.0
  %6052 = vmatpush1.msra.mxu0 0.0
  %6053 = vmatprep.subr.mxu0 0.0
  %6054 = vmatpush1.msra.mxu0 0.0
  %6055 = vmatprep.subr.mxu0 0.0
  %6056 = vmatpush1.msra.mxu0 0.0
  %6057 = vmatprep.subr.mxu0 0.0
  %6058 = vmatpush1.msra.mxu0 0.0
  %6059 = vmatprep.subr.mxu0 0.0
  %6060 = vmatpush1.msra.mxu0 0.0
  %6061 = vmatprep.subr.mxu0 0.0
  %6062 = vmatpush1.msra.mxu0 0.0
  %6063 = vmatprep.subr.mxu0 0.0
  %6064 = vmatpush1.msra.mxu0 0.0
  %6065 = vmatprep.subr.mxu0 0.0
  %6066 = vmatpush1.msra.mxu0 0.0
  %6067 = vmatprep.subr.mxu0 0.0
  %6068 = vmatpush1.msra.mxu0 0.0
  %6069 = vmatprep.mubr.f32.mxu0 0.0
  %6070 = vmatmul.mubr.f32.gmra.mrb[0].mxu0 %v5932
  %v6071 = vpop.f32.mrb[0].mxu0
  %v6072 = vadd.f32 0.0, %v6071
  %v6073 = vpop.f32.mrb[0].mxu0
  %v6074 = vadd.f32 0.0, %v6073
  %6075 = vdwg.mxu0
  %v6076 = vadd.f32 %v5927, %v6001
  %v6077 = vadd.f32 %v5928, %v6003
  %v6078 = vadd.f32 %v5929, %v6072
  %v6079 = vadd.f32 %v5930, %v6074
  %v6080 = vxor.u32 %v6076, 2147483648
  %v6081 = vmul.f32 %v6080, 1.442695
  %v6082 = vpow.pop %v6081
  %v6083 = vadd.f32 %v6082, 1.0
  %v6084 = vrcp.pop %v6083
  %v6085 = vmul.f32 1.0, %v6084
  %v6086 = vxor.u32 %v6077, 2147483648
  %v6087 = vmul.f32 %v6086, 1.442695
  %v6088 = vpow.pop %v6087
  %v6089 = vadd.f32 %v6088, 1.0
  %v6090 = vrcp.pop %v6089
  %v6091 = vmul.f32 1.0, %v6090
  %v6092 = vtanh.pop %v6078
  %v6093 = vxor.u32 %v6079, 2147483648
  %v6094 = vmul.f32 %v6093, 1.442695
  %v6095 = vpow.pop %v6094
  %v6096 = vadd.f32 %v6095, 1.0
  %v6097 = vrcp.pop %v6096
  %v6098 = vmul.f32 1.0, %v6097
  %v6099 = vmul.f32 %v6091, %v5923
  %v6100 = vmul.f32 %v6085, %v6092
  %v6101 = vadd.f32 %v6099, %v6100
  %v6102 = vtanh.pop %v6101
  %v6103 = vmul.f32 %v6098, %v6102
  %s6104 = scalar_lea.vmem [#allocation4], 384
  %v6105 = vld [vmem:[%s6104] sm:$0xff]
  %v6106 = vld [vmem:[%s6104 + $0x8] sm:$0xff]
  %v6107 = vld [vmem:[%s6104 + $0x10] sm:$0xff]
  %v6108 = vld [vmem:[%s6104 + $0x18] sm:$0xff]
  %v6110 = vsel %vm29, %v6103, 0
  %6112 = vmatprep.subr.mxu0 %v3958
  %6113 = vmatpush1.msra.mxu0 %v3957
  %6114 = vmatprep.subr.mxu0 %v3962
  %6115 = vmatpush1.msra.mxu0 %v3961
  %6116 = vmatprep.subr.mxu0 %v3966
  %6117 = vmatpush1.msra.mxu0 %v3965
  %6118 = vmatprep.subr.mxu0 0.0
  %6119 = vmatpush1.msra.mxu0 0.0
  %6120 = vmatprep.subr.mxu0 0.0
  %6121 = vmatpush1.msra.mxu0 0.0
  %6122 = vmatprep.subr.mxu0 0.0
  %6123 = vmatpush1.msra.mxu0 0.0
  %6124 = vmatprep.subr.mxu0 0.0
  %6125 = vmatpush1.msra.mxu0 0.0
  %6126 = vmatprep.subr.mxu0 0.0
  %6127 = vmatpush1.msra.mxu0 0.0
  %6128 = vmatprep.subr.mxu0 0.0
  %6129 = vmatpush1.msra.mxu0 0.0
  %6130 = vmatprep.subr.mxu0 0.0
  %6131 = vmatpush1.msra.mxu0 0.0
  %6132 = vmatprep.subr.mxu0 0.0
  %6133 = vmatpush1.msra.mxu0 0.0
  %6134 = vmatprep.subr.mxu0 0.0
  %6135 = vmatpush1.msra.mxu0 0.0
  %6136 = vmatprep.subr.mxu0 0.0
  %6137 = vmatpush1.msra.mxu0 0.0
  %6138 = vmatprep.subr.mxu0 0.0
  %6139 = vmatpush1.msra.mxu0 0.0
  %6140 = vmatprep.subr.mxu0 0.0
  %6141 = vmatpush1.msra.mxu0 0.0
  %6142 = vmatprep.subr.mxu0 0.0
  %6143 = vmatpush1.msra.mxu0 0.0
  %6144 = vmatprep.subr.mxu0 0.0
  %6145 = vmatpush1.msra.mxu0 0.0
  %6146 = vmatprep.subr.mxu0 0.0
  %6147 = vmatpush1.msra.mxu0 0.0
  %6148 = vmatprep.subr.mxu0 0.0
  %6149 = vmatpush1.msra.mxu0 0.0
  %6150 = vmatprep.subr.mxu0 0.0
  %6151 = vmatpush1.msra.mxu0 0.0
  %6152 = vmatprep.subr.mxu0 0.0
  %6153 = vmatpush1.msra.mxu0 0.0
  %6154 = vmatprep.subr.mxu0 0.0
  %6155 = vmatpush1.msra.mxu0 0.0
  %6156 = vmatprep.subr.mxu0 0.0
  %6157 = vmatpush1.msra.mxu0 0.0
  %6158 = vmatprep.subr.mxu0 0.0
  %6159 = vmatpush1.msra.mxu0 0.0
  %6160 = vmatprep.subr.mxu0 0.0
  %6161 = vmatpush1.msra.mxu0 0.0
  %6162 = vmatprep.subr.mxu0 0.0
  %6163 = vmatpush1.msra.mxu0 0.0
  %6164 = vmatprep.subr.mxu0 0.0
  %6165 = vmatpush1.msra.mxu0 0.0
  %6166 = vmatprep.subr.mxu0 0.0
  %6167 = vmatpush1.msra.mxu0 0.0
  %6168 = vmatprep.subr.mxu0 0.0
  %6169 = vmatpush1.msra.mxu0 0.0
  %6170 = vmatprep.subr.mxu0 0.0
  %6171 = vmatpush1.msra.mxu0 0.0
  %6172 = vmatprep.subr.mxu0 0.0
  %6173 = vmatpush1.msra.mxu0 0.0
  %6174 = vmatprep.subr.mxu0 0.0
  %6175 = vmatpush1.msra.mxu0 0.0
  %6176 = vmatprep.mubr.f32.mxu0 0.0
  %6177 = vmatmul.mubr.f32.gmra.mrb[0].mxu0 %v6110
  %v6178 = vpop.f32.mrb[0].mxu0
  %v6179 = vadd.f32 0.0, %v6178
  %v6180 = vpop.f32.mrb[0].mxu0
  %v6181 = vadd.f32 0.0, %v6180
  %6182 = vdwg.mxu0
  %6183 = vmatprep.subr.mxu0 %v3960
  %6184 = vmatpush1.msra.mxu0 %v3959
  %6185 = vmatprep.subr.mxu0 %v3964
  %6186 = vmatpush1.msra.mxu0 %v3963
  %6187 = vmatprep.subr.mxu0 %v3968
  %6188 = vmatpush1.msra.mxu0 %v3967
  %6189 = vmatprep.subr.mxu0 0.0
  %6190 = vmatpush1.msra.mxu0 0.0
  %6191 = vmatprep.subr.mxu0 0.0
  %6192 = vmatpush1.msra.mxu0 0.0
  %6193 = vmatprep.subr.mxu0 0.0
  %6194 = vmatpush1.msra.mxu0 0.0
  %6195 = vmatprep.subr.mxu0 0.0
  %6196 = vmatpush1.msra.mxu0 0.0
  %6197 = vmatprep.subr.mxu0 0.0
  %6198 = vmatpush1.msra.mxu0 0.0
  %6199 = vmatprep.subr.mxu0 0.0
  %6200 = vmatpush1.msra.mxu0 0.0
  %6201 = vmatprep.subr.mxu0 0.0
  %6202 = vmatpush1.msra.mxu0 0.0
  %6203 = vmatprep.subr.mxu0 0.0
  %6204 = vmatpush1.msra.mxu0 0.0
  %6205 = vmatprep.subr.mxu0 0.0
  %6206 = vmatpush1.msra.mxu0 0.0
  %6207 = vmatprep.subr.mxu0 0.0
  %6208 = vmatpush1.msra.mxu0 0.0
  %6209 = vmatprep.subr.mxu0 0.0
  %6210 = vmatpush1.msra.mxu0 0.0
  %6211 = vmatprep.subr.mxu0 0.0
  %6212 = vmatpush1.msra.mxu0 0.0
  %6213 = vmatprep.subr.mxu0 0.0
  %6214 = vmatpush1.msra.mxu0 0.0
  %6215 = vmatprep.subr.mxu0 0.0
  %6216 = vmatpush1.msra.mxu0 0.0
  %6217 = vmatprep.subr.mxu0 0.0
  %6218 = vmatpush1.msra.mxu0 0.0
  %6219 = vmatprep.subr.mxu0 0.0
  %6220 = vmatpush1.msra.mxu0 0.0
  %6221 = vmatprep.subr.mxu0 0.0
  %6222 = vmatpush1.msra.mxu0 0.0
  %6223 = vmatprep.subr.mxu0 0.0
  %6224 = vmatpush1.msra.mxu0 0.0
  %6225 = vmatprep.subr.mxu0 0.0
  %6226 = vmatpush1.msra.mxu0 0.0
  %6227 = vmatprep.subr.mxu0 0.0
  %6228 = vmatpush1.msra.mxu0 0.0
  %6229 = vmatprep.subr.mxu0 0.0
  %6230 = vmatpush1.msra.mxu0 0.0
  %6231 = vmatprep.subr.mxu0 0.0
  %6232 = vmatpush1.msra.mxu0 0.0
  %6233 = vmatprep.subr.mxu0 0.0
  %6234 = vmatpush1.msra.mxu0 0.0
  %6235 = vmatprep.subr.mxu0 0.0
  %6236 = vmatpush1.msra.mxu0 0.0
  %6237 = vmatprep.subr.mxu0 0.0
  %6238 = vmatpush1.msra.mxu0 0.0
  %6239 = vmatprep.subr.mxu0 0.0
  %6240 = vmatpush1.msra.mxu0 0.0
  %6241 = vmatprep.subr.mxu0 0.0
  %6242 = vmatpush1.msra.mxu0 0.0
  %6243 = vmatprep.subr.mxu0 0.0
  %6244 = vmatpush1.msra.mxu0 0.0
  %6245 = vmatprep.subr.mxu0 0.0
  %6246 = vmatpush1.msra.mxu0 0.0
  %6247 = vmatprep.mubr.f32.mxu0 0.0
  %6248 = vmatmul.mubr.f32.gmra.mrb[0].mxu0 %v6110
  %v6249 = vpop.f32.mrb[0].mxu0
  %v6250 = vadd.f32 0.0, %v6249
  %v6251 = vpop.f32.mrb[0].mxu0
  %v6252 = vadd.f32 0.0, %v6251
  %6253 = vdwg.mxu0
  %v6254 = vadd.f32 %v6105, %v6179
  %v6255 = vadd.f32 %v6106, %v6181
  %v6256 = vadd.f32 %v6107, %v6250
  %v6257 = vadd.f32 %v6108, %v6252
  %v6258 = vxor.u32 %v6254, 2147483648
  %v6259 = vmul.f32 %v6258, 1.442695
  %v6260 = vpow.pop %v6259
  %v6261 = vadd.f32 %v6260, 1.0
  %v6262 = vrcp.pop %v6261
  %v6263 = vmul.f32 1.0, %v6262
  %v6264 = vxor.u32 %v6255, 2147483648
  %v6265 = vmul.f32 %v6264, 1.442695
  %v6266 = vpow.pop %v6265
  %v6267 = vadd.f32 %v6266, 1.0
  %v6268 = vrcp.pop %v6267
  %v6269 = vmul.f32 1.0, %v6268
  %v6270 = vtanh.pop %v6256
  %v6271 = vxor.u32 %v6257, 2147483648
  %v6272 = vmul.f32 %v6271, 1.442695
  %v6273 = vpow.pop %v6272
  %v6274 = vadd.f32 %v6273, 1.0
  %v6275 = vrcp.pop %v6274
  %v6276 = vmul.f32 1.0, %v6275
  %v6277 = vmul.f32 %v6269, %v6101
  %v6278 = vmul.f32 %v6263, %v6270
  %v6279 = vadd.f32 %v6277, %v6278
  %v6280 = vtanh.pop %v6279
  %v6281 = vmul.f32 %v6276, %v6280
  %s6282 = scalar_lea.vmem [#allocation4], 416
  %v6283 = vld [vmem:[%s6282] sm:$0xff]
  %v6284 = vld [vmem:[%s6282 + $0x8] sm:$0xff]
  %v6285 = vld [vmem:[%s6282 + $0x10] sm:$0xff]
  %v6286 = vld [vmem:[%s6282 + $0x18] sm:$0xff]
  %v6288 = vsel %vm29, %v6281, 0
  %6290 = vmatprep.subr.mxu0 %v3958
  %6291 = vmatpush1.msra.mxu0 %v3957
  %6292 = vmatprep.subr.mxu0 %v3962
  %6293 = vmatpush1.msra.mxu0 %v3961
  %6294 = vmatprep.subr.mxu0 %v3966
  %6295 = vmatpush1.msra.mxu0 %v3965
  %6296 = vmatprep.subr.mxu0 0.0
  %6297 = vmatpush1.msra.mxu0 0.0
  %6298 = vmatprep.subr.mxu0 0.0
  %6299 = vmatpush1.msra.mxu0 0.0
  %6300 = vmatprep.subr.mxu0 0.0
  %6301 = vmatpush1.msra.mxu0 0.0
  %6302 = vmatprep.subr.mxu0 0.0
  %6303 = vmatpush1.msra.mxu0 0.0
  %6304 = vmatprep.subr.mxu0 0.0
  %6305 = vmatpush1.msra.mxu0 0.0
  %6306 = vmatprep.subr.mxu0 0.0
  %6307 = vmatpush1.msra.mxu0 0.0
  %6308 = vmatprep.subr.mxu0 0.0
  %6309 = vmatpush1.msra.mxu0 0.0
  %6310 = vmatprep.subr.mxu0 0.0
  %6311 = vmatpush1.msra.mxu0 0.0
  %6312 = vmatprep.subr.mxu0 0.0
  %6313 = vmatpush1.msra.mxu0 0.0
  %6314 = vmatprep.subr.mxu0 0.0
  %6315 = vmatpush1.msra.mxu0 0.0
  %6316 = vmatprep.subr.mxu0 0.0
  %6317 = vmatpush1.msra.mxu0 0.0
  %6318 = vmatprep.subr.mxu0 0.0
  %6319 = vmatpush1.msra.mxu0 0.0
  %6320 = vmatprep.subr.mxu0 0.0
  %6321 = vmatpush1.msra.mxu0 0.0
  %6322 = vmatprep.subr.mxu0 0.0
  %6323 = vmatpush1.msra.mxu0 0.0
  %6324 = vmatprep.subr.mxu0 0.0
  %6325 = vmatpush1.msra.mxu0 0.0
  %6326 = vmatprep.subr.mxu0 0.0
  %6327 = vmatpush1.msra.mxu0 0.0
  %6328 = vmatprep.subr.mxu0 0.0
  %6329 = vmatpush1.msra.mxu0 0.0
  %6330 = vmatprep.subr.mxu0 0.0
  %6331 = vmatpush1.msra.mxu0 0.0
  %6332 = vmatprep.subr.mxu0 0.0
  %6333 = vmatpush1.msra.mxu0 0.0
  %6334 = vmatprep.subr.mxu0 0.0
  %6335 = vmatpush1.msra.mxu0 0.0
  %6336 = vmatprep.subr.mxu0 0.0
  %6337 = vmatpush1.msra.mxu0 0.0
  %6338 = vmatprep.subr.mxu0 0.0
  %6339 = vmatpush1.msra.mxu0 0.0
  %6340 = vmatprep.subr.mxu0 0.0
  %6341 = vmatpush1.msra.mxu0 0.0
  %6342 = vmatprep.subr.mxu0 0.0
  %6343 = vmatpush1.msra.mxu0 0.0
  %6344 = vmatprep.subr.mxu0 0.0
  %6345 = vmatpush1.msra.mxu0 0.0
  %6346 = vmatprep.subr.mxu0 0.0
  %6347 = vmatpush1.msra.mxu0 0.0
  %6348 = vmatprep.subr.mxu0 0.0
  %6349 = vmatpush1.msra.mxu0 0.0
  %6350 = vmatprep.subr.mxu0 0.0
  %6351 = vmatpush1.msra.mxu0 0.0
  %6352 = vmatprep.subr.mxu0 0.0
  %6353 = vmatpush1.msra.mxu0 0.0
  %6354 = vmatprep.mubr.f32.mxu0 0.0
  %6355 = vmatmul.mubr.f32.gmra.mrb[0].mxu0 %v6288
  %v6356 = vpop.f32.mrb[0].mxu0
  %v6357 = vadd.f32 0.0, %v6356
  %v6358 = vpop.f32.mrb[0].mxu0
  %v6359 = vadd.f32 0.0, %v6358
  %6360 = vdwg.mxu0
  %6361 = vmatprep.subr.mxu0 %v3960
  %6362 = vmatpush1.msra.mxu0 %v3959
  %6363 = vmatprep.subr.mxu0 %v3964
  %6364 = vmatpush1.msra.mxu0 %v3963
  %6365 = vmatprep.subr.mxu0 %v3968
  %6366 = vmatpush1.msra.mxu0 %v3967
  %6367 = vmatprep.subr.mxu0 0.0
  %6368 = vmatpush1.msra.mxu0 0.0
  %6369 = vmatprep.subr.mxu0 0.0
  %6370 = vmatpush1.msra.mxu0 0.0
  %6371 = vmatprep.subr.mxu0 0.0
  %6372 = vmatpush1.msra.mxu0 0.0
  %6373 = vmatprep.subr.mxu0 0.0
  %6374 = vmatpush1.msra.mxu0 0.0
  %6375 = vmatprep.subr.mxu0 0.0
  %6376 = vmatpush1.msra.mxu0 0.0
  %6377 = vmatprep.subr.mxu0 0.0
  %6378 = vmatpush1.msra.mxu0 0.0
  %6379 = vmatprep.subr.mxu0 0.0
  %6380 = vmatpush1.msra.mxu0 0.0
  %6381 = vmatprep.subr.mxu0 0.0
  %6382 = vmatpush1.msra.mxu0 0.0
  %6383 = vmatprep.subr.mxu0 0.0
  %6384 = vmatpush1.msra.mxu0 0.0
  %6385 = vmatprep.subr.mxu0 0.0
  %6386 = vmatpush1.msra.mxu0 0.0
  %6387 = vmatprep.subr.mxu0 0.0
  %6388 = vmatpush1.msra.mxu0 0.0
  %6389 = vmatprep.subr.mxu0 0.0
  %6390 = vmatpush1.msra.mxu0 0.0
  %6391 = vmatprep.subr.mxu0 0.0
  %6392 = vmatpush1.msra.mxu0 0.0
  %6393 = vmatprep.subr.mxu0 0.0
  %6394 = vmatpush1.msra.mxu0 0.0
  %6395 = vmatprep.subr.mxu0 0.0
  %6396 = vmatpush1.msra.mxu0 0.0
  %6397 = vmatprep.subr.mxu0 0.0
  %6398 = vmatpush1.msra.mxu0 0.0
  %6399 = vmatprep.subr.mxu0 0.0
  %6400 = vmatpush1.msra.mxu0 0.0
  %6401 = vmatprep.subr.mxu0 0.0
  %6402 = vmatpush1.msra.mxu0 0.0
  %6403 = vmatprep.subr.mxu0 0.0
  %6404 = vmatpush1.msra.mxu0 0.0
  %6405 = vmatprep.subr.mxu0 0.0
  %6406 = vmatpush1.msra.mxu0 0.0
  %6407 = vmatprep.subr.mxu0 0.0
  %6408 = vmatpush1.msra.mxu0 0.0
  %6409 = vmatprep.subr.mxu0 0.0
  %6410 = vmatpush1.msra.mxu0 0.0
  %6411 = vmatprep.subr.mxu0 0.0
  %6412 = vmatpush1.msra.mxu0 0.0
  %6413 = vmatprep.subr.mxu0 0.0
  %6414 = vmatpush1.msra.mxu0 0.0
  %6415 = vmatprep.subr.mxu0 0.0
  %6416 = vmatpush1.msra.mxu0 0.0
  %6417 = vmatprep.subr.mxu0 0.0
  %6418 = vmatpush1.msra.mxu0 0.0
  %6419 = vmatprep.subr.mxu0 0.0
  %6420 = vmatpush1.msra.mxu0 0.0
  %6421 = vmatprep.subr.mxu0 0.0
  %6422 = vmatpush1.msra.mxu0 0.0
  %6423 = vmatprep.subr.mxu0 0.0
  %6424 = vmatpush1.msra.mxu0 0.0
  %6425 = vmatprep.mubr.f32.mxu0 0.0
  %6426 = vmatmul.mubr.f32.gmra.mrb[0].mxu0 %v6288
  %v6427 = vpop.f32.mrb[0].mxu0
  %v6428 = vadd.f32 0.0, %v6427
  %v6429 = vpop.f32.mrb[0].mxu0
  %v6430 = vadd.f32 0.0, %v6429
  %6431 = vdwg.mxu0
  %v6432 = vadd.f32 %v6283, %v6357
  %v6433 = vadd.f32 %v6284, %v6359
  %v6434 = vadd.f32 %v6285, %v6428
  %v6435 = vadd.f32 %v6286, %v6430
  %v6436 = vxor.u32 %v6432, 2147483648
  %v6437 = vmul.f32 %v6436, 1.442695
  %v6438 = vpow.pop %v6437
  %v6439 = vadd.f32 %v6438, 1.0
  %v6440 = vrcp.pop %v6439
  %v6441 = vmul.f32 1.0, %v6440
  %v6442 = vxor.u32 %v6433, 2147483648
  %v6443 = vmul.f32 %v6442, 1.442695
  %v6444 = vpow.pop %v6443
  %v6445 = vadd.f32 %v6444, 1.0
  %v6446 = vrcp.pop %v6445
  %v6447 = vmul.f32 1.0, %v6446
  %v6448 = vtanh.pop %v6434
  %v6449 = vxor.u32 %v6435, 2147483648
  %v6450 = vmul.f32 %v6449, 1.442695
  %v6451 = vpow.pop %v6450
  %v6452 = vadd.f32 %v6451, 1.0
  %v6453 = vrcp.pop %v6452
  %v6454 = vmul.f32 1.0, %v6453
  %v6455 = vmul.f32 %v6447, %v6279
  %v6456 = vmul.f32 %v6441, %v6448
  %v6457 = vadd.f32 %v6455, %v6456
  %v6458 = vtanh.pop %v6457
  %v6459 = vmul.f32 %v6454, %v6458
  %s6460 = scalar_lea.vmem [#allocation4], 448
  %v6461 = vld [vmem:[%s6460] sm:$0xff]
  %v6462 = vld [vmem:[%s6460 + $0x8] sm:$0xff]
  %v6463 = vld [vmem:[%s6460 + $0x10] sm:$0xff]
  %v6464 = vld [vmem:[%s6460 + $0x18] sm:$0xff]
  %v6466 = vsel %vm29, %v6459, 0
  %6468 = vmatprep.subr.mxu0 %v3958
  %6469 = vmatpush1.msra.mxu0 %v3957
  %6470 = vmatprep.subr.mxu0 %v3962
  %6471 = vmatpush1.msra.mxu0 %v3961
  %6472 = vmatprep.subr.mxu0 %v3966
  %6473 = vmatpush1.msra.mxu0 %v3965
  %6474 = vmatprep.subr.mxu0 0.0
  %6475 = vmatpush1.msra.mxu0 0.0
  %6476 = vmatprep.subr.mxu0 0.0
  %6477 = vmatpush1.msra.mxu0 0.0
  %6478 = vmatprep.subr.mxu0 0.0
  %6479 = vmatpush1.msra.mxu0 0.0
  %6480 = vmatprep.subr.mxu0 0.0
  %6481 = vmatpush1.msra.mxu0 0.0
  %6482 = vmatprep.subr.mxu0 0.0
  %6483 = vmatpush1.msra.mxu0 0.0
  %6484 = vmatprep.subr.mxu0 0.0
  %6485 = vmatpush1.msra.mxu0 0.0
  %6486 = vmatprep.subr.mxu0 0.0
  %6487 = vmatpush1.msra.mxu0 0.0
  %6488 = vmatprep.subr.mxu0 0.0
  %6489 = vmatpush1.msra.mxu0 0.0
  %6490 = vmatprep.subr.mxu0 0.0
  %6491 = vmatpush1.msra.mxu0 0.0
  %6492 = vmatprep.subr.mxu0 0.0
  %6493 = vmatpush1.msra.mxu0 0.0
  %6494 = vmatprep.subr.mxu0 0.0
  %6495 = vmatpush1.msra.mxu0 0.0
  %6496 = vmatprep.subr.mxu0 0.0
  %6497 = vmatpush1.msra.mxu0 0.0
  %6498 = vmatprep.subr.mxu0 0.0
  %6499 = vmatpush1.msra.mxu0 0.0
  %6500 = vmatprep.subr.mxu0 0.0
  %6501 = vmatpush1.msra.mxu0 0.0
  %6502 = vmatprep.subr.mxu0 0.0
  %6503 = vmatpush1.msra.mxu0 0.0
  %6504 = vmatprep.subr.mxu0 0.0
  %6505 = vmatpush1.msra.mxu0 0.0
  %6506 = vmatprep.subr.mxu0 0.0
  %6507 = vmatpush1.msra.mxu0 0.0
  %6508 = vmatprep.subr.mxu0 0.0
  %6509 = vmatpush1.msra.mxu0 0.0
  %6510 = vmatprep.subr.mxu0 0.0
  %6511 = vmatpush1.msra.mxu0 0.0
  %6512 = vmatprep.subr.mxu0 0.0
  %6513 = vmatpush1.msra.mxu0 0.0
  %6514 = vmatprep.subr.mxu0 0.0
  %6515 = vmatpush1.msra.mxu0 0.0
  %6516 = vmatprep.subr.mxu0 0.0
  %6517 = vmatpush1.msra.mxu0 0.0
  %6518 = vmatprep.subr.mxu0 0.0
  %6519 = vmatpush1.msra.mxu0 0.0
  %6520 = vmatprep.subr.mxu0 0.0
  %6521 = vmatpush1.msra.mxu0 0.0
  %6522 = vmatprep.subr.mxu0 0.0
  %6523 = vmatpush1.msra.mxu0 0.0
  %6524 = vmatprep.subr.mxu0 0.0
  %6525 = vmatpush1.msra.mxu0 0.0
  %6526 = vmatprep.subr.mxu0 0.0
  %6527 = vmatpush1.msra.mxu0 0.0
  %6528 = vmatprep.subr.mxu0 0.0
  %6529 = vmatpush1.msra.mxu0 0.0
  %6530 = vmatprep.subr.mxu0 0.0
  %6531 = vmatpush1.msra.mxu0 0.0
  %6532 = vmatprep.mubr.f32.mxu0 0.0
  %6533 = vmatmul.mubr.f32.gmra.mrb[0].mxu0 %v6466
  %v6534 = vpop.f32.mrb[0].mxu0
  %v6535 = vadd.f32 0.0, %v6534
  %v6536 = vpop.f32.mrb[0].mxu0
  %v6537 = vadd.f32 0.0, %v6536
  %6538 = vdwg.mxu0
  %6539 = vmatprep.subr.mxu0 %v3960
  %6540 = vmatpush1.msra.mxu0 %v3959
  %6541 = vmatprep.subr.mxu0 %v3964
  %6542 = vmatpush1.msra.mxu0 %v3963
  %6543 = vmatprep.subr.mxu0 %v3968
  %6544 = vmatpush1.msra.mxu0 %v3967
  %6545 = vmatprep.subr.mxu0 0.0
  %6546 = vmatpush1.msra.mxu0 0.0
  %6547 = vmatprep.subr.mxu0 0.0
  %6548 = vmatpush1.msra.mxu0 0.0
  %6549 = vmatprep.subr.mxu0 0.0
  %6550 = vmatpush1.msra.mxu0 0.0
  %6551 = vmatprep.subr.mxu0 0.0
  %6552 = vmatpush1.msra.mxu0 0.0
  %6553 = vmatprep.subr.mxu0 0.0
  %6554 = vmatpush1.msra.mxu0 0.0
  %6555 = vmatprep.subr.mxu0 0.0
  %6556 = vmatpush1.msra.mxu0 0.0
  %6557 = vmatprep.subr.mxu0 0.0
  %6558 = vmatpush1.msra.mxu0 0.0
  %6559 = vmatprep.subr.mxu0 0.0
  %6560 = vmatpush1.msra.mxu0 0.0
  %6561 = vmatprep.subr.mxu0 0.0
  %6562 = vmatpush1.msra.mxu0 0.0
  %6563 = vmatprep.subr.mxu0 0.0
  %6564 = vmatpush1.msra.mxu0 0.0
  %6565 = vmatprep.subr.mxu0 0.0
  %6566 = vmatpush1.msra.mxu0 0.0
  %6567 = vmatprep.subr.mxu0 0.0
  %6568 = vmatpush1.msra.mxu0 0.0
  %6569 = vmatprep.subr.mxu0 0.0
  %6570 = vmatpush1.msra.mxu0 0.0
  %6571 = vmatprep.subr.mxu0 0.0
  %6572 = vmatpush1.msra.mxu0 0.0
  %6573 = vmatprep.subr.mxu0 0.0
  %6574 = vmatpush1.msra.mxu0 0.0
  %6575 = vmatprep.subr.mxu0 0.0
  %6576 = vmatpush1.msra.mxu0 0.0
  %6577 = vmatprep.subr.mxu0 0.0
  %6578 = vmatpush1.msra.mxu0 0.0
  %6579 = vmatprep.subr.mxu0 0.0
  %6580 = vmatpush1.msra.mxu0 0.0
  %6581 = vmatprep.subr.mxu0 0.0
  %6582 = vmatpush1.msra.mxu0 0.0
  %6583 = vmatprep.subr.mxu0 0.0
  %6584 = vmatpush1.msra.mxu0 0.0
  %6585 = vmatprep.subr.mxu0 0.0
  %6586 = vmatpush1.msra.mxu0 0.0
  %6587 = vmatprep.subr.mxu0 0.0
  %6588 = vmatpush1.msra.mxu0 0.0
  %6589 = vmatprep.subr.mxu0 0.0
  %6590 = vmatpush1.msra.mxu0 0.0
  %6591 = vmatprep.subr.mxu0 0.0
  %6592 = vmatpush1.msra.mxu0 0.0
  %6593 = vmatprep.subr.mxu0 0.0
  %6594 = vmatpush1.msra.mxu0 0.0
  %6595 = vmatprep.subr.mxu0 0.0
  %6596 = vmatpush1.msra.mxu0 0.0
  %6597 = vmatprep.subr.mxu0 0.0
  %6598 = vmatpush1.msra.mxu0 0.0
  %6599 = vmatprep.subr.mxu0 0.0
  %6600 = vmatpush1.msra.mxu0 0.0
  %6601 = vmatprep.subr.mxu0 0.0
  %6602 = vmatpush1.msra.mxu0 0.0
  %6603 = vmatprep.mubr.f32.mxu0 0.0
  %6604 = vmatmul.mubr.f32.gmra.mrb[0].mxu0 %v6466
  %v6605 = vpop.f32.mrb[0].mxu0
  %v6606 = vadd.f32 0.0, %v6605
  %v6607 = vpop.f32.mrb[0].mxu0
  %v6608 = vadd.f32 0.0, %v6607
  %6609 = vdwg.mxu0
  %v6610 = vadd.f32 %v6461, %v6535
  %v6611 = vadd.f32 %v6462, %v6537
  %v6612 = vadd.f32 %v6463, %v6606
  %v6613 = vadd.f32 %v6464, %v6608
  %v6614 = vxor.u32 %v6610, 2147483648
  %v6615 = vmul.f32 %v6614, 1.442695
  %v6616 = vpow.pop %v6615
  %v6617 = vadd.f32 %v6616, 1.0
  %v6618 = vrcp.pop %v6617
  %v6619 = vmul.f32 1.0, %v6618
  %v6620 = vxor.u32 %v6611, 2147483648
  %v6621 = vmul.f32 %v6620, 1.442695
  %v6622 = vpow.pop %v6621
  %v6623 = vadd.f32 %v6622, 1.0
  %v6624 = vrcp.pop %v6623
  %v6625 = vmul.f32 1.0, %v6624
  %v6626 = vtanh.pop %v6612
  %v6627 = vxor.u32 %v6613, 2147483648
  %v6628 = vmul.f32 %v6627, 1.442695
  %v6629 = vpow.pop %v6628
  %v6630 = vadd.f32 %v6629, 1.0
  %v6631 = vrcp.pop %v6630
  %v6632 = vmul.f32 1.0, %v6631
  %v6633 = vmul.f32 %v6625, %v6457
  %v6634 = vmul.f32 %v6619, %v6626
  %v6635 = vadd.f32 %v6633, %v6634
  %v6636 = vtanh.pop %v6635
  %v6637 = vmul.f32 %v6632, %v6636
  %s6638 = scalar_lea.vmem [#allocation4], 480
  %v6639 = vld [vmem:[%s6638] sm:$0xff]
  %v6640 = vld [vmem:[%s6638 + $0x8] sm:$0xff]
  %v6641 = vld [vmem:[%s6638 + $0x10] sm:$0xff]
  %v6642 = vld [vmem:[%s6638 + $0x18] sm:$0xff]
  %v6644 = vsel %vm29, %v6637, 0
  %6646 = vmatprep.subr.mxu0 %v3958
  %6647 = vmatpush1.msra.mxu0 %v3957
  %6648 = vmatprep.subr.mxu0 %v3962
  %6649 = vmatpush1.msra.mxu0 %v3961
  %6650 = vmatprep.subr.mxu0 %v3966
  %6651 = vmatpush1.msra.mxu0 %v3965
  %6652 = vmatprep.subr.mxu0 0.0
  %6653 = vmatpush1.msra.mxu0 0.0
  %6654 = vmatprep.subr.mxu0 0.0
  %6655 = vmatpush1.msra.mxu0 0.0
  %6656 = vmatprep.subr.mxu0 0.0
  %6657 = vmatpush1.msra.mxu0 0.0
  %6658 = vmatprep.subr.mxu0 0.0
  %6659 = vmatpush1.msra.mxu0 0.0
  %6660 = vmatprep.subr.mxu0 0.0
  %6661 = vmatpush1.msra.mxu0 0.0
  %6662 = vmatprep.subr.mxu0 0.0
  %6663 = vmatpush1.msra.mxu0 0.0
  %6664 = vmatprep.subr.mxu0 0.0
  %6665 = vmatpush1.msra.mxu0 0.0
  %6666 = vmatprep.subr.mxu0 0.0
  %6667 = vmatpush1.msra.mxu0 0.0
  %6668 = vmatprep.subr.mxu0 0.0
  %6669 = vmatpush1.msra.mxu0 0.0
  %6670 = vmatprep.subr.mxu0 0.0
  %6671 = vmatpush1.msra.mxu0 0.0
  %6672 = vmatprep.subr.mxu0 0.0
  %6673 = vmatpush1.msra.mxu0 0.0
  %6674 = vmatprep.subr.mxu0 0.0
  %6675 = vmatpush1.msra.mxu0 0.0
  %6676 = vmatprep.subr.mxu0 0.0
  %6677 = vmatpush1.msra.mxu0 0.0
  %6678 = vmatprep.subr.mxu0 0.0
  %6679 = vmatpush1.msra.mxu0 0.0
  %6680 = vmatprep.subr.mxu0 0.0
  %6681 = vmatpush1.msra.mxu0 0.0
  %6682 = vmatprep.subr.mxu0 0.0
  %6683 = vmatpush1.msra.mxu0 0.0
  %6684 = vmatprep.subr.mxu0 0.0
  %6685 = vmatpush1.msra.mxu0 0.0
  %6686 = vmatprep.subr.mxu0 0.0
  %6687 = vmatpush1.msra.mxu0 0.0
  %6688 = vmatprep.subr.mxu0 0.0
  %6689 = vmatpush1.msra.mxu0 0.0
  %6690 = vmatprep.subr.mxu0 0.0
  %6691 = vmatpush1.msra.mxu0 0.0
  %6692 = vmatprep.subr.mxu0 0.0
  %6693 = vmatpush1.msra.mxu0 0.0
  %6694 = vmatprep.subr.mxu0 0.0
  %6695 = vmatpush1.msra.mxu0 0.0
  %6696 = vmatprep.subr.mxu0 0.0
  %6697 = vmatpush1.msra.mxu0 0.0
  %6698 = vmatprep.subr.mxu0 0.0
  %6699 = vmatpush1.msra.mxu0 0.0
  %6700 = vmatprep.subr.mxu0 0.0
  %6701 = vmatpush1.msra.mxu0 0.0
  %6702 = vmatprep.subr.mxu0 0.0
  %6703 = vmatpush1.msra.mxu0 0.0
  %6704 = vmatprep.subr.mxu0 0.0
  %6705 = vmatpush1.msra.mxu0 0.0
  %6706 = vmatprep.subr.mxu0 0.0
  %6707 = vmatpush1.msra.mxu0 0.0
  %6708 = vmatprep.subr.mxu0 0.0
  %6709 = vmatpush1.msra.mxu0 0.0
  %6710 = vmatprep.mubr.f32.mxu0 0.0
  %6711 = vmatmul.mubr.f32.gmra.mrb[0].mxu0 %v6644
  %v6712 = vpop.f32.mrb[0].mxu0
  %v6713 = vadd.f32 0.0, %v6712
  %v6714 = vpop.f32.mrb[0].mxu0
  %v6715 = vadd.f32 0.0, %v6714
  %6716 = vdwg.mxu0
  %6717 = vmatprep.subr.mxu0 %v3960
  %6718 = vmatpush1.msra.mxu0 %v3959
  %6719 = vmatprep.subr.mxu0 %v3964
  %6720 = vmatpush1.msra.mxu0 %v3963
  %6721 = vmatprep.subr.mxu0 %v3968
  %6722 = vmatpush1.msra.mxu0 %v3967
  %6723 = vmatprep.subr.mxu0 0.0
  %6724 = vmatpush1.msra.mxu0 0.0
  %6725 = vmatprep.subr.mxu0 0.0
  %6726 = vmatpush1.msra.mxu0 0.0
  %6727 = vmatprep.subr.mxu0 0.0
  %6728 = vmatpush1.msra.mxu0 0.0
  %6729 = vmatprep.subr.mxu0 0.0
  %6730 = vmatpush1.msra.mxu0 0.0
  %6731 = vmatprep.subr.mxu0 0.0
  %6732 = vmatpush1.msra.mxu0 0.0
  %6733 = vmatprep.subr.mxu0 0.0
  %6734 = vmatpush1.msra.mxu0 0.0
  %6735 = vmatprep.subr.mxu0 0.0
  %6736 = vmatpush1.msra.mxu0 0.0
  %6737 = vmatprep.subr.mxu0 0.0
  %6738 = vmatpush1.msra.mxu0 0.0
  %6739 = vmatprep.subr.mxu0 0.0
  %6740 = vmatpush1.msra.mxu0 0.0
  %6741 = vmatprep.subr.mxu0 0.0
  %6742 = vmatpush1.msra.mxu0 0.0
  %6743 = vmatprep.subr.mxu0 0.0
  %6744 = vmatpush1.msra.mxu0 0.0
  %6745 = vmatprep.subr.mxu0 0.0
  %6746 = vmatpush1.msra.mxu0 0.0
  %6747 = vmatprep.subr.mxu0 0.0
  %6748 = vmatpush1.msra.mxu0 0.0
  %6749 = vmatprep.subr.mxu0 0.0
  %6750 = vmatpush1.msra.mxu0 0.0
  %6751 = vmatprep.subr.mxu0 0.0
  %6752 = vmatpush1.msra.mxu0 0.0
  %6753 = vmatprep.subr.mxu0 0.0
  %6754 = vmatpush1.msra.mxu0 0.0
  %6755 = vmatprep.subr.mxu0 0.0
  %6756 = vmatpush1.msra.mxu0 0.0
  %6757 = vmatprep.subr.mxu0 0.0
  %6758 = vmatpush1.msra.mxu0 0.0
  %6759 = vmatprep.subr.mxu0 0.0
  %6760 = vmatpush1.msra.mxu0 0.0
  %6761 = vmatprep.subr.mxu0 0.0
  %6762 = vmatpush1.msra.mxu0 0.0
  %6763 = vmatprep.subr.mxu0 0.0
  %6764 = vmatpush1.msra.mxu0 0.0
  %6765 = vmatprep.subr.mxu0 0.0
  %6766 = vmatpush1.msra.mxu0 0.0
  %6767 = vmatprep.subr.mxu0 0.0
  %6768 = vmatpush1.msra.mxu0 0.0
  %6769 = vmatprep.subr.mxu0 0.0
  %6770 = vmatpush1.msra.mxu0 0.0
  %6771 = vmatprep.subr.mxu0 0.0
  %6772 = vmatpush1.msra.mxu0 0.0
  %6773 = vmatprep.subr.mxu0 0.0
  %6774 = vmatpush1.msra.mxu0 0.0
  %6775 = vmatprep.subr.mxu0 0.0
  %6776 = vmatpush1.msra.mxu0 0.0
  %6777 = vmatprep.subr.mxu0 0.0
  %6778 = vmatpush1.msra.mxu0 0.0
  %6779 = vmatprep.subr.mxu0 0.0
  %6780 = vmatpush1.msra.mxu0 0.0
  %6781 = vmatprep.mubr.f32.mxu0 0.0
  %6782 = vmatmul.mubr.f32.gmra.mrb[0].mxu0 %v6644
  %v6783 = vpop.f32.mrb[0].mxu0
  %v6784 = vadd.f32 0.0, %v6783
  %v6785 = vpop.f32.mrb[0].mxu0
  %v6786 = vadd.f32 0.0, %v6785
  %6787 = vdwg.mxu0
  %v6788 = vadd.f32 %v6639, %v6713
  %v6789 = vadd.f32 %v6640, %v6715
  %v6790 = vadd.f32 %v6641, %v6784
  %v6791 = vadd.f32 %v6642, %v6786
  %v6792 = vxor.u32 %v6788, 2147483648
  %v6793 = vmul.f32 %v6792, 1.442695
  %v6794 = vpow.pop %v6793
  %v6795 = vadd.f32 %v6794, 1.0
  %v6796 = vrcp.pop %v6795
  %v6797 = vmul.f32 1.0, %v6796
  %v6798 = vxor.u32 %v6789, 2147483648
  %v6799 = vmul.f32 %v6798, 1.442695
  %v6800 = vpow.pop %v6799
  %v6801 = vadd.f32 %v6800, 1.0
  %v6802 = vrcp.pop %v6801
  %v6803 = vmul.f32 1.0, %v6802
  %v6804 = vtanh.pop %v6790
  %v6805 = vxor.u32 %v6791, 2147483648
  %v6806 = vmul.f32 %v6805, 1.442695
  %v6807 = vpow.pop %v6806
  %v6808 = vadd.f32 %v6807, 1.0
  %v6809 = vrcp.pop %v6808
  %v6810 = vmul.f32 1.0, %v6809
  %v6811 = vmul.f32 %v6803, %v6635
  %v6812 = vmul.f32 %v6797, %v6804
  %v6813 = vadd.f32 %v6811, %v6812
  %v6814 = vtanh.pop %v6813
  %v6815 = vmul.f32 %v6810, %v6814
  %6816 = vst.msk [vmem:[%s8] sm:$0xff] %vm29, %v6815
  // Predicated region
  $region34: #{summary_net3_forward.1} parent=0 // pred_check
    _
  $region35: #{summary_net3_forward.1} parent=0 // pred_check_branch
    %6818 = sbr.rel (0) target = $region37
  $region36: #{summary_net3_forward.1} parent=0 // pred_region
    _
  $region37: #{summary_net3_forward.1} parent=0 // pred_fallthru
    _
  // Predicated region
  $region38: #{summary_net3_forward.1} parent=0 // pred_check
    _
  $region39: #{summary_net3_forward.1} parent=0 // pred_check_branch
    %6820 = sbr.rel (0) target = $region41
  $region40: #{summary_net3_forward.1} parent=0 // pred_region
    _
  $region41: #{summary_net3_forward.1} parent=0 // pred_fallthru
    _

</llo_original>
